<compile_context>
chip_gen: v5e
topology: v5e:2x2
jax: 0.10.0
libtpu: 0.0.40
codegen_flags: <defaults>
</compile_context>

<pallas_src>
import math

import jax
import jax.numpy as jnp
from jax.experimental import pallas as pl
from jax.experimental.pallas import tpu as pltpu


def _make_kernel(T, H, has_prev):
    def kernel(*refs):
        if has_prev:
            (x_ref, prev_ref, wq_ref, bq_ref, wk_ref, bk_ref, wv_ref, bv_ref,
             wap_ref, bap_ref, wlp_ref, blp_ref, wproj_ref, bproj_ref,
             y_ref, att_ref) = refs
        else:
            (x_ref, wq_ref, bq_ref, wk_ref, bk_ref, wv_ref, bv_ref,
             wap_ref, bap_ref, wproj_ref, bproj_ref,
             y_ref, att_ref) = refs
            prev_ref = wlp_ref = blp_ref = None

        x_f32 = x_ref[0]                               # (T, C) f32
        x = x_f32.astype(jnp.bfloat16)                 # bf16 operand for the MXU

        row = jax.lax.broadcasted_iota(jnp.int32, (T, T), 0)
        col = jax.lax.broadcasted_iota(jnp.int32, (T, T), 1)
        tril = col <= row

        if has_prev:
            # gamma_h = sigmoid(x @ w_lp + b_lp) for all heads at once: (T, H), f32.
            lp = jnp.dot(x_f32, wlp_ref[...],
                         preferred_element_type=jnp.float32) + blp_ref[...]
            gamma_all = jax.nn.sigmoid(lp)

        y_acc = jnp.zeros(y_ref.shape[1:], jnp.float32)              # (T, C) f32

        for h in range(H):
            # Per-head q/k/v, lane-dense (T, D).  1/sqrt(D) pre-folded into wq/bq.
            q = jnp.dot(x, wq_ref[h], preferred_element_type=jnp.float32) + bq_ref[h]
            k = jnp.dot(x, wk_ref[h], preferred_element_type=jnp.float32) + bk_ref[h]
            v = jnp.dot(x, wv_ref[h], preferred_element_type=jnp.float32) + bv_ref[h]

            # Causal softmax.  q @ k^T via dot_general (contract last dims), bf16 in, f32 acc.
            s = jax.lax.dot_general(q.astype(jnp.bfloat16), k.astype(jnp.bfloat16),
                                    (((1,), (1,)), ((), ())),
                                    preferred_element_type=jnp.float32)      # (T, T)
            s = jnp.where(tril, s, -jnp.inf)
            s = s - jnp.max(s, axis=-1, keepdims=True)
            e = jnp.exp(s)
            att = e * pl.reciprocal(jnp.sum(e, axis=-1, keepdims=True), approx=True)

            # beta: softmax over this head's 7 shift slots of attn_proj.
            ap = jnp.dot(x, wap_ref[h], preferred_element_type=jnp.float32) + bap_ref[h]
            ap = ap - jnp.max(ap, axis=-1, keepdims=True)
            eap = jnp.exp(ap)
            beta = eap * pl.reciprocal(jnp.sum(eap, axis=-1, keepdims=True), approx=True)

            # Interpolate the 7 shifted attention matrices.  Shifts are XLU lane rolls +
            # wrap-column zero masks.  Slot order matches the torch code:
            # [id, left1, right1, left2, right2, left3, right3].
            interp = beta[:, 0:1] * att
            for i in range(1, 4):
                left = pltpu.roll(att, T - i, axis=1)          # out[:, c] = att[:, c + i]
                left = jnp.where(col < T - i, left, 0.0)       # zero wrapped-in right cols
                right = pltpu.roll(att, i, axis=1)             # out[:, c] = att[:, c - i]
                right = jnp.where(col >= i, right, 0.0)        # zero wrapped-in left cols
                interp = (interp
                          + beta[:, 2 * i - 1:2 * i] * left
                          + beta[:, 2 * i:2 * i + 1] * right)
            interp = jnp.where(tril, interp, 0.0)              # re-apply causal zeroing

            if has_prev:
                g = gamma_all[:, h:h + 1]                      # (T, 1)
                final = g * interp + (1.0 - g) * prev_ref[0, h]
            else:
                final = interp

            att_ref[0, h] = final

            # y_h = final @ v ; fused c_proj: y_acc += y_h @ Wproj[h*D:(h+1)*D, :]
            yh = jnp.dot(final.astype(jnp.bfloat16), v.astype(jnp.bfloat16),
                         preferred_element_type=jnp.float32)                 # (T, D)
            y_acc = y_acc + jnp.dot(yh.astype(jnp.bfloat16), wproj_ref[h],
                                    preferred_element_type=jnp.float32)      # (T, C)

        y_ref[0] = y_acc + bproj_ref[...]

    return kernel


def shifted_causal_self_attention(x, params, prev_attn=None):
    B, T, C = x.shape
    H = params["n_head"]
    D = C // H
    has_prev = prev_attn is not None
    scale = 1.0 / math.sqrt(D)

    # --- host-side weight preparation (per-head layout, bf16 matmul operands) ---
    w_attn, b_attn = params["w_attn"], params["b_attn"]
    wq = w_attn[:, :C] * scale                 # fold 1/sqrt(D) into q projection
    wk = w_attn[:, C:2 * C]
    wv = w_attn[:, 2 * C:]
    bq = b_attn[:, :C] * scale
    bk = b_attn[:, C:2 * C]
    bv = b_attn[:, 2 * C:]

    def head_w(w):                             # (C, C) -> (H, C, D)
        return w.reshape(C, H, D).transpose(1, 0, 2).astype(jnp.bfloat16)

    def head_b(b):                             # (1, C) -> (H, 1, D)
        return b.reshape(H, D)[:, None, :].astype(jnp.float32)

    wq_h, wk_h, wv_h = head_w(wq), head_w(wk), head_w(wv)
    bq_h, bk_h, bv_h = head_b(bq), head_b(bk), head_b(bv)
    # attn_proj columns: flat index = slot*H + head  ->  (H, C, 7) / (H, 1, 7)
    wap_h = params["w_ap"].reshape(C, 7, H).transpose(2, 0, 1).astype(jnp.bfloat16)
    bap_h = params["b_ap"].reshape(7, H).T[:, None, :].astype(jnp.float32)
    wproj_h = params["w_proj"].reshape(H, D, C).astype(jnp.bfloat16)            # (H, D, C)
    bproj = params["b_proj"].astype(jnp.float32)                                # (1, C)

    def const_spec(shape):
        nd = len(shape)
        return pl.BlockSpec(tuple(shape), lambda b, _nd=nd: (0,) * _nd)

    inputs = [x.astype(jnp.float32)]
    in_specs = [pl.BlockSpec((1, T, C), lambda b: (b, 0, 0))]
    if has_prev:
        inputs.append(prev_attn.astype(jnp.float32))
        in_specs.append(pl.BlockSpec((1, H, T, T), lambda b: (b, 0, 0, 0)))

    for arr in (wq_h, bq_h, wk_h, bk_h, wv_h, bv_h, wap_h, bap_h):
        inputs.append(arr)
        in_specs.append(const_spec(arr.shape))

    if has_prev:
        wlp = params["w_lp"].astype(jnp.float32)              # (C, H)
        blp = params["b_lp"].astype(jnp.float32)              # (1, H)
        inputs += [wlp, blp]
        in_specs += [const_spec(wlp.shape), const_spec(blp.shape)]

    inputs += [wproj_h, bproj]
    in_specs += [const_spec(wproj_h.shape), const_spec(bproj.shape)]

    kernel = _make_kernel(T, H, has_prev)

    grid_spec = pltpu.PrefetchScalarGridSpec(
        num_scalar_prefetch=0,
        grid=(B,),
        in_specs=in_specs,
        out_specs=[pl.BlockSpec((1, T, C), lambda b: (b, 0, 0)),        # y
                   pl.BlockSpec((1, H, T, T), lambda b: (b, 0, 0, 0))],  # final_att
    )

    y, att = pl.pallas_call(
        kernel,
        out_shape=(jax.ShapeDtypeStruct((B, T, C), jnp.float32),
                   jax.ShapeDtypeStruct((B, H, T, T), jnp.float32)),
        grid_spec=grid_spec,
        compiler_params=pltpu.CompilerParams(
            dimension_semantics=("parallel",)),
    )(*inputs)
    return y, att


def reference_forward(x, params, prev_attn=None):
    """Pure-JAX f32 mirror of the PyTorch forward (eval mode)."""
    B, T, C = x.shape
    H = params["n_head"]
    D = C // H
    qkv = x @ params["w_attn"] + params["b_attn"][0]
    q, k, v = jnp.split(qkv, 3, axis=-1)

    def heads(t):
        return t.reshape(B, T, H, D).transpose(0, 2, 1, 3)

    q, k, v = heads(q), heads(k), heads(v)
    att = (q @ jnp.swapaxes(k, -1, -2)) / math.sqrt(D)
    tril = jnp.tril(jnp.ones((T, T), bool))
    att = jnp.where(tril, att, -jnp.inf)
    att = jax.nn.softmax(att, axis=-1)

    shifted = [att]
    for i in range(1, 4):
        shifted.append(jnp.pad(att[..., i:], ((0, 0), (0, 0), (0, 0), (0, i))))
        shifted.append(jnp.pad(att[..., :T - i], ((0, 0), (0, 0), (0, 0), (i, 0))))

    ap = (x @ params["w_ap"] + params["b_ap"][0]).reshape(B, T, 7, H).transpose(0, 2, 3, 1)
    beta = jax.nn.softmax(ap, axis=1)[..., None]               # (B, 7, H, T, 1)
    interp = sum(beta[:, i] * shifted[i] for i in range(7))
    interp = jnp.where(tril, interp, 0.0)

    if prev_attn is not None:
        gamma = jax.nn.sigmoid(x @ params["w_lp"] + params["b_lp"][0])
        gamma = gamma.transpose(0, 2, 1)[..., None]            # (B, H, T, 1)
        final = gamma * interp + (1.0 - gamma) * prev_attn
    else:
        final = interp

    y = final @ v
    y = y.transpose(0, 2, 1, 3).reshape(B, T, C)
    y = y @ params["w_proj"] + params["b_proj"][0]
    return y, final


if __name__ == "__main__":
    B, T, C, H = 2, 128, 32, 4   # block_size = T = 128, n_embd = 32, n_head = 4
    key = jax.random.PRNGKey(0)
    keys = jax.random.split(key, 10)
    params = {
        "n_head": H,
        "w_attn": 0.02 * jax.random.normal(keys[0], (C, 3 * C), jnp.float32),
        "b_attn": 0.02 * jax.random.normal(keys[1], (1, 3 * C), jnp.float32),
        "w_ap":   0.02 * jax.random.normal(keys[2], (C, 7 * H), jnp.float32),
        "b_ap":   0.02 * jax.random.normal(keys[3], (1, 7 * H), jnp.float32),
        "w_lp":   0.02 * jax.random.normal(keys[4], (C, H), jnp.float32),
        "b_lp":   0.02 * jax.random.normal(keys[5], (1, H), jnp.float32),
        "w_proj": 0.02 * jax.random.normal(keys[6], (C, C), jnp.float32),
        "b_proj": 0.02 * jax.random.normal(keys[7], (1, C), jnp.float32),
    }
    x = jax.random.normal(keys[8], (B, T, C), jnp.float32)

    # prev_attn=None path (first layer) ...
    y1, att1 = shifted_causal_self_attention(x, params, prev_attn=None)
    # ... and the prev_attn path (subsequent layer), feeding the attention back in.
    y2, att2 = shifted_causal_self_attention(x, params, prev_attn=att1)
    jax.block_until_ready((y1, att1, y2, att2))

    ry1, ratt1 = reference_forward(x, params, prev_attn=None)
    ry2, ratt2 = reference_forward(x, params, prev_attn=ratt1)
    # Kernel runs matmuls in bf16 (f32 accumulation) + approx reciprocals; compare
    # against the f32 reference with correspondingly relaxed tolerances.
    for got, want in ((y1, ry1), (att1, ratt1), (y2, ry2), (att2, ratt2)):
        assert jnp.allclose(got, want, rtol=3e-2, atol=3e-3), \
            float(jnp.max(jnp.abs(got - want)))

    print("KERNEL_OK")
</pallas_src>

<mosaic_0001>
module attributes {stable_mosaic.version = 11 : i64} {
  func.func @kernel(%arg0: i32, %arg1: memref<1x128x32xf32, #tpu.memory_space<vmem>>, %arg2: memref<4x32x8xbf16, #tpu.memory_space<vmem>>, %arg3: memref<4x1x8xf32, #tpu.memory_space<vmem>>, %arg4: memref<4x32x8xbf16, #tpu.memory_space<vmem>>, %arg5: memref<4x1x8xf32, #tpu.memory_space<vmem>>, %arg6: memref<4x32x8xbf16, #tpu.memory_space<vmem>>, %arg7: memref<4x1x8xf32, #tpu.memory_space<vmem>>, %arg8: memref<4x32x7xbf16, #tpu.memory_space<vmem>>, %arg9: memref<4x1x7xf32, #tpu.memory_space<vmem>>, %arg10: memref<4x8x32xbf16, #tpu.memory_space<vmem>>, %arg11: memref<1x32xf32, #tpu.memory_space<vmem>>, %arg12: memref<1x128x32xf32, #tpu.memory_space<vmem>>, %arg13: memref<1x4x128x128xf32, #tpu.memory_space<vmem>>) attributes {dimension_semantics = [#tpu.dimension_semantics<parallel>], iteration_bounds = array<i64: 2>, scalar_prefetch = 0 : i64, scratch_operands = 0 : i64, tpu.core_type = #tpu.core_type<tc>, window_params = [{transform_indices = @transform_0, window_bounds = array<i64: 1, 128, 32>}, {pipeline_mode = #tpu.pipeline_mode<synchronous>, transform_indices = @transform_1, window_bounds = array<i64: 4, 32, 8>}, {pipeline_mode = #tpu.pipeline_mode<synchronous>, transform_indices = @transform_2, window_bounds = array<i64: 4, 1, 8>}, {pipeline_mode = #tpu.pipeline_mode<synchronous>, transform_indices = @transform_3, window_bounds = array<i64: 4, 32, 8>}, {pipeline_mode = #tpu.pipeline_mode<synchronous>, transform_indices = @transform_4, window_bounds = array<i64: 4, 1, 8>}, {pipeline_mode = #tpu.pipeline_mode<synchronous>, transform_indices = @transform_5, window_bounds = array<i64: 4, 32, 8>}, {pipeline_mode = #tpu.pipeline_mode<synchronous>, transform_indices = @transform_6, window_bounds = array<i64: 4, 1, 8>}, {pipeline_mode = #tpu.pipeline_mode<synchronous>, transform_indices = @transform_7, window_bounds = array<i64: 4, 32, 7>}, {pipeline_mode = #tpu.pipeline_mode<synchronous>, transform_indices = @transform_8, window_bounds = array<i64: 4, 1, 7>}, {pipeline_mode = #tpu.pipeline_mode<synchronous>, transform_indices = @transform_9, window_bounds = array<i64: 4, 8, 32>}, {pipeline_mode = #tpu.pipeline_mode<synchronous>, transform_indices = @transform_10, window_bounds = array<i64: 1, 32>}, {transform_indices = @transform_11, window_bounds = array<i64: 1, 128, 32>}, {transform_indices = @transform_12, window_bounds = array<i64: 1, 4, 128, 128>}]} {
    %c0 = arith.constant 0 : index
    %c0_0 = arith.constant 0 : index
    %c0_1 = arith.constant 0 : index
    %0 = vector.load %arg1[%c0, %c0_0, %c0_1] : memref<1x128x32xf32, #tpu.memory_space<vmem>>, vector<1x128x32xf32>
    %1 = vector.shape_cast %0 : vector<1x128x32xf32> to vector<128x32xf32>
    %2 = arith.truncf %1 : vector<128x32xf32> to vector<128x32xbf16>
    %3 = tpu.iota {dimensions = array<i32: 0>} : vector<128x128xi32>
    %4 = tpu.iota {dimensions = array<i32: 1>} : vector<128x128xi32>
    %5 = arith.cmpi sle, %4, %3 : vector<128x128xi32>
    %cst = arith.constant 0.000000e+00 : f32
    %6 = vector.broadcast %cst : f32 to vector<128x32xf32>
    %c0_2 = arith.constant 0 : index
    %c0_3 = arith.constant 0 : index
    %c0_4 = arith.constant 0 : index
    %7 = vector.load %arg2[%c0_2, %c0_3, %c0_4] : memref<4x32x8xbf16, #tpu.memory_space<vmem>>, vector<1x32x8xbf16>
    %8 = vector.shape_cast %7 : vector<1x32x8xbf16> to vector<32x8xbf16>
    %cst_5 = arith.constant dense<0.000000e+00> : vector<128x8xf32>
    %9 = tpu.matmul %2, %8, %cst_5 {dimension_numbers = #tpu.dot_dimension_numbers<[1], [0], [0], [1], [0, 0, 1, 1], [], []>} : vector<128x32xbf16>, vector<32x8xbf16>, vector<128x8xf32> -> vector<128x8xf32>
    %c0_6 = arith.constant 0 : index
    %c0_7 = arith.constant 0 : index
    %c0_8 = arith.constant 0 : index
    %10 = vector.load %arg3[%c0_6, %c0_7, %c0_8] : memref<4x1x8xf32, #tpu.memory_space<vmem>>, vector<1x1x8xf32>
    %11 = vector.shape_cast %10 : vector<1x1x8xf32> to vector<1x8xf32>
    %12 = vector.broadcast %11 : vector<1x8xf32> to vector<128x8xf32>
    %13 = arith.addf %9, %12 : vector<128x8xf32>
    %c0_9 = arith.constant 0 : index
    %c0_10 = arith.constant 0 : index
    %c0_11 = arith.constant 0 : index
    %14 = vector.load %arg4[%c0_9, %c0_10, %c0_11] : memref<4x32x8xbf16, #tpu.memory_space<vmem>>, vector<1x32x8xbf16>
    %15 = vector.shape_cast %14 : vector<1x32x8xbf16> to vector<32x8xbf16>
    %cst_12 = arith.constant dense<0.000000e+00> : vector<128x8xf32>
    %16 = tpu.matmul %2, %15, %cst_12 {dimension_numbers = #tpu.dot_dimension_numbers<[1], [0], [0], [1], [0, 0, 1, 1], [], []>} : vector<128x32xbf16>, vector<32x8xbf16>, vector<128x8xf32> -> vector<128x8xf32>
    %c0_13 = arith.constant 0 : index
    %c0_14 = arith.constant 0 : index
    %c0_15 = arith.constant 0 : index
    %17 = vector.load %arg5[%c0_13, %c0_14, %c0_15] : memref<4x1x8xf32, #tpu.memory_space<vmem>>, vector<1x1x8xf32>
    %18 = vector.shape_cast %17 : vector<1x1x8xf32> to vector<1x8xf32>
    %19 = vector.broadcast %18 : vector<1x8xf32> to vector<128x8xf32>
    %20 = arith.addf %16, %19 : vector<128x8xf32>
    %c0_16 = arith.constant 0 : index
    %c0_17 = arith.constant 0 : index
    %c0_18 = arith.constant 0 : index
    %21 = vector.load %arg6[%c0_16, %c0_17, %c0_18] : memref<4x32x8xbf16, #tpu.memory_space<vmem>>, vector<1x32x8xbf16>
    %22 = vector.shape_cast %21 : vector<1x32x8xbf16> to vector<32x8xbf16>
    %cst_19 = arith.constant dense<0.000000e+00> : vector<128x8xf32>
    %23 = tpu.matmul %2, %22, %cst_19 {dimension_numbers = #tpu.dot_dimension_numbers<[1], [0], [0], [1], [0, 0, 1, 1], [], []>} : vector<128x32xbf16>, vector<32x8xbf16>, vector<128x8xf32> -> vector<128x8xf32>
    %c0_20 = arith.constant 0 : index
    %c0_21 = arith.constant 0 : index
    %c0_22 = arith.constant 0 : index
    %24 = vector.load %arg7[%c0_20, %c0_21, %c0_22] : memref<4x1x8xf32, #tpu.memory_space<vmem>>, vector<1x1x8xf32>
    %25 = vector.shape_cast %24 : vector<1x1x8xf32> to vector<1x8xf32>
    %26 = vector.broadcast %25 : vector<1x8xf32> to vector<128x8xf32>
    %27 = arith.addf %23, %26 : vector<128x8xf32>
    %28 = arith.truncf %13 : vector<128x8xf32> to vector<128x8xbf16>
    %29 = arith.truncf %20 : vector<128x8xf32> to vector<128x8xbf16>
    %cst_23 = arith.constant dense<0.000000e+00> : vector<128x128xf32>
    %30 = tpu.matmul %28, %29, %cst_23 {dimension_numbers = #tpu.dot_dimension_numbers<[1], [1], [0], [0], [0, 0, 1, 0], [], []>} : vector<128x8xbf16>, vector<128x8xbf16>, vector<128x128xf32> -> vector<128x128xf32>
    %cst_24 = arith.constant 0xFF800000 : f32
    %31 = vector.broadcast %cst_24 : f32 to vector<128x128xf32>
    %32 = arith.select %5, %30, %31 : vector<128x128xi1>, vector<128x128xf32>
    %cst_25 = arith.constant dense<0xFF800000> : vector<128xf32>
    %33 = vector.multi_reduction <maximumf>, %32, %cst_25 [1] : vector<128x128xf32> to vector<128xf32>
    %34 = vector.shape_cast %33 : vector<128xf32> to vector<128x1xf32>
    %35 = vector.broadcast %34 : vector<128x1xf32> to vector<128x128xf32>
    %36 = arith.subf %32, %35 : vector<128x128xf32>
    %37 = math.exp %36 : vector<128x128xf32>
    %cst_26 = arith.constant dense<0.000000e+00> : vector<128xf32>
    %38 = vector.multi_reduction <add>, %37, %cst_26 [1] : vector<128x128xf32> to vector<128xf32>
    %39 = vector.shape_cast %38 : vector<128xf32> to vector<128x1xf32>
    %40 = tpu.reciprocal %39 {approx = true} : vector<128x1xf32> -> vector<128x1xf32>
    %41 = vector.broadcast %40 : vector<128x1xf32> to vector<128x128xf32>
    %42 = arith.mulf %37, %41 : vector<128x128xf32>
    %c0_27 = arith.constant 0 : index
    %c0_28 = arith.constant 0 : index
    %c0_29 = arith.constant 0 : index
    %43 = vector.load %arg8[%c0_27, %c0_28, %c0_29] : memref<4x32x7xbf16, #tpu.memory_space<vmem>>, vector<1x32x7xbf16>
    %44 = vector.shape_cast %43 : vector<1x32x7xbf16> to vector<32x7xbf16>
    %cst_30 = arith.constant dense<0.000000e+00> : vector<128x7xf32>
    %45 = tpu.matmul %2, %44, %cst_30 {dimension_numbers = #tpu.dot_dimension_numbers<[1], [0], [0], [1], [0, 0, 1, 1], [], []>} : vector<128x32xbf16>, vector<32x7xbf16>, vector<128x7xf32> -> vector<128x7xf32>
    %c0_31 = arith.constant 0 : index
    %c0_32 = arith.constant 0 : index
    %c0_33 = arith.constant 0 : index
    %46 = vector.load %arg9[%c0_31, %c0_32, %c0_33] : memref<4x1x7xf32, #tpu.memory_space<vmem>>, vector<1x1x7xf32>
    %47 = vector.shape_cast %46 : vector<1x1x7xf32> to vector<1x7xf32>
    %48 = vector.broadcast %47 : vector<1x7xf32> to vector<128x7xf32>
    %49 = arith.addf %45, %48 : vector<128x7xf32>
    %cst_34 = arith.constant dense<0xFF800000> : vector<128xf32>
    %50 = vector.multi_reduction <maximumf>, %49, %cst_34 [1] : vector<128x7xf32> to vector<128xf32>
    %51 = vector.shape_cast %50 : vector<128xf32> to vector<128x1xf32>
    %52 = vector.broadcast %51 : vector<128x1xf32> to vector<128x7xf32>
    %53 = arith.subf %49, %52 : vector<128x7xf32>
    %54 = math.exp %53 : vector<128x7xf32>
    %cst_35 = arith.constant dense<0.000000e+00> : vector<128xf32>
    %55 = vector.multi_reduction <add>, %54, %cst_35 [1] : vector<128x7xf32> to vector<128xf32>
    %56 = vector.shape_cast %55 : vector<128xf32> to vector<128x1xf32>
    %57 = tpu.reciprocal %56 {approx = true} : vector<128x1xf32> -> vector<128x1xf32>
    %58 = vector.broadcast %57 : vector<128x1xf32> to vector<128x7xf32>
    %59 = arith.mulf %54, %58 : vector<128x7xf32>
    %60 = vector.extract_strided_slice %59 {offsets = [0, 0], sizes = [128, 1], strides = [1, 1]} : vector<128x7xf32> to vector<128x1xf32>
    %61 = vector.broadcast %60 : vector<128x1xf32> to vector<128x128xf32>
    %62 = arith.mulf %61, %42 : vector<128x128xf32>
    %c127_i32 = arith.constant 127 : i32
    %63 = tpu.dynamic_rotate %42 by %c127_i32 dim 1 : vector<128x128xf32>, i32 -> vector<128x128xf32>
    %c127_i32_36 = arith.constant 127 : i32
    %64 = vector.broadcast %c127_i32_36 : i32 to vector<128x128xi32>
    %65 = arith.cmpi slt, %4, %64 : vector<128x128xi32>
    %cst_37 = arith.constant 0.000000e+00 : f32
    %66 = vector.broadcast %cst_37 : f32 to vector<128x128xf32>
    %67 = arith.select %65, %63, %66 : vector<128x128xi1>, vector<128x128xf32>
    %c1_i32 = arith.constant 1 : i32
    %68 = tpu.dynamic_rotate %42 by %c1_i32 dim 1 : vector<128x128xf32>, i32 -> vector<128x128xf32>
    %c1_i32_38 = arith.constant 1 : i32
    %69 = vector.broadcast %c1_i32_38 : i32 to vector<128x128xi32>
    %70 = arith.cmpi sge, %4, %69 : vector<128x128xi32>
    %cst_39 = arith.constant 0.000000e+00 : f32
    %71 = vector.broadcast %cst_39 : f32 to vector<128x128xf32>
    %72 = arith.select %70, %68, %71 : vector<128x128xi1>, vector<128x128xf32>
    %73 = vector.extract_strided_slice %59 {offsets = [0, 1], sizes = [128, 1], strides = [1, 1]} : vector<128x7xf32> to vector<128x1xf32>
    %74 = vector.broadcast %73 : vector<128x1xf32> to vector<128x128xf32>
    %75 = arith.mulf %74, %67 : vector<128x128xf32>
    %76 = arith.addf %62, %75 : vector<128x128xf32>
    %77 = vector.extract_strided_slice %59 {offsets = [0, 2], sizes = [128, 1], strides = [1, 1]} : vector<128x7xf32> to vector<128x1xf32>
    %78 = vector.broadcast %77 : vector<128x1xf32> to vector<128x128xf32>
    %79 = arith.mulf %78, %72 : vector<128x128xf32>
    %80 = arith.addf %76, %79 : vector<128x128xf32>
    %c126_i32 = arith.constant 126 : i32
    %81 = tpu.dynamic_rotate %42 by %c126_i32 dim 1 : vector<128x128xf32>, i32 -> vector<128x128xf32>
    %c126_i32_40 = arith.constant 126 : i32
    %82 = vector.broadcast %c126_i32_40 : i32 to vector<128x128xi32>
    %83 = arith.cmpi slt, %4, %82 : vector<128x128xi32>
    %cst_41 = arith.constant 0.000000e+00 : f32
    %84 = vector.broadcast %cst_41 : f32 to vector<128x128xf32>
    %85 = arith.select %83, %81, %84 : vector<128x128xi1>, vector<128x128xf32>
    %c2_i32 = arith.constant 2 : i32
    %86 = tpu.dynamic_rotate %42 by %c2_i32 dim 1 : vector<128x128xf32>, i32 -> vector<128x128xf32>
    %c2_i32_42 = arith.constant 2 : i32
    %87 = vector.broadcast %c2_i32_42 : i32 to vector<128x128xi32>
    %88 = arith.cmpi sge, %4, %87 : vector<128x128xi32>
    %cst_43 = arith.constant 0.000000e+00 : f32
    %89 = vector.broadcast %cst_43 : f32 to vector<128x128xf32>
    %90 = arith.select %88, %86, %89 : vector<128x128xi1>, vector<128x128xf32>
    %91 = vector.extract_strided_slice %59 {offsets = [0, 3], sizes = [128, 1], strides = [1, 1]} : vector<128x7xf32> to vector<128x1xf32>
    %92 = vector.broadcast %91 : vector<128x1xf32> to vector<128x128xf32>
    %93 = arith.mulf %92, %85 : vector<128x128xf32>
    %94 = arith.addf %80, %93 : vector<128x128xf32>
    %95 = vector.extract_strided_slice %59 {offsets = [0, 4], sizes = [128, 1], strides = [1, 1]} : vector<128x7xf32> to vector<128x1xf32>
    %96 = vector.broadcast %95 : vector<128x1xf32> to vector<128x128xf32>
    %97 = arith.mulf %96, %90 : vector<128x128xf32>
    %98 = arith.addf %94, %97 : vector<128x128xf32>
    %c125_i32 = arith.constant 125 : i32
    %99 = tpu.dynamic_rotate %42 by %c125_i32 dim 1 : vector<128x128xf32>, i32 -> vector<128x128xf32>
    %c125_i32_44 = arith.constant 125 : i32
    %100 = vector.broadcast %c125_i32_44 : i32 to vector<128x128xi32>
    %101 = arith.cmpi slt, %4, %100 : vector<128x128xi32>
    %cst_45 = arith.constant 0.000000e+00 : f32
    %102 = vector.broadcast %cst_45 : f32 to vector<128x128xf32>
    %103 = arith.select %101, %99, %102 : vector<128x128xi1>, vector<128x128xf32>
    %c3_i32 = arith.constant 3 : i32
    %104 = tpu.dynamic_rotate %42 by %c3_i32 dim 1 : vector<128x128xf32>, i32 -> vector<128x128xf32>
    %c3_i32_46 = arith.constant 3 : i32
    %105 = vector.broadcast %c3_i32_46 : i32 to vector<128x128xi32>
    %106 = arith.cmpi sge, %4, %105 : vector<128x128xi32>
    %cst_47 = arith.constant 0.000000e+00 : f32
    %107 = vector.broadcast %cst_47 : f32 to vector<128x128xf32>
    %108 = arith.select %106, %104, %107 : vector<128x128xi1>, vector<128x128xf32>
    %109 = vector.extract_strided_slice %59 {offsets = [0, 5], sizes = [128, 1], strides = [1, 1]} : vector<128x7xf32> to vector<128x1xf32>
    %110 = vector.broadcast %109 : vector<128x1xf32> to vector<128x128xf32>
    %111 = arith.mulf %110, %103 : vector<128x128xf32>
    %112 = arith.addf %98, %111 : vector<128x128xf32>
    %113 = vector.extract_strided_slice %59 {offsets = [0, 6], sizes = [128, 1], strides = [1, 1]} : vector<128x7xf32> to vector<128x1xf32>
    %114 = vector.broadcast %113 : vector<128x1xf32> to vector<128x128xf32>
    %115 = arith.mulf %114, %108 : vector<128x128xf32>
    %116 = arith.addf %112, %115 : vector<128x128xf32>
    %cst_48 = arith.constant 0.000000e+00 : f32
    %117 = vector.broadcast %cst_48 : f32 to vector<128x128xf32>
    %118 = arith.select %5, %116, %117 : vector<128x128xi1>, vector<128x128xf32>
    %c0_49 = arith.constant 0 : index
    %c0_50 = arith.constant 0 : index
    %c0_51 = arith.constant 0 : index
    %c0_52 = arith.constant 0 : index
    %119 = vector.load %arg13[%c0_49, %c0_50, %c0_51, %c0_52] : memref<1x4x128x128xf32, #tpu.memory_space<vmem>>, vector<1x1x128x128xf32>
    %120 = vector.shape_cast %119 : vector<1x1x128x128xf32> to vector<128x128xf32>
    %121 = vector.shape_cast %118 : vector<128x128xf32> to vector<1x1x128x128xf32>
    tpu.vector_store %arg13[%c0_49, %c0_50, %c0_51, %c0_52], %121 {strides = array<i32>} : memref<1x4x128x128xf32, #tpu.memory_space<vmem>>, vector<1x1x128x128xf32>,
    %122 = arith.truncf %118 : vector<128x128xf32> to vector<128x128xbf16>
    %123 = arith.truncf %27 : vector<128x8xf32> to vector<128x8xbf16>
    %cst_53 = arith.constant dense<0.000000e+00> : vector<128x8xf32>
    %124 = tpu.matmul %122, %123, %cst_53 {dimension_numbers = #tpu.dot_dimension_numbers<[1], [0], [0], [1], [0, 0, 1, 1], [], []>} : vector<128x128xbf16>, vector<128x8xbf16>, vector<128x8xf32> -> vector<128x8xf32>
    %125 = arith.truncf %124 : vector<128x8xf32> to vector<128x8xbf16>
    %c0_54 = arith.constant 0 : index
    %c0_55 = arith.constant 0 : index
    %c0_56 = arith.constant 0 : index
    %126 = vector.load %arg10[%c0_54, %c0_55, %c0_56] : memref<4x8x32xbf16, #tpu.memory_space<vmem>>, vector<1x8x32xbf16>
    %127 = vector.shape_cast %126 : vector<1x8x32xbf16> to vector<8x32xbf16>
    %cst_57 = arith.constant dense<0.000000e+00> : vector<128x32xf32>
    %128 = tpu.matmul %125, %127, %cst_57 {dimension_numbers = #tpu.dot_dimension_numbers<[1], [0], [0], [1], [0, 0, 1, 1], [], []>} : vector<128x8xbf16>, vector<8x32xbf16>, vector<128x32xf32> -> vector<128x32xf32>
    %129 = arith.addf %6, %128 : vector<128x32xf32>
    %c1 = arith.constant 1 : index
    %c0_58 = arith.constant 0 : index
    %c0_59 = arith.constant 0 : index
    %130 = vector.load %arg2[%c1, %c0_58, %c0_59] : memref<4x32x8xbf16, #tpu.memory_space<vmem>>, vector<1x32x8xbf16>
    %131 = vector.shape_cast %130 : vector<1x32x8xbf16> to vector<32x8xbf16>
    %cst_60 = arith.constant dense<0.000000e+00> : vector<128x8xf32>
    %132 = tpu.matmul %2, %131, %cst_60 {dimension_numbers = #tpu.dot_dimension_numbers<[1], [0], [0], [1], [0, 0, 1, 1], [], []>} : vector<128x32xbf16>, vector<32x8xbf16>, vector<128x8xf32> -> vector<128x8xf32>
    %c1_61 = arith.constant 1 : index
    %c0_62 = arith.constant 0 : index
    %c0_63 = arith.constant 0 : index
    %133 = vector.load %arg3[%c1_61, %c0_62, %c0_63] : memref<4x1x8xf32, #tpu.memory_space<vmem>>, vector<1x1x8xf32>
    %134 = vector.shape_cast %133 : vector<1x1x8xf32> to vector<1x8xf32>
    %135 = vector.broadcast %134 : vector<1x8xf32> to vector<128x8xf32>
    %136 = arith.addf %132, %135 : vector<128x8xf32>
    %c1_64 = arith.constant 1 : index
    %c0_65 = arith.constant 0 : index
    %c0_66 = arith.constant 0 : index
    %137 = vector.load %arg4[%c1_64, %c0_65, %c0_66] : memref<4x32x8xbf16, #tpu.memory_space<vmem>>, vector<1x32x8xbf16>
    %138 = vector.shape_cast %137 : vector<1x32x8xbf16> to vector<32x8xbf16>
    %cst_67 = arith.constant dense<0.000000e+00> : vector<128x8xf32>
    %139 = tpu.matmul %2, %138, %cst_67 {dimension_numbers = #tpu.dot_dimension_numbers<[1], [0], [0], [1], [0, 0, 1, 1], [], []>} : vector<128x32xbf16>, vector<32x8xbf16>, vector<128x8xf32> -> vector<128x8xf32>
    %c1_68 = arith.constant 1 : index
    %c0_69 = arith.constant 0 : index
    %c0_70 = arith.constant 0 : index
    %140 = vector.load %arg5[%c1_68, %c0_69, %c0_70] : memref<4x1x8xf32, #tpu.memory_space<vmem>>, vector<1x1x8xf32>
    %141 = vector.shape_cast %140 : vector<1x1x8xf32> to vector<1x8xf32>
    %142 = vector.broadcast %141 : vector<1x8xf32> to vector<128x8xf32>
    %143 = arith.addf %139, %142 : vector<128x8xf32>
    %c1_71 = arith.constant 1 : index
    %c0_72 = arith.constant 0 : index
    %c0_73 = arith.constant 0 : index
    %144 = vector.load %arg6[%c1_71, %c0_72, %c0_73] : memref<4x32x8xbf16, #tpu.memory_space<vmem>>, vector<1x32x8xbf16>
    %145 = vector.shape_cast %144 : vector<1x32x8xbf16> to vector<32x8xbf16>
    %cst_74 = arith.constant dense<0.000000e+00> : vector<128x8xf32>
    %146 = tpu.matmul %2, %145, %cst_74 {dimension_numbers = #tpu.dot_dimension_numbers<[1], [0], [0], [1], [0, 0, 1, 1], [], []>} : vector<128x32xbf16>, vector<32x8xbf16>, vector<128x8xf32> -> vector<128x8xf32>
    %c1_75 = arith.constant 1 : index
    %c0_76 = arith.constant 0 : index
    %c0_77 = arith.constant 0 : index
    %147 = vector.load %arg7[%c1_75, %c0_76, %c0_77] : memref<4x1x8xf32, #tpu.memory_space<vmem>>, vector<1x1x8xf32>
    %148 = vector.shape_cast %147 : vector<1x1x8xf32> to vector<1x8xf32>
    %149 = vector.broadcast %148 : vector<1x8xf32> to vector<128x8xf32>
    %150 = arith.addf %146, %149 : vector<128x8xf32>
    %151 = arith.truncf %136 : vector<128x8xf32> to vector<128x8xbf16>
    %152 = arith.truncf %143 : vector<128x8xf32> to vector<128x8xbf16>
    %cst_78 = arith.constant dense<0.000000e+00> : vector<128x128xf32>
    %153 = tpu.matmul %151, %152, %cst_78 {dimension_numbers = #tpu.dot_dimension_numbers<[1], [1], [0], [0], [0, 0, 1, 0], [], []>} : vector<128x8xbf16>, vector<128x8xbf16>, vector<128x128xf32> -> vector<128x128xf32>
    %cst_79 = arith.constant 0xFF800000 : f32
    %154 = vector.broadcast %cst_79 : f32 to vector<128x128xf32>
    %155 = arith.select %5, %153, %154 : vector<128x128xi1>, vector<128x128xf32>
    %cst_80 = arith.constant dense<0xFF800000> : vector<128xf32>
    %156 = vector.multi_reduction <maximumf>, %155, %cst_80 [1] : vector<128x128xf32> to vector<128xf32>
    %157 = vector.shape_cast %156 : vector<128xf32> to vector<128x1xf32>
    %158 = vector.broadcast %157 : vector<128x1xf32> to vector<128x128xf32>
    %159 = arith.subf %155, %158 : vector<128x128xf32>
    %160 = math.exp %159 : vector<128x128xf32>
    %cst_81 = arith.constant dense<0.000000e+00> : vector<128xf32>
    %161 = vector.multi_reduction <add>, %160, %cst_81 [1] : vector<128x128xf32> to vector<128xf32>
    %162 = vector.shape_cast %161 : vector<128xf32> to vector<128x1xf32>
    %163 = tpu.reciprocal %162 {approx = true} : vector<128x1xf32> -> vector<128x1xf32>
    %164 = vector.broadcast %163 : vector<128x1xf32> to vector<128x128xf32>
    %165 = arith.mulf %160, %164 : vector<128x128xf32>
    %c1_82 = arith.constant 1 : index
    %c0_83 = arith.constant 0 : index
    %c0_84 = arith.constant 0 : index
    %166 = vector.load %arg8[%c1_82, %c0_83, %c0_84] : memref<4x32x7xbf16, #tpu.memory_space<vmem>>, vector<1x32x7xbf16>
    %167 = vector.shape_cast %166 : vector<1x32x7xbf16> to vector<32x7xbf16>
    %cst_85 = arith.constant dense<0.000000e+00> : vector<128x7xf32>
    %168 = tpu.matmul %2, %167, %cst_85 {dimension_numbers = #tpu.dot_dimension_numbers<[1], [0], [0], [1], [0, 0, 1, 1], [], []>} : vector<128x32xbf16>, vector<32x7xbf16>, vector<128x7xf32> -> vector<128x7xf32>
    %c1_86 = arith.constant 1 : index
    %c0_87 = arith.constant 0 : index
    %c0_88 = arith.constant 0 : index
    %169 = vector.load %arg9[%c1_86, %c0_87, %c0_88] : memref<4x1x7xf32, #tpu.memory_space<vmem>>, vector<1x1x7xf32>
    %170 = vector.shape_cast %169 : vector<1x1x7xf32> to vector<1x7xf32>
    %171 = vector.broadcast %170 : vector<1x7xf32> to vector<128x7xf32>
    %172 = arith.addf %168, %171 : vector<128x7xf32>
    %cst_89 = arith.constant dense<0xFF800000> : vector<128xf32>
    %173 = vector.multi_reduction <maximumf>, %172, %cst_89 [1] : vector<128x7xf32> to vector<128xf32>
    %174 = vector.shape_cast %173 : vector<128xf32> to vector<128x1xf32>
    %175 = vector.broadcast %174 : vector<128x1xf32> to vector<128x7xf32>
    %176 = arith.subf %172, %175 : vector<128x7xf32>
    %177 = math.exp %176 : vector<128x7xf32>
    %cst_90 = arith.constant dense<0.000000e+00> : vector<128xf32>
    %178 = vector.multi_reduction <add>, %177, %cst_90 [1] : vector<128x7xf32> to vector<128xf32>
    %179 = vector.shape_cast %178 : vector<128xf32> to vector<128x1xf32>
    %180 = tpu.reciprocal %179 {approx = true} : vector<128x1xf32> -> vector<128x1xf32>
    %181 = vector.broadcast %180 : vector<128x1xf32> to vector<128x7xf32>
    %182 = arith.mulf %177, %181 : vector<128x7xf32>
    %183 = vector.extract_strided_slice %182 {offsets = [0, 0], sizes = [128, 1], strides = [1, 1]} : vector<128x7xf32> to vector<128x1xf32>
    %184 = vector.broadcast %183 : vector<128x1xf32> to vector<128x128xf32>
    %185 = arith.mulf %184, %165 : vector<128x128xf32>
    %c127_i32_91 = arith.constant 127 : i32
    %186 = tpu.dynamic_rotate %165 by %c127_i32_91 dim 1 : vector<128x128xf32>, i32 -> vector<128x128xf32>
    %c127_i32_92 = arith.constant 127 : i32
    %187 = vector.broadcast %c127_i32_92 : i32 to vector<128x128xi32>
    %188 = arith.cmpi slt, %4, %187 : vector<128x128xi32>
    %cst_93 = arith.constant 0.000000e+00 : f32
    %189 = vector.broadcast %cst_93 : f32 to vector<128x128xf32>
    %190 = arith.select %188, %186, %189 : vector<128x128xi1>, vector<128x128xf32>
    %c1_i32_94 = arith.constant 1 : i32
    %191 = tpu.dynamic_rotate %165 by %c1_i32_94 dim 1 : vector<128x128xf32>, i32 -> vector<128x128xf32>
    %c1_i32_95 = arith.constant 1 : i32
    %192 = vector.broadcast %c1_i32_95 : i32 to vector<128x128xi32>
    %193 = arith.cmpi sge, %4, %192 : vector<128x128xi32>
    %cst_96 = arith.constant 0.000000e+00 : f32
    %194 = vector.broadcast %cst_96 : f32 to vector<128x128xf32>
    %195 = arith.select %193, %191, %194 : vector<128x128xi1>, vector<128x128xf32>
    %196 = vector.extract_strided_slice %182 {offsets = [0, 1], sizes = [128, 1], strides = [1, 1]} : vector<128x7xf32> to vector<128x1xf32>
    %197 = vector.broadcast %196 : vector<128x1xf32> to vector<128x128xf32>
    %198 = arith.mulf %197, %190 : vector<128x128xf32>
    %199 = arith.addf %185, %198 : vector<128x128xf32>
    %200 = vector.extract_strided_slice %182 {offsets = [0, 2], sizes = [128, 1], strides = [1, 1]} : vector<128x7xf32> to vector<128x1xf32>
    %201 = vector.broadcast %200 : vector<128x1xf32> to vector<128x128xf32>
    %202 = arith.mulf %201, %195 : vector<128x128xf32>
    %203 = arith.addf %199, %202 : vector<128x128xf32>
    %c126_i32_97 = arith.constant 126 : i32
    %204 = tpu.dynamic_rotate %165 by %c126_i32_97 dim 1 : vector<128x128xf32>, i32 -> vector<128x128xf32>
    %c126_i32_98 = arith.constant 126 : i32
    %205 = vector.broadcast %c126_i32_98 : i32 to vector<128x128xi32>
    %206 = arith.cmpi slt, %4, %205 : vector<128x128xi32>
    %cst_99 = arith.constant 0.000000e+00 : f32
    %207 = vector.broadcast %cst_99 : f32 to vector<128x128xf32>
    %208 = arith.select %206, %204, %207 : vector<128x128xi1>, vector<128x128xf32>
    %c2_i32_100 = arith.constant 2 : i32
    %209 = tpu.dynamic_rotate %165 by %c2_i32_100 dim 1 : vector<128x128xf32>, i32 -> vector<128x128xf32>
    %c2_i32_101 = arith.constant 2 : i32
    %210 = vector.broadcast %c2_i32_101 : i32 to vector<128x128xi32>
    %211 = arith.cmpi sge, %4, %210 : vector<128x128xi32>
    %cst_102 = arith.constant 0.000000e+00 : f32
    %212 = vector.broadcast %cst_102 : f32 to vector<128x128xf32>
    %213 = arith.select %211, %209, %212 : vector<128x128xi1>, vector<128x128xf32>
    %214 = vector.extract_strided_slice %182 {offsets = [0, 3], sizes = [128, 1], strides = [1, 1]} : vector<128x7xf32> to vector<128x1xf32>
    %215 = vector.broadcast %214 : vector<128x1xf32> to vector<128x128xf32>
    %216 = arith.mulf %215, %208 : vector<128x128xf32>
    %217 = arith.addf %203, %216 : vector<128x128xf32>
    %218 = vector.extract_strided_slice %182 {offsets = [0, 4], sizes = [128, 1], strides = [1, 1]} : vector<128x7xf32> to vector<128x1xf32>
    %219 = vector.broadcast %218 : vector<128x1xf32> to vector<128x128xf32>
    %220 = arith.mulf %219, %213 : vector<128x128xf32>
    %221 = arith.addf %217, %220 : vector<128x128xf32>
    %c125_i32_103 = arith.constant 125 : i32
    %222 = tpu.dynamic_rotate %165 by %c125_i32_103 dim 1 : vector<128x128xf32>, i32 -> vector<128x128xf32>
    %c125_i32_104 = arith.constant 125 : i32
    %223 = vector.broadcast %c125_i32_104 : i32 to vector<128x128xi32>
    %224 = arith.cmpi slt, %4, %223 : vector<128x128xi32>
    %cst_105 = arith.constant 0.000000e+00 : f32
    %225 = vector.broadcast %cst_105 : f32 to vector<128x128xf32>
    %226 = arith.select %224, %222, %225 : vector<128x128xi1>, vector<128x128xf32>
    %c3_i32_106 = arith.constant 3 : i32
    %227 = tpu.dynamic_rotate %165 by %c3_i32_106 dim 1 : vector<128x128xf32>, i32 -> vector<128x128xf32>
    %c3_i32_107 = arith.constant 3 : i32
    %228 = vector.broadcast %c3_i32_107 : i32 to vector<128x128xi32>
    %229 = arith.cmpi sge, %4, %228 : vector<128x128xi32>
    %cst_108 = arith.constant 0.000000e+00 : f32
    %230 = vector.broadcast %cst_108 : f32 to vector<128x128xf32>
    %231 = arith.select %229, %227, %230 : vector<128x128xi1>, vector<128x128xf32>
    %232 = vector.extract_strided_slice %182 {offsets = [0, 5], sizes = [128, 1], strides = [1, 1]} : vector<128x7xf32> to vector<128x1xf32>
    %233 = vector.broadcast %232 : vector<128x1xf32> to vector<128x128xf32>
    %234 = arith.mulf %233, %226 : vector<128x128xf32>
    %235 = arith.addf %221, %234 : vector<128x128xf32>
    %236 = vector.extract_strided_slice %182 {offsets = [0, 6], sizes = [128, 1], strides = [1, 1]} : vector<128x7xf32> to vector<128x1xf32>
    %237 = vector.broadcast %236 : vector<128x1xf32> to vector<128x128xf32>
    %238 = arith.mulf %237, %231 : vector<128x128xf32>
    %239 = arith.addf %235, %238 : vector<128x128xf32>
    %cst_109 = arith.constant 0.000000e+00 : f32
    %240 = vector.broadcast %cst_109 : f32 to vector<128x128xf32>
    %241 = arith.select %5, %239, %240 : vector<128x128xi1>, vector<128x128xf32>
    %c0_110 = arith.constant 0 : index
    %c1_111 = arith.constant 1 : index
    %c0_112 = arith.constant 0 : index
    %c0_113 = arith.constant 0 : index
    %242 = vector.load %arg13[%c0_110, %c1_111, %c0_112, %c0_113] : memref<1x4x128x128xf32, #tpu.memory_space<vmem>>, vector<1x1x128x128xf32>
    %243 = vector.shape_cast %242 : vector<1x1x128x128xf32> to vector<128x128xf32>
    %244 = vector.shape_cast %241 : vector<128x128xf32> to vector<1x1x128x128xf32>
    tpu.vector_store %arg13[%c0_110, %c1_111, %c0_112, %c0_113], %244 {strides = array<i32>} : memref<1x4x128x128xf32, #tpu.memory_space<vmem>>, vector<1x1x128x128xf32>,
    %245 = arith.truncf %241 : vector<128x128xf32> to vector<128x128xbf16>
    %246 = arith.truncf %150 : vector<128x8xf32> to vector<128x8xbf16>
    %cst_114 = arith.constant dense<0.000000e+00> : vector<128x8xf32>
    %247 = tpu.matmul %245, %246, %cst_114 {dimension_numbers = #tpu.dot_dimension_numbers<[1], [0], [0], [1], [0, 0, 1, 1], [], []>} : vector<128x128xbf16>, vector<128x8xbf16>, vector<128x8xf32> -> vector<128x8xf32>
    %248 = arith.truncf %247 : vector<128x8xf32> to vector<128x8xbf16>
    %c1_115 = arith.constant 1 : index
    %c0_116 = arith.constant 0 : index
    %c0_117 = arith.constant 0 : index
    %249 = vector.load %arg10[%c1_115, %c0_116, %c0_117] : memref<4x8x32xbf16, #tpu.memory_space<vmem>>, vector<1x8x32xbf16>
    %250 = vector.shape_cast %249 : vector<1x8x32xbf16> to vector<8x32xbf16>
    %cst_118 = arith.constant dense<0.000000e+00> : vector<128x32xf32>
    %251 = tpu.matmul %248, %250, %cst_118 {dimension_numbers = #tpu.dot_dimension_numbers<[1], [0], [0], [1], [0, 0, 1, 1], [], []>} : vector<128x8xbf16>, vector<8x32xbf16>, vector<128x32xf32> -> vector<128x32xf32>
    %252 = arith.addf %129, %251 : vector<128x32xf32>
    %c2 = arith.constant 2 : index
    %c0_119 = arith.constant 0 : index
    %c0_120 = arith.constant 0 : index
    %253 = vector.load %arg2[%c2, %c0_119, %c0_120] : memref<4x32x8xbf16, #tpu.memory_space<vmem>>, vector<1x32x8xbf16>
    %254 = vector.shape_cast %253 : vector<1x32x8xbf16> to vector<32x8xbf16>
    %cst_121 = arith.constant dense<0.000000e+00> : vector<128x8xf32>
    %255 = tpu.matmul %2, %254, %cst_121 {dimension_numbers = #tpu.dot_dimension_numbers<[1], [0], [0], [1], [0, 0, 1, 1], [], []>} : vector<128x32xbf16>, vector<32x8xbf16>, vector<128x8xf32> -> vector<128x8xf32>
    %c2_122 = arith.constant 2 : index
    %c0_123 = arith.constant 0 : index
    %c0_124 = arith.constant 0 : index
    %256 = vector.load %arg3[%c2_122, %c0_123, %c0_124] : memref<4x1x8xf32, #tpu.memory_space<vmem>>, vector<1x1x8xf32>
    %257 = vector.shape_cast %256 : vector<1x1x8xf32> to vector<1x8xf32>
    %258 = vector.broadcast %257 : vector<1x8xf32> to vector<128x8xf32>
    %259 = arith.addf %255, %258 : vector<128x8xf32>
    %c2_125 = arith.constant 2 : index
    %c0_126 = arith.constant 0 : index
    %c0_127 = arith.constant 0 : index
    %260 = vector.load %arg4[%c2_125, %c0_126, %c0_127] : memref<4x32x8xbf16, #tpu.memory_space<vmem>>, vector<1x32x8xbf16>
    %261 = vector.shape_cast %260 : vector<1x32x8xbf16> to vector<32x8xbf16>
    %cst_128 = arith.constant dense<0.000000e+00> : vector<128x8xf32>
    %262 = tpu.matmul %2, %261, %cst_128 {dimension_numbers = #tpu.dot_dimension_numbers<[1], [0], [0], [1], [0, 0, 1, 1], [], []>} : vector<128x32xbf16>, vector<32x8xbf16>, vector<128x8xf32> -> vector<128x8xf32>
    %c2_129 = arith.constant 2 : index
    %c0_130 = arith.constant 0 : index
    %c0_131 = arith.constant 0 : index
    %263 = vector.load %arg5[%c2_129, %c0_130, %c0_131] : memref<4x1x8xf32, #tpu.memory_space<vmem>>, vector<1x1x8xf32>
    %264 = vector.shape_cast %263 : vector<1x1x8xf32> to vector<1x8xf32>
    %265 = vector.broadcast %264 : vector<1x8xf32> to vector<128x8xf32>
    %266 = arith.addf %262, %265 : vector<128x8xf32>
    %c2_132 = arith.constant 2 : index
    %c0_133 = arith.constant 0 : index
    %c0_134 = arith.constant 0 : index
    %267 = vector.load %arg6[%c2_132, %c0_133, %c0_134] : memref<4x32x8xbf16, #tpu.memory_space<vmem>>, vector<1x32x8xbf16>
    %268 = vector.shape_cast %267 : vector<1x32x8xbf16> to vector<32x8xbf16>
    %cst_135 = arith.constant dense<0.000000e+00> : vector<128x8xf32>
    %269 = tpu.matmul %2, %268, %cst_135 {dimension_numbers = #tpu.dot_dimension_numbers<[1], [0], [0], [1], [0, 0, 1, 1], [], []>} : vector<128x32xbf16>, vector<32x8xbf16>, vector<128x8xf32> -> vector<128x8xf32>
    %c2_136 = arith.constant 2 : index
    %c0_137 = arith.constant 0 : index
    %c0_138 = arith.constant 0 : index
    %270 = vector.load %arg7[%c2_136, %c0_137, %c0_138] : memref<4x1x8xf32, #tpu.memory_space<vmem>>, vector<1x1x8xf32>
    %271 = vector.shape_cast %270 : vector<1x1x8xf32> to vector<1x8xf32>
    %272 = vector.broadcast %271 : vector<1x8xf32> to vector<128x8xf32>
    %273 = arith.addf %269, %272 : vector<128x8xf32>
    %274 = arith.truncf %259 : vector<128x8xf32> to vector<128x8xbf16>
    %275 = arith.truncf %266 : vector<128x8xf32> to vector<128x8xbf16>
    %cst_139 = arith.constant dense<0.000000e+00> : vector<128x128xf32>
    %276 = tpu.matmul %274, %275, %cst_139 {dimension_numbers = #tpu.dot_dimension_numbers<[1], [1], [0], [0], [0, 0, 1, 0], [], []>} : vector<128x8xbf16>, vector<128x8xbf16>, vector<128x128xf32> -> vector<128x128xf32>
    %cst_140 = arith.constant 0xFF800000 : f32
    %277 = vector.broadcast %cst_140 : f32 to vector<128x128xf32>
    %278 = arith.select %5, %276, %277 : vector<128x128xi1>, vector<128x128xf32>
    %cst_141 = arith.constant dense<0xFF800000> : vector<128xf32>
    %279 = vector.multi_reduction <maximumf>, %278, %cst_141 [1] : vector<128x128xf32> to vector<128xf32>
    %280 = vector.shape_cast %279 : vector<128xf32> to vector<128x1xf32>
    %281 = vector.broadcast %280 : vector<128x1xf32> to vector<128x128xf32>
    %282 = arith.subf %278, %281 : vector<128x128xf32>
    %283 = math.exp %282 : vector<128x128xf32>
    %cst_142 = arith.constant dense<0.000000e+00> : vector<128xf32>
    %284 = vector.multi_reduction <add>, %283, %cst_142 [1] : vector<128x128xf32> to vector<128xf32>
    %285 = vector.shape_cast %284 : vector<128xf32> to vector<128x1xf32>
    %286 = tpu.reciprocal %285 {approx = true} : vector<128x1xf32> -> vector<128x1xf32>
    %287 = vector.broadcast %286 : vector<128x1xf32> to vector<128x128xf32>
    %288 = arith.mulf %283, %287 : vector<128x128xf32>
    %c2_143 = arith.constant 2 : index
    %c0_144 = arith.constant 0 : index
    %c0_145 = arith.constant 0 : index
    %289 = vector.load %arg8[%c2_143, %c0_144, %c0_145] : memref<4x32x7xbf16, #tpu.memory_space<vmem>>, vector<1x32x7xbf16>
    %290 = vector.shape_cast %289 : vector<1x32x7xbf16> to vector<32x7xbf16>
    %cst_146 = arith.constant dense<0.000000e+00> : vector<128x7xf32>
    %291 = tpu.matmul %2, %290, %cst_146 {dimension_numbers = #tpu.dot_dimension_numbers<[1], [0], [0], [1], [0, 0, 1, 1], [], []>} : vector<128x32xbf16>, vector<32x7xbf16>, vector<128x7xf32> -> vector<128x7xf32>
    %c2_147 = arith.constant 2 : index
    %c0_148 = arith.constant 0 : index
    %c0_149 = arith.constant 0 : index
    %292 = vector.load %arg9[%c2_147, %c0_148, %c0_149] : memref<4x1x7xf32, #tpu.memory_space<vmem>>, vector<1x1x7xf32>
    %293 = vector.shape_cast %292 : vector<1x1x7xf32> to vector<1x7xf32>
    %294 = vector.broadcast %293 : vector<1x7xf32> to vector<128x7xf32>
    %295 = arith.addf %291, %294 : vector<128x7xf32>
    %cst_150 = arith.constant dense<0xFF800000> : vector<128xf32>
    %296 = vector.multi_reduction <maximumf>, %295, %cst_150 [1] : vector<128x7xf32> to vector<128xf32>
    %297 = vector.shape_cast %296 : vector<128xf32> to vector<128x1xf32>
    %298 = vector.broadcast %297 : vector<128x1xf32> to vector<128x7xf32>
    %299 = arith.subf %295, %298 : vector<128x7xf32>
    %300 = math.exp %299 : vector<128x7xf32>
    %cst_151 = arith.constant dense<0.000000e+00> : vector<128xf32>
    %301 = vector.multi_reduction <add>, %300, %cst_151 [1] : vector<128x7xf32> to vector<128xf32>
    %302 = vector.shape_cast %301 : vector<128xf32> to vector<128x1xf32>
    %303 = tpu.reciprocal %302 {approx = true} : vector<128x1xf32> -> vector<128x1xf32>
    %304 = vector.broadcast %303 : vector<128x1xf32> to vector<128x7xf32>
    %305 = arith.mulf %300, %304 : vector<128x7xf32>
    %306 = vector.extract_strided_slice %305 {offsets = [0, 0], sizes = [128, 1], strides = [1, 1]} : vector<128x7xf32> to vector<128x1xf32>
    %307 = vector.broadcast %306 : vector<128x1xf32> to vector<128x128xf32>
    %308 = arith.mulf %307, %288 : vector<128x128xf32>
    %c127_i32_152 = arith.constant 127 : i32
    %309 = tpu.dynamic_rotate %288 by %c127_i32_152 dim 1 : vector<128x128xf32>, i32 -> vector<128x128xf32>
    %c127_i32_153 = arith.constant 127 : i32
    %310 = vector.broadcast %c127_i32_153 : i32 to vector<128x128xi32>
    %311 = arith.cmpi slt, %4, %310 : vector<128x128xi32>
    %cst_154 = arith.constant 0.000000e+00 : f32
    %312 = vector.broadcast %cst_154 : f32 to vector<128x128xf32>
    %313 = arith.select %311, %309, %312 : vector<128x128xi1>, vector<128x128xf32>
    %c1_i32_155 = arith.constant 1 : i32
    %314 = tpu.dynamic_rotate %288 by %c1_i32_155 dim 1 : vector<128x128xf32>, i32 -> vector<128x128xf32>
    %c1_i32_156 = arith.constant 1 : i32
    %315 = vector.broadcast %c1_i32_156 : i32 to vector<128x128xi32>
    %316 = arith.cmpi sge, %4, %315 : vector<128x128xi32>
    %cst_157 = arith.constant 0.000000e+00 : f32
    %317 = vector.broadcast %cst_157 : f32 to vector<128x128xf32>
    %318 = arith.select %316, %314, %317 : vector<128x128xi1>, vector<128x128xf32>
    %319 = vector.extract_strided_slice %305 {offsets = [0, 1], sizes = [128, 1], strides = [1, 1]} : vector<128x7xf32> to vector<128x1xf32>
    %320 = vector.broadcast %319 : vector<128x1xf32> to vector<128x128xf32>
    %321 = arith.mulf %320, %313 : vector<128x128xf32>
    %322 = arith.addf %308, %321 : vector<128x128xf32>
    %323 = vector.extract_strided_slice %305 {offsets = [0, 2], sizes = [128, 1], strides = [1, 1]} : vector<128x7xf32> to vector<128x1xf32>
    %324 = vector.broadcast %323 : vector<128x1xf32> to vector<128x128xf32>
    %325 = arith.mulf %324, %318 : vector<128x128xf32>
    %326 = arith.addf %322, %325 : vector<128x128xf32>
    %c126_i32_158 = arith.constant 126 : i32
    %327 = tpu.dynamic_rotate %288 by %c126_i32_158 dim 1 : vector<128x128xf32>, i32 -> vector<128x128xf32>
    %c126_i32_159 = arith.constant 126 : i32
    %328 = vector.broadcast %c126_i32_159 : i32 to vector<128x128xi32>
    %329 = arith.cmpi slt, %4, %328 : vector<128x128xi32>
    %cst_160 = arith.constant 0.000000e+00 : f32
    %330 = vector.broadcast %cst_160 : f32 to vector<128x128xf32>
    %331 = arith.select %329, %327, %330 : vector<128x128xi1>, vector<128x128xf32>
    %c2_i32_161 = arith.constant 2 : i32
    %332 = tpu.dynamic_rotate %288 by %c2_i32_161 dim 1 : vector<128x128xf32>, i32 -> vector<128x128xf32>
    %c2_i32_162 = arith.constant 2 : i32
    %333 = vector.broadcast %c2_i32_162 : i32 to vector<128x128xi32>
    %334 = arith.cmpi sge, %4, %333 : vector<128x128xi32>
    %cst_163 = arith.constant 0.000000e+00 : f32
    %335 = vector.broadcast %cst_163 : f32 to vector<128x128xf32>
    %336 = arith.select %334, %332, %335 : vector<128x128xi1>, vector<128x128xf32>
    %337 = vector.extract_strided_slice %305 {offsets = [0, 3], sizes = [128, 1], strides = [1, 1]} : vector<128x7xf32> to vector<128x1xf32>
    %338 = vector.broadcast %337 : vector<128x1xf32> to vector<128x128xf32>
    %339 = arith.mulf %338, %331 : vector<128x128xf32>
    %340 = arith.addf %326, %339 : vector<128x128xf32>
    %341 = vector.extract_strided_slice %305 {offsets = [0, 4], sizes = [128, 1], strides = [1, 1]} : vector<128x7xf32> to vector<128x1xf32>
    %342 = vector.broadcast %341 : vector<128x1xf32> to vector<128x128xf32>
    %343 = arith.mulf %342, %336 : vector<128x128xf32>
    %344 = arith.addf %340, %343 : vector<128x128xf32>
    %c125_i32_164 = arith.constant 125 : i32
    %345 = tpu.dynamic_rotate %288 by %c125_i32_164 dim 1 : vector<128x128xf32>, i32 -> vector<128x128xf32>
    %c125_i32_165 = arith.constant 125 : i32
    %346 = vector.broadcast %c125_i32_165 : i32 to vector<128x128xi32>
    %347 = arith.cmpi slt, %4, %346 : vector<128x128xi32>
    %cst_166 = arith.constant 0.000000e+00 : f32
    %348 = vector.broadcast %cst_166 : f32 to vector<128x128xf32>
    %349 = arith.select %347, %345, %348 : vector<128x128xi1>, vector<128x128xf32>
    %c3_i32_167 = arith.constant 3 : i32
    %350 = tpu.dynamic_rotate %288 by %c3_i32_167 dim 1 : vector<128x128xf32>, i32 -> vector<128x128xf32>
    %c3_i32_168 = arith.constant 3 : i32
    %351 = vector.broadcast %c3_i32_168 : i32 to vector<128x128xi32>
    %352 = arith.cmpi sge, %4, %351 : vector<128x128xi32>
    %cst_169 = arith.constant 0.000000e+00 : f32
    %353 = vector.broadcast %cst_169 : f32 to vector<128x128xf32>
    %354 = arith.select %352, %350, %353 : vector<128x128xi1>, vector<128x128xf32>
    %355 = vector.extract_strided_slice %305 {offsets = [0, 5], sizes = [128, 1], strides = [1, 1]} : vector<128x7xf32> to vector<128x1xf32>
    %356 = vector.broadcast %355 : vector<128x1xf32> to vector<128x128xf32>
    %357 = arith.mulf %356, %349 : vector<128x128xf32>
    %358 = arith.addf %344, %357 : vector<128x128xf32>
    %359 = vector.extract_strided_slice %305 {offsets = [0, 6], sizes = [128, 1], strides = [1, 1]} : vector<128x7xf32> to vector<128x1xf32>
    %360 = vector.broadcast %359 : vector<128x1xf32> to vector<128x128xf32>
    %361 = arith.mulf %360, %354 : vector<128x128xf32>
    %362 = arith.addf %358, %361 : vector<128x128xf32>
    %cst_170 = arith.constant 0.000000e+00 : f32
    %363 = vector.broadcast %cst_170 : f32 to vector<128x128xf32>
    %364 = arith.select %5, %362, %363 : vector<128x128xi1>, vector<128x128xf32>
    %c0_171 = arith.constant 0 : index
    %c2_172 = arith.constant 2 : index
    %c0_173 = arith.constant 0 : index
    %c0_174 = arith.constant 0 : index
    %365 = vector.load %arg13[%c0_171, %c2_172, %c0_173, %c0_174] : memref<1x4x128x128xf32, #tpu.memory_space<vmem>>, vector<1x1x128x128xf32>
    %366 = vector.shape_cast %365 : vector<1x1x128x128xf32> to vector<128x128xf32>
    %367 = vector.shape_cast %364 : vector<128x128xf32> to vector<1x1x128x128xf32>
    tpu.vector_store %arg13[%c0_171, %c2_172, %c0_173, %c0_174], %367 {strides = array<i32>} : memref<1x4x128x128xf32, #tpu.memory_space<vmem>>, vector<1x1x128x128xf32>,
    %368 = arith.truncf %364 : vector<128x128xf32> to vector<128x128xbf16>
    %369 = arith.truncf %273 : vector<128x8xf32> to vector<128x8xbf16>
    %cst_175 = arith.constant dense<0.000000e+00> : vector<128x8xf32>
    %370 = tpu.matmul %368, %369, %cst_175 {dimension_numbers = #tpu.dot_dimension_numbers<[1], [0], [0], [1], [0, 0, 1, 1], [], []>} : vector<128x128xbf16>, vector<128x8xbf16>, vector<128x8xf32> -> vector<128x8xf32>
    %371 = arith.truncf %370 : vector<128x8xf32> to vector<128x8xbf16>
    %c2_176 = arith.constant 2 : index
    %c0_177 = arith.constant 0 : index
    %c0_178 = arith.constant 0 : index
    %372 = vector.load %arg10[%c2_176, %c0_177, %c0_178] : memref<4x8x32xbf16, #tpu.memory_space<vmem>>, vector<1x8x32xbf16>
    %373 = vector.shape_cast %372 : vector<1x8x32xbf16> to vector<8x32xbf16>
    %cst_179 = arith.constant dense<0.000000e+00> : vector<128x32xf32>
    %374 = tpu.matmul %371, %373, %cst_179 {dimension_numbers = #tpu.dot_dimension_numbers<[1], [0], [0], [1], [0, 0, 1, 1], [], []>} : vector<128x8xbf16>, vector<8x32xbf16>, vector<128x32xf32> -> vector<128x32xf32>
    %375 = arith.addf %252, %374 : vector<128x32xf32>
    %c3 = arith.constant 3 : index
    %c0_180 = arith.constant 0 : index
    %c0_181 = arith.constant 0 : index
    %376 = vector.load %arg2[%c3, %c0_180, %c0_181] : memref<4x32x8xbf16, #tpu.memory_space<vmem>>, vector<1x32x8xbf16>
    %377 = vector.shape_cast %376 : vector<1x32x8xbf16> to vector<32x8xbf16>
    %cst_182 = arith.constant dense<0.000000e+00> : vector<128x8xf32>
    %378 = tpu.matmul %2, %377, %cst_182 {dimension_numbers = #tpu.dot_dimension_numbers<[1], [0], [0], [1], [0, 0, 1, 1], [], []>} : vector<128x32xbf16>, vector<32x8xbf16>, vector<128x8xf32> -> vector<128x8xf32>
    %c3_183 = arith.constant 3 : index
    %c0_184 = arith.constant 0 : index
    %c0_185 = arith.constant 0 : index
    %379 = vector.load %arg3[%c3_183, %c0_184, %c0_185] : memref<4x1x8xf32, #tpu.memory_space<vmem>>, vector<1x1x8xf32>
    %380 = vector.shape_cast %379 : vector<1x1x8xf32> to vector<1x8xf32>
    %381 = vector.broadcast %380 : vector<1x8xf32> to vector<128x8xf32>
    %382 = arith.addf %378, %381 : vector<128x8xf32>
    %c3_186 = arith.constant 3 : index
    %c0_187 = arith.constant 0 : index
    %c0_188 = arith.constant 0 : index
    %383 = vector.load %arg4[%c3_186, %c0_187, %c0_188] : memref<4x32x8xbf16, #tpu.memory_space<vmem>>, vector<1x32x8xbf16>
    %384 = vector.shape_cast %383 : vector<1x32x8xbf16> to vector<32x8xbf16>
    %cst_189 = arith.constant dense<0.000000e+00> : vector<128x8xf32>
    %385 = tpu.matmul %2, %384, %cst_189 {dimension_numbers = #tpu.dot_dimension_numbers<[1], [0], [0], [1], [0, 0, 1, 1], [], []>} : vector<128x32xbf16>, vector<32x8xbf16>, vector<128x8xf32> -> vector<128x8xf32>
    %c3_190 = arith.constant 3 : index
    %c0_191 = arith.constant 0 : index
    %c0_192 = arith.constant 0 : index
    %386 = vector.load %arg5[%c3_190, %c0_191, %c0_192] : memref<4x1x8xf32, #tpu.memory_space<vmem>>, vector<1x1x8xf32>
    %387 = vector.shape_cast %386 : vector<1x1x8xf32> to vector<1x8xf32>
    %388 = vector.broadcast %387 : vector<1x8xf32> to vector<128x8xf32>
    %389 = arith.addf %385, %388 : vector<128x8xf32>
    %c3_193 = arith.constant 3 : index
    %c0_194 = arith.constant 0 : index
    %c0_195 = arith.constant 0 : index
    %390 = vector.load %arg6[%c3_193, %c0_194, %c0_195] : memref<4x32x8xbf16, #tpu.memory_space<vmem>>, vector<1x32x8xbf16>
    %391 = vector.shape_cast %390 : vector<1x32x8xbf16> to vector<32x8xbf16>
    %cst_196 = arith.constant dense<0.000000e+00> : vector<128x8xf32>
    %392 = tpu.matmul %2, %391, %cst_196 {dimension_numbers = #tpu.dot_dimension_numbers<[1], [0], [0], [1], [0, 0, 1, 1], [], []>} : vector<128x32xbf16>, vector<32x8xbf16>, vector<128x8xf32> -> vector<128x8xf32>
    %c3_197 = arith.constant 3 : index
    %c0_198 = arith.constant 0 : index
    %c0_199 = arith.constant 0 : index
    %393 = vector.load %arg7[%c3_197, %c0_198, %c0_199] : memref<4x1x8xf32, #tpu.memory_space<vmem>>, vector<1x1x8xf32>
    %394 = vector.shape_cast %393 : vector<1x1x8xf32> to vector<1x8xf32>
    %395 = vector.broadcast %394 : vector<1x8xf32> to vector<128x8xf32>
    %396 = arith.addf %392, %395 : vector<128x8xf32>
    %397 = arith.truncf %382 : vector<128x8xf32> to vector<128x8xbf16>
    %398 = arith.truncf %389 : vector<128x8xf32> to vector<128x8xbf16>
    %cst_200 = arith.constant dense<0.000000e+00> : vector<128x128xf32>
    %399 = tpu.matmul %397, %398, %cst_200 {dimension_numbers = #tpu.dot_dimension_numbers<[1], [1], [0], [0], [0, 0, 1, 0], [], []>} : vector<128x8xbf16>, vector<128x8xbf16>, vector<128x128xf32> -> vector<128x128xf32>
    %cst_201 = arith.constant 0xFF800000 : f32
    %400 = vector.broadcast %cst_201 : f32 to vector<128x128xf32>
    %401 = arith.select %5, %399, %400 : vector<128x128xi1>, vector<128x128xf32>
    %cst_202 = arith.constant dense<0xFF800000> : vector<128xf32>
    %402 = vector.multi_reduction <maximumf>, %401, %cst_202 [1] : vector<128x128xf32> to vector<128xf32>
    %403 = vector.shape_cast %402 : vector<128xf32> to vector<128x1xf32>
    %404 = vector.broadcast %403 : vector<128x1xf32> to vector<128x128xf32>
    %405 = arith.subf %401, %404 : vector<128x128xf32>
    %406 = math.exp %405 : vector<128x128xf32>
    %cst_203 = arith.constant dense<0.000000e+00> : vector<128xf32>
    %407 = vector.multi_reduction <add>, %406, %cst_203 [1] : vector<128x128xf32> to vector<128xf32>
    %408 = vector.shape_cast %407 : vector<128xf32> to vector<128x1xf32>
    %409 = tpu.reciprocal %408 {approx = true} : vector<128x1xf32> -> vector<128x1xf32>
    %410 = vector.broadcast %409 : vector<128x1xf32> to vector<128x128xf32>
    %411 = arith.mulf %406, %410 : vector<128x128xf32>
    %c3_204 = arith.constant 3 : index
    %c0_205 = arith.constant 0 : index
    %c0_206 = arith.constant 0 : index
    %412 = vector.load %arg8[%c3_204, %c0_205, %c0_206] : memref<4x32x7xbf16, #tpu.memory_space<vmem>>, vector<1x32x7xbf16>
    %413 = vector.shape_cast %412 : vector<1x32x7xbf16> to vector<32x7xbf16>
    %cst_207 = arith.constant dense<0.000000e+00> : vector<128x7xf32>
    %414 = tpu.matmul %2, %413, %cst_207 {dimension_numbers = #tpu.dot_dimension_numbers<[1], [0], [0], [1], [0, 0, 1, 1], [], []>} : vector<128x32xbf16>, vector<32x7xbf16>, vector<128x7xf32> -> vector<128x7xf32>
    %c3_208 = arith.constant 3 : index
    %c0_209 = arith.constant 0 : index
    %c0_210 = arith.constant 0 : index
    %415 = vector.load %arg9[%c3_208, %c0_209, %c0_210] : memref<4x1x7xf32, #tpu.memory_space<vmem>>, vector<1x1x7xf32>
    %416 = vector.shape_cast %415 : vector<1x1x7xf32> to vector<1x7xf32>
    %417 = vector.broadcast %416 : vector<1x7xf32> to vector<128x7xf32>
    %418 = arith.addf %414, %417 : vector<128x7xf32>
    %cst_211 = arith.constant dense<0xFF800000> : vector<128xf32>
    %419 = vector.multi_reduction <maximumf>, %418, %cst_211 [1] : vector<128x7xf32> to vector<128xf32>
    %420 = vector.shape_cast %419 : vector<128xf32> to vector<128x1xf32>
    %421 = vector.broadcast %420 : vector<128x1xf32> to vector<128x7xf32>
    %422 = arith.subf %418, %421 : vector<128x7xf32>
    %423 = math.exp %422 : vector<128x7xf32>
    %cst_212 = arith.constant dense<0.000000e+00> : vector<128xf32>
    %424 = vector.multi_reduction <add>, %423, %cst_212 [1] : vector<128x7xf32> to vector<128xf32>
    %425 = vector.shape_cast %424 : vector<128xf32> to vector<128x1xf32>
    %426 = tpu.reciprocal %425 {approx = true} : vector<128x1xf32> -> vector<128x1xf32>
    %427 = vector.broadcast %426 : vector<128x1xf32> to vector<128x7xf32>
    %428 = arith.mulf %423, %427 : vector<128x7xf32>
    %429 = vector.extract_strided_slice %428 {offsets = [0, 0], sizes = [128, 1], strides = [1, 1]} : vector<128x7xf32> to vector<128x1xf32>
    %430 = vector.broadcast %429 : vector<128x1xf32> to vector<128x128xf32>
    %431 = arith.mulf %430, %411 : vector<128x128xf32>
    %c127_i32_213 = arith.constant 127 : i32
    %432 = tpu.dynamic_rotate %411 by %c127_i32_213 dim 1 : vector<128x128xf32>, i32 -> vector<128x128xf32>
    %c127_i32_214 = arith.constant 127 : i32
    %433 = vector.broadcast %c127_i32_214 : i32 to vector<128x128xi32>
    %434 = arith.cmpi slt, %4, %433 : vector<128x128xi32>
    %cst_215 = arith.constant 0.000000e+00 : f32
    %435 = vector.broadcast %cst_215 : f32 to vector<128x128xf32>
    %436 = arith.select %434, %432, %435 : vector<128x128xi1>, vector<128x128xf32>
    %c1_i32_216 = arith.constant 1 : i32
    %437 = tpu.dynamic_rotate %411 by %c1_i32_216 dim 1 : vector<128x128xf32>, i32 -> vector<128x128xf32>
    %c1_i32_217 = arith.constant 1 : i32
    %438 = vector.broadcast %c1_i32_217 : i32 to vector<128x128xi32>
    %439 = arith.cmpi sge, %4, %438 : vector<128x128xi32>
    %cst_218 = arith.constant 0.000000e+00 : f32
    %440 = vector.broadcast %cst_218 : f32 to vector<128x128xf32>
    %441 = arith.select %439, %437, %440 : vector<128x128xi1>, vector<128x128xf32>
    %442 = vector.extract_strided_slice %428 {offsets = [0, 1], sizes = [128, 1], strides = [1, 1]} : vector<128x7xf32> to vector<128x1xf32>
    %443 = vector.broadcast %442 : vector<128x1xf32> to vector<128x128xf32>
    %444 = arith.mulf %443, %436 : vector<128x128xf32>
    %445 = arith.addf %431, %444 : vector<128x128xf32>
    %446 = vector.extract_strided_slice %428 {offsets = [0, 2], sizes = [128, 1], strides = [1, 1]} : vector<128x7xf32> to vector<128x1xf32>
    %447 = vector.broadcast %446 : vector<128x1xf32> to vector<128x128xf32>
    %448 = arith.mulf %447, %441 : vector<128x128xf32>
    %449 = arith.addf %445, %448 : vector<128x128xf32>
    %c126_i32_219 = arith.constant 126 : i32
    %450 = tpu.dynamic_rotate %411 by %c126_i32_219 dim 1 : vector<128x128xf32>, i32 -> vector<128x128xf32>
    %c126_i32_220 = arith.constant 126 : i32
    %451 = vector.broadcast %c126_i32_220 : i32 to vector<128x128xi32>
    %452 = arith.cmpi slt, %4, %451 : vector<128x128xi32>
    %cst_221 = arith.constant 0.000000e+00 : f32
    %453 = vector.broadcast %cst_221 : f32 to vector<128x128xf32>
    %454 = arith.select %452, %450, %453 : vector<128x128xi1>, vector<128x128xf32>
    %c2_i32_222 = arith.constant 2 : i32
    %455 = tpu.dynamic_rotate %411 by %c2_i32_222 dim 1 : vector<128x128xf32>, i32 -> vector<128x128xf32>
    %c2_i32_223 = arith.constant 2 : i32
    %456 = vector.broadcast %c2_i32_223 : i32 to vector<128x128xi32>
    %457 = arith.cmpi sge, %4, %456 : vector<128x128xi32>
    %cst_224 = arith.constant 0.000000e+00 : f32
    %458 = vector.broadcast %cst_224 : f32 to vector<128x128xf32>
    %459 = arith.select %457, %455, %458 : vector<128x128xi1>, vector<128x128xf32>
    %460 = vector.extract_strided_slice %428 {offsets = [0, 3], sizes = [128, 1], strides = [1, 1]} : vector<128x7xf32> to vector<128x1xf32>
    %461 = vector.broadcast %460 : vector<128x1xf32> to vector<128x128xf32>
    %462 = arith.mulf %461, %454 : vector<128x128xf32>
    %463 = arith.addf %449, %462 : vector<128x128xf32>
    %464 = vector.extract_strided_slice %428 {offsets = [0, 4], sizes = [128, 1], strides = [1, 1]} : vector<128x7xf32> to vector<128x1xf32>
    %465 = vector.broadcast %464 : vector<128x1xf32> to vector<128x128xf32>
    %466 = arith.mulf %465, %459 : vector<128x128xf32>
    %467 = arith.addf %463, %466 : vector<128x128xf32>
    %c125_i32_225 = arith.constant 125 : i32
    %468 = tpu.dynamic_rotate %411 by %c125_i32_225 dim 1 : vector<128x128xf32>, i32 -> vector<128x128xf32>
    %c125_i32_226 = arith.constant 125 : i32
    %469 = vector.broadcast %c125_i32_226 : i32 to vector<128x128xi32>
    %470 = arith.cmpi slt, %4, %469 : vector<128x128xi32>
    %cst_227 = arith.constant 0.000000e+00 : f32
    %471 = vector.broadcast %cst_227 : f32 to vector<128x128xf32>
    %472 = arith.select %470, %468, %471 : vector<128x128xi1>, vector<128x128xf32>
    %c3_i32_228 = arith.constant 3 : i32
    %473 = tpu.dynamic_rotate %411 by %c3_i32_228 dim 1 : vector<128x128xf32>, i32 -> vector<128x128xf32>
    %c3_i32_229 = arith.constant 3 : i32
    %474 = vector.broadcast %c3_i32_229 : i32 to vector<128x128xi32>
    %475 = arith.cmpi sge, %4, %474 : vector<128x128xi32>
    %cst_230 = arith.constant 0.000000e+00 : f32
    %476 = vector.broadcast %cst_230 : f32 to vector<128x128xf32>
    %477 = arith.select %475, %473, %476 : vector<128x128xi1>, vector<128x128xf32>
    %478 = vector.extract_strided_slice %428 {offsets = [0, 5], sizes = [128, 1], strides = [1, 1]} : vector<128x7xf32> to vector<128x1xf32>
    %479 = vector.broadcast %478 : vector<128x1xf32> to vector<128x128xf32>
    %480 = arith.mulf %479, %472 : vector<128x128xf32>
    %481 = arith.addf %467, %480 : vector<128x128xf32>
    %482 = vector.extract_strided_slice %428 {offsets = [0, 6], sizes = [128, 1], strides = [1, 1]} : vector<128x7xf32> to vector<128x1xf32>
    %483 = vector.broadcast %482 : vector<128x1xf32> to vector<128x128xf32>
    %484 = arith.mulf %483, %477 : vector<128x128xf32>
    %485 = arith.addf %481, %484 : vector<128x128xf32>
    %cst_231 = arith.constant 0.000000e+00 : f32
    %486 = vector.broadcast %cst_231 : f32 to vector<128x128xf32>
    %487 = arith.select %5, %485, %486 : vector<128x128xi1>, vector<128x128xf32>
    %c0_232 = arith.constant 0 : index
    %c3_233 = arith.constant 3 : index
    %c0_234 = arith.constant 0 : index
    %c0_235 = arith.constant 0 : index
    %488 = vector.load %arg13[%c0_232, %c3_233, %c0_234, %c0_235] : memref<1x4x128x128xf32, #tpu.memory_space<vmem>>, vector<1x1x128x128xf32>
    %489 = vector.shape_cast %488 : vector<1x1x128x128xf32> to vector<128x128xf32>
    %490 = vector.shape_cast %487 : vector<128x128xf32> to vector<1x1x128x128xf32>
    tpu.vector_store %arg13[%c0_232, %c3_233, %c0_234, %c0_235], %490 {strides = array<i32>} : memref<1x4x128x128xf32, #tpu.memory_space<vmem>>, vector<1x1x128x128xf32>,
    %491 = arith.truncf %487 : vector<128x128xf32> to vector<128x128xbf16>
    %492 = arith.truncf %396 : vector<128x8xf32> to vector<128x8xbf16>
    %cst_236 = arith.constant dense<0.000000e+00> : vector<128x8xf32>
    %493 = tpu.matmul %491, %492, %cst_236 {dimension_numbers = #tpu.dot_dimension_numbers<[1], [0], [0], [1], [0, 0, 1, 1], [], []>} : vector<128x128xbf16>, vector<128x8xbf16>, vector<128x8xf32> -> vector<128x8xf32>
    %494 = arith.truncf %493 : vector<128x8xf32> to vector<128x8xbf16>
    %c3_237 = arith.constant 3 : index
    %c0_238 = arith.constant 0 : index
    %c0_239 = arith.constant 0 : index
    %495 = vector.load %arg10[%c3_237, %c0_238, %c0_239] : memref<4x8x32xbf16, #tpu.memory_space<vmem>>, vector<1x8x32xbf16>
    %496 = vector.shape_cast %495 : vector<1x8x32xbf16> to vector<8x32xbf16>
    %cst_240 = arith.constant dense<0.000000e+00> : vector<128x32xf32>
    %497 = tpu.matmul %494, %496, %cst_240 {dimension_numbers = #tpu.dot_dimension_numbers<[1], [0], [0], [1], [0, 0, 1, 1], [], []>} : vector<128x8xbf16>, vector<8x32xbf16>, vector<128x32xf32> -> vector<128x32xf32>
    %498 = arith.addf %375, %497 : vector<128x32xf32>
    %c0_241 = arith.constant 0 : index
    %c0_242 = arith.constant 0 : index
    %499 = vector.load %arg11[%c0_241, %c0_242] : memref<1x32xf32, #tpu.memory_space<vmem>>, vector<1x32xf32>
    %500 = vector.broadcast %499 : vector<1x32xf32> to vector<128x32xf32>
    %501 = arith.addf %498, %500 : vector<128x32xf32>
    %c0_243 = arith.constant 0 : index
    %c0_244 = arith.constant 0 : index
    %c0_245 = arith.constant 0 : index
    %502 = vector.load %arg12[%c0_243, %c0_244, %c0_245] : memref<1x128x32xf32, #tpu.memory_space<vmem>>, vector<1x128x32xf32>
    %503 = vector.shape_cast %502 : vector<1x128x32xf32> to vector<128x32xf32>
    %504 = vector.shape_cast %501 : vector<128x32xf32> to vector<1x128x32xf32>
    tpu.vector_store %arg12[%c0_243, %c0_244, %c0_245], %504 {strides = array<i32>} : memref<1x128x32xf32, #tpu.memory_space<vmem>>, vector<1x128x32xf32>,
    return
  }
  func.func @transform_0(%arg0: i32) -> (i32, i32, i32) {
    %c0_i32 = arith.constant 0 : i32
    %c0_i32_0 = arith.constant 0 : i32
    %c0_i32_1 = arith.constant 0 : i32
    return %arg0, %c0_i32, %c0_i32_0 : i32, i32, i32
  }
  func.func @transform_1(%arg0: i32) -> (i32, i32, i32) {
    %c0_i32 = arith.constant 0 : i32
    %c0_i32_0 = arith.constant 0 : i32
    %c0_i32_1 = arith.constant 0 : i32
    %c0_i32_2 = arith.constant 0 : i32
    return %c0_i32, %c0_i32_0, %c0_i32_1 : i32, i32, i32
  }
  func.func @transform_2(%arg0: i32) -> (i32, i32, i32) {
    %c0_i32 = arith.constant 0 : i32
    %c0_i32_0 = arith.constant 0 : i32
    %c0_i32_1 = arith.constant 0 : i32
    %c0_i32_2 = arith.constant 0 : i32
    return %c0_i32, %c0_i32_0, %c0_i32_1 : i32, i32, i32
  }
  func.func @transform_3(%arg0: i32) -> (i32, i32, i32) {
    %c0_i32 = arith.constant 0 : i32
    %c0_i32_0 = arith.constant 0 : i32
    %c0_i32_1 = arith.constant 0 : i32
    %c0_i32_2 = arith.constant 0 : i32
    return %c0_i32, %c0_i32_0, %c0_i32_1 : i32, i32, i32
  }
  func.func @transform_4(%arg0: i32) -> (i32, i32, i32) {
    %c0_i32 = arith.constant 0 : i32
    %c0_i32_0 = arith.constant 0 : i32
    %c0_i32_1 = arith.constant 0 : i32
    %c0_i32_2 = arith.constant 0 : i32
    return %c0_i32, %c0_i32_0, %c0_i32_1 : i32, i32, i32
  }
  func.func @transform_5(%arg0: i32) -> (i32, i32, i32) {
    %c0_i32 = arith.constant 0 : i32
    %c0_i32_0 = arith.constant 0 : i32
    %c0_i32_1 = arith.constant 0 : i32
    %c0_i32_2 = arith.constant 0 : i32
    return %c0_i32, %c0_i32_0, %c0_i32_1 : i32, i32, i32
  }
  func.func @transform_6(%arg0: i32) -> (i32, i32, i32) {
    %c0_i32 = arith.constant 0 : i32
    %c0_i32_0 = arith.constant 0 : i32
    %c0_i32_1 = arith.constant 0 : i32
    %c0_i32_2 = arith.constant 0 : i32
    return %c0_i32, %c0_i32_0, %c0_i32_1 : i32, i32, i32
  }
  func.func @transform_7(%arg0: i32) -> (i32, i32, i32) {
    %c0_i32 = arith.constant 0 : i32
    %c0_i32_0 = arith.constant 0 : i32
    %c0_i32_1 = arith.constant 0 : i32
    %c0_i32_2 = arith.constant 0 : i32
    return %c0_i32, %c0_i32_0, %c0_i32_1 : i32, i32, i32
  }
  func.func @transform_8(%arg0: i32) -> (i32, i32, i32) {
    %c0_i32 = arith.constant 0 : i32
    %c0_i32_0 = arith.constant 0 : i32
    %c0_i32_1 = arith.constant 0 : i32
    %c0_i32_2 = arith.constant 0 : i32
    return %c0_i32, %c0_i32_0, %c0_i32_1 : i32, i32, i32
  }
  func.func @transform_9(%arg0: i32) -> (i32, i32, i32) {
    %c0_i32 = arith.constant 0 : i32
    %c0_i32_0 = arith.constant 0 : i32
    %c0_i32_1 = arith.constant 0 : i32
    %c0_i32_2 = arith.constant 0 : i32
    return %c0_i32, %c0_i32_0, %c0_i32_1 : i32, i32, i32
  }
  func.func @transform_10(%arg0: i32) -> (i32, i32) {
    %c0_i32 = arith.constant 0 : i32
    %c0_i32_0 = arith.constant 0 : i32
    %c0_i32_1 = arith.constant 0 : i32
    return %c0_i32, %c0_i32_0 : i32, i32
  }
  func.func @transform_11(%arg0: i32) -> (i32, i32, i32) {
    %c0_i32 = arith.constant 0 : i32
    %c0_i32_0 = arith.constant 0 : i32
    %c0_i32_1 = arith.constant 0 : i32
    return %arg0, %c0_i32, %c0_i32_0 : i32, i32, i32
  }
  func.func @transform_12(%arg0: i32) -> (i32, i32, i32, i32) {
    %c0_i32 = arith.constant 0 : i32
    %c0_i32_0 = arith.constant 0 : i32
    %c0_i32_1 = arith.constant 0 : i32
    %c0_i32_2 = arith.constant 0 : i32
    return %arg0, %c0_i32, %c0_i32_0, %c0_i32_1 : i32, i32, i32, i32
  }
}

</mosaic_0001>

<llo_original>
// kernel: tpu_custom_call.1
$region0: #{tpu_custom_call.1}
  #allocation0 [shape = 'u32[]', space=smem, size = 0x4, offset = 0x4, fixed_abs, tag = 'smem constant byte address 0x4 - core index']
  #allocation1 [shape = 'u32[72,128]{1,0:T(1,128)}', space=vmem, size = 0x9000, scoped, tag = 'internal scratch']
  %s0 = inlined_call_operand.vmem [shape: f32[2,128,32], index: 0, kind: input, shape index: {}]
  %s1 = inlined_call_operand.vmem [shape: bf16[4,32,8], index: 1, kind: input, shape index: {}]
  %s2 = inlined_call_operand.vmem [shape: f32[4,1,8], index: 2, kind: input, shape index: {}]
  %s3 = inlined_call_operand.vmem [shape: bf16[4,32,8], index: 3, kind: input, shape index: {}]
  %s4 = inlined_call_operand.vmem [shape: f32[4,1,8], index: 4, kind: input, shape index: {}]
  %s5 = inlined_call_operand.vmem [shape: bf16[4,32,8], index: 5, kind: input, shape index: {}]
  %s6 = inlined_call_operand.vmem [shape: f32[4,1,8], index: 6, kind: input, shape index: {}]
  %s7 = inlined_call_operand.vmem [shape: bf16[4,32,7], index: 7, kind: input, shape index: {}]
  %s8 = inlined_call_operand.vmem [shape: f32[4,1,7], index: 8, kind: input, shape index: {}]
  %s9 = inlined_call_operand.vmem [shape: bf16[4,8,32], index: 9, kind: input, shape index: {}]
  %s10 = inlined_call_operand.vmem [shape: f32[1,32], index: 10, kind: input, shape index: {}]
  %s11 = inlined_call_operand.vmem [shape: f32[2,128,32], index: 11, kind: output, shape index: {0}]
  %s12 = inlined_call_operand.hbm [shape: f32[2,4,128,128], index: 12, kind: output, shape index: {1}]
  %13 = xla_tuple %s11, %s12
  %s14 = sld [smem:[#allocation0]]
  $region85: #{tpu_custom_call.1} parent=0
    _
  %s16 = ssub.s32 1, %s14
  %s17 = scalar_select 0, %s16, %s14
  $region1: #{tpu_custom_call.1} parent=0
    #allocation2 [shape = 'u8[524288]{0}', space=vmem, size = 0x80000, scoped, tag = 'output window, operand 1']
    #allocation3 [shape = 's32[2]{0}', space=sflag, size = 0x8, scoped, tag = 'scoped memory for tpu_custom_call.1']
    %18 = vsyncpa [#allocation3], 0
    %s19 = scalar_lea.sflag [#allocation3], 1
    %20 = vsyncpa %s19, 0
    loop: start=0, step=1, limit=4
    $region2: #{tpu_custom_call.1} parent=1 // loop_pre_header
      _
    $region3: #{tpu_custom_call.1} parent=1 // loop_header
      %s22 = sphi 0, %s26
      %p23 = scmp.ge.s32.totalorder %s22, 4
      %s32 = sphi 0, %s34
      %s35 = sphi 0, %s32
      %s36 = sphi 0, %s35
      %s52 = sphi 0, %s36
      %s56 = sphi 0, %s56
      %s58 = sphi 0, %s56
      %s59 = sphi 0, %s58
      %s73 = sphi 0, %s59
      %s77 = sphi 0, %s77
      %s79 = sphi 0, %s77
      %s80 = sphi 0, %s79
      %s94 = sphi 0, %s80
      %s98 = sphi 0, %s98
      %s100 = sphi 0, %s98
      %s101 = sphi 0, %s100
      %s115 = sphi 0, %s101
      %s119 = sphi 0, %s119
      %s121 = sphi 0, %s119
      %s122 = sphi 0, %s121
      %s136 = sphi 0, %s122
      %s140 = sphi 0, %s140
      %s142 = sphi 0, %s140
      %s143 = sphi 0, %s142
      %s157 = sphi 0, %s143
      %s161 = sphi 0, %s161
      %s163 = sphi 0, %s161
      %s164 = sphi 0, %s163
      %s178 = sphi 0, %s164
      %s182 = sphi 0, %s182
      %s184 = sphi 0, %s182
      %s185 = sphi 0, %s184
      %s199 = sphi 0, %s185
      %s203 = sphi 0, %s203
      %s205 = sphi 0, %s203
      %s206 = sphi 0, %s205
      %s220 = sphi 0, %s206
      %s224 = sphi 0, %s224
      %s226 = sphi 0, %s224
      %s227 = sphi 0, %s226
      %s241 = sphi 0, %s227
      %s245 = sphi 0, %s245
      %s247 = sphi 0, %s245
      %s248 = sphi 0, %s247
      %s262 = sphi 0, %s248
      %s268 = sphi 0, %s270
      %s271 = sphi 0, %s268
      %s272 = sphi 0, %s271
      %s288 = sphi 0, %s272
      %s294 = sphi 0, %s296
      %s297 = sphi 0, %s294
      %s298 = sphi 0, %s297
      %s314 = sphi 0, %s298
    $region4: #{tpu_custom_call.1} parent=1 // loop_header_branch
      %25 = sbr.rel (%p23) target = $region8
    $region5: #{tpu_custom_call.1} parent=1 // loop_body
      %s27 = ssub.s32 %s22, 1
      %s28 = ssub.s32 %s22, 2
      %s29 = sadd.s32 %s22, 1
      %s30 = ssub.s32 %s22, %s29
      %p31 = scmp.eq.s32.totalorder %s30, 0
      %s33 = sadd.s32 %s32, 1
      %s34 = scalar_select %p31, %s32, %s33
      %p37 = pneg %p31
      %p38 = scmp.eq.s32.totalorder %s22, 1
      %p39 = por %p37, %p38
      %p40 = scmp.ne.s32.totalorder %s32, %s35
      %p41 = scmp.eq.s32.totalorder %s22, 0
      %p42 = por %p40, %p41
      %p43 = scmp.ne.s32.totalorder %s32, %s35
      %p44 = scmp.eq.s32.totalorder %s27, 1
      %p45 = por %p43, %p44
      %p46 = scmp.ne.s32.totalorder %s35, %s36
      %p47 = scmp.eq.s32.totalorder %s27, 0
      %p48 = por %p46, %p47
      %p49 = scmp.ne.s32.totalorder %s35, %s36
      %p50 = scmp.eq.s32.totalorder %s28, 1
      %p51 = por %p49, %p50
      %p53 = scmp.ne.s32.totalorder %s36, %s52
      %p54 = scmp.eq.s32.totalorder %s28, 0
      %p55 = por %p53, %p54
      %s57 = sadd.s32 %s56, 1
      %p60 = scmp.eq.s32.totalorder %s22, 1
      %p61 = scmp.ne.s32.totalorder %s56, %s58
      %p62 = scmp.eq.s32.totalorder %s22, 0
      %p63 = por %p61, %p62
      %p64 = scmp.ne.s32.totalorder %s56, %s58
      %p65 = scmp.eq.s32.totalorder %s27, 1
      %p66 = por %p64, %p65
      %p67 = scmp.ne.s32.totalorder %s58, %s59
      %p68 = scmp.eq.s32.totalorder %s27, 0
      %p69 = por %p67, %p68
      %p70 = scmp.ne.s32.totalorder %s58, %s59
      %p71 = scmp.eq.s32.totalorder %s28, 1
      %p72 = por %p70, %p71
      %p74 = scmp.ne.s32.totalorder %s59, %s73
      %p75 = scmp.eq.s32.totalorder %s28, 0
      %p76 = por %p74, %p75
      %s78 = sadd.s32 %s77, 1
      %p81 = scmp.eq.s32.totalorder %s22, 1
      %p82 = scmp.ne.s32.totalorder %s77, %s79
      %p83 = scmp.eq.s32.totalorder %s22, 0
      %p84 = por %p82, %p83
      %p85 = scmp.ne.s32.totalorder %s77, %s79
      %p86 = scmp.eq.s32.totalorder %s27, 1
      %p87 = por %p85, %p86
      %p88 = scmp.ne.s32.totalorder %s79, %s80
      %p89 = scmp.eq.s32.totalorder %s27, 0
      %p90 = por %p88, %p89
      %p91 = scmp.ne.s32.totalorder %s79, %s80
      %p92 = scmp.eq.s32.totalorder %s28, 1
      %p93 = por %p91, %p92
      %p95 = scmp.ne.s32.totalorder %s80, %s94
      %p96 = scmp.eq.s32.totalorder %s28, 0
      %p97 = por %p95, %p96
      %s99 = sadd.s32 %s98, 1
      %p102 = scmp.eq.s32.totalorder %s22, 1
      %p103 = scmp.ne.s32.totalorder %s98, %s100
      %p104 = scmp.eq.s32.totalorder %s22, 0
      %p105 = por %p103, %p104
      %p106 = scmp.ne.s32.totalorder %s98, %s100
      %p107 = scmp.eq.s32.totalorder %s27, 1
      %p108 = por %p106, %p107
      %p109 = scmp.ne.s32.totalorder %s100, %s101
      %p110 = scmp.eq.s32.totalorder %s27, 0
      %p111 = por %p109, %p110
      %p112 = scmp.ne.s32.totalorder %s100, %s101
      %p113 = scmp.eq.s32.totalorder %s28, 1
      %p114 = por %p112, %p113
      %p116 = scmp.ne.s32.totalorder %s101, %s115
      %p117 = scmp.eq.s32.totalorder %s28, 0
      %p118 = por %p116, %p117
      %s120 = sadd.s32 %s119, 1
      %p123 = scmp.eq.s32.totalorder %s22, 1
      %p124 = scmp.ne.s32.totalorder %s119, %s121
      %p125 = scmp.eq.s32.totalorder %s22, 0
      %p126 = por %p124, %p125
      %p127 = scmp.ne.s32.totalorder %s119, %s121
      %p128 = scmp.eq.s32.totalorder %s27, 1
      %p129 = por %p127, %p128
      %p130 = scmp.ne.s32.totalorder %s121, %s122
      %p131 = scmp.eq.s32.totalorder %s27, 0
      %p132 = por %p130, %p131
      %p133 = scmp.ne.s32.totalorder %s121, %s122
      %p134 = scmp.eq.s32.totalorder %s28, 1
      %p135 = por %p133, %p134
      %p137 = scmp.ne.s32.totalorder %s122, %s136
      %p138 = scmp.eq.s32.totalorder %s28, 0
      %p139 = por %p137, %p138
      %s141 = sadd.s32 %s140, 1
      %p144 = scmp.eq.s32.totalorder %s22, 1
      %p145 = scmp.ne.s32.totalorder %s140, %s142
      %p146 = scmp.eq.s32.totalorder %s22, 0
      %p147 = por %p145, %p146
      %p148 = scmp.ne.s32.totalorder %s140, %s142
      %p149 = scmp.eq.s32.totalorder %s27, 1
      %p150 = por %p148, %p149
      %p151 = scmp.ne.s32.totalorder %s142, %s143
      %p152 = scmp.eq.s32.totalorder %s27, 0
      %p153 = por %p151, %p152
      %p154 = scmp.ne.s32.totalorder %s142, %s143
      %p155 = scmp.eq.s32.totalorder %s28, 1
      %p156 = por %p154, %p155
      %p158 = scmp.ne.s32.totalorder %s143, %s157
      %p159 = scmp.eq.s32.totalorder %s28, 0
      %p160 = por %p158, %p159
      %s162 = sadd.s32 %s161, 1
      %p165 = scmp.eq.s32.totalorder %s22, 1
      %p166 = scmp.ne.s32.totalorder %s161, %s163
      %p167 = scmp.eq.s32.totalorder %s22, 0
      %p168 = por %p166, %p167
      %p169 = scmp.ne.s32.totalorder %s161, %s163
      %p170 = scmp.eq.s32.totalorder %s27, 1
      %p171 = por %p169, %p170
      %p172 = scmp.ne.s32.totalorder %s163, %s164
      %p173 = scmp.eq.s32.totalorder %s27, 0
      %p174 = por %p172, %p173
      %p175 = scmp.ne.s32.totalorder %s163, %s164
      %p176 = scmp.eq.s32.totalorder %s28, 1
      %p177 = por %p175, %p176
      %p179 = scmp.ne.s32.totalorder %s164, %s178
      %p180 = scmp.eq.s32.totalorder %s28, 0
      %p181 = por %p179, %p180
      %s183 = sadd.s32 %s182, 1
      %p186 = scmp.eq.s32.totalorder %s22, 1
      %p187 = scmp.ne.s32.totalorder %s182, %s184
      %p188 = scmp.eq.s32.totalorder %s22, 0
      %p189 = por %p187, %p188
      %p190 = scmp.ne.s32.totalorder %s182, %s184
      %p191 = scmp.eq.s32.totalorder %s27, 1
      %p192 = por %p190, %p191
      %p193 = scmp.ne.s32.totalorder %s184, %s185
      %p194 = scmp.eq.s32.totalorder %s27, 0
      %p195 = por %p193, %p194
      %p196 = scmp.ne.s32.totalorder %s184, %s185
      %p197 = scmp.eq.s32.totalorder %s28, 1
      %p198 = por %p196, %p197
      %p200 = scmp.ne.s32.totalorder %s185, %s199
      %p201 = scmp.eq.s32.totalorder %s28, 0
      %p202 = por %p200, %p201
      %s204 = sadd.s32 %s203, 1
      %p207 = scmp.eq.s32.totalorder %s22, 1
      %p208 = scmp.ne.s32.totalorder %s203, %s205
      %p209 = scmp.eq.s32.totalorder %s22, 0
      %p210 = por %p208, %p209
      %p211 = scmp.ne.s32.totalorder %s203, %s205
      %p212 = scmp.eq.s32.totalorder %s27, 1
      %p213 = por %p211, %p212
      %p214 = scmp.ne.s32.totalorder %s205, %s206
      %p215 = scmp.eq.s32.totalorder %s27, 0
      %p216 = por %p214, %p215
      %p217 = scmp.ne.s32.totalorder %s205, %s206
      %p218 = scmp.eq.s32.totalorder %s28, 1
      %p219 = por %p217, %p218
      %p221 = scmp.ne.s32.totalorder %s206, %s220
      %p222 = scmp.eq.s32.totalorder %s28, 0
      %p223 = por %p221, %p222
      %s225 = sadd.s32 %s224, 1
      %p228 = scmp.eq.s32.totalorder %s22, 1
      %p229 = scmp.ne.s32.totalorder %s224, %s226
      %p230 = scmp.eq.s32.totalorder %s22, 0
      %p231 = por %p229, %p230
      %p232 = scmp.ne.s32.totalorder %s224, %s226
      %p233 = scmp.eq.s32.totalorder %s27, 1
      %p234 = por %p232, %p233
      %p235 = scmp.ne.s32.totalorder %s226, %s227
      %p236 = scmp.eq.s32.totalorder %s27, 0
      %p237 = por %p235, %p236
      %p238 = scmp.ne.s32.totalorder %s226, %s227
      %p239 = scmp.eq.s32.totalorder %s28, 1
      %p240 = por %p238, %p239
      %p242 = scmp.ne.s32.totalorder %s227, %s241
      %p243 = scmp.eq.s32.totalorder %s28, 0
      %p244 = por %p242, %p243
      %s246 = sadd.s32 %s245, 1
      %p249 = scmp.eq.s32.totalorder %s22, 1
      %p250 = scmp.ne.s32.totalorder %s245, %s247
      %p251 = scmp.eq.s32.totalorder %s22, 0
      %p252 = por %p250, %p251
      %p253 = scmp.ne.s32.totalorder %s245, %s247
      %p254 = scmp.eq.s32.totalorder %s27, 1
      %p255 = por %p253, %p254
      %p256 = scmp.ne.s32.totalorder %s247, %s248
      %p257 = scmp.eq.s32.totalorder %s27, 0
      %p258 = por %p256, %p257
      %p259 = scmp.ne.s32.totalorder %s247, %s248
      %p260 = scmp.eq.s32.totalorder %s28, 1
      %p261 = por %p259, %p260
      %p263 = scmp.ne.s32.totalorder %s248, %s262
      %p264 = scmp.eq.s32.totalorder %s28, 0
      %p265 = por %p263, %p264
      %s266 = ssub.s32 %s22, %s29
      %p267 = scmp.eq.s32.totalorder %s266, 0
      %s269 = sadd.s32 %s268, 1
      %s270 = scalar_select %p267, %s268, %s269
      %p273 = pneg %p267
      %p274 = scmp.eq.s32.totalorder %s22, 1
      %p275 = por %p273, %p274
      %p276 = scmp.ne.s32.totalorder %s268, %s271
      %p277 = scmp.eq.s32.totalorder %s22, 0
      %p278 = por %p276, %p277
      %p279 = scmp.ne.s32.totalorder %s268, %s271
      %p280 = scmp.eq.s32.totalorder %s27, 1
      %p281 = por %p279, %p280
      %p282 = scmp.ne.s32.totalorder %s271, %s272
      %p283 = scmp.eq.s32.totalorder %s27, 0
      %p284 = por %p282, %p283
      %p285 = scmp.ne.s32.totalorder %s271, %s272
      %p286 = scmp.eq.s32.totalorder %s28, 1
      %p287 = por %p285, %p286
      %p289 = scmp.ne.s32.totalorder %s272, %s288
      %p290 = scmp.eq.s32.totalorder %s28, 0
      %p291 = por %p289, %p290
      %s292 = ssub.s32 %s22, %s29
      %p293 = scmp.eq.s32.totalorder %s292, 0
      %s295 = sadd.s32 %s294, 1
      %s296 = scalar_select %p293, %s294, %s295
      %p299 = pneg %p293
      %p300 = scmp.eq.s32.totalorder %s22, 1
      %p301 = por %p299, %p300
      %p302 = scmp.ne.s32.totalorder %s294, %s297
      %p303 = scmp.eq.s32.totalorder %s22, 0
      %p304 = por %p302, %p303
      %p305 = scmp.ne.s32.totalorder %s294, %s297
      %p306 = scmp.eq.s32.totalorder %s27, 1
      %p307 = por %p305, %p306
      %p308 = scmp.ne.s32.totalorder %s297, %s298
      %p309 = scmp.eq.s32.totalorder %s27, 0
      %p310 = por %p308, %p309
      %p311 = scmp.ne.s32.totalorder %s297, %s298
      %p312 = scmp.eq.s32.totalorder %s28, 1
      %p313 = por %p311, %p312
      %p315 = scmp.ne.s32.totalorder %s298, %s314
      %p316 = scmp.eq.s32.totalorder %s28, 0
      %p317 = por %p315, %p316
      %p318 = scmp.le.s32.totalorder 1, %s22
      %p319 = scmp.lt.s32.totalorder %s22, 3
      %p320 = pnand %p318, %p319
      %p321 = pneg %p320
      // Predicated region
      $region9: #{tpu_custom_call.1} parent=5 // pred_check
        _
      $region10: #{tpu_custom_call.1} parent=5 // pred_check_branch
        %323 = sbr.rel (%p320) target = $region12
      $region11: #{tpu_custom_call.1} parent=5 // pred_region
        %s324 = ssub.s32 %s22, 1
        // Predicated region
        $region13: #{tpu_custom_call.1} parent=11 // pred_check
          %p325 = pneg %p69
        $region14: #{tpu_custom_call.1} parent=11 // pred_check_branch
          %327 = sbr.rel (%p325) target = $region16
        $region15: #{tpu_custom_call.1} parent=11 // pred_region
          _
        $region16: #{tpu_custom_call.1} parent=11 // pred_fallthru
          _
        // Predicated region
        $region17: #{tpu_custom_call.1} parent=11 // pred_check
          %p328 = pneg %p90
        $region18: #{tpu_custom_call.1} parent=11 // pred_check_branch
          %330 = sbr.rel (%p328) target = $region20
        $region19: #{tpu_custom_call.1} parent=11 // pred_region
          _
        $region20: #{tpu_custom_call.1} parent=11 // pred_fallthru
          _
        // Predicated region
        $region21: #{tpu_custom_call.1} parent=11 // pred_check
          %p331 = pneg %p111
        $region22: #{tpu_custom_call.1} parent=11 // pred_check_branch
          %333 = sbr.rel (%p331) target = $region24
        $region23: #{tpu_custom_call.1} parent=11 // pred_region
          _
        $region24: #{tpu_custom_call.1} parent=11 // pred_fallthru
          _
        // Predicated region
        $region25: #{tpu_custom_call.1} parent=11 // pred_check
          %p334 = pneg %p132
        $region26: #{tpu_custom_call.1} parent=11 // pred_check_branch
          %336 = sbr.rel (%p334) target = $region28
        $region27: #{tpu_custom_call.1} parent=11 // pred_region
          _
        $region28: #{tpu_custom_call.1} parent=11 // pred_fallthru
          _
        // Predicated region
        $region29: #{tpu_custom_call.1} parent=11 // pred_check
          %p337 = pneg %p153
        $region30: #{tpu_custom_call.1} parent=11 // pred_check_branch
          %339 = sbr.rel (%p337) target = $region32
        $region31: #{tpu_custom_call.1} parent=11 // pred_region
          _
        $region32: #{tpu_custom_call.1} parent=11 // pred_fallthru
          _
        // Predicated region
        $region33: #{tpu_custom_call.1} parent=11 // pred_check
          %p340 = pneg %p174
        $region34: #{tpu_custom_call.1} parent=11 // pred_check_branch
          %342 = sbr.rel (%p340) target = $region36
        $region35: #{tpu_custom_call.1} parent=11 // pred_region
          _
        $region36: #{tpu_custom_call.1} parent=11 // pred_fallthru
          _
        // Predicated region
        $region37: #{tpu_custom_call.1} parent=11 // pred_check
          %p343 = pneg %p195
        $region38: #{tpu_custom_call.1} parent=11 // pred_check_branch
          %345 = sbr.rel (%p343) target = $region40
        $region39: #{tpu_custom_call.1} parent=11 // pred_region
          _
        $region40: #{tpu_custom_call.1} parent=11 // pred_fallthru
          _
        // Predicated region
        $region41: #{tpu_custom_call.1} parent=11 // pred_check
          %p346 = pneg %p216
        $region42: #{tpu_custom_call.1} parent=11 // pred_check_branch
          %348 = sbr.rel (%p346) target = $region44
        $region43: #{tpu_custom_call.1} parent=11 // pred_region
          _
        $region44: #{tpu_custom_call.1} parent=11 // pred_fallthru
          _
        // Predicated region
        $region45: #{tpu_custom_call.1} parent=11 // pred_check
          %p349 = pneg %p237
        $region46: #{tpu_custom_call.1} parent=11 // pred_check_branch
          %351 = sbr.rel (%p349) target = $region48
        $region47: #{tpu_custom_call.1} parent=11 // pred_region
          _
        $region48: #{tpu_custom_call.1} parent=11 // pred_fallthru
          _
        // Predicated region
        $region49: #{tpu_custom_call.1} parent=11 // pred_check
          %p352 = pneg %p258
        $region50: #{tpu_custom_call.1} parent=11 // pred_check_branch
          %354 = sbr.rel (%p352) target = $region52
        $region51: #{tpu_custom_call.1} parent=11 // pred_region
          _
        $region52: #{tpu_custom_call.1} parent=11 // pred_fallthru
          _
      $region12: #{tpu_custom_call.1} parent=5 // pred_fallthru
        _
      %p355 = scmp.lt.s32.totalorder %s22, 2
      // Predicated region
      $region53: #{tpu_custom_call.1} parent=5 // pred_check
        %p356 = pneg %p355
      $region54: #{tpu_custom_call.1} parent=5 // pred_check_branch
        %358 = sbr.rel (%p356) target = $region56
      $region55: #{tpu_custom_call.1} parent=5 // pred_region
        // Predicated region
        $region57: #{tpu_custom_call.1} parent=55 // pred_check
          %p359 = pneg %p42
        $region58: #{tpu_custom_call.1} parent=55 // pred_check_branch
          %361 = sbr.rel (%p359) target = $region60
        $region59: #{tpu_custom_call.1} parent=55 // pred_region
          %p362 = scmp.lt.s32.totalorder %s22, 1
          %s363 = scalar_select %p362, %s22, 1
          %s364 = smul.addr %s363, 16
          %s365 = smul.addr %s364, 8
          %s366 = scalar_lea.vmem %s0, %s365
        $region60: #{tpu_custom_call.1} parent=55 // pred_fallthru
          _
      $region56: #{tpu_custom_call.1} parent=5 // pred_fallthru
        _
      %p367 = scmp.le.s32.totalorder 1, %s22
      %p368 = scmp.lt.s32.totalorder %s22, 3
      %p369 = pnand %p367, %p368
      %p370 = pneg %p369
      // Predicated region
      $region61: #{tpu_custom_call.1} parent=5 // pred_check
        _
      $region62: #{tpu_custom_call.1} parent=5 // pred_check_branch
        %372 = sbr.rel (%p369) target = $region64
      $region63: #{tpu_custom_call.1} parent=5 // pred_region
        %s373 = ssub.s32 %s22, 1
        %p374 = scmp.lt.s32.totalorder %s27, 1
        %s375 = scalar_select %p374, %s27, 1
        %s376 = smul.addr %s375, 16
        %s377 = smul.addr %s376, 8
        %s378 = scalar_lea.vmem %s0, %s377
        %p379 = pneg %p48
        %p380 = pneg %p45
        %p381 = pneg %p69
        %p382 = pneg %p66
        %p383 = pneg %p90
        %p384 = pneg %p87
        %p385 = pneg %p111
        %p386 = pneg %p108
        %p387 = pneg %p132
        %p388 = pneg %p129
        %p389 = pneg %p153
        %p390 = pneg %p150
        %p391 = pneg %p174
        %p392 = pneg %p171
        %p393 = pneg %p195
        %p394 = pneg %p192
        %p395 = pneg %p216
        %p396 = pneg %p213
        %p397 = pneg %p237
        %p398 = pneg %p234
        %p399 = pneg %p258
        %p400 = pneg %p255
        %p401 = pneg %p284
        %p402 = pneg %p281
        %p403 = scmp.lt.s32.totalorder %s27, 1
        %s404 = scalar_select %p403, %s27, 1
        %s405 = smul.addr %s404, 16
        %s406 = smul.addr %s405, 8
        %s407 = scalar_lea.vmem %s11, %s406
        %p408 = pneg %p310
        %p409 = pneg %p307
        %s410 = sand.u32 %s297, 1
        %s411 = scalar_lea.sflag [#allocation3], %s410
        %s412 = sand.u32 %s297, 1
        %s413 = smul.addr %s412, 512
        %s414 = scalar_lea.vmem [#allocation2], %s413
        %p415 = scmp.lt.s32.totalorder %s27, 1
        %s416 = scalar_select %p415, %s27, 1
        %s417 = smul.addr %s416, 16
        %s418 = smul.addr %s417, 8
        %s419 = scalar_lea.vmem %s0, %s418
        %p420 = scmp.lt.s32.totalorder %s27, 1
        %s421 = scalar_select %p420, %s27, 1
        %s422 = smul.addr %s421, 16
        %s423 = smul.addr %s422, 8
        %s424 = scalar_lea.vmem %s11, %s423
        %v426 = vld [vmem:[%s419] sm:$0xff]
        %v427 = vld [vmem:[%s419 + $0x8] sm:$0xff]
        %v428 = vld [vmem:[%s419 + $0x10] sm:$0xff]
        %v429 = vld [vmem:[%s419 + $0x18] sm:$0xff]
        %v430 = vld [vmem:[%s419 + $0x20] sm:$0xff]
        %v431 = vld [vmem:[%s419 + $0x28] sm:$0xff]
        %v432 = vld [vmem:[%s419 + $0x30] sm:$0xff]
        %v433 = vld [vmem:[%s419 + $0x38] sm:$0xff]
        %v434 = vld [vmem:[%s419 + $0x40] sm:$0xff]
        %v435 = vld [vmem:[%s419 + $0x48] sm:$0xff]
        %v436 = vld [vmem:[%s419 + $0x50] sm:$0xff]
        %v437 = vld [vmem:[%s419 + $0x58] sm:$0xff]
        %v438 = vld [vmem:[%s419 + $0x60] sm:$0xff]
        %v439 = vld [vmem:[%s419 + $0x68] sm:$0xff]
        %v440 = vld [vmem:[%s419 + $0x70] sm:$0xff]
        %v441 = vld [vmem:[%s419 + $0x78] sm:$0xff]
        %v442 = vpack.c.bf16 %v427, %v426
        %v443 = vpack.c.bf16 %v429, %v428
        %v444 = vpack.c.bf16 %v431, %v430
        %v445 = vpack.c.bf16 %v433, %v432
        %v446 = vpack.c.bf16 %v435, %v434
        %v447 = vpack.c.bf16 %v437, %v436
        %v448 = vpack.c.bf16 %v439, %v438
        %v449 = vpack.c.bf16 %v441, %v440
        %v450 = vlaneseq
        %v451 = vshrl.u32 %v450, 7
        %v452 = vadd.s32 %v451, 8
        %v453 = vadd.s32 %v451, 16
        %v454 = vadd.s32 %v451, 24
        %v455 = vadd.s32 %v451, 32
        %v456 = vadd.s32 %v451, 40
        %v457 = vadd.s32 %v451, 48
        %v458 = vadd.s32 %v451, 56
        %v459 = vadd.s32 %v451, 64
        %v460 = vadd.s32 %v451, 72
        %v461 = vadd.s32 %v451, 80
        %v462 = vadd.s32 %v451, 88
        %v463 = vadd.s32 %v451, 96
        %v464 = vadd.s32 %v451, 104
        %v465 = vadd.s32 %v451, 112
        %v466 = vadd.s32 %v451, 120
        %v467 = vlaneseq
        %v468 = vand.u32 %v467, 127
        %vm469 = vcmp.le.s32.totalorder %v468, %v451
        %vm470 = vcmp.le.s32.totalorder %v468, %v452
        %vm471 = vcmp.le.s32.totalorder %v468, %v453
        %vm472 = vcmp.le.s32.totalorder %v468, %v454
        %vm473 = vcmp.le.s32.totalorder %v468, %v455
        %vm474 = vcmp.le.s32.totalorder %v468, %v456
        %vm475 = vcmp.le.s32.totalorder %v468, %v457
        %vm476 = vcmp.le.s32.totalorder %v468, %v458
        %vm477 = vcmp.le.s32.totalorder %v468, %v459
        %vm478 = vcmp.le.s32.totalorder %v468, %v460
        %vm479 = vcmp.le.s32.totalorder %v468, %v461
        %vm480 = vcmp.le.s32.totalorder %v468, %v462
        %vm481 = vcmp.le.s32.totalorder %v468, %v463
        %vm482 = vcmp.le.s32.totalorder %v468, %v464
        %vm483 = vcmp.le.s32.totalorder %v468, %v465
        %vm484 = vcmp.le.s32.totalorder %v468, %v466
        %v485 = vld [vmem:[%s1] sm:$0xf]
        %v486 = vld [vmem:[%s1 + $0x4] sm:$0xf]
        %v487 = vld [vmem:[%s1 + $0x8] sm:$0xf]
        %v488 = vld [vmem:[%s1 + $0xc] sm:$0xf]
        %v489 = vld [vmem:[%s2] sm:$0x1]
        %v491 = vperm.slane %v489, 0
        %v497 = vunpack.c.l.b16 %v485
        %v498 = vunpack.c.l.b16 %v486
        %v499 = vunpack.c.l.b16 %v487
        %v500 = vunpack.c.l.b16 %v488
        %v501 = vpack.c.b16 %v498, %v497
        %v502 = vpack.c.b16 %v500, %v499
        %vm505 = vcmask 261120
        %v507 = vsel %vm505, %v442, 0
        %v510 = vsel %vm505, %v443, 0
        %v513 = vsel %vm505, %v444, 0
        %v516 = vsel %vm505, %v445, 0
        %v519 = vsel %vm505, %v446, 0
        %v522 = vsel %vm505, %v447, 0
        %v525 = vsel %vm505, %v448, 0
        %v528 = vsel %vm505, %v449, 0
        %530 = vmatpush.bf16.msra.mxu0 0
        %531 = vmatpush.bf16.msra.mxu0 0
        %532 = vmatpush.bf16.msra.mxu0 0
        %533 = vmatpush.bf16.msra.mxu0 0
        %534 = vmatpush.bf16.msra.mxu0 0
        %535 = vmatpush.bf16.msra.mxu0 0
        %536 = vmatpush.bf16.msra.mxu0 %v502
        %537 = vmatpush.bf16.msra.mxu0 %v501
        %538 = vmatmul.bf16.gmra.mxu0 %v507
        %v539 = vpop.f32.mrf.mxu0
        %v540 = vadd.f32 %v491, %v539
        %v541 = vpop.f32.mrf.mxu0
        %v542 = vadd.f32 %v491, %v541
        %543 = vmatmul.bf16.gmra.mxu0 %v510
        %v544 = vpop.f32.mrf.mxu0
        %v545 = vadd.f32 %v491, %v544
        %v546 = vpop.f32.mrf.mxu0
        %v547 = vadd.f32 %v491, %v546
        %548 = vmatmul.bf16.gmra.mxu0 %v513
        %v549 = vpop.f32.mrf.mxu0
        %v550 = vadd.f32 %v491, %v549
        %v551 = vpop.f32.mrf.mxu0
        %v552 = vadd.f32 %v491, %v551
        %553 = vmatmul.bf16.gmra.mxu0 %v516
        %v554 = vpop.f32.mrf.mxu0
        %v555 = vadd.f32 %v491, %v554
        %v556 = vpop.f32.mrf.mxu0
        %v557 = vadd.f32 %v491, %v556
        %558 = vmatmul.bf16.gmra.mxu0 %v519
        %v559 = vpop.f32.mrf.mxu0
        %v560 = vadd.f32 %v491, %v559
        %v561 = vpop.f32.mrf.mxu0
        %v562 = vadd.f32 %v491, %v561
        %563 = vmatmul.bf16.gmra.mxu0 %v522
        %v564 = vpop.f32.mrf.mxu0
        %v565 = vadd.f32 %v491, %v564
        %v566 = vpop.f32.mrf.mxu0
        %v567 = vadd.f32 %v491, %v566
        %568 = vmatmul.bf16.gmra.mxu0 %v525
        %v569 = vpop.f32.mrf.mxu0
        %v570 = vadd.f32 %v491, %v569
        %v571 = vpop.f32.mrf.mxu0
        %v572 = vadd.f32 %v491, %v571
        %573 = vmatmul.bf16.gmra.mxu0 %v528
        %v574 = vpop.f32.mrf.mxu0
        %v575 = vadd.f32 %v491, %v574
        %v576 = vpop.f32.mrf.mxu0
        %v577 = vadd.f32 %v491, %v576
        %578 = vdwg.mxu0
        %v579 = vld [vmem:[%s3] sm:$0xf]
        %v580 = vld [vmem:[%s3 + $0x4] sm:$0xf]
        %v581 = vld [vmem:[%s3 + $0x8] sm:$0xf]
        %v582 = vld [vmem:[%s3 + $0xc] sm:$0xf]
        %v583 = vld [vmem:[%s4] sm:$0x1]
        %v585 = vperm.slane %v583, 0
        %v591 = vunpack.c.l.b16 %v579
        %v592 = vunpack.c.l.b16 %v580
        %v593 = vunpack.c.l.b16 %v581
        %v594 = vunpack.c.l.b16 %v582
        %v595 = vpack.c.b16 %v592, %v591
        %v596 = vpack.c.b16 %v594, %v593
        %599 = vmatpush.bf16.msra.mxu0 0
        %600 = vmatpush.bf16.msra.mxu0 0
        %601 = vmatpush.bf16.msra.mxu0 0
        %602 = vmatpush.bf16.msra.mxu0 0
        %603 = vmatpush.bf16.msra.mxu0 0
        %604 = vmatpush.bf16.msra.mxu0 0
        %605 = vmatpush.bf16.msra.mxu0 %v596
        %606 = vmatpush.bf16.msra.mxu0 %v595
        %607 = vmatmul.bf16.gmra.mxu0 %v507
        %v608 = vpop.f32.mrf.mxu0
        %v609 = vadd.f32 %v585, %v608
        %v610 = vpop.f32.mrf.mxu0
        %v611 = vadd.f32 %v585, %v610
        %612 = vmatmul.bf16.gmra.mxu0 %v510
        %v613 = vpop.f32.mrf.mxu0
        %v614 = vadd.f32 %v585, %v613
        %v615 = vpop.f32.mrf.mxu0
        %v616 = vadd.f32 %v585, %v615
        %617 = vmatmul.bf16.gmra.mxu0 %v513
        %v618 = vpop.f32.mrf.mxu0
        %v619 = vadd.f32 %v585, %v618
        %v620 = vpop.f32.mrf.mxu0
        %v621 = vadd.f32 %v585, %v620
        %622 = vmatmul.bf16.gmra.mxu0 %v516
        %v623 = vpop.f32.mrf.mxu0
        %v624 = vadd.f32 %v585, %v623
        %v625 = vpop.f32.mrf.mxu0
        %v626 = vadd.f32 %v585, %v625
        %627 = vmatmul.bf16.gmra.mxu0 %v519
        %v628 = vpop.f32.mrf.mxu0
        %v629 = vadd.f32 %v585, %v628
        %v630 = vpop.f32.mrf.mxu0
        %v631 = vadd.f32 %v585, %v630
        %632 = vmatmul.bf16.gmra.mxu0 %v522
        %v633 = vpop.f32.mrf.mxu0
        %v634 = vadd.f32 %v585, %v633
        %v635 = vpop.f32.mrf.mxu0
        %v636 = vadd.f32 %v585, %v635
        %637 = vmatmul.bf16.gmra.mxu0 %v525
        %v638 = vpop.f32.mrf.mxu0
        %v639 = vadd.f32 %v585, %v638
        %v640 = vpop.f32.mrf.mxu0
        %v641 = vadd.f32 %v585, %v640
        %642 = vmatmul.bf16.gmra.mxu0 %v528
        %v643 = vpop.f32.mrf.mxu0
        %v644 = vadd.f32 %v585, %v643
        %v645 = vpop.f32.mrf.mxu0
        %v646 = vadd.f32 %v585, %v645
        %647 = vdwg.mxu0
        %v648 = vld [vmem:[%s5] sm:$0xf]
        %v649 = vld [vmem:[%s5 + $0x4] sm:$0xf]
        %v650 = vld [vmem:[%s5 + $0x8] sm:$0xf]
        %v651 = vld [vmem:[%s5 + $0xc] sm:$0xf]
        %v652 = vld [vmem:[%s6] sm:$0x1]
        %v654 = vperm.slane %v652, 0
        %v660 = vunpack.c.l.b16 %v648
        %v661 = vunpack.c.l.b16 %v649
        %v662 = vunpack.c.l.b16 %v650
        %v663 = vunpack.c.l.b16 %v651
        %v664 = vpack.c.b16 %v661, %v660
        %v665 = vpack.c.b16 %v663, %v662
        %668 = vmatpush.bf16.msra.mxu0 0
        %669 = vmatpush.bf16.msra.mxu0 0
        %670 = vmatpush.bf16.msra.mxu0 0
        %671 = vmatpush.bf16.msra.mxu0 0
        %672 = vmatpush.bf16.msra.mxu0 0
        %673 = vmatpush.bf16.msra.mxu0 0
        %674 = vmatpush.bf16.msra.mxu0 %v665
        %675 = vmatpush.bf16.msra.mxu0 %v664
        %676 = vmatmul.bf16.gmra.mxu0 %v507
        %v677 = vpop.f32.mrf.mxu0
        %v678 = vadd.f32 %v654, %v677
        %v679 = vpop.f32.mrf.mxu0
        %v680 = vadd.f32 %v654, %v679
        %681 = vmatmul.bf16.gmra.mxu0 %v510
        %v682 = vpop.f32.mrf.mxu0
        %v683 = vadd.f32 %v654, %v682
        %v684 = vpop.f32.mrf.mxu0
        %v685 = vadd.f32 %v654, %v684
        %686 = vmatmul.bf16.gmra.mxu0 %v513
        %v687 = vpop.f32.mrf.mxu0
        %v688 = vadd.f32 %v654, %v687
        %v689 = vpop.f32.mrf.mxu0
        %v690 = vadd.f32 %v654, %v689
        %691 = vmatmul.bf16.gmra.mxu0 %v516
        %v692 = vpop.f32.mrf.mxu0
        %v693 = vadd.f32 %v654, %v692
        %v694 = vpop.f32.mrf.mxu0
        %v695 = vadd.f32 %v654, %v694
        %696 = vmatmul.bf16.gmra.mxu0 %v519
        %v697 = vpop.f32.mrf.mxu0
        %v698 = vadd.f32 %v654, %v697
        %v699 = vpop.f32.mrf.mxu0
        %v700 = vadd.f32 %v654, %v699
        %701 = vmatmul.bf16.gmra.mxu0 %v522
        %v702 = vpop.f32.mrf.mxu0
        %v703 = vadd.f32 %v654, %v702
        %v704 = vpop.f32.mrf.mxu0
        %v705 = vadd.f32 %v654, %v704
        %706 = vmatmul.bf16.gmra.mxu0 %v525
        %v707 = vpop.f32.mrf.mxu0
        %v708 = vadd.f32 %v654, %v707
        %v709 = vpop.f32.mrf.mxu0
        %v710 = vadd.f32 %v654, %v709
        %711 = vmatmul.bf16.gmra.mxu0 %v528
        %v712 = vpop.f32.mrf.mxu0
        %v713 = vadd.f32 %v654, %v712
        %v714 = vpop.f32.mrf.mxu0
        %v715 = vadd.f32 %v654, %v714
        %716 = vdwg.mxu0
        %v717 = vpack.c.bf16 %v542, %v540
        %v718 = vpack.c.bf16 %v547, %v545
        %v719 = vpack.c.bf16 %v552, %v550
        %v720 = vpack.c.bf16 %v557, %v555
        %v721 = vpack.c.bf16 %v562, %v560
        %v722 = vpack.c.bf16 %v567, %v565
        %v723 = vpack.c.bf16 %v572, %v570
        %v724 = vpack.c.bf16 %v577, %v575
        %v725 = vpack.c.bf16 %v611, %v609
        %v726 = vpack.c.bf16 %v616, %v614
        %v727 = vpack.c.bf16 %v621, %v619
        %v728 = vpack.c.bf16 %v626, %v624
        %v729 = vpack.c.bf16 %v631, %v629
        %v730 = vpack.c.bf16 %v636, %v634
        %v731 = vpack.c.bf16 %v641, %v639
        %v732 = vpack.c.bf16 %v646, %v644
        %vm733 = vcmask 64512
        %v735 = vsel %vm733, %v717, 0
        %v738 = vsel %vm733, %v718, 0
        %v741 = vsel %vm733, %v719, 0
        %v744 = vsel %vm733, %v720, 0
        %v747 = vsel %vm733, %v721, 0
        %v750 = vsel %vm733, %v722, 0
        %v753 = vsel %vm733, %v723, 0
        %v756 = vsel %vm733, %v724, 0
        %v759 = vsel %vm733, %v725, 0
        %v762 = vsel %vm733, %v726, 0
        %v765 = vsel %vm733, %v727, 0
        %v768 = vsel %vm733, %v728, 0
        %v771 = vsel %vm733, %v729, 0
        %v774 = vsel %vm733, %v730, 0
        %v777 = vsel %vm733, %v731, 0
        %v780 = vsel %vm733, %v732, 0
        %782 = vmatpush.bf16.xpose.msra.mxu0 %v780
        %783 = vmatpush.bf16.xpose.msra.mxu0 %v777
        %784 = vmatpush.bf16.xpose.msra.mxu0 %v774
        %785 = vmatpush.bf16.xpose.msra.mxu0 %v771
        %786 = vmatpush.bf16.xpose.msra.mxu0 %v768
        %787 = vmatpush.bf16.xpose.msra.mxu0 %v765
        %788 = vmatpush.bf16.xpose.msra.mxu0 %v762
        %789 = vmatpush.bf16.xpose.msra.mxu0 %v759
        %790 = vmatmul.bf16.gmra.mxu0 %v735
        %v791 = vpop.f32.mrf.mxu0
        %v792 = vadd.f32 0.0, %v791
        %v793 = vpop.f32.mrf.mxu0
        %v794 = vadd.f32 0.0, %v793
        %795 = vmatmul.bf16.gmra.mxu0 %v738
        %v796 = vpop.f32.mrf.mxu0
        %v797 = vadd.f32 0.0, %v796
        %v798 = vpop.f32.mrf.mxu0
        %v799 = vadd.f32 0.0, %v798
        %800 = vmatmul.bf16.gmra.mxu0 %v741
        %v801 = vpop.f32.mrf.mxu0
        %v802 = vadd.f32 0.0, %v801
        %v803 = vpop.f32.mrf.mxu0
        %v804 = vadd.f32 0.0, %v803
        %805 = vmatmul.bf16.gmra.mxu0 %v744
        %v806 = vpop.f32.mrf.mxu0
        %v807 = vadd.f32 0.0, %v806
        %v808 = vpop.f32.mrf.mxu0
        %v809 = vadd.f32 0.0, %v808
        %810 = vmatmul.bf16.gmra.mxu0 %v747
        %v811 = vpop.f32.mrf.mxu0
        %v812 = vadd.f32 0.0, %v811
        %v813 = vpop.f32.mrf.mxu0
        %v814 = vadd.f32 0.0, %v813
        %815 = vmatmul.bf16.gmra.mxu0 %v750
        %v816 = vpop.f32.mrf.mxu0
        %v817 = vadd.f32 0.0, %v816
        %v818 = vpop.f32.mrf.mxu0
        %v819 = vadd.f32 0.0, %v818
        %820 = vmatmul.bf16.gmra.mxu0 %v753
        %v821 = vpop.f32.mrf.mxu0
        %v822 = vadd.f32 0.0, %v821
        %v823 = vpop.f32.mrf.mxu0
        %v824 = vadd.f32 0.0, %v823
        %825 = vmatmul.bf16.gmra.mxu0 %v756
        %v826 = vpop.f32.mrf.mxu0
        %v827 = vadd.f32 0.0, %v826
        %v828 = vpop.f32.mrf.mxu0
        %v829 = vadd.f32 0.0, %v828
        %830 = vdwg.mxu0
        %v831 = vsel %vm469, %v792, -inf
        %v832 = vsel %vm470, %v794, -inf
        %v833 = vsel %vm471, %v797, -inf
        %v834 = vsel %vm472, %v799, -inf
        %v835 = vsel %vm473, %v802, -inf
        %v836 = vsel %vm474, %v804, -inf
        %v837 = vsel %vm475, %v807, -inf
        %v838 = vsel %vm476, %v809, -inf
        %v839 = vsel %vm477, %v812, -inf
        %v840 = vsel %vm478, %v814, -inf
        %v841 = vsel %vm479, %v817, -inf
        %v842 = vsel %vm480, %v819, -inf
        %v843 = vsel %vm481, %v822, -inf
        %v844 = vsel %vm482, %v824, -inf
        %v845 = vsel %vm483, %v827, -inf
        %v846 = vsel %vm484, %v829, -inf
        %847 = vmax.xlane.f32.xlu0 %v831
        %v848 = vpop.xlane.xlu0 %847
        %849 = vmax.xlane.f32.xlu0 %v832
        %v850 = vpop.xlane.xlu0 %849
        %851 = vmax.xlane.f32.xlu0 %v833
        %v852 = vpop.xlane.xlu0 %851
        %853 = vmax.xlane.f32.xlu0 %v834
        %v854 = vpop.xlane.xlu0 %853
        %855 = vmax.xlane.f32.xlu0 %v835
        %v856 = vpop.xlane.xlu0 %855
        %857 = vmax.xlane.f32.xlu0 %v836
        %v858 = vpop.xlane.xlu0 %857
        %859 = vmax.xlane.f32.xlu0 %v837
        %v860 = vpop.xlane.xlu0 %859
        %861 = vmax.xlane.f32.xlu0 %v838
        %v862 = vpop.xlane.xlu0 %861
        %863 = vmax.xlane.f32.xlu0 %v839
        %v864 = vpop.xlane.xlu0 %863
        %865 = vmax.xlane.f32.xlu0 %v840
        %v866 = vpop.xlane.xlu0 %865
        %867 = vmax.xlane.f32.xlu0 %v841
        %v868 = vpop.xlane.xlu0 %867
        %869 = vmax.xlane.f32.xlu0 %v842
        %v870 = vpop.xlane.xlu0 %869
        %871 = vmax.xlane.f32.xlu0 %v843
        %v872 = vpop.xlane.xlu0 %871
        %873 = vmax.xlane.f32.xlu0 %v844
        %v874 = vpop.xlane.xlu0 %873
        %875 = vmax.xlane.f32.xlu0 %v845
        %v876 = vpop.xlane.xlu0 %875
        %877 = vmax.xlane.f32.xlu0 %v846
        %v878 = vpop.xlane.xlu0 %877
        %v879 = vsub.f32 %v831, %v848
        %v880 = vsub.f32 %v832, %v850
        %v881 = vsub.f32 %v833, %v852
        %v882 = vsub.f32 %v834, %v854
        %v883 = vsub.f32 %v835, %v856
        %v884 = vsub.f32 %v836, %v858
        %v885 = vsub.f32 %v837, %v860
        %v886 = vsub.f32 %v838, %v862
        %v887 = vsub.f32 %v839, %v864
        %v888 = vsub.f32 %v840, %v866
        %v889 = vsub.f32 %v841, %v868
        %v890 = vsub.f32 %v842, %v870
        %v891 = vsub.f32 %v843, %v872
        %v892 = vsub.f32 %v844, %v874
        %v893 = vsub.f32 %v845, %v876
        %v894 = vsub.f32 %v846, %v878
        %v895 = vmul.f32 %v879, 1.442695
        %v896 = vpow.pop %v895
        %v897 = vmul.f32 %v880, 1.442695
        %v898 = vpow.pop %v897
        %v899 = vmul.f32 %v881, 1.442695
        %v900 = vpow.pop %v899
        %v901 = vmul.f32 %v882, 1.442695
        %v902 = vpow.pop %v901
        %v903 = vmul.f32 %v883, 1.442695
        %v904 = vpow.pop %v903
        %v905 = vmul.f32 %v884, 1.442695
        %v906 = vpow.pop %v905
        %v907 = vmul.f32 %v885, 1.442695
        %v908 = vpow.pop %v907
        %v909 = vmul.f32 %v886, 1.442695
        %v910 = vpow.pop %v909
        %v911 = vmul.f32 %v887, 1.442695
        %v912 = vpow.pop %v911
        %v913 = vmul.f32 %v888, 1.442695
        %v914 = vpow.pop %v913
        %v915 = vmul.f32 %v889, 1.442695
        %v916 = vpow.pop %v915
        %v917 = vmul.f32 %v890, 1.442695
        %v918 = vpow.pop %v917
        %v919 = vmul.f32 %v891, 1.442695
        %v920 = vpow.pop %v919
        %v921 = vmul.f32 %v892, 1.442695
        %v922 = vpow.pop %v921
        %v923 = vmul.f32 %v893, 1.442695
        %v924 = vpow.pop %v923
        %v925 = vmul.f32 %v894, 1.442695
        %v926 = vpow.pop %v925
        %927 = vadd.xlane.f32.xlu0 %v896
        %v928 = vpop.xlane.xlu0 %927
        %929 = vadd.xlane.f32.xlu0 %v898
        %v930 = vpop.xlane.xlu0 %929
        %931 = vadd.xlane.f32.xlu0 %v900
        %v932 = vpop.xlane.xlu0 %931
        %933 = vadd.xlane.f32.xlu0 %v902
        %v934 = vpop.xlane.xlu0 %933
        %935 = vadd.xlane.f32.xlu0 %v904
        %v936 = vpop.xlane.xlu0 %935
        %937 = vadd.xlane.f32.xlu0 %v906
        %v938 = vpop.xlane.xlu0 %937
        %939 = vadd.xlane.f32.xlu0 %v908
        %v940 = vpop.xlane.xlu0 %939
        %941 = vadd.xlane.f32.xlu0 %v910
        %v942 = vpop.xlane.xlu0 %941
        %943 = vadd.xlane.f32.xlu0 %v912
        %v944 = vpop.xlane.xlu0 %943
        %945 = vadd.xlane.f32.xlu0 %v914
        %v946 = vpop.xlane.xlu0 %945
        %947 = vadd.xlane.f32.xlu0 %v916
        %v948 = vpop.xlane.xlu0 %947
        %949 = vadd.xlane.f32.xlu0 %v918
        %v950 = vpop.xlane.xlu0 %949
        %951 = vadd.xlane.f32.xlu0 %v920
        %v952 = vpop.xlane.xlu0 %951
        %953 = vadd.xlane.f32.xlu0 %v922
        %v954 = vpop.xlane.xlu0 %953
        %955 = vadd.xlane.f32.xlu0 %v924
        %v956 = vpop.xlane.xlu0 %955
        %957 = vadd.xlane.f32.xlu0 %v926
        %v958 = vpop.xlane.xlu0 %957
        %v959 = vrcp.pop %v928
        %v960 = vrcp.pop %v930
        %v961 = vrcp.pop %v932
        %v962 = vrcp.pop %v934
        %v963 = vrcp.pop %v936
        %v964 = vrcp.pop %v938
        %v965 = vrcp.pop %v940
        %v966 = vrcp.pop %v942
        %v967 = vrcp.pop %v944
        %v968 = vrcp.pop %v946
        %v969 = vrcp.pop %v948
        %v970 = vrcp.pop %v950
        %v971 = vrcp.pop %v952
        %v972 = vrcp.pop %v954
        %v973 = vrcp.pop %v956
        %v974 = vrcp.pop %v958
        %v975 = vmul.f32 %v896, %v959
        %v976 = vmul.f32 %v898, %v960
        %v977 = vmul.f32 %v900, %v961
        %v978 = vmul.f32 %v902, %v962
        %v979 = vmul.f32 %v904, %v963
        %v980 = vmul.f32 %v906, %v964
        %v981 = vmul.f32 %v908, %v965
        %v982 = vmul.f32 %v910, %v966
        %v983 = vmul.f32 %v912, %v967
        %v984 = vmul.f32 %v914, %v968
        %v985 = vmul.f32 %v916, %v969
        %v986 = vmul.f32 %v918, %v970
        %v987 = vmul.f32 %v920, %v971
        %v988 = vmul.f32 %v922, %v972
        %v989 = vmul.f32 %v924, %v973
        %v990 = vmul.f32 %v926, %v974
        %v991 = vld [vmem:[%s7] sm:$0xf]
        %v992 = vld [vmem:[%s7 + $0x4] sm:$0xf]
        %v993 = vld [vmem:[%s7 + $0x8] sm:$0xf]
        %v994 = vld [vmem:[%s7 + $0xc] sm:$0xf]
        %v995 = vld [vmem:[%s8] sm:$0x1]
        %v997 = vperm.slane %v995, 0
        %v1003 = vunpack.c.l.b16 %v991
        %v1004 = vunpack.c.l.b16 %v992
        %v1005 = vunpack.c.l.b16 %v993
        %v1006 = vunpack.c.l.b16 %v994
        %v1007 = vpack.c.b16 %v1004, %v1003
        %v1008 = vpack.c.b16 %v1006, %v1005
        %1011 = vmatpush.bf16.msra.mxu0 0
        %1012 = vmatpush.bf16.msra.mxu0 0
        %1013 = vmatpush.bf16.msra.mxu0 0
        %1014 = vmatpush.bf16.msra.mxu0 0
        %1015 = vmatpush.bf16.msra.mxu0 0
        %1016 = vmatpush.bf16.msra.mxu0 0
        %1017 = vmatpush.bf16.msra.mxu0 %v1008
        %1018 = vmatpush.bf16.msra.mxu0 %v1007
        %1019 = vmatmul.bf16.gmra.mxu0 %v507
        %v1020 = vpop.f32.mrf.mxu0
        %v1021 = vadd.f32 %v997, %v1020
        %v1022 = vpop.f32.mrf.mxu0
        %v1023 = vadd.f32 %v997, %v1022
        %1024 = vmatmul.bf16.gmra.mxu0 %v510
        %v1025 = vpop.f32.mrf.mxu0
        %v1026 = vadd.f32 %v997, %v1025
        %v1027 = vpop.f32.mrf.mxu0
        %v1028 = vadd.f32 %v997, %v1027
        %1029 = vmatmul.bf16.gmra.mxu0 %v513
        %v1030 = vpop.f32.mrf.mxu0
        %v1031 = vadd.f32 %v997, %v1030
        %v1032 = vpop.f32.mrf.mxu0
        %v1033 = vadd.f32 %v997, %v1032
        %1034 = vmatmul.bf16.gmra.mxu0 %v516
        %v1035 = vpop.f32.mrf.mxu0
        %v1036 = vadd.f32 %v997, %v1035
        %v1037 = vpop.f32.mrf.mxu0
        %v1038 = vadd.f32 %v997, %v1037
        %1039 = vmatmul.bf16.gmra.mxu0 %v519
        %v1040 = vpop.f32.mrf.mxu0
        %v1041 = vadd.f32 %v997, %v1040
        %v1042 = vpop.f32.mrf.mxu0
        %v1043 = vadd.f32 %v997, %v1042
        %1044 = vmatmul.bf16.gmra.mxu0 %v522
        %v1045 = vpop.f32.mrf.mxu0
        %v1046 = vadd.f32 %v997, %v1045
        %v1047 = vpop.f32.mrf.mxu0
        %v1048 = vadd.f32 %v997, %v1047
        %1049 = vmatmul.bf16.gmra.mxu0 %v525
        %v1050 = vpop.f32.mrf.mxu0
        %v1051 = vadd.f32 %v997, %v1050
        %v1052 = vpop.f32.mrf.mxu0
        %v1053 = vadd.f32 %v997, %v1052
        %1054 = vmatmul.bf16.gmra.mxu0 %v528
        %v1055 = vpop.f32.mrf.mxu0
        %v1056 = vadd.f32 %v997, %v1055
        %v1057 = vpop.f32.mrf.mxu0
        %v1058 = vadd.f32 %v997, %v1057
        %1059 = vdwg.mxu0
        %vm1060 = vcmask 56320
        %v1061 = vsel %vm1060, %v1021, -inf
        %1062 = vmax.xlane.f32.xlu0 %v1061
        %v1063 = vpop.xlane.xlu0 %1062
        %v1064 = vsel %vm1060, %v1023, -inf
        %1065 = vmax.xlane.f32.xlu0 %v1064
        %v1066 = vpop.xlane.xlu0 %1065
        %v1067 = vsel %vm1060, %v1026, -inf
        %1068 = vmax.xlane.f32.xlu0 %v1067
        %v1069 = vpop.xlane.xlu0 %1068
        %v1070 = vsel %vm1060, %v1028, -inf
        %1071 = vmax.xlane.f32.xlu0 %v1070
        %v1072 = vpop.xlane.xlu0 %1071
        %v1073 = vsel %vm1060, %v1031, -inf
        %1074 = vmax.xlane.f32.xlu0 %v1073
        %v1075 = vpop.xlane.xlu0 %1074
        %v1076 = vsel %vm1060, %v1033, -inf
        %1077 = vmax.xlane.f32.xlu0 %v1076
        %v1078 = vpop.xlane.xlu0 %1077
        %v1079 = vsel %vm1060, %v1036, -inf
        %1080 = vmax.xlane.f32.xlu0 %v1079
        %v1081 = vpop.xlane.xlu0 %1080
        %v1082 = vsel %vm1060, %v1038, -inf
        %1083 = vmax.xlane.f32.xlu0 %v1082
        %v1084 = vpop.xlane.xlu0 %1083
        %v1085 = vsel %vm1060, %v1041, -inf
        %1086 = vmax.xlane.f32.xlu0 %v1085
        %v1087 = vpop.xlane.xlu0 %1086
        %v1088 = vsel %vm1060, %v1043, -inf
        %1089 = vmax.xlane.f32.xlu0 %v1088
        %v1090 = vpop.xlane.xlu0 %1089
        %v1091 = vsel %vm1060, %v1046, -inf
        %1092 = vmax.xlane.f32.xlu0 %v1091
        %v1093 = vpop.xlane.xlu0 %1092
        %v1094 = vsel %vm1060, %v1048, -inf
        %1095 = vmax.xlane.f32.xlu0 %v1094
        %v1096 = vpop.xlane.xlu0 %1095
        %v1097 = vsel %vm1060, %v1051, -inf
        %1098 = vmax.xlane.f32.xlu0 %v1097
        %v1099 = vpop.xlane.xlu0 %1098
        %v1100 = vsel %vm1060, %v1053, -inf
        %1101 = vmax.xlane.f32.xlu0 %v1100
        %v1102 = vpop.xlane.xlu0 %1101
        %v1103 = vsel %vm1060, %v1056, -inf
        %1104 = vmax.xlane.f32.xlu0 %v1103
        %v1105 = vpop.xlane.xlu0 %1104
        %v1106 = vsel %vm1060, %v1058, -inf
        %1107 = vmax.xlane.f32.xlu0 %v1106
        %v1108 = vpop.xlane.xlu0 %1107
        %v1109 = vsub.f32 %v1021, %v1063
        %v1110 = vsub.f32 %v1023, %v1066
        %v1111 = vsub.f32 %v1026, %v1069
        %v1112 = vsub.f32 %v1028, %v1072
        %v1113 = vsub.f32 %v1031, %v1075
        %v1114 = vsub.f32 %v1033, %v1078
        %v1115 = vsub.f32 %v1036, %v1081
        %v1116 = vsub.f32 %v1038, %v1084
        %v1117 = vsub.f32 %v1041, %v1087
        %v1118 = vsub.f32 %v1043, %v1090
        %v1119 = vsub.f32 %v1046, %v1093
        %v1120 = vsub.f32 %v1048, %v1096
        %v1121 = vsub.f32 %v1051, %v1099
        %v1122 = vsub.f32 %v1053, %v1102
        %v1123 = vsub.f32 %v1056, %v1105
        %v1124 = vsub.f32 %v1058, %v1108
        %v1125 = vmul.f32 %v1109, 1.442695
        %v1126 = vpow.pop %v1125
        %v1127 = vmul.f32 %v1110, 1.442695
        %v1128 = vpow.pop %v1127
        %v1129 = vmul.f32 %v1111, 1.442695
        %v1130 = vpow.pop %v1129
        %v1131 = vmul.f32 %v1112, 1.442695
        %v1132 = vpow.pop %v1131
        %v1133 = vmul.f32 %v1113, 1.442695
        %v1134 = vpow.pop %v1133
        %v1135 = vmul.f32 %v1114, 1.442695
        %v1136 = vpow.pop %v1135
        %v1137 = vmul.f32 %v1115, 1.442695
        %v1138 = vpow.pop %v1137
        %v1139 = vmul.f32 %v1116, 1.442695
        %v1140 = vpow.pop %v1139
        %v1141 = vmul.f32 %v1117, 1.442695
        %v1142 = vpow.pop %v1141
        %v1143 = vmul.f32 %v1118, 1.442695
        %v1144 = vpow.pop %v1143
        %v1145 = vmul.f32 %v1119, 1.442695
        %v1146 = vpow.pop %v1145
        %v1147 = vmul.f32 %v1120, 1.442695
        %v1148 = vpow.pop %v1147
        %v1149 = vmul.f32 %v1121, 1.442695
        %v1150 = vpow.pop %v1149
        %v1151 = vmul.f32 %v1122, 1.442695
        %v1152 = vpow.pop %v1151
        %v1153 = vmul.f32 %v1123, 1.442695
        %v1154 = vpow.pop %v1153
        %v1155 = vmul.f32 %v1124, 1.442695
        %v1156 = vpow.pop %v1155
        %v1157 = vsel %vm1060, %v1126, 0.0
        %1158 = vadd.xlane.f32.xlu0 %v1157
        %v1159 = vpop.xlane.xlu0 %1158
        %v1160 = vsel %vm1060, %v1128, 0.0
        %1161 = vadd.xlane.f32.xlu0 %v1160
        %v1162 = vpop.xlane.xlu0 %1161
        %v1163 = vsel %vm1060, %v1130, 0.0
        %1164 = vadd.xlane.f32.xlu0 %v1163
        %v1165 = vpop.xlane.xlu0 %1164
        %v1166 = vsel %vm1060, %v1132, 0.0
        %1167 = vadd.xlane.f32.xlu0 %v1166
        %v1168 = vpop.xlane.xlu0 %1167
        %v1169 = vsel %vm1060, %v1134, 0.0
        %1170 = vadd.xlane.f32.xlu0 %v1169
        %v1171 = vpop.xlane.xlu0 %1170
        %v1172 = vsel %vm1060, %v1136, 0.0
        %1173 = vadd.xlane.f32.xlu0 %v1172
        %v1174 = vpop.xlane.xlu0 %1173
        %v1175 = vsel %vm1060, %v1138, 0.0
        %1176 = vadd.xlane.f32.xlu0 %v1175
        %v1177 = vpop.xlane.xlu0 %1176
        %v1178 = vsel %vm1060, %v1140, 0.0
        %1179 = vadd.xlane.f32.xlu0 %v1178
        %v1180 = vpop.xlane.xlu0 %1179
        %v1181 = vsel %vm1060, %v1142, 0.0
        %1182 = vadd.xlane.f32.xlu0 %v1181
        %v1183 = vpop.xlane.xlu0 %1182
        %v1184 = vsel %vm1060, %v1144, 0.0
        %1185 = vadd.xlane.f32.xlu0 %v1184
        %v1186 = vpop.xlane.xlu0 %1185
        %v1187 = vsel %vm1060, %v1146, 0.0
        %1188 = vadd.xlane.f32.xlu0 %v1187
        %v1189 = vpop.xlane.xlu0 %1188
        %v1190 = vsel %vm1060, %v1148, 0.0
        %1191 = vadd.xlane.f32.xlu0 %v1190
        %v1192 = vpop.xlane.xlu0 %1191
        %v1193 = vsel %vm1060, %v1150, 0.0
        %1194 = vadd.xlane.f32.xlu0 %v1193
        %v1195 = vpop.xlane.xlu0 %1194
        %v1196 = vsel %vm1060, %v1152, 0.0
        %1197 = vadd.xlane.f32.xlu0 %v1196
        %v1198 = vpop.xlane.xlu0 %1197
        %v1199 = vsel %vm1060, %v1154, 0.0
        %1200 = vadd.xlane.f32.xlu0 %v1199
        %v1201 = vpop.xlane.xlu0 %1200
        %v1202 = vsel %vm1060, %v1156, 0.0
        %1203 = vadd.xlane.f32.xlu0 %v1202
        %v1204 = vpop.xlane.xlu0 %1203
        %v1205 = vrcp.pop %v1159
        %v1206 = vrcp.pop %v1162
        %v1207 = vrcp.pop %v1165
        %v1208 = vrcp.pop %v1168
        %v1209 = vrcp.pop %v1171
        %v1210 = vrcp.pop %v1174
        %v1211 = vrcp.pop %v1177
        %v1212 = vrcp.pop %v1180
        %v1213 = vrcp.pop %v1183
        %v1214 = vrcp.pop %v1186
        %v1215 = vrcp.pop %v1189
        %v1216 = vrcp.pop %v1192
        %v1217 = vrcp.pop %v1195
        %v1218 = vrcp.pop %v1198
        %v1219 = vrcp.pop %v1201
        %v1220 = vrcp.pop %v1204
        %v1221 = vmul.f32 %v1126, %v1205
        %v1222 = vmul.f32 %v1128, %v1206
        %v1223 = vmul.f32 %v1130, %v1207
        %v1224 = vmul.f32 %v1132, %v1208
        %v1225 = vmul.f32 %v1134, %v1209
        %v1226 = vmul.f32 %v1136, %v1210
        %v1227 = vmul.f32 %v1138, %v1211
        %v1228 = vmul.f32 %v1140, %v1212
        %v1229 = vmul.f32 %v1142, %v1213
        %v1230 = vmul.f32 %v1144, %v1214
        %v1231 = vmul.f32 %v1146, %v1215
        %v1232 = vmul.f32 %v1148, %v1216
        %v1233 = vmul.f32 %v1150, %v1217
        %v1234 = vmul.f32 %v1152, %v1218
        %v1235 = vmul.f32 %v1154, %v1219
        %v1236 = vmul.f32 %v1156, %v1220
        %1238 = vset.pattern.permute.xlu0 0
        %1239 = vperm.xlu0 %1238, %v1221
        %v1240 = vpop.permute.xlu0 %1239
        %1243 = vset.pattern.permute.xlu0 0
        %1244 = vperm.xlu0 %1243, %v1222
        %v1245 = vpop.permute.xlu0 %1244
        %1248 = vset.pattern.permute.xlu0 0
        %1249 = vperm.xlu0 %1248, %v1223
        %v1250 = vpop.permute.xlu0 %1249
        %1253 = vset.pattern.permute.xlu0 0
        %1254 = vperm.xlu0 %1253, %v1224
        %v1255 = vpop.permute.xlu0 %1254
        %1258 = vset.pattern.permute.xlu0 0
        %1259 = vperm.xlu0 %1258, %v1225
        %v1260 = vpop.permute.xlu0 %1259
        %1263 = vset.pattern.permute.xlu0 0
        %1264 = vperm.xlu0 %1263, %v1226
        %v1265 = vpop.permute.xlu0 %1264
        %1268 = vset.pattern.permute.xlu0 0
        %1269 = vperm.xlu0 %1268, %v1227
        %v1270 = vpop.permute.xlu0 %1269
        %1273 = vset.pattern.permute.xlu0 0
        %1274 = vperm.xlu0 %1273, %v1228
        %v1275 = vpop.permute.xlu0 %1274
        %1278 = vset.pattern.permute.xlu0 0
        %1279 = vperm.xlu0 %1278, %v1229
        %v1280 = vpop.permute.xlu0 %1279
        %1283 = vset.pattern.permute.xlu0 0
        %1284 = vperm.xlu0 %1283, %v1230
        %v1285 = vpop.permute.xlu0 %1284
        %1288 = vset.pattern.permute.xlu0 0
        %1289 = vperm.xlu0 %1288, %v1231
        %v1290 = vpop.permute.xlu0 %1289
        %1293 = vset.pattern.permute.xlu0 0
        %1294 = vperm.xlu0 %1293, %v1232
        %v1295 = vpop.permute.xlu0 %1294
        %1298 = vset.pattern.permute.xlu0 0
        %1299 = vperm.xlu0 %1298, %v1233
        %v1300 = vpop.permute.xlu0 %1299
        %1303 = vset.pattern.permute.xlu0 0
        %1304 = vperm.xlu0 %1303, %v1234
        %v1305 = vpop.permute.xlu0 %1304
        %1308 = vset.pattern.permute.xlu0 0
        %1309 = vperm.xlu0 %1308, %v1235
        %v1310 = vpop.permute.xlu0 %1309
        %1313 = vset.pattern.permute.xlu0 0
        %1314 = vperm.xlu0 %1313, %v1236
        %v1315 = vpop.permute.xlu0 %1314
        %v1317 = vmul.f32 %v1240, %v975
        %v1318 = vmul.f32 %v1245, %v976
        %v1319 = vmul.f32 %v1250, %v977
        %v1320 = vmul.f32 %v1255, %v978
        %v1321 = vmul.f32 %v1260, %v979
        %v1322 = vmul.f32 %v1265, %v980
        %v1323 = vmul.f32 %v1270, %v981
        %v1324 = vmul.f32 %v1275, %v982
        %v1325 = vmul.f32 %v1280, %v983
        %v1326 = vmul.f32 %v1285, %v984
        %v1327 = vmul.f32 %v1290, %v985
        %v1328 = vmul.f32 %v1295, %v986
        %v1329 = vmul.f32 %v1300, %v987
        %v1330 = vmul.f32 %v1305, %v988
        %v1331 = vmul.f32 %v1310, %v989
        %v1332 = vmul.f32 %v1315, %v990
        %1333 = vrot.lane.b32.xlu0 %v975, 127
        %v1334 = vpop.permute.xlu0 %1333
        %1335 = vrot.lane.b32.xlu0 %v976, 127
        %v1336 = vpop.permute.xlu0 %1335
        %1337 = vrot.lane.b32.xlu0 %v977, 127
        %v1338 = vpop.permute.xlu0 %1337
        %1339 = vrot.lane.b32.xlu0 %v978, 127
        %v1340 = vpop.permute.xlu0 %1339
        %1341 = vrot.lane.b32.xlu0 %v979, 127
        %v1342 = vpop.permute.xlu0 %1341
        %1343 = vrot.lane.b32.xlu0 %v980, 127
        %v1344 = vpop.permute.xlu0 %1343
        %1345 = vrot.lane.b32.xlu0 %v981, 127
        %v1346 = vpop.permute.xlu0 %1345
        %1347 = vrot.lane.b32.xlu0 %v982, 127
        %v1348 = vpop.permute.xlu0 %1347
        %1349 = vrot.lane.b32.xlu0 %v983, 127
        %v1350 = vpop.permute.xlu0 %1349
        %1351 = vrot.lane.b32.xlu0 %v984, 127
        %v1352 = vpop.permute.xlu0 %1351
        %1353 = vrot.lane.b32.xlu0 %v985, 127
        %v1354 = vpop.permute.xlu0 %1353
        %1355 = vrot.lane.b32.xlu0 %v986, 127
        %v1356 = vpop.permute.xlu0 %1355
        %1357 = vrot.lane.b32.xlu0 %v987, 127
        %v1358 = vpop.permute.xlu0 %1357
        %1359 = vrot.lane.b32.xlu0 %v988, 127
        %v1360 = vpop.permute.xlu0 %1359
        %1361 = vrot.lane.b32.xlu0 %v989, 127
        %v1362 = vpop.permute.xlu0 %1361
        %1363 = vrot.lane.b32.xlu0 %v990, 127
        %v1364 = vpop.permute.xlu0 %1363
        %vm1365 = vcmp.lt.s32.totalorder %v468, 127
        %v1366 = vsel %vm1365, %v1334, 0.0
        %v1367 = vsel %vm1365, %v1336, 0.0
        %v1368 = vsel %vm1365, %v1338, 0.0
        %v1369 = vsel %vm1365, %v1340, 0.0
        %v1370 = vsel %vm1365, %v1342, 0.0
        %v1371 = vsel %vm1365, %v1344, 0.0
        %v1372 = vsel %vm1365, %v1346, 0.0
        %v1373 = vsel %vm1365, %v1348, 0.0
        %v1374 = vsel %vm1365, %v1350, 0.0
        %v1375 = vsel %vm1365, %v1352, 0.0
        %v1376 = vsel %vm1365, %v1354, 0.0
        %v1377 = vsel %vm1365, %v1356, 0.0
        %v1378 = vsel %vm1365, %v1358, 0.0
        %v1379 = vsel %vm1365, %v1360, 0.0
        %v1380 = vsel %vm1365, %v1362, 0.0
        %v1381 = vsel %vm1365, %v1364, 0.0
        %1382 = vrot.lane.b32.xlu0 %v975, 1
        %v1383 = vpop.permute.xlu0 %1382
        %1384 = vrot.lane.b32.xlu0 %v976, 1
        %v1385 = vpop.permute.xlu0 %1384
        %1386 = vrot.lane.b32.xlu0 %v977, 1
        %v1387 = vpop.permute.xlu0 %1386
        %1388 = vrot.lane.b32.xlu0 %v978, 1
        %v1389 = vpop.permute.xlu0 %1388
        %1390 = vrot.lane.b32.xlu0 %v979, 1
        %v1391 = vpop.permute.xlu0 %1390
        %1392 = vrot.lane.b32.xlu0 %v980, 1
        %v1393 = vpop.permute.xlu0 %1392
        %1394 = vrot.lane.b32.xlu0 %v981, 1
        %v1395 = vpop.permute.xlu0 %1394
        %1396 = vrot.lane.b32.xlu0 %v982, 1
        %v1397 = vpop.permute.xlu0 %1396
        %1398 = vrot.lane.b32.xlu0 %v983, 1
        %v1399 = vpop.permute.xlu0 %1398
        %1400 = vrot.lane.b32.xlu0 %v984, 1
        %v1401 = vpop.permute.xlu0 %1400
        %1402 = vrot.lane.b32.xlu0 %v985, 1
        %v1403 = vpop.permute.xlu0 %1402
        %1404 = vrot.lane.b32.xlu0 %v986, 1
        %v1405 = vpop.permute.xlu0 %1404
        %1406 = vrot.lane.b32.xlu0 %v987, 1
        %v1407 = vpop.permute.xlu0 %1406
        %1408 = vrot.lane.b32.xlu0 %v988, 1
        %v1409 = vpop.permute.xlu0 %1408
        %1410 = vrot.lane.b32.xlu0 %v989, 1
        %v1411 = vpop.permute.xlu0 %1410
        %1412 = vrot.lane.b32.xlu0 %v990, 1
        %v1413 = vpop.permute.xlu0 %1412
        %vm1414 = vcmp.ge.s32.totalorder %v468, 1
        %v1415 = vsel %vm1414, %v1383, 0.0
        %v1416 = vsel %vm1414, %v1385, 0.0
        %v1417 = vsel %vm1414, %v1387, 0.0
        %v1418 = vsel %vm1414, %v1389, 0.0
        %v1419 = vsel %vm1414, %v1391, 0.0
        %v1420 = vsel %vm1414, %v1393, 0.0
        %v1421 = vsel %vm1414, %v1395, 0.0
        %v1422 = vsel %vm1414, %v1397, 0.0
        %v1423 = vsel %vm1414, %v1399, 0.0
        %v1424 = vsel %vm1414, %v1401, 0.0
        %v1425 = vsel %vm1414, %v1403, 0.0
        %v1426 = vsel %vm1414, %v1405, 0.0
        %v1427 = vsel %vm1414, %v1407, 0.0
        %v1428 = vsel %vm1414, %v1409, 0.0
        %v1429 = vsel %vm1414, %v1411, 0.0
        %v1430 = vsel %vm1414, %v1413, 0.0
        %1431 = vset.pattern.permute.xlu0 1
        %1432 = vperm.xlu0 %1431, %v1221
        %v1433 = vpop.permute.xlu0 %1432
        %1435 = vset.pattern.permute.xlu0 1
        %1436 = vperm.xlu0 %1435, %v1222
        %v1437 = vpop.permute.xlu0 %1436
        %1439 = vset.pattern.permute.xlu0 1
        %1440 = vperm.xlu0 %1439, %v1223
        %v1441 = vpop.permute.xlu0 %1440
        %1443 = vset.pattern.permute.xlu0 1
        %1444 = vperm.xlu0 %1443, %v1224
        %v1445 = vpop.permute.xlu0 %1444
        %1447 = vset.pattern.permute.xlu0 1
        %1448 = vperm.xlu0 %1447, %v1225
        %v1449 = vpop.permute.xlu0 %1448
        %1451 = vset.pattern.permute.xlu0 1
        %1452 = vperm.xlu0 %1451, %v1226
        %v1453 = vpop.permute.xlu0 %1452
        %1455 = vset.pattern.permute.xlu0 1
        %1456 = vperm.xlu0 %1455, %v1227
        %v1457 = vpop.permute.xlu0 %1456
        %1459 = vset.pattern.permute.xlu0 1
        %1460 = vperm.xlu0 %1459, %v1228
        %v1461 = vpop.permute.xlu0 %1460
        %1463 = vset.pattern.permute.xlu0 1
        %1464 = vperm.xlu0 %1463, %v1229
        %v1465 = vpop.permute.xlu0 %1464
        %1467 = vset.pattern.permute.xlu0 1
        %1468 = vperm.xlu0 %1467, %v1230
        %v1469 = vpop.permute.xlu0 %1468
        %1471 = vset.pattern.permute.xlu0 1
        %1472 = vperm.xlu0 %1471, %v1231
        %v1473 = vpop.permute.xlu0 %1472
        %1475 = vset.pattern.permute.xlu0 1
        %1476 = vperm.xlu0 %1475, %v1232
        %v1477 = vpop.permute.xlu0 %1476
        %1479 = vset.pattern.permute.xlu0 1
        %1480 = vperm.xlu0 %1479, %v1233
        %v1481 = vpop.permute.xlu0 %1480
        %1483 = vset.pattern.permute.xlu0 1
        %1484 = vperm.xlu0 %1483, %v1234
        %v1485 = vpop.permute.xlu0 %1484
        %1487 = vset.pattern.permute.xlu0 1
        %1488 = vperm.xlu0 %1487, %v1235
        %v1489 = vpop.permute.xlu0 %1488
        %1491 = vset.pattern.permute.xlu0 1
        %1492 = vperm.xlu0 %1491, %v1236
        %v1493 = vpop.permute.xlu0 %1492
        %v1495 = vmul.f32 %v1433, %v1366
        %v1496 = vmul.f32 %v1437, %v1367
        %v1497 = vmul.f32 %v1441, %v1368
        %v1498 = vmul.f32 %v1445, %v1369
        %v1499 = vmul.f32 %v1449, %v1370
        %v1500 = vmul.f32 %v1453, %v1371
        %v1501 = vmul.f32 %v1457, %v1372
        %v1502 = vmul.f32 %v1461, %v1373
        %v1503 = vmul.f32 %v1465, %v1374
        %v1504 = vmul.f32 %v1469, %v1375
        %v1505 = vmul.f32 %v1473, %v1376
        %v1506 = vmul.f32 %v1477, %v1377
        %v1507 = vmul.f32 %v1481, %v1378
        %v1508 = vmul.f32 %v1485, %v1379
        %v1509 = vmul.f32 %v1489, %v1380
        %v1510 = vmul.f32 %v1493, %v1381
        %v1511 = vadd.f32 %v1317, %v1495
        %v1512 = vadd.f32 %v1318, %v1496
        %v1513 = vadd.f32 %v1319, %v1497
        %v1514 = vadd.f32 %v1320, %v1498
        %v1515 = vadd.f32 %v1321, %v1499
        %v1516 = vadd.f32 %v1322, %v1500
        %v1517 = vadd.f32 %v1323, %v1501
        %v1518 = vadd.f32 %v1324, %v1502
        %v1519 = vadd.f32 %v1325, %v1503
        %v1520 = vadd.f32 %v1326, %v1504
        %v1521 = vadd.f32 %v1327, %v1505
        %v1522 = vadd.f32 %v1328, %v1506
        %v1523 = vadd.f32 %v1329, %v1507
        %v1524 = vadd.f32 %v1330, %v1508
        %v1525 = vadd.f32 %v1331, %v1509
        %v1526 = vadd.f32 %v1332, %v1510
        %1527 = vset.pattern.permute.xlu0 2
        %1528 = vperm.xlu0 %1527, %v1221
        %v1529 = vpop.permute.xlu0 %1528
        %1531 = vset.pattern.permute.xlu0 2
        %1532 = vperm.xlu0 %1531, %v1222
        %v1533 = vpop.permute.xlu0 %1532
        %1535 = vset.pattern.permute.xlu0 2
        %1536 = vperm.xlu0 %1535, %v1223
        %v1537 = vpop.permute.xlu0 %1536
        %1539 = vset.pattern.permute.xlu0 2
        %1540 = vperm.xlu0 %1539, %v1224
        %v1541 = vpop.permute.xlu0 %1540
        %1543 = vset.pattern.permute.xlu0 2
        %1544 = vperm.xlu0 %1543, %v1225
        %v1545 = vpop.permute.xlu0 %1544
        %1547 = vset.pattern.permute.xlu0 2
        %1548 = vperm.xlu0 %1547, %v1226
        %v1549 = vpop.permute.xlu0 %1548
        %1551 = vset.pattern.permute.xlu0 2
        %1552 = vperm.xlu0 %1551, %v1227
        %v1553 = vpop.permute.xlu0 %1552
        %1555 = vset.pattern.permute.xlu0 2
        %1556 = vperm.xlu0 %1555, %v1228
        %v1557 = vpop.permute.xlu0 %1556
        %1559 = vset.pattern.permute.xlu0 2
        %1560 = vperm.xlu0 %1559, %v1229
        %v1561 = vpop.permute.xlu0 %1560
        %1563 = vset.pattern.permute.xlu0 2
        %1564 = vperm.xlu0 %1563, %v1230
        %v1565 = vpop.permute.xlu0 %1564
        %1567 = vset.pattern.permute.xlu0 2
        %1568 = vperm.xlu0 %1567, %v1231
        %v1569 = vpop.permute.xlu0 %1568
        %1571 = vset.pattern.permute.xlu0 2
        %1572 = vperm.xlu0 %1571, %v1232
        %v1573 = vpop.permute.xlu0 %1572
        %1575 = vset.pattern.permute.xlu0 2
        %1576 = vperm.xlu0 %1575, %v1233
        %v1577 = vpop.permute.xlu0 %1576
        %1579 = vset.pattern.permute.xlu0 2
        %1580 = vperm.xlu0 %1579, %v1234
        %v1581 = vpop.permute.xlu0 %1580
        %1583 = vset.pattern.permute.xlu0 2
        %1584 = vperm.xlu0 %1583, %v1235
        %v1585 = vpop.permute.xlu0 %1584
        %1587 = vset.pattern.permute.xlu0 2
        %1588 = vperm.xlu0 %1587, %v1236
        %v1589 = vpop.permute.xlu0 %1588
        %v1591 = vmul.f32 %v1529, %v1415
        %v1592 = vmul.f32 %v1533, %v1416
        %v1593 = vmul.f32 %v1537, %v1417
        %v1594 = vmul.f32 %v1541, %v1418
        %v1595 = vmul.f32 %v1545, %v1419
        %v1596 = vmul.f32 %v1549, %v1420
        %v1597 = vmul.f32 %v1553, %v1421
        %v1598 = vmul.f32 %v1557, %v1422
        %v1599 = vmul.f32 %v1561, %v1423
        %v1600 = vmul.f32 %v1565, %v1424
        %v1601 = vmul.f32 %v1569, %v1425
        %v1602 = vmul.f32 %v1573, %v1426
        %v1603 = vmul.f32 %v1577, %v1427
        %v1604 = vmul.f32 %v1581, %v1428
        %v1605 = vmul.f32 %v1585, %v1429
        %v1606 = vmul.f32 %v1589, %v1430
        %v1607 = vadd.f32 %v1511, %v1591
        %v1608 = vadd.f32 %v1512, %v1592
        %v1609 = vadd.f32 %v1513, %v1593
        %v1610 = vadd.f32 %v1514, %v1594
        %v1611 = vadd.f32 %v1515, %v1595
        %v1612 = vadd.f32 %v1516, %v1596
        %v1613 = vadd.f32 %v1517, %v1597
        %v1614 = vadd.f32 %v1518, %v1598
        %v1615 = vadd.f32 %v1519, %v1599
        %v1616 = vadd.f32 %v1520, %v1600
        %v1617 = vadd.f32 %v1521, %v1601
        %v1618 = vadd.f32 %v1522, %v1602
        %v1619 = vadd.f32 %v1523, %v1603
        %v1620 = vadd.f32 %v1524, %v1604
        %v1621 = vadd.f32 %v1525, %v1605
        %v1622 = vadd.f32 %v1526, %v1606
        %1623 = vrot.lane.b32.xlu0 %v975, 126
        %v1624 = vpop.permute.xlu0 %1623
        %1625 = vrot.lane.b32.xlu0 %v976, 126
        %v1626 = vpop.permute.xlu0 %1625
        %1627 = vrot.lane.b32.xlu0 %v977, 126
        %v1628 = vpop.permute.xlu0 %1627
        %1629 = vrot.lane.b32.xlu0 %v978, 126
        %v1630 = vpop.permute.xlu0 %1629
        %1631 = vrot.lane.b32.xlu0 %v979, 126
        %v1632 = vpop.permute.xlu0 %1631
        %1633 = vrot.lane.b32.xlu0 %v980, 126
        %v1634 = vpop.permute.xlu0 %1633
        %1635 = vrot.lane.b32.xlu0 %v981, 126
        %v1636 = vpop.permute.xlu0 %1635
        %1637 = vrot.lane.b32.xlu0 %v982, 126
        %v1638 = vpop.permute.xlu0 %1637
        %1639 = vrot.lane.b32.xlu0 %v983, 126
        %v1640 = vpop.permute.xlu0 %1639
        %1641 = vrot.lane.b32.xlu0 %v984, 126
        %v1642 = vpop.permute.xlu0 %1641
        %1643 = vrot.lane.b32.xlu0 %v985, 126
        %v1644 = vpop.permute.xlu0 %1643
        %1645 = vrot.lane.b32.xlu0 %v986, 126
        %v1646 = vpop.permute.xlu0 %1645
        %1647 = vrot.lane.b32.xlu0 %v987, 126
        %v1648 = vpop.permute.xlu0 %1647
        %1649 = vrot.lane.b32.xlu0 %v988, 126
        %v1650 = vpop.permute.xlu0 %1649
        %1651 = vrot.lane.b32.xlu0 %v989, 126
        %v1652 = vpop.permute.xlu0 %1651
        %1653 = vrot.lane.b32.xlu0 %v990, 126
        %v1654 = vpop.permute.xlu0 %1653
        %vm1655 = vcmp.lt.s32.totalorder %v468, 126
        %v1656 = vsel %vm1655, %v1624, 0.0
        %v1657 = vsel %vm1655, %v1626, 0.0
        %v1658 = vsel %vm1655, %v1628, 0.0
        %v1659 = vsel %vm1655, %v1630, 0.0
        %v1660 = vsel %vm1655, %v1632, 0.0
        %v1661 = vsel %vm1655, %v1634, 0.0
        %v1662 = vsel %vm1655, %v1636, 0.0
        %v1663 = vsel %vm1655, %v1638, 0.0
        %v1664 = vsel %vm1655, %v1640, 0.0
        %v1665 = vsel %vm1655, %v1642, 0.0
        %v1666 = vsel %vm1655, %v1644, 0.0
        %v1667 = vsel %vm1655, %v1646, 0.0
        %v1668 = vsel %vm1655, %v1648, 0.0
        %v1669 = vsel %vm1655, %v1650, 0.0
        %v1670 = vsel %vm1655, %v1652, 0.0
        %v1671 = vsel %vm1655, %v1654, 0.0
        %1672 = vrot.lane.b32.xlu0 %v975, 2
        %v1673 = vpop.permute.xlu0 %1672
        %1674 = vrot.lane.b32.xlu0 %v976, 2
        %v1675 = vpop.permute.xlu0 %1674
        %1676 = vrot.lane.b32.xlu0 %v977, 2
        %v1677 = vpop.permute.xlu0 %1676
        %1678 = vrot.lane.b32.xlu0 %v978, 2
        %v1679 = vpop.permute.xlu0 %1678
        %1680 = vrot.lane.b32.xlu0 %v979, 2
        %v1681 = vpop.permute.xlu0 %1680
        %1682 = vrot.lane.b32.xlu0 %v980, 2
        %v1683 = vpop.permute.xlu0 %1682
        %1684 = vrot.lane.b32.xlu0 %v981, 2
        %v1685 = vpop.permute.xlu0 %1684
        %1686 = vrot.lane.b32.xlu0 %v982, 2
        %v1687 = vpop.permute.xlu0 %1686
        %1688 = vrot.lane.b32.xlu0 %v983, 2
        %v1689 = vpop.permute.xlu0 %1688
        %1690 = vrot.lane.b32.xlu0 %v984, 2
        %v1691 = vpop.permute.xlu0 %1690
        %1692 = vrot.lane.b32.xlu0 %v985, 2
        %v1693 = vpop.permute.xlu0 %1692
        %1694 = vrot.lane.b32.xlu0 %v986, 2
        %v1695 = vpop.permute.xlu0 %1694
        %1696 = vrot.lane.b32.xlu0 %v987, 2
        %v1697 = vpop.permute.xlu0 %1696
        %1698 = vrot.lane.b32.xlu0 %v988, 2
        %v1699 = vpop.permute.xlu0 %1698
        %1700 = vrot.lane.b32.xlu0 %v989, 2
        %v1701 = vpop.permute.xlu0 %1700
        %1702 = vrot.lane.b32.xlu0 %v990, 2
        %v1703 = vpop.permute.xlu0 %1702
        %vm1704 = vcmp.ge.s32.totalorder %v468, 2
        %v1705 = vsel %vm1704, %v1673, 0.0
        %v1706 = vsel %vm1704, %v1675, 0.0
        %v1707 = vsel %vm1704, %v1677, 0.0
        %v1708 = vsel %vm1704, %v1679, 0.0
        %v1709 = vsel %vm1704, %v1681, 0.0
        %v1710 = vsel %vm1704, %v1683, 0.0
        %v1711 = vsel %vm1704, %v1685, 0.0
        %v1712 = vsel %vm1704, %v1687, 0.0
        %v1713 = vsel %vm1704, %v1689, 0.0
        %v1714 = vsel %vm1704, %v1691, 0.0
        %v1715 = vsel %vm1704, %v1693, 0.0
        %v1716 = vsel %vm1704, %v1695, 0.0
        %v1717 = vsel %vm1704, %v1697, 0.0
        %v1718 = vsel %vm1704, %v1699, 0.0
        %v1719 = vsel %vm1704, %v1701, 0.0
        %v1720 = vsel %vm1704, %v1703, 0.0
        %1721 = vset.pattern.permute.xlu0 3
        %1722 = vperm.xlu0 %1721, %v1221
        %v1723 = vpop.permute.xlu0 %1722
        %1725 = vset.pattern.permute.xlu0 3
        %1726 = vperm.xlu0 %1725, %v1222
        %v1727 = vpop.permute.xlu0 %1726
        %1729 = vset.pattern.permute.xlu0 3
        %1730 = vperm.xlu0 %1729, %v1223
        %v1731 = vpop.permute.xlu0 %1730
        %1733 = vset.pattern.permute.xlu0 3
        %1734 = vperm.xlu0 %1733, %v1224
        %v1735 = vpop.permute.xlu0 %1734
        %1737 = vset.pattern.permute.xlu0 3
        %1738 = vperm.xlu0 %1737, %v1225
        %v1739 = vpop.permute.xlu0 %1738
        %1741 = vset.pattern.permute.xlu0 3
        %1742 = vperm.xlu0 %1741, %v1226
        %v1743 = vpop.permute.xlu0 %1742
        %1745 = vset.pattern.permute.xlu0 3
        %1746 = vperm.xlu0 %1745, %v1227
        %v1747 = vpop.permute.xlu0 %1746
        %1749 = vset.pattern.permute.xlu0 3
        %1750 = vperm.xlu0 %1749, %v1228
        %v1751 = vpop.permute.xlu0 %1750
        %1753 = vset.pattern.permute.xlu0 3
        %1754 = vperm.xlu0 %1753, %v1229
        %v1755 = vpop.permute.xlu0 %1754
        %1757 = vset.pattern.permute.xlu0 3
        %1758 = vperm.xlu0 %1757, %v1230
        %v1759 = vpop.permute.xlu0 %1758
        %1761 = vset.pattern.permute.xlu0 3
        %1762 = vperm.xlu0 %1761, %v1231
        %v1763 = vpop.permute.xlu0 %1762
        %1765 = vset.pattern.permute.xlu0 3
        %1766 = vperm.xlu0 %1765, %v1232
        %v1767 = vpop.permute.xlu0 %1766
        %1769 = vset.pattern.permute.xlu0 3
        %1770 = vperm.xlu0 %1769, %v1233
        %v1771 = vpop.permute.xlu0 %1770
        %1773 = vset.pattern.permute.xlu0 3
        %1774 = vperm.xlu0 %1773, %v1234
        %v1775 = vpop.permute.xlu0 %1774
        %1777 = vset.pattern.permute.xlu0 3
        %1778 = vperm.xlu0 %1777, %v1235
        %v1779 = vpop.permute.xlu0 %1778
        %1781 = vset.pattern.permute.xlu0 3
        %1782 = vperm.xlu0 %1781, %v1236
        %v1783 = vpop.permute.xlu0 %1782
        %v1785 = vmul.f32 %v1723, %v1656
        %v1786 = vmul.f32 %v1727, %v1657
        %v1787 = vmul.f32 %v1731, %v1658
        %v1788 = vmul.f32 %v1735, %v1659
        %v1789 = vmul.f32 %v1739, %v1660
        %v1790 = vmul.f32 %v1743, %v1661
        %v1791 = vmul.f32 %v1747, %v1662
        %v1792 = vmul.f32 %v1751, %v1663
        %v1793 = vmul.f32 %v1755, %v1664
        %v1794 = vmul.f32 %v1759, %v1665
        %v1795 = vmul.f32 %v1763, %v1666
        %v1796 = vmul.f32 %v1767, %v1667
        %v1797 = vmul.f32 %v1771, %v1668
        %v1798 = vmul.f32 %v1775, %v1669
        %v1799 = vmul.f32 %v1779, %v1670
        %v1800 = vmul.f32 %v1783, %v1671
        %v1801 = vadd.f32 %v1607, %v1785
        %v1802 = vadd.f32 %v1608, %v1786
        %v1803 = vadd.f32 %v1609, %v1787
        %v1804 = vadd.f32 %v1610, %v1788
        %v1805 = vadd.f32 %v1611, %v1789
        %v1806 = vadd.f32 %v1612, %v1790
        %v1807 = vadd.f32 %v1613, %v1791
        %v1808 = vadd.f32 %v1614, %v1792
        %v1809 = vadd.f32 %v1615, %v1793
        %v1810 = vadd.f32 %v1616, %v1794
        %v1811 = vadd.f32 %v1617, %v1795
        %v1812 = vadd.f32 %v1618, %v1796
        %v1813 = vadd.f32 %v1619, %v1797
        %v1814 = vadd.f32 %v1620, %v1798
        %v1815 = vadd.f32 %v1621, %v1799
        %v1816 = vadd.f32 %v1622, %v1800
        %1817 = vset.pattern.permute.xlu0 4
        %1818 = vperm.xlu0 %1817, %v1221
        %v1819 = vpop.permute.xlu0 %1818
        %1821 = vset.pattern.permute.xlu0 4
        %1822 = vperm.xlu0 %1821, %v1222
        %v1823 = vpop.permute.xlu0 %1822
        %1825 = vset.pattern.permute.xlu0 4
        %1826 = vperm.xlu0 %1825, %v1223
        %v1827 = vpop.permute.xlu0 %1826
        %1829 = vset.pattern.permute.xlu0 4
        %1830 = vperm.xlu0 %1829, %v1224
        %v1831 = vpop.permute.xlu0 %1830
        %1833 = vset.pattern.permute.xlu0 4
        %1834 = vperm.xlu0 %1833, %v1225
        %v1835 = vpop.permute.xlu0 %1834
        %1837 = vset.pattern.permute.xlu0 4
        %1838 = vperm.xlu0 %1837, %v1226
        %v1839 = vpop.permute.xlu0 %1838
        %1841 = vset.pattern.permute.xlu0 4
        %1842 = vperm.xlu0 %1841, %v1227
        %v1843 = vpop.permute.xlu0 %1842
        %1845 = vset.pattern.permute.xlu0 4
        %1846 = vperm.xlu0 %1845, %v1228
        %v1847 = vpop.permute.xlu0 %1846
        %1849 = vset.pattern.permute.xlu0 4
        %1850 = vperm.xlu0 %1849, %v1229
        %v1851 = vpop.permute.xlu0 %1850
        %1853 = vset.pattern.permute.xlu0 4
        %1854 = vperm.xlu0 %1853, %v1230
        %v1855 = vpop.permute.xlu0 %1854
        %1857 = vset.pattern.permute.xlu0 4
        %1858 = vperm.xlu0 %1857, %v1231
        %v1859 = vpop.permute.xlu0 %1858
        %1861 = vset.pattern.permute.xlu0 4
        %1862 = vperm.xlu0 %1861, %v1232
        %v1863 = vpop.permute.xlu0 %1862
        %1865 = vset.pattern.permute.xlu0 4
        %1866 = vperm.xlu0 %1865, %v1233
        %v1867 = vpop.permute.xlu0 %1866
        %1869 = vset.pattern.permute.xlu0 4
        %1870 = vperm.xlu0 %1869, %v1234
        %v1871 = vpop.permute.xlu0 %1870
        %1873 = vset.pattern.permute.xlu0 4
        %1874 = vperm.xlu0 %1873, %v1235
        %v1875 = vpop.permute.xlu0 %1874
        %1877 = vset.pattern.permute.xlu0 4
        %1878 = vperm.xlu0 %1877, %v1236
        %v1879 = vpop.permute.xlu0 %1878
        %v1881 = vmul.f32 %v1819, %v1705
        %v1882 = vmul.f32 %v1823, %v1706
        %v1883 = vmul.f32 %v1827, %v1707
        %v1884 = vmul.f32 %v1831, %v1708
        %v1885 = vmul.f32 %v1835, %v1709
        %v1886 = vmul.f32 %v1839, %v1710
        %v1887 = vmul.f32 %v1843, %v1711
        %v1888 = vmul.f32 %v1847, %v1712
        %v1889 = vmul.f32 %v1851, %v1713
        %v1890 = vmul.f32 %v1855, %v1714
        %v1891 = vmul.f32 %v1859, %v1715
        %v1892 = vmul.f32 %v1863, %v1716
        %v1893 = vmul.f32 %v1867, %v1717
        %v1894 = vmul.f32 %v1871, %v1718
        %v1895 = vmul.f32 %v1875, %v1719
        %v1896 = vmul.f32 %v1879, %v1720
        %v1897 = vadd.f32 %v1801, %v1881
        %v1898 = vadd.f32 %v1802, %v1882
        %v1899 = vadd.f32 %v1803, %v1883
        %v1900 = vadd.f32 %v1804, %v1884
        %v1901 = vadd.f32 %v1805, %v1885
        %v1902 = vadd.f32 %v1806, %v1886
        %v1903 = vadd.f32 %v1807, %v1887
        %v1904 = vadd.f32 %v1808, %v1888
        %v1905 = vadd.f32 %v1809, %v1889
        %v1906 = vadd.f32 %v1810, %v1890
        %v1907 = vadd.f32 %v1811, %v1891
        %v1908 = vadd.f32 %v1812, %v1892
        %v1909 = vadd.f32 %v1813, %v1893
        %v1910 = vadd.f32 %v1814, %v1894
        %v1911 = vadd.f32 %v1815, %v1895
        %v1912 = vadd.f32 %v1816, %v1896
        %1913 = vrot.lane.b32.xlu0 %v975, 125
        %v1914 = vpop.permute.xlu0 %1913
        %1915 = vrot.lane.b32.xlu0 %v976, 125
        %v1916 = vpop.permute.xlu0 %1915
        %1917 = vrot.lane.b32.xlu0 %v977, 125
        %v1918 = vpop.permute.xlu0 %1917
        %1919 = vrot.lane.b32.xlu0 %v978, 125
        %v1920 = vpop.permute.xlu0 %1919
        %1921 = vrot.lane.b32.xlu0 %v979, 125
        %v1922 = vpop.permute.xlu0 %1921
        %1923 = vrot.lane.b32.xlu0 %v980, 125
        %v1924 = vpop.permute.xlu0 %1923
        %1925 = vrot.lane.b32.xlu0 %v981, 125
        %v1926 = vpop.permute.xlu0 %1925
        %1927 = vrot.lane.b32.xlu0 %v982, 125
        %v1928 = vpop.permute.xlu0 %1927
        %1929 = vrot.lane.b32.xlu0 %v983, 125
        %v1930 = vpop.permute.xlu0 %1929
        %1931 = vrot.lane.b32.xlu0 %v984, 125
        %v1932 = vpop.permute.xlu0 %1931
        %1933 = vrot.lane.b32.xlu0 %v985, 125
        %v1934 = vpop.permute.xlu0 %1933
        %1935 = vrot.lane.b32.xlu0 %v986, 125
        %v1936 = vpop.permute.xlu0 %1935
        %1937 = vrot.lane.b32.xlu0 %v987, 125
        %v1938 = vpop.permute.xlu0 %1937
        %1939 = vrot.lane.b32.xlu0 %v988, 125
        %v1940 = vpop.permute.xlu0 %1939
        %1941 = vrot.lane.b32.xlu0 %v989, 125
        %v1942 = vpop.permute.xlu0 %1941
        %1943 = vrot.lane.b32.xlu0 %v990, 125
        %v1944 = vpop.permute.xlu0 %1943
        %vm1945 = vcmp.lt.s32.totalorder %v468, 125
        %v1946 = vsel %vm1945, %v1914, 0.0
        %v1947 = vsel %vm1945, %v1916, 0.0
        %v1948 = vsel %vm1945, %v1918, 0.0
        %v1949 = vsel %vm1945, %v1920, 0.0
        %v1950 = vsel %vm1945, %v1922, 0.0
        %v1951 = vsel %vm1945, %v1924, 0.0
        %v1952 = vsel %vm1945, %v1926, 0.0
        %v1953 = vsel %vm1945, %v1928, 0.0
        %v1954 = vsel %vm1945, %v1930, 0.0
        %v1955 = vsel %vm1945, %v1932, 0.0
        %v1956 = vsel %vm1945, %v1934, 0.0
        %v1957 = vsel %vm1945, %v1936, 0.0
        %v1958 = vsel %vm1945, %v1938, 0.0
        %v1959 = vsel %vm1945, %v1940, 0.0
        %v1960 = vsel %vm1945, %v1942, 0.0
        %v1961 = vsel %vm1945, %v1944, 0.0
        %1962 = vrot.lane.b32.xlu0 %v975, 3
        %v1963 = vpop.permute.xlu0 %1962
        %1964 = vrot.lane.b32.xlu0 %v976, 3
        %v1965 = vpop.permute.xlu0 %1964
        %1966 = vrot.lane.b32.xlu0 %v977, 3
        %v1967 = vpop.permute.xlu0 %1966
        %1968 = vrot.lane.b32.xlu0 %v978, 3
        %v1969 = vpop.permute.xlu0 %1968
        %1970 = vrot.lane.b32.xlu0 %v979, 3
        %v1971 = vpop.permute.xlu0 %1970
        %1972 = vrot.lane.b32.xlu0 %v980, 3
        %v1973 = vpop.permute.xlu0 %1972
        %1974 = vrot.lane.b32.xlu0 %v981, 3
        %v1975 = vpop.permute.xlu0 %1974
        %1976 = vrot.lane.b32.xlu0 %v982, 3
        %v1977 = vpop.permute.xlu0 %1976
        %1978 = vrot.lane.b32.xlu0 %v983, 3
        %v1979 = vpop.permute.xlu0 %1978
        %1980 = vrot.lane.b32.xlu0 %v984, 3
        %v1981 = vpop.permute.xlu0 %1980
        %1982 = vrot.lane.b32.xlu0 %v985, 3
        %v1983 = vpop.permute.xlu0 %1982
        %1984 = vrot.lane.b32.xlu0 %v986, 3
        %v1985 = vpop.permute.xlu0 %1984
        %1986 = vrot.lane.b32.xlu0 %v987, 3
        %v1987 = vpop.permute.xlu0 %1986
        %1988 = vrot.lane.b32.xlu0 %v988, 3
        %v1989 = vpop.permute.xlu0 %1988
        %1990 = vrot.lane.b32.xlu0 %v989, 3
        %v1991 = vpop.permute.xlu0 %1990
        %1992 = vrot.lane.b32.xlu0 %v990, 3
        %v1993 = vpop.permute.xlu0 %1992
        %vm1994 = vcmp.ge.s32.totalorder %v468, 3
        %v1995 = vsel %vm1994, %v1963, 0.0
        %v1996 = vsel %vm1994, %v1965, 0.0
        %v1997 = vsel %vm1994, %v1967, 0.0
        %v1998 = vsel %vm1994, %v1969, 0.0
        %v1999 = vsel %vm1994, %v1971, 0.0
        %v2000 = vsel %vm1994, %v1973, 0.0
        %v2001 = vsel %vm1994, %v1975, 0.0
        %v2002 = vsel %vm1994, %v1977, 0.0
        %v2003 = vsel %vm1994, %v1979, 0.0
        %v2004 = vsel %vm1994, %v1981, 0.0
        %v2005 = vsel %vm1994, %v1983, 0.0
        %v2006 = vsel %vm1994, %v1985, 0.0
        %v2007 = vsel %vm1994, %v1987, 0.0
        %v2008 = vsel %vm1994, %v1989, 0.0
        %v2009 = vsel %vm1994, %v1991, 0.0
        %v2010 = vsel %vm1994, %v1993, 0.0
        %2011 = vset.pattern.permute.xlu0 5
        %2012 = vperm.xlu0 %2011, %v1221
        %v2013 = vpop.permute.xlu0 %2012
        %2015 = vset.pattern.permute.xlu0 5
        %2016 = vperm.xlu0 %2015, %v1222
        %v2017 = vpop.permute.xlu0 %2016
        %2019 = vset.pattern.permute.xlu0 5
        %2020 = vperm.xlu0 %2019, %v1223
        %v2021 = vpop.permute.xlu0 %2020
        %2023 = vset.pattern.permute.xlu0 5
        %2024 = vperm.xlu0 %2023, %v1224
        %v2025 = vpop.permute.xlu0 %2024
        %2027 = vset.pattern.permute.xlu0 5
        %2028 = vperm.xlu0 %2027, %v1225
        %v2029 = vpop.permute.xlu0 %2028
        %2031 = vset.pattern.permute.xlu0 5
        %2032 = vperm.xlu0 %2031, %v1226
        %v2033 = vpop.permute.xlu0 %2032
        %2035 = vset.pattern.permute.xlu0 5
        %2036 = vperm.xlu0 %2035, %v1227
        %v2037 = vpop.permute.xlu0 %2036
        %2039 = vset.pattern.permute.xlu0 5
        %2040 = vperm.xlu0 %2039, %v1228
        %v2041 = vpop.permute.xlu0 %2040
        %2043 = vset.pattern.permute.xlu0 5
        %2044 = vperm.xlu0 %2043, %v1229
        %v2045 = vpop.permute.xlu0 %2044
        %2047 = vset.pattern.permute.xlu0 5
        %2048 = vperm.xlu0 %2047, %v1230
        %v2049 = vpop.permute.xlu0 %2048
        %2051 = vset.pattern.permute.xlu0 5
        %2052 = vperm.xlu0 %2051, %v1231
        %v2053 = vpop.permute.xlu0 %2052
        %2055 = vset.pattern.permute.xlu0 5
        %2056 = vperm.xlu0 %2055, %v1232
        %v2057 = vpop.permute.xlu0 %2056
        %2059 = vset.pattern.permute.xlu0 5
        %2060 = vperm.xlu0 %2059, %v1233
        %v2061 = vpop.permute.xlu0 %2060
        %2063 = vset.pattern.permute.xlu0 5
        %2064 = vperm.xlu0 %2063, %v1234
        %v2065 = vpop.permute.xlu0 %2064
        %2067 = vset.pattern.permute.xlu0 5
        %2068 = vperm.xlu0 %2067, %v1235
        %v2069 = vpop.permute.xlu0 %2068
        %2071 = vset.pattern.permute.xlu0 5
        %2072 = vperm.xlu0 %2071, %v1236
        %v2073 = vpop.permute.xlu0 %2072
        %v2075 = vmul.f32 %v2013, %v1946
        %v2076 = vmul.f32 %v2017, %v1947
        %v2077 = vmul.f32 %v2021, %v1948
        %v2078 = vmul.f32 %v2025, %v1949
        %v2079 = vmul.f32 %v2029, %v1950
        %v2080 = vmul.f32 %v2033, %v1951
        %v2081 = vmul.f32 %v2037, %v1952
        %v2082 = vmul.f32 %v2041, %v1953
        %v2083 = vmul.f32 %v2045, %v1954
        %v2084 = vmul.f32 %v2049, %v1955
        %v2085 = vmul.f32 %v2053, %v1956
        %v2086 = vmul.f32 %v2057, %v1957
        %v2087 = vmul.f32 %v2061, %v1958
        %v2088 = vmul.f32 %v2065, %v1959
        %v2089 = vmul.f32 %v2069, %v1960
        %v2090 = vmul.f32 %v2073, %v1961
        %v2091 = vadd.f32 %v1897, %v2075
        %v2092 = vadd.f32 %v1898, %v2076
        %v2093 = vadd.f32 %v1899, %v2077
        %v2094 = vadd.f32 %v1900, %v2078
        %v2095 = vadd.f32 %v1901, %v2079
        %v2096 = vadd.f32 %v1902, %v2080
        %v2097 = vadd.f32 %v1903, %v2081
        %v2098 = vadd.f32 %v1904, %v2082
        %v2099 = vadd.f32 %v1905, %v2083
        %v2100 = vadd.f32 %v1906, %v2084
        %v2101 = vadd.f32 %v1907, %v2085
        %v2102 = vadd.f32 %v1908, %v2086
        %v2103 = vadd.f32 %v1909, %v2087
        %v2104 = vadd.f32 %v1910, %v2088
        %v2105 = vadd.f32 %v1911, %v2089
        %v2106 = vadd.f32 %v1912, %v2090
        %2107 = vset.pattern.permute.xlu0 6
        %2108 = vperm.xlu0 %2107, %v1221
        %v2109 = vpop.permute.xlu0 %2108
        %2111 = vset.pattern.permute.xlu0 6
        %2112 = vperm.xlu0 %2111, %v1222
        %v2113 = vpop.permute.xlu0 %2112
        %2115 = vset.pattern.permute.xlu0 6
        %2116 = vperm.xlu0 %2115, %v1223
        %v2117 = vpop.permute.xlu0 %2116
        %2119 = vset.pattern.permute.xlu0 6
        %2120 = vperm.xlu0 %2119, %v1224
        %v2121 = vpop.permute.xlu0 %2120
        %2123 = vset.pattern.permute.xlu0 6
        %2124 = vperm.xlu0 %2123, %v1225
        %v2125 = vpop.permute.xlu0 %2124
        %2127 = vset.pattern.permute.xlu0 6
        %2128 = vperm.xlu0 %2127, %v1226
        %v2129 = vpop.permute.xlu0 %2128
        %2131 = vset.pattern.permute.xlu0 6
        %2132 = vperm.xlu0 %2131, %v1227
        %v2133 = vpop.permute.xlu0 %2132
        %2135 = vset.pattern.permute.xlu0 6
        %2136 = vperm.xlu0 %2135, %v1228
        %v2137 = vpop.permute.xlu0 %2136
        %2139 = vset.pattern.permute.xlu0 6
        %2140 = vperm.xlu0 %2139, %v1229
        %v2141 = vpop.permute.xlu0 %2140
        %2143 = vset.pattern.permute.xlu0 6
        %2144 = vperm.xlu0 %2143, %v1230
        %v2145 = vpop.permute.xlu0 %2144
        %2147 = vset.pattern.permute.xlu0 6
        %2148 = vperm.xlu0 %2147, %v1231
        %v2149 = vpop.permute.xlu0 %2148
        %2151 = vset.pattern.permute.xlu0 6
        %2152 = vperm.xlu0 %2151, %v1232
        %v2153 = vpop.permute.xlu0 %2152
        %2155 = vset.pattern.permute.xlu0 6
        %2156 = vperm.xlu0 %2155, %v1233
        %v2157 = vpop.permute.xlu0 %2156
        %2159 = vset.pattern.permute.xlu0 6
        %2160 = vperm.xlu0 %2159, %v1234
        %v2161 = vpop.permute.xlu0 %2160
        %2163 = vset.pattern.permute.xlu0 6
        %2164 = vperm.xlu0 %2163, %v1235
        %v2165 = vpop.permute.xlu0 %2164
        %2167 = vset.pattern.permute.xlu0 6
        %2168 = vperm.xlu0 %2167, %v1236
        %v2169 = vpop.permute.xlu0 %2168
        %v2171 = vmul.f32 %v2109, %v1995
        %v2172 = vmul.f32 %v2113, %v1996
        %v2173 = vmul.f32 %v2117, %v1997
        %v2174 = vmul.f32 %v2121, %v1998
        %v2175 = vmul.f32 %v2125, %v1999
        %v2176 = vmul.f32 %v2129, %v2000
        %v2177 = vmul.f32 %v2133, %v2001
        %v2178 = vmul.f32 %v2137, %v2002
        %v2179 = vmul.f32 %v2141, %v2003
        %v2180 = vmul.f32 %v2145, %v2004
        %v2181 = vmul.f32 %v2149, %v2005
        %v2182 = vmul.f32 %v2153, %v2006
        %v2183 = vmul.f32 %v2157, %v2007
        %v2184 = vmul.f32 %v2161, %v2008
        %v2185 = vmul.f32 %v2165, %v2009
        %v2186 = vmul.f32 %v2169, %v2010
        %v2187 = vadd.f32 %v2091, %v2171
        %v2188 = vadd.f32 %v2092, %v2172
        %v2189 = vadd.f32 %v2093, %v2173
        %v2190 = vadd.f32 %v2094, %v2174
        %v2191 = vadd.f32 %v2095, %v2175
        %v2192 = vadd.f32 %v2096, %v2176
        %v2193 = vadd.f32 %v2097, %v2177
        %v2194 = vadd.f32 %v2098, %v2178
        %v2195 = vadd.f32 %v2099, %v2179
        %v2196 = vadd.f32 %v2100, %v2180
        %v2197 = vadd.f32 %v2101, %v2181
        %v2198 = vadd.f32 %v2102, %v2182
        %v2199 = vadd.f32 %v2103, %v2183
        %v2200 = vadd.f32 %v2104, %v2184
        %v2201 = vadd.f32 %v2105, %v2185
        %v2202 = vadd.f32 %v2106, %v2186
        %v2203 = vsel %vm469, %v2187, 0.0
        %v2204 = vsel %vm470, %v2188, 0.0
        %v2205 = vsel %vm471, %v2189, 0.0
        %v2206 = vsel %vm472, %v2190, 0.0
        %v2207 = vsel %vm473, %v2191, 0.0
        %v2208 = vsel %vm474, %v2192, 0.0
        %v2209 = vsel %vm475, %v2193, 0.0
        %v2210 = vsel %vm476, %v2194, 0.0
        %v2211 = vsel %vm477, %v2195, 0.0
        %v2212 = vsel %vm478, %v2196, 0.0
        %v2213 = vsel %vm479, %v2197, 0.0
        %v2214 = vsel %vm480, %v2198, 0.0
        %v2215 = vsel %vm481, %v2199, 0.0
        %v2216 = vsel %vm482, %v2200, 0.0
        %v2217 = vsel %vm483, %v2201, 0.0
        %v2218 = vsel %vm484, %v2202, 0.0
        %2219 = vst [vmem:[%s414] sm:$0xff] %v2203
        %2220 = vst [vmem:[%s414 + $0x8] sm:$0xff] %v2204
        %2221 = vst [vmem:[%s414 + $0x10] sm:$0xff] %v2205
        %2222 = vst [vmem:[%s414 + $0x18] sm:$0xff] %v2206
        %2223 = vst [vmem:[%s414 + $0x20] sm:$0xff] %v2207
        %2224 = vst [vmem:[%s414 + $0x28] sm:$0xff] %v2208
        %2225 = vst [vmem:[%s414 + $0x30] sm:$0xff] %v2209
        %2226 = vst [vmem:[%s414 + $0x38] sm:$0xff] %v2210
        %2227 = vst [vmem:[%s414 + $0x40] sm:$0xff] %v2211
        %2228 = vst [vmem:[%s414 + $0x48] sm:$0xff] %v2212
        %2229 = vst [vmem:[%s414 + $0x50] sm:$0xff] %v2213
        %2230 = vst [vmem:[%s414 + $0x58] sm:$0xff] %v2214
        %2231 = vst [vmem:[%s414 + $0x60] sm:$0xff] %v2215
        %2232 = vst [vmem:[%s414 + $0x68] sm:$0xff] %v2216
        %2233 = vst [vmem:[%s414 + $0x70] sm:$0xff] %v2217
        %2234 = vst [vmem:[%s414 + $0x78] sm:$0xff] %v2218
        %v2235 = vpack.c.bf16 %v2204, %v2203
        %v2236 = vpack.c.bf16 %v2206, %v2205
        %v2237 = vpack.c.bf16 %v2208, %v2207
        %v2238 = vpack.c.bf16 %v2210, %v2209
        %v2239 = vpack.c.bf16 %v2212, %v2211
        %v2240 = vpack.c.bf16 %v2214, %v2213
        %v2241 = vpack.c.bf16 %v2216, %v2215
        %v2242 = vpack.c.bf16 %v2218, %v2217
        %v2243 = vpack.c.bf16 %v680, %v678
        %v2244 = vpack.c.bf16 %v685, %v683
        %v2245 = vpack.c.bf16 %v690, %v688
        %v2246 = vpack.c.bf16 %v695, %v693
        %v2247 = vpack.c.bf16 %v700, %v698
        %v2248 = vpack.c.bf16 %v705, %v703
        %v2249 = vpack.c.bf16 %v710, %v708
        %v2250 = vpack.c.bf16 %v715, %v713
        %2251 = vmatpush.bf16.msra.mxu0 %v2250
        %2252 = vmatpush.bf16.msra.mxu0 %v2249
        %2253 = vmatpush.bf16.msra.mxu0 %v2248
        %2254 = vmatpush.bf16.msra.mxu0 %v2247
        %2255 = vmatpush.bf16.msra.mxu0 %v2246
        %2256 = vmatpush.bf16.msra.mxu0 %v2245
        %2257 = vmatpush.bf16.msra.mxu0 %v2244
        %2258 = vmatpush.bf16.msra.mxu0 %v2243
        %2259 = vmatmul.bf16.gmra.mxu0 %v2235
        %v2260 = vpop.f32.mrf.mxu0
        %v2261 = vadd.f32 0.0, %v2260
        %v2262 = vpop.f32.mrf.mxu0
        %v2263 = vadd.f32 0.0, %v2262
        %2264 = vmatmul.bf16.gmra.mxu0 %v2236
        %v2265 = vpop.f32.mrf.mxu0
        %v2266 = vadd.f32 0.0, %v2265
        %v2267 = vpop.f32.mrf.mxu0
        %v2268 = vadd.f32 0.0, %v2267
        %2269 = vmatmul.bf16.gmra.mxu0 %v2237
        %v2270 = vpop.f32.mrf.mxu0
        %v2271 = vadd.f32 0.0, %v2270
        %v2272 = vpop.f32.mrf.mxu0
        %v2273 = vadd.f32 0.0, %v2272
        %2274 = vmatmul.bf16.gmra.mxu0 %v2238
        %v2275 = vpop.f32.mrf.mxu0
        %v2276 = vadd.f32 0.0, %v2275
        %v2277 = vpop.f32.mrf.mxu0
        %v2278 = vadd.f32 0.0, %v2277
        %2279 = vmatmul.bf16.gmra.mxu0 %v2239
        %v2280 = vpop.f32.mrf.mxu0
        %v2281 = vadd.f32 0.0, %v2280
        %v2282 = vpop.f32.mrf.mxu0
        %v2283 = vadd.f32 0.0, %v2282
        %2284 = vmatmul.bf16.gmra.mxu0 %v2240
        %v2285 = vpop.f32.mrf.mxu0
        %v2286 = vadd.f32 0.0, %v2285
        %v2287 = vpop.f32.mrf.mxu0
        %v2288 = vadd.f32 0.0, %v2287
        %2289 = vmatmul.bf16.gmra.mxu0 %v2241
        %v2290 = vpop.f32.mrf.mxu0
        %v2291 = vadd.f32 0.0, %v2290
        %v2292 = vpop.f32.mrf.mxu0
        %v2293 = vadd.f32 0.0, %v2292
        %2294 = vmatmul.bf16.gmra.mxu0 %v2242
        %v2295 = vpop.f32.mrf.mxu0
        %v2296 = vadd.f32 0.0, %v2295
        %v2297 = vpop.f32.mrf.mxu0
        %v2298 = vadd.f32 0.0, %v2297
        %2299 = vdwg.mxu0
        %v2300 = vpack.c.bf16 %v2263, %v2261
        %v2301 = vpack.c.bf16 %v2268, %v2266
        %v2302 = vpack.c.bf16 %v2273, %v2271
        %v2303 = vpack.c.bf16 %v2278, %v2276
        %v2304 = vpack.c.bf16 %v2283, %v2281
        %v2305 = vpack.c.bf16 %v2288, %v2286
        %v2306 = vpack.c.bf16 %v2293, %v2291
        %v2307 = vpack.c.bf16 %v2298, %v2296
        %v2308 = vld [vmem:[%s9] sm:$0xf]
        %s2309 = scalar_lea.vmem %s1, 16
        %v2310 = vld [vmem:[%s2309] sm:$0xf]
        %v2311 = vld [vmem:[%s2309 + $0x4] sm:$0xf]
        %v2312 = vld [vmem:[%s2309 + $0x8] sm:$0xf]
        %v2313 = vld [vmem:[%s2309 + $0xc] sm:$0xf]
        %s2314 = scalar_lea.vmem %s2, 1
        %v2315 = vld [vmem:[%s2314] sm:$0x1]
        %v2317 = vperm.slane %v2315, 0
        %v2323 = vunpack.c.l.b16 %v2310
        %v2324 = vunpack.c.l.b16 %v2311
        %v2325 = vunpack.c.l.b16 %v2312
        %v2326 = vunpack.c.l.b16 %v2313
        %v2327 = vpack.c.b16 %v2324, %v2323
        %v2328 = vpack.c.b16 %v2326, %v2325
        %2331 = vmatpush.bf16.msra.mxu0 0
        %2332 = vmatpush.bf16.msra.mxu0 0
        %2333 = vmatpush.bf16.msra.mxu0 0
        %2334 = vmatpush.bf16.msra.mxu0 0
        %2335 = vmatpush.bf16.msra.mxu0 0
        %2336 = vmatpush.bf16.msra.mxu0 0
        %2337 = vmatpush.bf16.msra.mxu0 %v2328
        %2338 = vmatpush.bf16.msra.mxu0 %v2327
        %2339 = vmatmul.bf16.gmra.mxu0 %v507
        %v2340 = vpop.f32.mrf.mxu0
        %v2341 = vadd.f32 %v2317, %v2340
        %v2342 = vpop.f32.mrf.mxu0
        %v2343 = vadd.f32 %v2317, %v2342
        %2344 = vmatmul.bf16.gmra.mxu0 %v510
        %v2345 = vpop.f32.mrf.mxu0
        %v2346 = vadd.f32 %v2317, %v2345
        %v2347 = vpop.f32.mrf.mxu0
        %v2348 = vadd.f32 %v2317, %v2347
        %2349 = vmatmul.bf16.gmra.mxu0 %v513
        %v2350 = vpop.f32.mrf.mxu0
        %v2351 = vadd.f32 %v2317, %v2350
        %v2352 = vpop.f32.mrf.mxu0
        %v2353 = vadd.f32 %v2317, %v2352
        %2354 = vmatmul.bf16.gmra.mxu0 %v516
        %v2355 = vpop.f32.mrf.mxu0
        %v2356 = vadd.f32 %v2317, %v2355
        %v2357 = vpop.f32.mrf.mxu0
        %v2358 = vadd.f32 %v2317, %v2357
        %2359 = vmatmul.bf16.gmra.mxu0 %v519
        %v2360 = vpop.f32.mrf.mxu0
        %v2361 = vadd.f32 %v2317, %v2360
        %v2362 = vpop.f32.mrf.mxu0
        %v2363 = vadd.f32 %v2317, %v2362
        %2364 = vmatmul.bf16.gmra.mxu0 %v522
        %v2365 = vpop.f32.mrf.mxu0
        %v2366 = vadd.f32 %v2317, %v2365
        %v2367 = vpop.f32.mrf.mxu0
        %v2368 = vadd.f32 %v2317, %v2367
        %2369 = vmatmul.bf16.gmra.mxu0 %v525
        %v2370 = vpop.f32.mrf.mxu0
        %v2371 = vadd.f32 %v2317, %v2370
        %v2372 = vpop.f32.mrf.mxu0
        %v2373 = vadd.f32 %v2317, %v2372
        %2374 = vmatmul.bf16.gmra.mxu0 %v528
        %v2375 = vpop.f32.mrf.mxu0
        %v2376 = vadd.f32 %v2317, %v2375
        %v2377 = vpop.f32.mrf.mxu0
        %v2378 = vadd.f32 %v2317, %v2377
        %2379 = vdwg.mxu0
        %s2380 = scalar_lea.vmem %s3, 16
        %v2381 = vld [vmem:[%s2380] sm:$0xf]
        %v2382 = vld [vmem:[%s2380 + $0x4] sm:$0xf]
        %v2383 = vld [vmem:[%s2380 + $0x8] sm:$0xf]
        %v2384 = vld [vmem:[%s2380 + $0xc] sm:$0xf]
        %s2385 = scalar_lea.vmem %s4, 1
        %v2386 = vld [vmem:[%s2385] sm:$0x1]
        %v2388 = vperm.slane %v2386, 0
        %v2394 = vunpack.c.l.b16 %v2381
        %v2395 = vunpack.c.l.b16 %v2382
        %v2396 = vunpack.c.l.b16 %v2383
        %v2397 = vunpack.c.l.b16 %v2384
        %v2398 = vpack.c.b16 %v2395, %v2394
        %v2399 = vpack.c.b16 %v2397, %v2396
        %2402 = vmatpush.bf16.msra.mxu0 0
        %2403 = vmatpush.bf16.msra.mxu0 0
        %2404 = vmatpush.bf16.msra.mxu0 0
        %2405 = vmatpush.bf16.msra.mxu0 0
        %2406 = vmatpush.bf16.msra.mxu0 0
        %2407 = vmatpush.bf16.msra.mxu0 0
        %2408 = vmatpush.bf16.msra.mxu0 %v2399
        %2409 = vmatpush.bf16.msra.mxu0 %v2398
        %2410 = vmatmul.bf16.gmra.mxu0 %v507
        %v2411 = vpop.f32.mrf.mxu0
        %v2412 = vadd.f32 %v2388, %v2411
        %v2413 = vpop.f32.mrf.mxu0
        %v2414 = vadd.f32 %v2388, %v2413
        %2415 = vmatmul.bf16.gmra.mxu0 %v510
        %v2416 = vpop.f32.mrf.mxu0
        %v2417 = vadd.f32 %v2388, %v2416
        %v2418 = vpop.f32.mrf.mxu0
        %v2419 = vadd.f32 %v2388, %v2418
        %2420 = vmatmul.bf16.gmra.mxu0 %v513
        %v2421 = vpop.f32.mrf.mxu0
        %v2422 = vadd.f32 %v2388, %v2421
        %v2423 = vpop.f32.mrf.mxu0
        %v2424 = vadd.f32 %v2388, %v2423
        %2425 = vmatmul.bf16.gmra.mxu0 %v516
        %v2426 = vpop.f32.mrf.mxu0
        %v2427 = vadd.f32 %v2388, %v2426
        %v2428 = vpop.f32.mrf.mxu0
        %v2429 = vadd.f32 %v2388, %v2428
        %2430 = vmatmul.bf16.gmra.mxu0 %v519
        %v2431 = vpop.f32.mrf.mxu0
        %v2432 = vadd.f32 %v2388, %v2431
        %v2433 = vpop.f32.mrf.mxu0
        %v2434 = vadd.f32 %v2388, %v2433
        %2435 = vmatmul.bf16.gmra.mxu0 %v522
        %v2436 = vpop.f32.mrf.mxu0
        %v2437 = vadd.f32 %v2388, %v2436
        %v2438 = vpop.f32.mrf.mxu0
        %v2439 = vadd.f32 %v2388, %v2438
        %2440 = vmatmul.bf16.gmra.mxu0 %v525
        %v2441 = vpop.f32.mrf.mxu0
        %v2442 = vadd.f32 %v2388, %v2441
        %v2443 = vpop.f32.mrf.mxu0
        %v2444 = vadd.f32 %v2388, %v2443
        %2445 = vmatmul.bf16.gmra.mxu0 %v528
        %v2446 = vpop.f32.mrf.mxu0
        %v2447 = vadd.f32 %v2388, %v2446
        %v2448 = vpop.f32.mrf.mxu0
        %v2449 = vadd.f32 %v2388, %v2448
        %2450 = vdwg.mxu0
        %s2451 = scalar_lea.vmem %s5, 16
        %v2452 = vld [vmem:[%s2451] sm:$0xf]
        %v2453 = vld [vmem:[%s2451 + $0x4] sm:$0xf]
        %v2454 = vld [vmem:[%s2451 + $0x8] sm:$0xf]
        %v2455 = vld [vmem:[%s2451 + $0xc] sm:$0xf]
        %s2456 = scalar_lea.vmem %s6, 1
        %v2457 = vld [vmem:[%s2456] sm:$0x1]
        %v2459 = vperm.slane %v2457, 0
        %v2465 = vunpack.c.l.b16 %v2452
        %v2466 = vunpack.c.l.b16 %v2453
        %v2467 = vunpack.c.l.b16 %v2454
        %v2468 = vunpack.c.l.b16 %v2455
        %v2469 = vpack.c.b16 %v2466, %v2465
        %v2470 = vpack.c.b16 %v2468, %v2467
        %2473 = vmatpush.bf16.msra.mxu0 0
        %2474 = vmatpush.bf16.msra.mxu0 0
        %2475 = vmatpush.bf16.msra.mxu0 0
        %2476 = vmatpush.bf16.msra.mxu0 0
        %2477 = vmatpush.bf16.msra.mxu0 0
        %2478 = vmatpush.bf16.msra.mxu0 0
        %2479 = vmatpush.bf16.msra.mxu0 %v2470
        %2480 = vmatpush.bf16.msra.mxu0 %v2469
        %2481 = vmatmul.bf16.gmra.mxu0 %v507
        %v2482 = vpop.f32.mrf.mxu0
        %v2483 = vadd.f32 %v2459, %v2482
        %v2484 = vpop.f32.mrf.mxu0
        %v2485 = vadd.f32 %v2459, %v2484
        %2486 = vmatmul.bf16.gmra.mxu0 %v510
        %v2487 = vpop.f32.mrf.mxu0
        %v2488 = vadd.f32 %v2459, %v2487
        %v2489 = vpop.f32.mrf.mxu0
        %v2490 = vadd.f32 %v2459, %v2489
        %2491 = vmatmul.bf16.gmra.mxu0 %v513
        %v2492 = vpop.f32.mrf.mxu0
        %v2493 = vadd.f32 %v2459, %v2492
        %v2494 = vpop.f32.mrf.mxu0
        %v2495 = vadd.f32 %v2459, %v2494
        %2496 = vmatmul.bf16.gmra.mxu0 %v516
        %v2497 = vpop.f32.mrf.mxu0
        %v2498 = vadd.f32 %v2459, %v2497
        %v2499 = vpop.f32.mrf.mxu0
        %v2500 = vadd.f32 %v2459, %v2499
        %2501 = vmatmul.bf16.gmra.mxu0 %v519
        %v2502 = vpop.f32.mrf.mxu0
        %v2503 = vadd.f32 %v2459, %v2502
        %v2504 = vpop.f32.mrf.mxu0
        %v2505 = vadd.f32 %v2459, %v2504
        %2506 = vmatmul.bf16.gmra.mxu0 %v522
        %v2507 = vpop.f32.mrf.mxu0
        %v2508 = vadd.f32 %v2459, %v2507
        %v2509 = vpop.f32.mrf.mxu0
        %v2510 = vadd.f32 %v2459, %v2509
        %2511 = vmatmul.bf16.gmra.mxu0 %v525
        %v2512 = vpop.f32.mrf.mxu0
        %v2513 = vadd.f32 %v2459, %v2512
        %v2514 = vpop.f32.mrf.mxu0
        %v2515 = vadd.f32 %v2459, %v2514
        %2516 = vmatmul.bf16.gmra.mxu0 %v528
        %v2517 = vpop.f32.mrf.mxu0
        %v2518 = vadd.f32 %v2459, %v2517
        %v2519 = vpop.f32.mrf.mxu0
        %v2520 = vadd.f32 %v2459, %v2519
        %2521 = vdwg.mxu0
        %v2522 = vpack.c.bf16 %v2343, %v2341
        %v2523 = vpack.c.bf16 %v2348, %v2346
        %v2524 = vpack.c.bf16 %v2353, %v2351
        %v2525 = vpack.c.bf16 %v2358, %v2356
        %v2526 = vpack.c.bf16 %v2363, %v2361
        %v2527 = vpack.c.bf16 %v2368, %v2366
        %v2528 = vpack.c.bf16 %v2373, %v2371
        %v2529 = vpack.c.bf16 %v2378, %v2376
        %v2530 = vpack.c.bf16 %v2414, %v2412
        %v2531 = vpack.c.bf16 %v2419, %v2417
        %v2532 = vpack.c.bf16 %v2424, %v2422
        %v2533 = vpack.c.bf16 %v2429, %v2427
        %v2534 = vpack.c.bf16 %v2434, %v2432
        %v2535 = vpack.c.bf16 %v2439, %v2437
        %v2536 = vpack.c.bf16 %v2444, %v2442
        %v2537 = vpack.c.bf16 %v2449, %v2447
        %v2539 = vsel %vm733, %v2522, 0
        %v2542 = vsel %vm733, %v2523, 0
        %v2545 = vsel %vm733, %v2524, 0
        %v2548 = vsel %vm733, %v2525, 0
        %v2551 = vsel %vm733, %v2526, 0
        %v2554 = vsel %vm733, %v2527, 0
        %v2557 = vsel %vm733, %v2528, 0
        %v2560 = vsel %vm733, %v2529, 0
        %v2563 = vsel %vm733, %v2530, 0
        %v2566 = vsel %vm733, %v2531, 0
        %v2569 = vsel %vm733, %v2532, 0
        %v2572 = vsel %vm733, %v2533, 0
        %v2575 = vsel %vm733, %v2534, 0
        %v2578 = vsel %vm733, %v2535, 0
        %v2581 = vsel %vm733, %v2536, 0
        %v2584 = vsel %vm733, %v2537, 0
        %2586 = vmatpush.bf16.xpose.msra.mxu0 %v2584
        %2587 = vmatpush.bf16.xpose.msra.mxu0 %v2581
        %2588 = vmatpush.bf16.xpose.msra.mxu0 %v2578
        %2589 = vmatpush.bf16.xpose.msra.mxu0 %v2575
        %2590 = vmatpush.bf16.xpose.msra.mxu0 %v2572
        %2591 = vmatpush.bf16.xpose.msra.mxu0 %v2569
        %2592 = vmatpush.bf16.xpose.msra.mxu0 %v2566
        %2593 = vmatpush.bf16.xpose.msra.mxu0 %v2563
        %2594 = vmatmul.bf16.gmra.mxu0 %v2539
        %v2595 = vpop.f32.mrf.mxu0
        %v2596 = vadd.f32 0.0, %v2595
        %v2597 = vpop.f32.mrf.mxu0
        %v2598 = vadd.f32 0.0, %v2597
        %2599 = vmatmul.bf16.gmra.mxu0 %v2542
        %v2600 = vpop.f32.mrf.mxu0
        %v2601 = vadd.f32 0.0, %v2600
        %v2602 = vpop.f32.mrf.mxu0
        %v2603 = vadd.f32 0.0, %v2602
        %2604 = vmatmul.bf16.gmra.mxu0 %v2545
        %v2605 = vpop.f32.mrf.mxu0
        %v2606 = vadd.f32 0.0, %v2605
        %v2607 = vpop.f32.mrf.mxu0
        %v2608 = vadd.f32 0.0, %v2607
        %2609 = vmatmul.bf16.gmra.mxu0 %v2548
        %v2610 = vpop.f32.mrf.mxu0
        %v2611 = vadd.f32 0.0, %v2610
        %v2612 = vpop.f32.mrf.mxu0
        %v2613 = vadd.f32 0.0, %v2612
        %2614 = vmatmul.bf16.gmra.mxu0 %v2551
        %v2615 = vpop.f32.mrf.mxu0
        %v2616 = vadd.f32 0.0, %v2615
        %v2617 = vpop.f32.mrf.mxu0
        %v2618 = vadd.f32 0.0, %v2617
        %2619 = vmatmul.bf16.gmra.mxu0 %v2554
        %v2620 = vpop.f32.mrf.mxu0
        %v2621 = vadd.f32 0.0, %v2620
        %v2622 = vpop.f32.mrf.mxu0
        %v2623 = vadd.f32 0.0, %v2622
        %2624 = vmatmul.bf16.gmra.mxu0 %v2557
        %v2625 = vpop.f32.mrf.mxu0
        %v2626 = vadd.f32 0.0, %v2625
        %v2627 = vpop.f32.mrf.mxu0
        %v2628 = vadd.f32 0.0, %v2627
        %2629 = vmatmul.bf16.gmra.mxu0 %v2560
        %v2630 = vpop.f32.mrf.mxu0
        %v2631 = vadd.f32 0.0, %v2630
        %v2632 = vpop.f32.mrf.mxu0
        %v2633 = vadd.f32 0.0, %v2632
        %2634 = vdwg.mxu0
        %v2635 = vsel %vm469, %v2596, -inf
        %v2636 = vsel %vm470, %v2598, -inf
        %v2637 = vsel %vm471, %v2601, -inf
        %v2638 = vsel %vm472, %v2603, -inf
        %v2639 = vsel %vm473, %v2606, -inf
        %v2640 = vsel %vm474, %v2608, -inf
        %v2641 = vsel %vm475, %v2611, -inf
        %v2642 = vsel %vm476, %v2613, -inf
        %v2643 = vsel %vm477, %v2616, -inf
        %v2644 = vsel %vm478, %v2618, -inf
        %v2645 = vsel %vm479, %v2621, -inf
        %v2646 = vsel %vm480, %v2623, -inf
        %v2647 = vsel %vm481, %v2626, -inf
        %v2648 = vsel %vm482, %v2628, -inf
        %v2649 = vsel %vm483, %v2631, -inf
        %v2650 = vsel %vm484, %v2633, -inf
        %2651 = vmax.xlane.f32.xlu0 %v2635
        %v2652 = vpop.xlane.xlu0 %2651
        %2653 = vmax.xlane.f32.xlu0 %v2636
        %v2654 = vpop.xlane.xlu0 %2653
        %2655 = vmax.xlane.f32.xlu0 %v2637
        %v2656 = vpop.xlane.xlu0 %2655
        %2657 = vmax.xlane.f32.xlu0 %v2638
        %v2658 = vpop.xlane.xlu0 %2657
        %2659 = vmax.xlane.f32.xlu0 %v2639
        %v2660 = vpop.xlane.xlu0 %2659
        %2661 = vmax.xlane.f32.xlu0 %v2640
        %v2662 = vpop.xlane.xlu0 %2661
        %2663 = vmax.xlane.f32.xlu0 %v2641
        %v2664 = vpop.xlane.xlu0 %2663
        %2665 = vmax.xlane.f32.xlu0 %v2642
        %v2666 = vpop.xlane.xlu0 %2665
        %2667 = vmax.xlane.f32.xlu0 %v2643
        %v2668 = vpop.xlane.xlu0 %2667
        %2669 = vmax.xlane.f32.xlu0 %v2644
        %v2670 = vpop.xlane.xlu0 %2669
        %2671 = vmax.xlane.f32.xlu0 %v2645
        %v2672 = vpop.xlane.xlu0 %2671
        %2673 = vmax.xlane.f32.xlu0 %v2646
        %v2674 = vpop.xlane.xlu0 %2673
        %2675 = vmax.xlane.f32.xlu0 %v2647
        %v2676 = vpop.xlane.xlu0 %2675
        %2677 = vmax.xlane.f32.xlu0 %v2648
        %v2678 = vpop.xlane.xlu0 %2677
        %2679 = vmax.xlane.f32.xlu0 %v2649
        %v2680 = vpop.xlane.xlu0 %2679
        %2681 = vmax.xlane.f32.xlu0 %v2650
        %v2682 = vpop.xlane.xlu0 %2681
        %v2683 = vsub.f32 %v2635, %v2652
        %v2684 = vsub.f32 %v2636, %v2654
        %v2685 = vsub.f32 %v2637, %v2656
        %v2686 = vsub.f32 %v2638, %v2658
        %v2687 = vsub.f32 %v2639, %v2660
        %v2688 = vsub.f32 %v2640, %v2662
        %v2689 = vsub.f32 %v2641, %v2664
        %v2690 = vsub.f32 %v2642, %v2666
        %v2691 = vsub.f32 %v2643, %v2668
        %v2692 = vsub.f32 %v2644, %v2670
        %v2693 = vsub.f32 %v2645, %v2672
        %v2694 = vsub.f32 %v2646, %v2674
        %v2695 = vsub.f32 %v2647, %v2676
        %v2696 = vsub.f32 %v2648, %v2678
        %v2697 = vsub.f32 %v2649, %v2680
        %v2698 = vsub.f32 %v2650, %v2682
        %v2699 = vmul.f32 %v2683, 1.442695
        %v2700 = vpow.pop %v2699
        %v2701 = vmul.f32 %v2684, 1.442695
        %v2702 = vpow.pop %v2701
        %v2703 = vmul.f32 %v2685, 1.442695
        %v2704 = vpow.pop %v2703
        %v2705 = vmul.f32 %v2686, 1.442695
        %v2706 = vpow.pop %v2705
        %v2707 = vmul.f32 %v2687, 1.442695
        %v2708 = vpow.pop %v2707
        %v2709 = vmul.f32 %v2688, 1.442695
        %v2710 = vpow.pop %v2709
        %v2711 = vmul.f32 %v2689, 1.442695
        %v2712 = vpow.pop %v2711
        %v2713 = vmul.f32 %v2690, 1.442695
        %v2714 = vpow.pop %v2713
        %v2715 = vmul.f32 %v2691, 1.442695
        %v2716 = vpow.pop %v2715
        %v2717 = vmul.f32 %v2692, 1.442695
        %v2718 = vpow.pop %v2717
        %v2719 = vmul.f32 %v2693, 1.442695
        %v2720 = vpow.pop %v2719
        %v2721 = vmul.f32 %v2694, 1.442695
        %v2722 = vpow.pop %v2721
        %v2723 = vmul.f32 %v2695, 1.442695
        %v2724 = vpow.pop %v2723
        %v2725 = vmul.f32 %v2696, 1.442695
        %v2726 = vpow.pop %v2725
        %v2727 = vmul.f32 %v2697, 1.442695
        %v2728 = vpow.pop %v2727
        %v2729 = vmul.f32 %v2698, 1.442695
        %v2730 = vpow.pop %v2729
        %2731 = vadd.xlane.f32.xlu0 %v2700
        %v2732 = vpop.xlane.xlu0 %2731
        %2733 = vadd.xlane.f32.xlu0 %v2702
        %v2734 = vpop.xlane.xlu0 %2733
        %2735 = vadd.xlane.f32.xlu0 %v2704
        %v2736 = vpop.xlane.xlu0 %2735
        %2737 = vadd.xlane.f32.xlu0 %v2706
        %v2738 = vpop.xlane.xlu0 %2737
        %2739 = vadd.xlane.f32.xlu0 %v2708
        %v2740 = vpop.xlane.xlu0 %2739
        %2741 = vadd.xlane.f32.xlu0 %v2710
        %v2742 = vpop.xlane.xlu0 %2741
        %2743 = vadd.xlane.f32.xlu0 %v2712
        %v2744 = vpop.xlane.xlu0 %2743
        %2745 = vadd.xlane.f32.xlu0 %v2714
        %v2746 = vpop.xlane.xlu0 %2745
        %2747 = vadd.xlane.f32.xlu0 %v2716
        %v2748 = vpop.xlane.xlu0 %2747
        %2749 = vadd.xlane.f32.xlu0 %v2718
        %v2750 = vpop.xlane.xlu0 %2749
        %2751 = vadd.xlane.f32.xlu0 %v2720
        %v2752 = vpop.xlane.xlu0 %2751
        %2753 = vadd.xlane.f32.xlu0 %v2722
        %v2754 = vpop.xlane.xlu0 %2753
        %2755 = vadd.xlane.f32.xlu0 %v2724
        %v2756 = vpop.xlane.xlu0 %2755
        %2757 = vadd.xlane.f32.xlu0 %v2726
        %v2758 = vpop.xlane.xlu0 %2757
        %2759 = vadd.xlane.f32.xlu0 %v2728
        %v2760 = vpop.xlane.xlu0 %2759
        %2761 = vadd.xlane.f32.xlu0 %v2730
        %v2762 = vpop.xlane.xlu0 %2761
        %v2763 = vrcp.pop %v2732
        %v2764 = vrcp.pop %v2734
        %v2765 = vrcp.pop %v2736
        %v2766 = vrcp.pop %v2738
        %v2767 = vrcp.pop %v2740
        %v2768 = vrcp.pop %v2742
        %v2769 = vrcp.pop %v2744
        %v2770 = vrcp.pop %v2746
        %v2771 = vrcp.pop %v2748
        %v2772 = vrcp.pop %v2750
        %v2773 = vrcp.pop %v2752
        %v2774 = vrcp.pop %v2754
        %v2775 = vrcp.pop %v2756
        %v2776 = vrcp.pop %v2758
        %v2777 = vrcp.pop %v2760
        %v2778 = vrcp.pop %v2762
        %v2779 = vmul.f32 %v2700, %v2763
        %v2780 = vmul.f32 %v2702, %v2764
        %v2781 = vmul.f32 %v2704, %v2765
        %v2782 = vmul.f32 %v2706, %v2766
        %v2783 = vmul.f32 %v2708, %v2767
        %v2784 = vmul.f32 %v2710, %v2768
        %v2785 = vmul.f32 %v2712, %v2769
        %v2786 = vmul.f32 %v2714, %v2770
        %v2787 = vmul.f32 %v2716, %v2771
        %v2788 = vmul.f32 %v2718, %v2772
        %v2789 = vmul.f32 %v2720, %v2773
        %v2790 = vmul.f32 %v2722, %v2774
        %v2791 = vmul.f32 %v2724, %v2775
        %v2792 = vmul.f32 %v2726, %v2776
        %v2793 = vmul.f32 %v2728, %v2777
        %v2794 = vmul.f32 %v2730, %v2778
        %s2795 = scalar_lea.vmem %s7, 16
        %v2796 = vld [vmem:[%s2795] sm:$0xf]
        %v2797 = vld [vmem:[%s2795 + $0x4] sm:$0xf]
        %v2798 = vld [vmem:[%s2795 + $0x8] sm:$0xf]
        %v2799 = vld [vmem:[%s2795 + $0xc] sm:$0xf]
        %s2800 = scalar_lea.vmem %s8, 1
        %v2801 = vld [vmem:[%s2800] sm:$0x1]
        %v2803 = vperm.slane %v2801, 0
        %v2809 = vunpack.c.l.b16 %v2796
        %v2810 = vunpack.c.l.b16 %v2797
        %v2811 = vunpack.c.l.b16 %v2798
        %v2812 = vunpack.c.l.b16 %v2799
        %v2813 = vpack.c.b16 %v2810, %v2809
        %v2814 = vpack.c.b16 %v2812, %v2811
        %2817 = vmatpush.bf16.msra.mxu0 0
        %2818 = vmatpush.bf16.msra.mxu0 0
        %2819 = vmatpush.bf16.msra.mxu0 0
        %2820 = vmatpush.bf16.msra.mxu0 0
        %2821 = vmatpush.bf16.msra.mxu0 0
        %2822 = vmatpush.bf16.msra.mxu0 0
        %2823 = vmatpush.bf16.msra.mxu0 %v2814
        %2824 = vmatpush.bf16.msra.mxu0 %v2813
        %2825 = vmatmul.bf16.gmra.mxu0 %v507
        %v2826 = vpop.f32.mrf.mxu0
        %v2827 = vadd.f32 %v2803, %v2826
        %v2828 = vpop.f32.mrf.mxu0
        %v2829 = vadd.f32 %v2803, %v2828
        %2830 = vmatmul.bf16.gmra.mxu0 %v510
        %v2831 = vpop.f32.mrf.mxu0
        %v2832 = vadd.f32 %v2803, %v2831
        %v2833 = vpop.f32.mrf.mxu0
        %v2834 = vadd.f32 %v2803, %v2833
        %2835 = vmatmul.bf16.gmra.mxu0 %v513
        %v2836 = vpop.f32.mrf.mxu0
        %v2837 = vadd.f32 %v2803, %v2836
        %v2838 = vpop.f32.mrf.mxu0
        %v2839 = vadd.f32 %v2803, %v2838
        %2840 = vmatmul.bf16.gmra.mxu0 %v516
        %v2841 = vpop.f32.mrf.mxu0
        %v2842 = vadd.f32 %v2803, %v2841
        %v2843 = vpop.f32.mrf.mxu0
        %v2844 = vadd.f32 %v2803, %v2843
        %2845 = vmatmul.bf16.gmra.mxu0 %v519
        %v2846 = vpop.f32.mrf.mxu0
        %v2847 = vadd.f32 %v2803, %v2846
        %v2848 = vpop.f32.mrf.mxu0
        %v2849 = vadd.f32 %v2803, %v2848
        %2850 = vmatmul.bf16.gmra.mxu0 %v522
        %v2851 = vpop.f32.mrf.mxu0
        %v2852 = vadd.f32 %v2803, %v2851
        %v2853 = vpop.f32.mrf.mxu0
        %v2854 = vadd.f32 %v2803, %v2853
        %2855 = vmatmul.bf16.gmra.mxu0 %v525
        %v2856 = vpop.f32.mrf.mxu0
        %v2857 = vadd.f32 %v2803, %v2856
        %v2858 = vpop.f32.mrf.mxu0
        %v2859 = vadd.f32 %v2803, %v2858
        %2860 = vmatmul.bf16.gmra.mxu0 %v528
        %v2861 = vpop.f32.mrf.mxu0
        %v2862 = vadd.f32 %v2803, %v2861
        %v2863 = vpop.f32.mrf.mxu0
        %v2864 = vadd.f32 %v2803, %v2863
        %2865 = vdwg.mxu0
        %v2866 = vsel %vm1060, %v2827, -inf
        %2867 = vmax.xlane.f32.xlu0 %v2866
        %v2868 = vpop.xlane.xlu0 %2867
        %v2869 = vsel %vm1060, %v2829, -inf
        %2870 = vmax.xlane.f32.xlu0 %v2869
        %v2871 = vpop.xlane.xlu0 %2870
        %v2872 = vsel %vm1060, %v2832, -inf
        %2873 = vmax.xlane.f32.xlu0 %v2872
        %v2874 = vpop.xlane.xlu0 %2873
        %v2875 = vsel %vm1060, %v2834, -inf
        %2876 = vmax.xlane.f32.xlu0 %v2875
        %v2877 = vpop.xlane.xlu0 %2876
        %v2878 = vsel %vm1060, %v2837, -inf
        %2879 = vmax.xlane.f32.xlu0 %v2878
        %v2880 = vpop.xlane.xlu0 %2879
        %v2881 = vsel %vm1060, %v2839, -inf
        %2882 = vmax.xlane.f32.xlu0 %v2881
        %v2883 = vpop.xlane.xlu0 %2882
        %v2884 = vsel %vm1060, %v2842, -inf
        %2885 = vmax.xlane.f32.xlu0 %v2884
        %v2886 = vpop.xlane.xlu0 %2885
        %v2887 = vsel %vm1060, %v2844, -inf
        %2888 = vmax.xlane.f32.xlu0 %v2887
        %v2889 = vpop.xlane.xlu0 %2888
        %v2890 = vsel %vm1060, %v2847, -inf
        %2891 = vmax.xlane.f32.xlu0 %v2890
        %v2892 = vpop.xlane.xlu0 %2891
        %v2893 = vsel %vm1060, %v2849, -inf
        %2894 = vmax.xlane.f32.xlu0 %v2893
        %v2895 = vpop.xlane.xlu0 %2894
        %v2896 = vsel %vm1060, %v2852, -inf
        %2897 = vmax.xlane.f32.xlu0 %v2896
        %v2898 = vpop.xlane.xlu0 %2897
        %v2899 = vsel %vm1060, %v2854, -inf
        %2900 = vmax.xlane.f32.xlu0 %v2899
        %v2901 = vpop.xlane.xlu0 %2900
        %v2902 = vsel %vm1060, %v2857, -inf
        %2903 = vmax.xlane.f32.xlu0 %v2902
        %v2904 = vpop.xlane.xlu0 %2903
        %v2905 = vsel %vm1060, %v2859, -inf
        %2906 = vmax.xlane.f32.xlu0 %v2905
        %v2907 = vpop.xlane.xlu0 %2906
        %v2908 = vsel %vm1060, %v2862, -inf
        %2909 = vmax.xlane.f32.xlu0 %v2908
        %v2910 = vpop.xlane.xlu0 %2909
        %v2911 = vsel %vm1060, %v2864, -inf
        %2912 = vmax.xlane.f32.xlu0 %v2911
        %v2913 = vpop.xlane.xlu0 %2912
        %v2914 = vsub.f32 %v2827, %v2868
        %v2915 = vsub.f32 %v2829, %v2871
        %v2916 = vsub.f32 %v2832, %v2874
        %v2917 = vsub.f32 %v2834, %v2877
        %v2918 = vsub.f32 %v2837, %v2880
        %v2919 = vsub.f32 %v2839, %v2883
        %v2920 = vsub.f32 %v2842, %v2886
        %v2921 = vsub.f32 %v2844, %v2889
        %v2922 = vsub.f32 %v2847, %v2892
        %v2923 = vsub.f32 %v2849, %v2895
        %v2924 = vsub.f32 %v2852, %v2898
        %v2925 = vsub.f32 %v2854, %v2901
        %v2926 = vsub.f32 %v2857, %v2904
        %v2927 = vsub.f32 %v2859, %v2907
        %v2928 = vsub.f32 %v2862, %v2910
        %v2929 = vsub.f32 %v2864, %v2913
        %v2930 = vmul.f32 %v2914, 1.442695
        %v2931 = vpow.pop %v2930
        %v2932 = vmul.f32 %v2915, 1.442695
        %v2933 = vpow.pop %v2932
        %v2934 = vmul.f32 %v2916, 1.442695
        %v2935 = vpow.pop %v2934
        %v2936 = vmul.f32 %v2917, 1.442695
        %v2937 = vpow.pop %v2936
        %v2938 = vmul.f32 %v2918, 1.442695
        %v2939 = vpow.pop %v2938
        %v2940 = vmul.f32 %v2919, 1.442695
        %v2941 = vpow.pop %v2940
        %v2942 = vmul.f32 %v2920, 1.442695
        %v2943 = vpow.pop %v2942
        %v2944 = vmul.f32 %v2921, 1.442695
        %v2945 = vpow.pop %v2944
        %v2946 = vmul.f32 %v2922, 1.442695
        %v2947 = vpow.pop %v2946
        %v2948 = vmul.f32 %v2923, 1.442695
        %v2949 = vpow.pop %v2948
        %v2950 = vmul.f32 %v2924, 1.442695
        %v2951 = vpow.pop %v2950
        %v2952 = vmul.f32 %v2925, 1.442695
        %v2953 = vpow.pop %v2952
        %v2954 = vmul.f32 %v2926, 1.442695
        %v2955 = vpow.pop %v2954
        %v2956 = vmul.f32 %v2927, 1.442695
        %v2957 = vpow.pop %v2956
        %v2958 = vmul.f32 %v2928, 1.442695
        %v2959 = vpow.pop %v2958
        %v2960 = vmul.f32 %v2929, 1.442695
        %v2961 = vpow.pop %v2960
        %v2962 = vsel %vm1060, %v2931, 0.0
        %2963 = vadd.xlane.f32.xlu0 %v2962
        %v2964 = vpop.xlane.xlu0 %2963
        %v2965 = vsel %vm1060, %v2933, 0.0
        %2966 = vadd.xlane.f32.xlu0 %v2965
        %v2967 = vpop.xlane.xlu0 %2966
        %v2968 = vsel %vm1060, %v2935, 0.0
        %2969 = vadd.xlane.f32.xlu0 %v2968
        %v2970 = vpop.xlane.xlu0 %2969
        %v2971 = vsel %vm1060, %v2937, 0.0
        %2972 = vadd.xlane.f32.xlu0 %v2971
        %v2973 = vpop.xlane.xlu0 %2972
        %v2974 = vsel %vm1060, %v2939, 0.0
        %2975 = vadd.xlane.f32.xlu0 %v2974
        %v2976 = vpop.xlane.xlu0 %2975
        %v2977 = vsel %vm1060, %v2941, 0.0
        %2978 = vadd.xlane.f32.xlu0 %v2977
        %v2979 = vpop.xlane.xlu0 %2978
        %v2980 = vsel %vm1060, %v2943, 0.0
        %2981 = vadd.xlane.f32.xlu0 %v2980
        %v2982 = vpop.xlane.xlu0 %2981
        %v2983 = vsel %vm1060, %v2945, 0.0
        %2984 = vadd.xlane.f32.xlu0 %v2983
        %v2985 = vpop.xlane.xlu0 %2984
        %v2986 = vsel %vm1060, %v2947, 0.0
        %2987 = vadd.xlane.f32.xlu0 %v2986
        %v2988 = vpop.xlane.xlu0 %2987
        %v2989 = vsel %vm1060, %v2949, 0.0
        %2990 = vadd.xlane.f32.xlu0 %v2989
        %v2991 = vpop.xlane.xlu0 %2990
        %v2992 = vsel %vm1060, %v2951, 0.0
        %2993 = vadd.xlane.f32.xlu0 %v2992
        %v2994 = vpop.xlane.xlu0 %2993
        %v2995 = vsel %vm1060, %v2953, 0.0
        %2996 = vadd.xlane.f32.xlu0 %v2995
        %v2997 = vpop.xlane.xlu0 %2996
        %v2998 = vsel %vm1060, %v2955, 0.0
        %2999 = vadd.xlane.f32.xlu0 %v2998
        %v3000 = vpop.xlane.xlu0 %2999
        %v3001 = vsel %vm1060, %v2957, 0.0
        %3002 = vadd.xlane.f32.xlu0 %v3001
        %v3003 = vpop.xlane.xlu0 %3002
        %v3004 = vsel %vm1060, %v2959, 0.0
        %3005 = vadd.xlane.f32.xlu0 %v3004
        %v3006 = vpop.xlane.xlu0 %3005
        %v3007 = vsel %vm1060, %v2961, 0.0
        %3008 = vadd.xlane.f32.xlu0 %v3007
        %v3009 = vpop.xlane.xlu0 %3008
        %v3010 = vrcp.pop %v2964
        %v3011 = vrcp.pop %v2967
        %v3012 = vrcp.pop %v2970
        %v3013 = vrcp.pop %v2973
        %v3014 = vrcp.pop %v2976
        %v3015 = vrcp.pop %v2979
        %v3016 = vrcp.pop %v2982
        %v3017 = vrcp.pop %v2985
        %v3018 = vrcp.pop %v2988
        %v3019 = vrcp.pop %v2991
        %v3020 = vrcp.pop %v2994
        %v3021 = vrcp.pop %v2997
        %v3022 = vrcp.pop %v3000
        %v3023 = vrcp.pop %v3003
        %v3024 = vrcp.pop %v3006
        %v3025 = vrcp.pop %v3009
        %v3026 = vmul.f32 %v2931, %v3010
        %v3027 = vmul.f32 %v2933, %v3011
        %v3028 = vmul.f32 %v2935, %v3012
        %v3029 = vmul.f32 %v2937, %v3013
        %v3030 = vmul.f32 %v2939, %v3014
        %v3031 = vmul.f32 %v2941, %v3015
        %v3032 = vmul.f32 %v2943, %v3016
        %v3033 = vmul.f32 %v2945, %v3017
        %v3034 = vmul.f32 %v2947, %v3018
        %v3035 = vmul.f32 %v2949, %v3019
        %v3036 = vmul.f32 %v2951, %v3020
        %v3037 = vmul.f32 %v2953, %v3021
        %v3038 = vmul.f32 %v2955, %v3022
        %v3039 = vmul.f32 %v2957, %v3023
        %v3040 = vmul.f32 %v2959, %v3024
        %v3041 = vmul.f32 %v2961, %v3025
        %3043 = vset.pattern.permute.xlu0 0
        %3044 = vperm.xlu0 %3043, %v3026
        %v3045 = vpop.permute.xlu0 %3044
        %3048 = vset.pattern.permute.xlu0 0
        %3049 = vperm.xlu0 %3048, %v3027
        %v3050 = vpop.permute.xlu0 %3049
        %3053 = vset.pattern.permute.xlu0 0
        %3054 = vperm.xlu0 %3053, %v3028
        %v3055 = vpop.permute.xlu0 %3054
        %3058 = vset.pattern.permute.xlu0 0
        %3059 = vperm.xlu0 %3058, %v3029
        %v3060 = vpop.permute.xlu0 %3059
        %3063 = vset.pattern.permute.xlu0 0
        %3064 = vperm.xlu0 %3063, %v3030
        %v3065 = vpop.permute.xlu0 %3064
        %3068 = vset.pattern.permute.xlu0 0
        %3069 = vperm.xlu0 %3068, %v3031
        %v3070 = vpop.permute.xlu0 %3069
        %3073 = vset.pattern.permute.xlu0 0
        %3074 = vperm.xlu0 %3073, %v3032
        %v3075 = vpop.permute.xlu0 %3074
        %3078 = vset.pattern.permute.xlu0 0
        %3079 = vperm.xlu0 %3078, %v3033
        %v3080 = vpop.permute.xlu0 %3079
        %3083 = vset.pattern.permute.xlu0 0
        %3084 = vperm.xlu0 %3083, %v3034
        %v3085 = vpop.permute.xlu0 %3084
        %3088 = vset.pattern.permute.xlu0 0
        %3089 = vperm.xlu0 %3088, %v3035
        %v3090 = vpop.permute.xlu0 %3089
        %3093 = vset.pattern.permute.xlu0 0
        %3094 = vperm.xlu0 %3093, %v3036
        %v3095 = vpop.permute.xlu0 %3094
        %3098 = vset.pattern.permute.xlu0 0
        %3099 = vperm.xlu0 %3098, %v3037
        %v3100 = vpop.permute.xlu0 %3099
        %3103 = vset.pattern.permute.xlu0 0
        %3104 = vperm.xlu0 %3103, %v3038
        %v3105 = vpop.permute.xlu0 %3104
        %3108 = vset.pattern.permute.xlu0 0
        %3109 = vperm.xlu0 %3108, %v3039
        %v3110 = vpop.permute.xlu0 %3109
        %3113 = vset.pattern.permute.xlu0 0
        %3114 = vperm.xlu0 %3113, %v3040
        %v3115 = vpop.permute.xlu0 %3114
        %3118 = vset.pattern.permute.xlu0 0
        %3119 = vperm.xlu0 %3118, %v3041
        %v3120 = vpop.permute.xlu0 %3119
        %v3122 = vmul.f32 %v3045, %v2779
        %v3123 = vmul.f32 %v3050, %v2780
        %v3124 = vmul.f32 %v3055, %v2781
        %v3125 = vmul.f32 %v3060, %v2782
        %v3126 = vmul.f32 %v3065, %v2783
        %v3127 = vmul.f32 %v3070, %v2784
        %v3128 = vmul.f32 %v3075, %v2785
        %v3129 = vmul.f32 %v3080, %v2786
        %v3130 = vmul.f32 %v3085, %v2787
        %v3131 = vmul.f32 %v3090, %v2788
        %v3132 = vmul.f32 %v3095, %v2789
        %v3133 = vmul.f32 %v3100, %v2790
        %v3134 = vmul.f32 %v3105, %v2791
        %v3135 = vmul.f32 %v3110, %v2792
        %v3136 = vmul.f32 %v3115, %v2793
        %v3137 = vmul.f32 %v3120, %v2794
        %3138 = vrot.lane.b32.xlu0 %v2779, 127
        %v3139 = vpop.permute.xlu0 %3138
        %3140 = vrot.lane.b32.xlu0 %v2780, 127
        %v3141 = vpop.permute.xlu0 %3140
        %3142 = vrot.lane.b32.xlu0 %v2781, 127
        %v3143 = vpop.permute.xlu0 %3142
        %3144 = vrot.lane.b32.xlu0 %v2782, 127
        %v3145 = vpop.permute.xlu0 %3144
        %3146 = vrot.lane.b32.xlu0 %v2783, 127
        %v3147 = vpop.permute.xlu0 %3146
        %3148 = vrot.lane.b32.xlu0 %v2784, 127
        %v3149 = vpop.permute.xlu0 %3148
        %3150 = vrot.lane.b32.xlu0 %v2785, 127
        %v3151 = vpop.permute.xlu0 %3150
        %3152 = vrot.lane.b32.xlu0 %v2786, 127
        %v3153 = vpop.permute.xlu0 %3152
        %3154 = vrot.lane.b32.xlu0 %v2787, 127
        %v3155 = vpop.permute.xlu0 %3154
        %3156 = vrot.lane.b32.xlu0 %v2788, 127
        %v3157 = vpop.permute.xlu0 %3156
        %3158 = vrot.lane.b32.xlu0 %v2789, 127
        %v3159 = vpop.permute.xlu0 %3158
        %3160 = vrot.lane.b32.xlu0 %v2790, 127
        %v3161 = vpop.permute.xlu0 %3160
        %3162 = vrot.lane.b32.xlu0 %v2791, 127
        %v3163 = vpop.permute.xlu0 %3162
        %3164 = vrot.lane.b32.xlu0 %v2792, 127
        %v3165 = vpop.permute.xlu0 %3164
        %3166 = vrot.lane.b32.xlu0 %v2793, 127
        %v3167 = vpop.permute.xlu0 %3166
        %3168 = vrot.lane.b32.xlu0 %v2794, 127
        %v3169 = vpop.permute.xlu0 %3168
        %v3170 = vsel %vm1365, %v3139, 0.0
        %v3171 = vsel %vm1365, %v3141, 0.0
        %v3172 = vsel %vm1365, %v3143, 0.0
        %v3173 = vsel %vm1365, %v3145, 0.0
        %v3174 = vsel %vm1365, %v3147, 0.0
        %v3175 = vsel %vm1365, %v3149, 0.0
        %v3176 = vsel %vm1365, %v3151, 0.0
        %v3177 = vsel %vm1365, %v3153, 0.0
        %v3178 = vsel %vm1365, %v3155, 0.0
        %v3179 = vsel %vm1365, %v3157, 0.0
        %v3180 = vsel %vm1365, %v3159, 0.0
        %v3181 = vsel %vm1365, %v3161, 0.0
        %v3182 = vsel %vm1365, %v3163, 0.0
        %v3183 = vsel %vm1365, %v3165, 0.0
        %v3184 = vsel %vm1365, %v3167, 0.0
        %v3185 = vsel %vm1365, %v3169, 0.0
        %3186 = vrot.lane.b32.xlu0 %v2779, 1
        %v3187 = vpop.permute.xlu0 %3186
        %3188 = vrot.lane.b32.xlu0 %v2780, 1
        %v3189 = vpop.permute.xlu0 %3188
        %3190 = vrot.lane.b32.xlu0 %v2781, 1
        %v3191 = vpop.permute.xlu0 %3190
        %3192 = vrot.lane.b32.xlu0 %v2782, 1
        %v3193 = vpop.permute.xlu0 %3192
        %3194 = vrot.lane.b32.xlu0 %v2783, 1
        %v3195 = vpop.permute.xlu0 %3194
        %3196 = vrot.lane.b32.xlu0 %v2784, 1
        %v3197 = vpop.permute.xlu0 %3196
        %3198 = vrot.lane.b32.xlu0 %v2785, 1
        %v3199 = vpop.permute.xlu0 %3198
        %3200 = vrot.lane.b32.xlu0 %v2786, 1
        %v3201 = vpop.permute.xlu0 %3200
        %3202 = vrot.lane.b32.xlu0 %v2787, 1
        %v3203 = vpop.permute.xlu0 %3202
        %3204 = vrot.lane.b32.xlu0 %v2788, 1
        %v3205 = vpop.permute.xlu0 %3204
        %3206 = vrot.lane.b32.xlu0 %v2789, 1
        %v3207 = vpop.permute.xlu0 %3206
        %3208 = vrot.lane.b32.xlu0 %v2790, 1
        %v3209 = vpop.permute.xlu0 %3208
        %3210 = vrot.lane.b32.xlu0 %v2791, 1
        %v3211 = vpop.permute.xlu0 %3210
        %3212 = vrot.lane.b32.xlu0 %v2792, 1
        %v3213 = vpop.permute.xlu0 %3212
        %3214 = vrot.lane.b32.xlu0 %v2793, 1
        %v3215 = vpop.permute.xlu0 %3214
        %3216 = vrot.lane.b32.xlu0 %v2794, 1
        %v3217 = vpop.permute.xlu0 %3216
        %v3218 = vsel %vm1414, %v3187, 0.0
        %v3219 = vsel %vm1414, %v3189, 0.0
        %v3220 = vsel %vm1414, %v3191, 0.0
        %v3221 = vsel %vm1414, %v3193, 0.0
        %v3222 = vsel %vm1414, %v3195, 0.0
        %v3223 = vsel %vm1414, %v3197, 0.0
        %v3224 = vsel %vm1414, %v3199, 0.0
        %v3225 = vsel %vm1414, %v3201, 0.0
        %v3226 = vsel %vm1414, %v3203, 0.0
        %v3227 = vsel %vm1414, %v3205, 0.0
        %v3228 = vsel %vm1414, %v3207, 0.0
        %v3229 = vsel %vm1414, %v3209, 0.0
        %v3230 = vsel %vm1414, %v3211, 0.0
        %v3231 = vsel %vm1414, %v3213, 0.0
        %v3232 = vsel %vm1414, %v3215, 0.0
        %v3233 = vsel %vm1414, %v3217, 0.0
        %3234 = vset.pattern.permute.xlu0 1
        %3235 = vperm.xlu0 %3234, %v3026
        %v3236 = vpop.permute.xlu0 %3235
        %3238 = vset.pattern.permute.xlu0 1
        %3239 = vperm.xlu0 %3238, %v3027
        %v3240 = vpop.permute.xlu0 %3239
        %3242 = vset.pattern.permute.xlu0 1
        %3243 = vperm.xlu0 %3242, %v3028
        %v3244 = vpop.permute.xlu0 %3243
        %3246 = vset.pattern.permute.xlu0 1
        %3247 = vperm.xlu0 %3246, %v3029
        %v3248 = vpop.permute.xlu0 %3247
        %3250 = vset.pattern.permute.xlu0 1
        %3251 = vperm.xlu0 %3250, %v3030
        %v3252 = vpop.permute.xlu0 %3251
        %3254 = vset.pattern.permute.xlu0 1
        %3255 = vperm.xlu0 %3254, %v3031
        %v3256 = vpop.permute.xlu0 %3255
        %3258 = vset.pattern.permute.xlu0 1
        %3259 = vperm.xlu0 %3258, %v3032
        %v3260 = vpop.permute.xlu0 %3259
        %3262 = vset.pattern.permute.xlu0 1
        %3263 = vperm.xlu0 %3262, %v3033
        %v3264 = vpop.permute.xlu0 %3263
        %3266 = vset.pattern.permute.xlu0 1
        %3267 = vperm.xlu0 %3266, %v3034
        %v3268 = vpop.permute.xlu0 %3267
        %3270 = vset.pattern.permute.xlu0 1
        %3271 = vperm.xlu0 %3270, %v3035
        %v3272 = vpop.permute.xlu0 %3271
        %3274 = vset.pattern.permute.xlu0 1
        %3275 = vperm.xlu0 %3274, %v3036
        %v3276 = vpop.permute.xlu0 %3275
        %3278 = vset.pattern.permute.xlu0 1
        %3279 = vperm.xlu0 %3278, %v3037
        %v3280 = vpop.permute.xlu0 %3279
        %3282 = vset.pattern.permute.xlu0 1
        %3283 = vperm.xlu0 %3282, %v3038
        %v3284 = vpop.permute.xlu0 %3283
        %3286 = vset.pattern.permute.xlu0 1
        %3287 = vperm.xlu0 %3286, %v3039
        %v3288 = vpop.permute.xlu0 %3287
        %3290 = vset.pattern.permute.xlu0 1
        %3291 = vperm.xlu0 %3290, %v3040
        %v3292 = vpop.permute.xlu0 %3291
        %3294 = vset.pattern.permute.xlu0 1
        %3295 = vperm.xlu0 %3294, %v3041
        %v3296 = vpop.permute.xlu0 %3295
        %v3298 = vmul.f32 %v3236, %v3170
        %v3299 = vmul.f32 %v3240, %v3171
        %v3300 = vmul.f32 %v3244, %v3172
        %v3301 = vmul.f32 %v3248, %v3173
        %v3302 = vmul.f32 %v3252, %v3174
        %v3303 = vmul.f32 %v3256, %v3175
        %v3304 = vmul.f32 %v3260, %v3176
        %v3305 = vmul.f32 %v3264, %v3177
        %v3306 = vmul.f32 %v3268, %v3178
        %v3307 = vmul.f32 %v3272, %v3179
        %v3308 = vmul.f32 %v3276, %v3180
        %v3309 = vmul.f32 %v3280, %v3181
        %v3310 = vmul.f32 %v3284, %v3182
        %v3311 = vmul.f32 %v3288, %v3183
        %v3312 = vmul.f32 %v3292, %v3184
        %v3313 = vmul.f32 %v3296, %v3185
        %v3314 = vadd.f32 %v3122, %v3298
        %v3315 = vadd.f32 %v3123, %v3299
        %v3316 = vadd.f32 %v3124, %v3300
        %v3317 = vadd.f32 %v3125, %v3301
        %v3318 = vadd.f32 %v3126, %v3302
        %v3319 = vadd.f32 %v3127, %v3303
        %v3320 = vadd.f32 %v3128, %v3304
        %v3321 = vadd.f32 %v3129, %v3305
        %v3322 = vadd.f32 %v3130, %v3306
        %v3323 = vadd.f32 %v3131, %v3307
        %v3324 = vadd.f32 %v3132, %v3308
        %v3325 = vadd.f32 %v3133, %v3309
        %v3326 = vadd.f32 %v3134, %v3310
        %v3327 = vadd.f32 %v3135, %v3311
        %v3328 = vadd.f32 %v3136, %v3312
        %v3329 = vadd.f32 %v3137, %v3313
        %3330 = vset.pattern.permute.xlu0 2
        %3331 = vperm.xlu0 %3330, %v3026
        %v3332 = vpop.permute.xlu0 %3331
        %3334 = vset.pattern.permute.xlu0 2
        %3335 = vperm.xlu0 %3334, %v3027
        %v3336 = vpop.permute.xlu0 %3335
        %3338 = vset.pattern.permute.xlu0 2
        %3339 = vperm.xlu0 %3338, %v3028
        %v3340 = vpop.permute.xlu0 %3339
        %3342 = vset.pattern.permute.xlu0 2
        %3343 = vperm.xlu0 %3342, %v3029
        %v3344 = vpop.permute.xlu0 %3343
        %3346 = vset.pattern.permute.xlu0 2
        %3347 = vperm.xlu0 %3346, %v3030
        %v3348 = vpop.permute.xlu0 %3347
        %3350 = vset.pattern.permute.xlu0 2
        %3351 = vperm.xlu0 %3350, %v3031
        %v3352 = vpop.permute.xlu0 %3351
        %3354 = vset.pattern.permute.xlu0 2
        %3355 = vperm.xlu0 %3354, %v3032
        %v3356 = vpop.permute.xlu0 %3355
        %3358 = vset.pattern.permute.xlu0 2
        %3359 = vperm.xlu0 %3358, %v3033
        %v3360 = vpop.permute.xlu0 %3359
        %3362 = vset.pattern.permute.xlu0 2
        %3363 = vperm.xlu0 %3362, %v3034
        %v3364 = vpop.permute.xlu0 %3363
        %3366 = vset.pattern.permute.xlu0 2
        %3367 = vperm.xlu0 %3366, %v3035
        %v3368 = vpop.permute.xlu0 %3367
        %3370 = vset.pattern.permute.xlu0 2
        %3371 = vperm.xlu0 %3370, %v3036
        %v3372 = vpop.permute.xlu0 %3371
        %3374 = vset.pattern.permute.xlu0 2
        %3375 = vperm.xlu0 %3374, %v3037
        %v3376 = vpop.permute.xlu0 %3375
        %3378 = vset.pattern.permute.xlu0 2
        %3379 = vperm.xlu0 %3378, %v3038
        %v3380 = vpop.permute.xlu0 %3379
        %3382 = vset.pattern.permute.xlu0 2
        %3383 = vperm.xlu0 %3382, %v3039
        %v3384 = vpop.permute.xlu0 %3383
        %3386 = vset.pattern.permute.xlu0 2
        %3387 = vperm.xlu0 %3386, %v3040
        %v3388 = vpop.permute.xlu0 %3387
        %3390 = vset.pattern.permute.xlu0 2
        %3391 = vperm.xlu0 %3390, %v3041
        %v3392 = vpop.permute.xlu0 %3391
        %v3394 = vmul.f32 %v3332, %v3218
        %v3395 = vmul.f32 %v3336, %v3219
        %v3396 = vmul.f32 %v3340, %v3220
        %v3397 = vmul.f32 %v3344, %v3221
        %v3398 = vmul.f32 %v3348, %v3222
        %v3399 = vmul.f32 %v3352, %v3223
        %v3400 = vmul.f32 %v3356, %v3224
        %v3401 = vmul.f32 %v3360, %v3225
        %v3402 = vmul.f32 %v3364, %v3226
        %v3403 = vmul.f32 %v3368, %v3227
        %v3404 = vmul.f32 %v3372, %v3228
        %v3405 = vmul.f32 %v3376, %v3229
        %v3406 = vmul.f32 %v3380, %v3230
        %v3407 = vmul.f32 %v3384, %v3231
        %v3408 = vmul.f32 %v3388, %v3232
        %v3409 = vmul.f32 %v3392, %v3233
        %v3410 = vadd.f32 %v3314, %v3394
        %v3411 = vadd.f32 %v3315, %v3395
        %v3412 = vadd.f32 %v3316, %v3396
        %v3413 = vadd.f32 %v3317, %v3397
        %v3414 = vadd.f32 %v3318, %v3398
        %v3415 = vadd.f32 %v3319, %v3399
        %v3416 = vadd.f32 %v3320, %v3400
        %v3417 = vadd.f32 %v3321, %v3401
        %v3418 = vadd.f32 %v3322, %v3402
        %v3419 = vadd.f32 %v3323, %v3403
        %v3420 = vadd.f32 %v3324, %v3404
        %v3421 = vadd.f32 %v3325, %v3405
        %v3422 = vadd.f32 %v3326, %v3406
        %v3423 = vadd.f32 %v3327, %v3407
        %v3424 = vadd.f32 %v3328, %v3408
        %v3425 = vadd.f32 %v3329, %v3409
        %3426 = vrot.lane.b32.xlu0 %v2779, 126
        %v3427 = vpop.permute.xlu0 %3426
        %3428 = vrot.lane.b32.xlu0 %v2780, 126
        %v3429 = vpop.permute.xlu0 %3428
        %3430 = vrot.lane.b32.xlu0 %v2781, 126
        %v3431 = vpop.permute.xlu0 %3430
        %3432 = vrot.lane.b32.xlu0 %v2782, 126
        %v3433 = vpop.permute.xlu0 %3432
        %3434 = vrot.lane.b32.xlu0 %v2783, 126
        %v3435 = vpop.permute.xlu0 %3434
        %3436 = vrot.lane.b32.xlu0 %v2784, 126
        %v3437 = vpop.permute.xlu0 %3436
        %3438 = vrot.lane.b32.xlu0 %v2785, 126
        %v3439 = vpop.permute.xlu0 %3438
        %3440 = vrot.lane.b32.xlu0 %v2786, 126
        %v3441 = vpop.permute.xlu0 %3440
        %3442 = vrot.lane.b32.xlu0 %v2787, 126
        %v3443 = vpop.permute.xlu0 %3442
        %3444 = vrot.lane.b32.xlu0 %v2788, 126
        %v3445 = vpop.permute.xlu0 %3444
        %3446 = vrot.lane.b32.xlu0 %v2789, 126
        %v3447 = vpop.permute.xlu0 %3446
        %3448 = vrot.lane.b32.xlu0 %v2790, 126
        %v3449 = vpop.permute.xlu0 %3448
        %3450 = vrot.lane.b32.xlu0 %v2791, 126
        %v3451 = vpop.permute.xlu0 %3450
        %3452 = vrot.lane.b32.xlu0 %v2792, 126
        %v3453 = vpop.permute.xlu0 %3452
        %3454 = vrot.lane.b32.xlu0 %v2793, 126
        %v3455 = vpop.permute.xlu0 %3454
        %3456 = vrot.lane.b32.xlu0 %v2794, 126
        %v3457 = vpop.permute.xlu0 %3456
        %v3458 = vsel %vm1655, %v3427, 0.0
        %v3459 = vsel %vm1655, %v3429, 0.0
        %v3460 = vsel %vm1655, %v3431, 0.0
        %v3461 = vsel %vm1655, %v3433, 0.0
        %v3462 = vsel %vm1655, %v3435, 0.0
        %v3463 = vsel %vm1655, %v3437, 0.0
        %v3464 = vsel %vm1655, %v3439, 0.0
        %v3465 = vsel %vm1655, %v3441, 0.0
        %v3466 = vsel %vm1655, %v3443, 0.0
        %v3467 = vsel %vm1655, %v3445, 0.0
        %v3468 = vsel %vm1655, %v3447, 0.0
        %v3469 = vsel %vm1655, %v3449, 0.0
        %v3470 = vsel %vm1655, %v3451, 0.0
        %v3471 = vsel %vm1655, %v3453, 0.0
        %v3472 = vsel %vm1655, %v3455, 0.0
        %v3473 = vsel %vm1655, %v3457, 0.0
        %3474 = vrot.lane.b32.xlu0 %v2779, 2
        %v3475 = vpop.permute.xlu0 %3474
        %3476 = vrot.lane.b32.xlu0 %v2780, 2
        %v3477 = vpop.permute.xlu0 %3476
        %3478 = vrot.lane.b32.xlu0 %v2781, 2
        %v3479 = vpop.permute.xlu0 %3478
        %3480 = vrot.lane.b32.xlu0 %v2782, 2
        %v3481 = vpop.permute.xlu0 %3480
        %3482 = vrot.lane.b32.xlu0 %v2783, 2
        %v3483 = vpop.permute.xlu0 %3482
        %3484 = vrot.lane.b32.xlu0 %v2784, 2
        %v3485 = vpop.permute.xlu0 %3484
        %3486 = vrot.lane.b32.xlu0 %v2785, 2
        %v3487 = vpop.permute.xlu0 %3486
        %3488 = vrot.lane.b32.xlu0 %v2786, 2
        %v3489 = vpop.permute.xlu0 %3488
        %3490 = vrot.lane.b32.xlu0 %v2787, 2
        %v3491 = vpop.permute.xlu0 %3490
        %3492 = vrot.lane.b32.xlu0 %v2788, 2
        %v3493 = vpop.permute.xlu0 %3492
        %3494 = vrot.lane.b32.xlu0 %v2789, 2
        %v3495 = vpop.permute.xlu0 %3494
        %3496 = vrot.lane.b32.xlu0 %v2790, 2
        %v3497 = vpop.permute.xlu0 %3496
        %3498 = vrot.lane.b32.xlu0 %v2791, 2
        %v3499 = vpop.permute.xlu0 %3498
        %3500 = vrot.lane.b32.xlu0 %v2792, 2
        %v3501 = vpop.permute.xlu0 %3500
        %3502 = vrot.lane.b32.xlu0 %v2793, 2
        %v3503 = vpop.permute.xlu0 %3502
        %3504 = vrot.lane.b32.xlu0 %v2794, 2
        %v3505 = vpop.permute.xlu0 %3504
        %v3506 = vsel %vm1704, %v3475, 0.0
        %v3507 = vsel %vm1704, %v3477, 0.0
        %v3508 = vsel %vm1704, %v3479, 0.0
        %v3509 = vsel %vm1704, %v3481, 0.0
        %v3510 = vsel %vm1704, %v3483, 0.0
        %v3511 = vsel %vm1704, %v3485, 0.0
        %v3512 = vsel %vm1704, %v3487, 0.0
        %v3513 = vsel %vm1704, %v3489, 0.0
        %v3514 = vsel %vm1704, %v3491, 0.0
        %v3515 = vsel %vm1704, %v3493, 0.0
        %v3516 = vsel %vm1704, %v3495, 0.0
        %v3517 = vsel %vm1704, %v3497, 0.0
        %v3518 = vsel %vm1704, %v3499, 0.0
        %v3519 = vsel %vm1704, %v3501, 0.0
        %v3520 = vsel %vm1704, %v3503, 0.0
        %v3521 = vsel %vm1704, %v3505, 0.0
        %3522 = vset.pattern.permute.xlu0 3
        %3523 = vperm.xlu0 %3522, %v3026
        %v3524 = vpop.permute.xlu0 %3523
        %3526 = vset.pattern.permute.xlu0 3
        %3527 = vperm.xlu0 %3526, %v3027
        %v3528 = vpop.permute.xlu0 %3527
        %3530 = vset.pattern.permute.xlu0 3
        %3531 = vperm.xlu0 %3530, %v3028
        %v3532 = vpop.permute.xlu0 %3531
        %3534 = vset.pattern.permute.xlu0 3
        %3535 = vperm.xlu0 %3534, %v3029
        %v3536 = vpop.permute.xlu0 %3535
        %3538 = vset.pattern.permute.xlu0 3
        %3539 = vperm.xlu0 %3538, %v3030
        %v3540 = vpop.permute.xlu0 %3539
        %3542 = vset.pattern.permute.xlu0 3
        %3543 = vperm.xlu0 %3542, %v3031
        %v3544 = vpop.permute.xlu0 %3543
        %3546 = vset.pattern.permute.xlu0 3
        %3547 = vperm.xlu0 %3546, %v3032
        %v3548 = vpop.permute.xlu0 %3547
        %3550 = vset.pattern.permute.xlu0 3
        %3551 = vperm.xlu0 %3550, %v3033
        %v3552 = vpop.permute.xlu0 %3551
        %3554 = vset.pattern.permute.xlu0 3
        %3555 = vperm.xlu0 %3554, %v3034
        %v3556 = vpop.permute.xlu0 %3555
        %3558 = vset.pattern.permute.xlu0 3
        %3559 = vperm.xlu0 %3558, %v3035
        %v3560 = vpop.permute.xlu0 %3559
        %3562 = vset.pattern.permute.xlu0 3
        %3563 = vperm.xlu0 %3562, %v3036
        %v3564 = vpop.permute.xlu0 %3563
        %3566 = vset.pattern.permute.xlu0 3
        %3567 = vperm.xlu0 %3566, %v3037
        %v3568 = vpop.permute.xlu0 %3567
        %3570 = vset.pattern.permute.xlu0 3
        %3571 = vperm.xlu0 %3570, %v3038
        %v3572 = vpop.permute.xlu0 %3571
        %3574 = vset.pattern.permute.xlu0 3
        %3575 = vperm.xlu0 %3574, %v3039
        %v3576 = vpop.permute.xlu0 %3575
        %3578 = vset.pattern.permute.xlu0 3
        %3579 = vperm.xlu0 %3578, %v3040
        %v3580 = vpop.permute.xlu0 %3579
        %3582 = vset.pattern.permute.xlu0 3
        %3583 = vperm.xlu0 %3582, %v3041
        %v3584 = vpop.permute.xlu0 %3583
        %v3586 = vmul.f32 %v3524, %v3458
        %v3587 = vmul.f32 %v3528, %v3459
        %v3588 = vmul.f32 %v3532, %v3460
        %v3589 = vmul.f32 %v3536, %v3461
        %v3590 = vmul.f32 %v3540, %v3462
        %v3591 = vmul.f32 %v3544, %v3463
        %v3592 = vmul.f32 %v3548, %v3464
        %v3593 = vmul.f32 %v3552, %v3465
        %v3594 = vmul.f32 %v3556, %v3466
        %v3595 = vmul.f32 %v3560, %v3467
        %v3596 = vmul.f32 %v3564, %v3468
        %v3597 = vmul.f32 %v3568, %v3469
        %v3598 = vmul.f32 %v3572, %v3470
        %v3599 = vmul.f32 %v3576, %v3471
        %v3600 = vmul.f32 %v3580, %v3472
        %v3601 = vmul.f32 %v3584, %v3473
        %v3602 = vadd.f32 %v3410, %v3586
        %v3603 = vadd.f32 %v3411, %v3587
        %v3604 = vadd.f32 %v3412, %v3588
        %v3605 = vadd.f32 %v3413, %v3589
        %v3606 = vadd.f32 %v3414, %v3590
        %v3607 = vadd.f32 %v3415, %v3591
        %v3608 = vadd.f32 %v3416, %v3592
        %v3609 = vadd.f32 %v3417, %v3593
        %v3610 = vadd.f32 %v3418, %v3594
        %v3611 = vadd.f32 %v3419, %v3595
        %v3612 = vadd.f32 %v3420, %v3596
        %v3613 = vadd.f32 %v3421, %v3597
        %v3614 = vadd.f32 %v3422, %v3598
        %v3615 = vadd.f32 %v3423, %v3599
        %v3616 = vadd.f32 %v3424, %v3600
        %v3617 = vadd.f32 %v3425, %v3601
        %3618 = vset.pattern.permute.xlu0 4
        %3619 = vperm.xlu0 %3618, %v3026
        %v3620 = vpop.permute.xlu0 %3619
        %3622 = vset.pattern.permute.xlu0 4
        %3623 = vperm.xlu0 %3622, %v3027
        %v3624 = vpop.permute.xlu0 %3623
        %3626 = vset.pattern.permute.xlu0 4
        %3627 = vperm.xlu0 %3626, %v3028
        %v3628 = vpop.permute.xlu0 %3627
        %3630 = vset.pattern.permute.xlu0 4
        %3631 = vperm.xlu0 %3630, %v3029
        %v3632 = vpop.permute.xlu0 %3631
        %3634 = vset.pattern.permute.xlu0 4
        %3635 = vperm.xlu0 %3634, %v3030
        %v3636 = vpop.permute.xlu0 %3635
        %3638 = vset.pattern.permute.xlu0 4
        %3639 = vperm.xlu0 %3638, %v3031
        %v3640 = vpop.permute.xlu0 %3639
        %3642 = vset.pattern.permute.xlu0 4
        %3643 = vperm.xlu0 %3642, %v3032
        %v3644 = vpop.permute.xlu0 %3643
        %3646 = vset.pattern.permute.xlu0 4
        %3647 = vperm.xlu0 %3646, %v3033
        %v3648 = vpop.permute.xlu0 %3647
        %3650 = vset.pattern.permute.xlu0 4
        %3651 = vperm.xlu0 %3650, %v3034
        %v3652 = vpop.permute.xlu0 %3651
        %3654 = vset.pattern.permute.xlu0 4
        %3655 = vperm.xlu0 %3654, %v3035
        %v3656 = vpop.permute.xlu0 %3655
        %3658 = vset.pattern.permute.xlu0 4
        %3659 = vperm.xlu0 %3658, %v3036
        %v3660 = vpop.permute.xlu0 %3659
        %3662 = vset.pattern.permute.xlu0 4
        %3663 = vperm.xlu0 %3662, %v3037
        %v3664 = vpop.permute.xlu0 %3663
        %3666 = vset.pattern.permute.xlu0 4
        %3667 = vperm.xlu0 %3666, %v3038
        %v3668 = vpop.permute.xlu0 %3667
        %3670 = vset.pattern.permute.xlu0 4
        %3671 = vperm.xlu0 %3670, %v3039
        %v3672 = vpop.permute.xlu0 %3671
        %3674 = vset.pattern.permute.xlu0 4
        %3675 = vperm.xlu0 %3674, %v3040
        %v3676 = vpop.permute.xlu0 %3675
        %3678 = vset.pattern.permute.xlu0 4
        %3679 = vperm.xlu0 %3678, %v3041
        %v3680 = vpop.permute.xlu0 %3679
        %v3682 = vmul.f32 %v3620, %v3506
        %v3683 = vmul.f32 %v3624, %v3507
        %v3684 = vmul.f32 %v3628, %v3508
        %v3685 = vmul.f32 %v3632, %v3509
        %v3686 = vmul.f32 %v3636, %v3510
        %v3687 = vmul.f32 %v3640, %v3511
        %v3688 = vmul.f32 %v3644, %v3512
        %v3689 = vmul.f32 %v3648, %v3513
        %v3690 = vmul.f32 %v3652, %v3514
        %v3691 = vmul.f32 %v3656, %v3515
        %v3692 = vmul.f32 %v3660, %v3516
        %v3693 = vmul.f32 %v3664, %v3517
        %v3694 = vmul.f32 %v3668, %v3518
        %v3695 = vmul.f32 %v3672, %v3519
        %v3696 = vmul.f32 %v3676, %v3520
        %v3697 = vmul.f32 %v3680, %v3521
        %v3698 = vadd.f32 %v3602, %v3682
        %v3699 = vadd.f32 %v3603, %v3683
        %v3700 = vadd.f32 %v3604, %v3684
        %v3701 = vadd.f32 %v3605, %v3685
        %v3702 = vadd.f32 %v3606, %v3686
        %v3703 = vadd.f32 %v3607, %v3687
        %v3704 = vadd.f32 %v3608, %v3688
        %v3705 = vadd.f32 %v3609, %v3689
        %v3706 = vadd.f32 %v3610, %v3690
        %v3707 = vadd.f32 %v3611, %v3691
        %v3708 = vadd.f32 %v3612, %v3692
        %v3709 = vadd.f32 %v3613, %v3693
        %v3710 = vadd.f32 %v3614, %v3694
        %v3711 = vadd.f32 %v3615, %v3695
        %v3712 = vadd.f32 %v3616, %v3696
        %v3713 = vadd.f32 %v3617, %v3697
        %3714 = vrot.lane.b32.xlu0 %v2779, 125
        %v3715 = vpop.permute.xlu0 %3714
        %3716 = vrot.lane.b32.xlu0 %v2780, 125
        %v3717 = vpop.permute.xlu0 %3716
        %3718 = vrot.lane.b32.xlu0 %v2781, 125
        %v3719 = vpop.permute.xlu0 %3718
        %3720 = vrot.lane.b32.xlu0 %v2782, 125
        %v3721 = vpop.permute.xlu0 %3720
        %3722 = vrot.lane.b32.xlu0 %v2783, 125
        %v3723 = vpop.permute.xlu0 %3722
        %3724 = vrot.lane.b32.xlu0 %v2784, 125
        %v3725 = vpop.permute.xlu0 %3724
        %3726 = vrot.lane.b32.xlu0 %v2785, 125
        %v3727 = vpop.permute.xlu0 %3726
        %3728 = vrot.lane.b32.xlu0 %v2786, 125
        %v3729 = vpop.permute.xlu0 %3728
        %3730 = vrot.lane.b32.xlu0 %v2787, 125
        %v3731 = vpop.permute.xlu0 %3730
        %3732 = vrot.lane.b32.xlu0 %v2788, 125
        %v3733 = vpop.permute.xlu0 %3732
        %3734 = vrot.lane.b32.xlu0 %v2789, 125
        %v3735 = vpop.permute.xlu0 %3734
        %3736 = vrot.lane.b32.xlu0 %v2790, 125
        %v3737 = vpop.permute.xlu0 %3736
        %3738 = vrot.lane.b32.xlu0 %v2791, 125
        %v3739 = vpop.permute.xlu0 %3738
        %3740 = vrot.lane.b32.xlu0 %v2792, 125
        %v3741 = vpop.permute.xlu0 %3740
        %3742 = vrot.lane.b32.xlu0 %v2793, 125
        %v3743 = vpop.permute.xlu0 %3742
        %3744 = vrot.lane.b32.xlu0 %v2794, 125
        %v3745 = vpop.permute.xlu0 %3744
        %v3746 = vsel %vm1945, %v3715, 0.0
        %v3747 = vsel %vm1945, %v3717, 0.0
        %v3748 = vsel %vm1945, %v3719, 0.0
        %v3749 = vsel %vm1945, %v3721, 0.0
        %v3750 = vsel %vm1945, %v3723, 0.0
        %v3751 = vsel %vm1945, %v3725, 0.0
        %v3752 = vsel %vm1945, %v3727, 0.0
        %v3753 = vsel %vm1945, %v3729, 0.0
        %v3754 = vsel %vm1945, %v3731, 0.0
        %v3755 = vsel %vm1945, %v3733, 0.0
        %v3756 = vsel %vm1945, %v3735, 0.0
        %v3757 = vsel %vm1945, %v3737, 0.0
        %v3758 = vsel %vm1945, %v3739, 0.0
        %v3759 = vsel %vm1945, %v3741, 0.0
        %v3760 = vsel %vm1945, %v3743, 0.0
        %v3761 = vsel %vm1945, %v3745, 0.0
        %3762 = vrot.lane.b32.xlu0 %v2779, 3
        %v3763 = vpop.permute.xlu0 %3762
        %3764 = vrot.lane.b32.xlu0 %v2780, 3
        %v3765 = vpop.permute.xlu0 %3764
        %3766 = vrot.lane.b32.xlu0 %v2781, 3
        %v3767 = vpop.permute.xlu0 %3766
        %3768 = vrot.lane.b32.xlu0 %v2782, 3
        %v3769 = vpop.permute.xlu0 %3768
        %3770 = vrot.lane.b32.xlu0 %v2783, 3
        %v3771 = vpop.permute.xlu0 %3770
        %3772 = vrot.lane.b32.xlu0 %v2784, 3
        %v3773 = vpop.permute.xlu0 %3772
        %3774 = vrot.lane.b32.xlu0 %v2785, 3
        %v3775 = vpop.permute.xlu0 %3774
        %3776 = vrot.lane.b32.xlu0 %v2786, 3
        %v3777 = vpop.permute.xlu0 %3776
        %3778 = vrot.lane.b32.xlu0 %v2787, 3
        %v3779 = vpop.permute.xlu0 %3778
        %3780 = vrot.lane.b32.xlu0 %v2788, 3
        %v3781 = vpop.permute.xlu0 %3780
        %3782 = vrot.lane.b32.xlu0 %v2789, 3
        %v3783 = vpop.permute.xlu0 %3782
        %3784 = vrot.lane.b32.xlu0 %v2790, 3
        %v3785 = vpop.permute.xlu0 %3784
        %3786 = vrot.lane.b32.xlu0 %v2791, 3
        %v3787 = vpop.permute.xlu0 %3786
        %3788 = vrot.lane.b32.xlu0 %v2792, 3
        %v3789 = vpop.permute.xlu0 %3788
        %3790 = vrot.lane.b32.xlu0 %v2793, 3
        %v3791 = vpop.permute.xlu0 %3790
        %3792 = vrot.lane.b32.xlu0 %v2794, 3
        %v3793 = vpop.permute.xlu0 %3792
        %v3794 = vsel %vm1994, %v3763, 0.0
        %v3795 = vsel %vm1994, %v3765, 0.0
        %v3796 = vsel %vm1994, %v3767, 0.0
        %v3797 = vsel %vm1994, %v3769, 0.0
        %v3798 = vsel %vm1994, %v3771, 0.0
        %v3799 = vsel %vm1994, %v3773, 0.0
        %v3800 = vsel %vm1994, %v3775, 0.0
        %v3801 = vsel %vm1994, %v3777, 0.0
        %v3802 = vsel %vm1994, %v3779, 0.0
        %v3803 = vsel %vm1994, %v3781, 0.0
        %v3804 = vsel %vm1994, %v3783, 0.0
        %v3805 = vsel %vm1994, %v3785, 0.0
        %v3806 = vsel %vm1994, %v3787, 0.0
        %v3807 = vsel %vm1994, %v3789, 0.0
        %v3808 = vsel %vm1994, %v3791, 0.0
        %v3809 = vsel %vm1994, %v3793, 0.0
        %3810 = vset.pattern.permute.xlu0 5
        %3811 = vperm.xlu0 %3810, %v3026
        %v3812 = vpop.permute.xlu0 %3811
        %3814 = vset.pattern.permute.xlu0 5
        %3815 = vperm.xlu0 %3814, %v3027
        %v3816 = vpop.permute.xlu0 %3815
        %3818 = vset.pattern.permute.xlu0 5
        %3819 = vperm.xlu0 %3818, %v3028
        %v3820 = vpop.permute.xlu0 %3819
        %3822 = vset.pattern.permute.xlu0 5
        %3823 = vperm.xlu0 %3822, %v3029
        %v3824 = vpop.permute.xlu0 %3823
        %3826 = vset.pattern.permute.xlu0 5
        %3827 = vperm.xlu0 %3826, %v3030
        %v3828 = vpop.permute.xlu0 %3827
        %3830 = vset.pattern.permute.xlu0 5
        %3831 = vperm.xlu0 %3830, %v3031
        %v3832 = vpop.permute.xlu0 %3831
        %3834 = vset.pattern.permute.xlu0 5
        %3835 = vperm.xlu0 %3834, %v3032
        %v3836 = vpop.permute.xlu0 %3835
        %3838 = vset.pattern.permute.xlu0 5
        %3839 = vperm.xlu0 %3838, %v3033
        %v3840 = vpop.permute.xlu0 %3839
        %3842 = vset.pattern.permute.xlu0 5
        %3843 = vperm.xlu0 %3842, %v3034
        %v3844 = vpop.permute.xlu0 %3843
        %3846 = vset.pattern.permute.xlu0 5
        %3847 = vperm.xlu0 %3846, %v3035
        %v3848 = vpop.permute.xlu0 %3847
        %3850 = vset.pattern.permute.xlu0 5
        %3851 = vperm.xlu0 %3850, %v3036
        %v3852 = vpop.permute.xlu0 %3851
        %3854 = vset.pattern.permute.xlu0 5
        %3855 = vperm.xlu0 %3854, %v3037
        %v3856 = vpop.permute.xlu0 %3855
        %3858 = vset.pattern.permute.xlu0 5
        %3859 = vperm.xlu0 %3858, %v3038
        %v3860 = vpop.permute.xlu0 %3859
        %3862 = vset.pattern.permute.xlu0 5
        %3863 = vperm.xlu0 %3862, %v3039
        %v3864 = vpop.permute.xlu0 %3863
        %3866 = vset.pattern.permute.xlu0 5
        %3867 = vperm.xlu0 %3866, %v3040
        %v3868 = vpop.permute.xlu0 %3867
        %3870 = vset.pattern.permute.xlu0 5
        %3871 = vperm.xlu0 %3870, %v3041
        %v3872 = vpop.permute.xlu0 %3871
        %v3874 = vmul.f32 %v3812, %v3746
        %v3875 = vmul.f32 %v3816, %v3747
        %v3876 = vmul.f32 %v3820, %v3748
        %v3877 = vmul.f32 %v3824, %v3749
        %v3878 = vmul.f32 %v3828, %v3750
        %v3879 = vmul.f32 %v3832, %v3751
        %v3880 = vmul.f32 %v3836, %v3752
        %v3881 = vmul.f32 %v3840, %v3753
        %v3882 = vmul.f32 %v3844, %v3754
        %v3883 = vmul.f32 %v3848, %v3755
        %v3884 = vmul.f32 %v3852, %v3756
        %v3885 = vmul.f32 %v3856, %v3757
        %v3886 = vmul.f32 %v3860, %v3758
        %v3887 = vmul.f32 %v3864, %v3759
        %v3888 = vmul.f32 %v3868, %v3760
        %v3889 = vmul.f32 %v3872, %v3761
        %v3890 = vadd.f32 %v3698, %v3874
        %v3891 = vadd.f32 %v3699, %v3875
        %v3892 = vadd.f32 %v3700, %v3876
        %v3893 = vadd.f32 %v3701, %v3877
        %v3894 = vadd.f32 %v3702, %v3878
        %v3895 = vadd.f32 %v3703, %v3879
        %v3896 = vadd.f32 %v3704, %v3880
        %v3897 = vadd.f32 %v3705, %v3881
        %v3898 = vadd.f32 %v3706, %v3882
        %v3899 = vadd.f32 %v3707, %v3883
        %v3900 = vadd.f32 %v3708, %v3884
        %v3901 = vadd.f32 %v3709, %v3885
        %v3902 = vadd.f32 %v3710, %v3886
        %v3903 = vadd.f32 %v3711, %v3887
        %v3904 = vadd.f32 %v3712, %v3888
        %v3905 = vadd.f32 %v3713, %v3889
        %3906 = vset.pattern.permute.xlu0 6
        %3907 = vperm.xlu0 %3906, %v3026
        %v3908 = vpop.permute.xlu0 %3907
        %3910 = vset.pattern.permute.xlu0 6
        %3911 = vperm.xlu0 %3910, %v3027
        %v3912 = vpop.permute.xlu0 %3911
        %3914 = vset.pattern.permute.xlu0 6
        %3915 = vperm.xlu0 %3914, %v3028
        %v3916 = vpop.permute.xlu0 %3915
        %3918 = vset.pattern.permute.xlu0 6
        %3919 = vperm.xlu0 %3918, %v3029
        %v3920 = vpop.permute.xlu0 %3919
        %3922 = vset.pattern.permute.xlu0 6
        %3923 = vperm.xlu0 %3922, %v3030
        %v3924 = vpop.permute.xlu0 %3923
        %3926 = vset.pattern.permute.xlu0 6
        %3927 = vperm.xlu0 %3926, %v3031
        %v3928 = vpop.permute.xlu0 %3927
        %3930 = vset.pattern.permute.xlu0 6
        %3931 = vperm.xlu0 %3930, %v3032
        %v3932 = vpop.permute.xlu0 %3931
        %3934 = vset.pattern.permute.xlu0 6
        %3935 = vperm.xlu0 %3934, %v3033
        %v3936 = vpop.permute.xlu0 %3935
        %3938 = vset.pattern.permute.xlu0 6
        %3939 = vperm.xlu0 %3938, %v3034
        %v3940 = vpop.permute.xlu0 %3939
        %3942 = vset.pattern.permute.xlu0 6
        %3943 = vperm.xlu0 %3942, %v3035
        %v3944 = vpop.permute.xlu0 %3943
        %3946 = vset.pattern.permute.xlu0 6
        %3947 = vperm.xlu0 %3946, %v3036
        %v3948 = vpop.permute.xlu0 %3947
        %3950 = vset.pattern.permute.xlu0 6
        %3951 = vperm.xlu0 %3950, %v3037
        %v3952 = vpop.permute.xlu0 %3951
        %3954 = vset.pattern.permute.xlu0 6
        %3955 = vperm.xlu0 %3954, %v3038
        %v3956 = vpop.permute.xlu0 %3955
        %3958 = vset.pattern.permute.xlu0 6
        %3959 = vperm.xlu0 %3958, %v3039
        %v3960 = vpop.permute.xlu0 %3959
        %3962 = vset.pattern.permute.xlu0 6
        %3963 = vperm.xlu0 %3962, %v3040
        %v3964 = vpop.permute.xlu0 %3963
        %3966 = vset.pattern.permute.xlu0 6
        %3967 = vperm.xlu0 %3966, %v3041
        %v3968 = vpop.permute.xlu0 %3967
        %v3970 = vmul.f32 %v3908, %v3794
        %v3971 = vmul.f32 %v3912, %v3795
        %v3972 = vmul.f32 %v3916, %v3796
        %v3973 = vmul.f32 %v3920, %v3797
        %v3974 = vmul.f32 %v3924, %v3798
        %v3975 = vmul.f32 %v3928, %v3799
        %v3976 = vmul.f32 %v3932, %v3800
        %v3977 = vmul.f32 %v3936, %v3801
        %v3978 = vmul.f32 %v3940, %v3802
        %v3979 = vmul.f32 %v3944, %v3803
        %v3980 = vmul.f32 %v3948, %v3804
        %v3981 = vmul.f32 %v3952, %v3805
        %v3982 = vmul.f32 %v3956, %v3806
        %v3983 = vmul.f32 %v3960, %v3807
        %v3984 = vmul.f32 %v3964, %v3808
        %v3985 = vmul.f32 %v3968, %v3809
        %v3986 = vadd.f32 %v3890, %v3970
        %v3987 = vadd.f32 %v3891, %v3971
        %v3988 = vadd.f32 %v3892, %v3972
        %v3989 = vadd.f32 %v3893, %v3973
        %v3990 = vadd.f32 %v3894, %v3974
        %v3991 = vadd.f32 %v3895, %v3975
        %v3992 = vadd.f32 %v3896, %v3976
        %v3993 = vadd.f32 %v3897, %v3977
        %v3994 = vadd.f32 %v3898, %v3978
        %v3995 = vadd.f32 %v3899, %v3979
        %v3996 = vadd.f32 %v3900, %v3980
        %v3997 = vadd.f32 %v3901, %v3981
        %v3998 = vadd.f32 %v3902, %v3982
        %v3999 = vadd.f32 %v3903, %v3983
        %v4000 = vadd.f32 %v3904, %v3984
        %v4001 = vadd.f32 %v3905, %v3985
        %v4002 = vsel %vm469, %v3986, 0.0
        %v4003 = vsel %vm470, %v3987, 0.0
        %v4004 = vsel %vm471, %v3988, 0.0
        %v4005 = vsel %vm472, %v3989, 0.0
        %v4006 = vsel %vm473, %v3990, 0.0
        %v4007 = vsel %vm474, %v3991, 0.0
        %v4008 = vsel %vm475, %v3992, 0.0
        %v4009 = vsel %vm476, %v3993, 0.0
        %v4010 = vsel %vm477, %v3994, 0.0
        %v4011 = vsel %vm478, %v3995, 0.0
        %v4012 = vsel %vm479, %v3996, 0.0
        %v4013 = vsel %vm480, %v3997, 0.0
        %v4014 = vsel %vm481, %v3998, 0.0
        %v4015 = vsel %vm482, %v3999, 0.0
        %v4016 = vsel %vm483, %v4000, 0.0
        %v4017 = vsel %vm484, %v4001, 0.0
        %s4018 = scalar_lea.vmem %s414, 128 [#allocation2]
        %4019 = vst [vmem:[%s4018] sm:$0xff] %v4002
        %4020 = vst [vmem:[%s4018 + $0x8] sm:$0xff] %v4003
        %4021 = vst [vmem:[%s4018 + $0x10] sm:$0xff] %v4004
        %4022 = vst [vmem:[%s4018 + $0x18] sm:$0xff] %v4005
        %4023 = vst [vmem:[%s4018 + $0x20] sm:$0xff] %v4006
        %4024 = vst [vmem:[%s4018 + $0x28] sm:$0xff] %v4007
        %4025 = vst [vmem:[%s4018 + $0x30] sm:$0xff] %v4008
        %4026 = vst [vmem:[%s4018 + $0x38] sm:$0xff] %v4009
        %4027 = vst [vmem:[%s4018 + $0x40] sm:$0xff] %v4010
        %4028 = vst [vmem:[%s4018 + $0x48] sm:$0xff] %v4011
        %4029 = vst [vmem:[%s4018 + $0x50] sm:$0xff] %v4012
        %4030 = vst [vmem:[%s4018 + $0x58] sm:$0xff] %v4013
        %4031 = vst [vmem:[%s4018 + $0x60] sm:$0xff] %v4014
        %4032 = vst [vmem:[%s4018 + $0x68] sm:$0xff] %v4015
        %4033 = vst [vmem:[%s4018 + $0x70] sm:$0xff] %v4016
        %4034 = vst [vmem:[%s4018 + $0x78] sm:$0xff] %v4017
        %v4035 = vpack.c.bf16 %v4003, %v4002
        %v4036 = vpack.c.bf16 %v4005, %v4004
        %v4037 = vpack.c.bf16 %v4007, %v4006
        %v4038 = vpack.c.bf16 %v4009, %v4008
        %v4039 = vpack.c.bf16 %v4011, %v4010
        %v4040 = vpack.c.bf16 %v4013, %v4012
        %v4041 = vpack.c.bf16 %v4015, %v4014
        %v4042 = vpack.c.bf16 %v4017, %v4016
        %v4043 = vpack.c.bf16 %v2485, %v2483
        %v4044 = vpack.c.bf16 %v2490, %v2488
        %v4045 = vpack.c.bf16 %v2495, %v2493
        %v4046 = vpack.c.bf16 %v2500, %v2498
        %v4047 = vpack.c.bf16 %v2505, %v2503
        %v4048 = vpack.c.bf16 %v2510, %v2508
        %v4049 = vpack.c.bf16 %v2515, %v2513
        %v4050 = vpack.c.bf16 %v2520, %v2518
        %4051 = vmatpush.bf16.msra.mxu0 %v4050
        %4052 = vmatpush.bf16.msra.mxu0 %v4049
        %4053 = vmatpush.bf16.msra.mxu0 %v4048
        %4054 = vmatpush.bf16.msra.mxu0 %v4047
        %4055 = vmatpush.bf16.msra.mxu0 %v4046
        %4056 = vmatpush.bf16.msra.mxu0 %v4045
        %4057 = vmatpush.bf16.msra.mxu0 %v4044
        %4058 = vmatpush.bf16.msra.mxu0 %v4043
        %4059 = vmatmul.bf16.gmra.mxu0 %v4035
        %v4060 = vpop.f32.mrf.mxu0
        %v4061 = vadd.f32 0.0, %v4060
        %v4062 = vpop.f32.mrf.mxu0
        %v4063 = vadd.f32 0.0, %v4062
        %4064 = vmatmul.bf16.gmra.mxu0 %v4036
        %v4065 = vpop.f32.mrf.mxu0
        %v4066 = vadd.f32 0.0, %v4065
        %v4067 = vpop.f32.mrf.mxu0
        %v4068 = vadd.f32 0.0, %v4067
        %4069 = vmatmul.bf16.gmra.mxu0 %v4037
        %v4070 = vpop.f32.mrf.mxu0
        %v4071 = vadd.f32 0.0, %v4070
        %v4072 = vpop.f32.mrf.mxu0
        %v4073 = vadd.f32 0.0, %v4072
        %4074 = vmatmul.bf16.gmra.mxu0 %v4038
        %v4075 = vpop.f32.mrf.mxu0
        %v4076 = vadd.f32 0.0, %v4075
        %v4077 = vpop.f32.mrf.mxu0
        %v4078 = vadd.f32 0.0, %v4077
        %4079 = vmatmul.bf16.gmra.mxu0 %v4039
        %v4080 = vpop.f32.mrf.mxu0
        %v4081 = vadd.f32 0.0, %v4080
        %v4082 = vpop.f32.mrf.mxu0
        %v4083 = vadd.f32 0.0, %v4082
        %4084 = vmatmul.bf16.gmra.mxu0 %v4040
        %v4085 = vpop.f32.mrf.mxu0
        %v4086 = vadd.f32 0.0, %v4085
        %v4087 = vpop.f32.mrf.mxu0
        %v4088 = vadd.f32 0.0, %v4087
        %4089 = vmatmul.bf16.gmra.mxu0 %v4041
        %v4090 = vpop.f32.mrf.mxu0
        %v4091 = vadd.f32 0.0, %v4090
        %v4092 = vpop.f32.mrf.mxu0
        %v4093 = vadd.f32 0.0, %v4092
        %4094 = vmatmul.bf16.gmra.mxu0 %v4042
        %v4095 = vpop.f32.mrf.mxu0
        %v4096 = vadd.f32 0.0, %v4095
        %v4097 = vpop.f32.mrf.mxu0
        %v4098 = vadd.f32 0.0, %v4097
        %4099 = vdwg.mxu0
        %v4100 = vpack.c.bf16 %v4063, %v4061
        %v4101 = vpack.c.bf16 %v4068, %v4066
        %v4102 = vpack.c.bf16 %v4073, %v4071
        %v4103 = vpack.c.bf16 %v4078, %v4076
        %v4104 = vpack.c.bf16 %v4083, %v4081
        %v4105 = vpack.c.bf16 %v4088, %v4086
        %v4106 = vpack.c.bf16 %v4093, %v4091
        %v4107 = vpack.c.bf16 %v4098, %v4096
        %s4108 = scalar_lea.vmem %s9, 4
        %v4109 = vld [vmem:[%s4108] sm:$0xf]
        %v4111 = vsel %vm733, %v4100, 0
        %v4114 = vsel %vm733, %v4101, 0
        %v4117 = vsel %vm733, %v4102, 0
        %v4120 = vsel %vm733, %v4103, 0
        %v4123 = vsel %vm733, %v4104, 0
        %v4126 = vsel %vm733, %v4105, 0
        %v4129 = vsel %vm733, %v4106, 0
        %v4132 = vsel %vm733, %v4107, 0
        %vm4134 = vcmask 1043456
        %v4136 = vsel %vm4134, %v4109, 0
        %4138 = vmatpush.bf16.msra.mxu0 0
        %4139 = vmatpush.bf16.msra.mxu0 0
        %4140 = vmatpush.bf16.msra.mxu0 0
        %4141 = vmatpush.bf16.msra.mxu0 0
        %4142 = vmatpush.bf16.msra.mxu0 0
        %4143 = vmatpush.bf16.msra.mxu0 0
        %4144 = vmatpush.bf16.msra.mxu0 0
        %4145 = vmatpush.bf16.msra.mxu0 %v4136
        %4146 = vmatmul.bf16.gmra.mxu0 %v4111
        %v4147 = vpop.f32.mrf.mxu0
        %v4148 = vadd.f32 0.0, %v4147
        %v4149 = vpop.f32.mrf.mxu0
        %v4150 = vadd.f32 0.0, %v4149
        %4151 = vmatmul.bf16.gmra.mxu0 %v4114
        %v4152 = vpop.f32.mrf.mxu0
        %v4153 = vadd.f32 0.0, %v4152
        %v4154 = vpop.f32.mrf.mxu0
        %v4155 = vadd.f32 0.0, %v4154
        %4156 = vmatmul.bf16.gmra.mxu0 %v4117
        %v4157 = vpop.f32.mrf.mxu0
        %v4158 = vadd.f32 0.0, %v4157
        %v4159 = vpop.f32.mrf.mxu0
        %v4160 = vadd.f32 0.0, %v4159
        %4161 = vmatmul.bf16.gmra.mxu0 %v4120
        %v4162 = vpop.f32.mrf.mxu0
        %v4163 = vadd.f32 0.0, %v4162
        %v4164 = vpop.f32.mrf.mxu0
        %v4165 = vadd.f32 0.0, %v4164
        %4166 = vmatmul.bf16.gmra.mxu0 %v4123
        %v4167 = vpop.f32.mrf.mxu0
        %v4168 = vadd.f32 0.0, %v4167
        %v4169 = vpop.f32.mrf.mxu0
        %v4170 = vadd.f32 0.0, %v4169
        %4171 = vmatmul.bf16.gmra.mxu0 %v4126
        %v4172 = vpop.f32.mrf.mxu0
        %v4173 = vadd.f32 0.0, %v4172
        %v4174 = vpop.f32.mrf.mxu0
        %v4175 = vadd.f32 0.0, %v4174
        %4176 = vmatmul.bf16.gmra.mxu0 %v4129
        %v4177 = vpop.f32.mrf.mxu0
        %v4178 = vadd.f32 0.0, %v4177
        %v4179 = vpop.f32.mrf.mxu0
        %v4180 = vadd.f32 0.0, %v4179
        %4181 = vmatmul.bf16.gmra.mxu0 %v4132
        %v4182 = vpop.f32.mrf.mxu0
        %v4183 = vadd.f32 0.0, %v4182
        %v4184 = vpop.f32.mrf.mxu0
        %v4185 = vadd.f32 0.0, %v4184
        %4186 = vdwg.mxu0
        %v4188 = vsel %vm733, %v2300, 0
        %v4191 = vsel %vm733, %v2301, 0
        %v4194 = vsel %vm733, %v2302, 0
        %v4197 = vsel %vm733, %v2303, 0
        %v4200 = vsel %vm733, %v2304, 0
        %v4203 = vsel %vm733, %v2305, 0
        %v4206 = vsel %vm733, %v2306, 0
        %v4209 = vsel %vm733, %v2307, 0
        %v4212 = vsel %vm4134, %v2308, 0
        %4214 = vmatpush.bf16.msra.mxu0 0
        %4215 = vmatpush.bf16.msra.mxu0 0
        %4216 = vmatpush.bf16.msra.mxu0 0
        %4217 = vmatpush.bf16.msra.mxu0 0
        %4218 = vmatpush.bf16.msra.mxu0 0
        %4219 = vmatpush.bf16.msra.mxu0 0
        %4220 = vmatpush.bf16.msra.mxu0 0
        %4221 = vmatpush.bf16.msra.mxu0 %v4212
        %4222 = vmatmul.bf16.gmra.mxu0 %v4188
        %v4223 = vpop.f32.mrf.mxu0
        %v4224 = vadd.f32 %v4148, %v4223
        %v4225 = vpop.f32.mrf.mxu0
        %v4226 = vadd.f32 %v4150, %v4225
        %4227 = vmatmul.bf16.gmra.mxu0 %v4191
        %v4228 = vpop.f32.mrf.mxu0
        %v4229 = vadd.f32 %v4153, %v4228
        %v4230 = vpop.f32.mrf.mxu0
        %v4231 = vadd.f32 %v4155, %v4230
        %4232 = vmatmul.bf16.gmra.mxu0 %v4194
        %v4233 = vpop.f32.mrf.mxu0
        %v4234 = vadd.f32 %v4158, %v4233
        %v4235 = vpop.f32.mrf.mxu0
        %v4236 = vadd.f32 %v4160, %v4235
        %4237 = vmatmul.bf16.gmra.mxu0 %v4197
        %v4238 = vpop.f32.mrf.mxu0
        %v4239 = vadd.f32 %v4163, %v4238
        %v4240 = vpop.f32.mrf.mxu0
        %v4241 = vadd.f32 %v4165, %v4240
        %4242 = vmatmul.bf16.gmra.mxu0 %v4200
        %v4243 = vpop.f32.mrf.mxu0
        %v4244 = vadd.f32 %v4168, %v4243
        %v4245 = vpop.f32.mrf.mxu0
        %v4246 = vadd.f32 %v4170, %v4245
        %4247 = vmatmul.bf16.gmra.mxu0 %v4203
        %v4248 = vpop.f32.mrf.mxu0
        %v4249 = vadd.f32 %v4173, %v4248
        %v4250 = vpop.f32.mrf.mxu0
        %v4251 = vadd.f32 %v4175, %v4250
        %4252 = vmatmul.bf16.gmra.mxu0 %v4206
        %v4253 = vpop.f32.mrf.mxu0
        %v4254 = vadd.f32 %v4178, %v4253
        %v4255 = vpop.f32.mrf.mxu0
        %v4256 = vadd.f32 %v4180, %v4255
        %4257 = vmatmul.bf16.gmra.mxu0 %v4209
        %v4258 = vpop.f32.mrf.mxu0
        %v4259 = vadd.f32 %v4183, %v4258
        %v4260 = vpop.f32.mrf.mxu0
        %v4261 = vadd.f32 %v4185, %v4260
        %4262 = vdwg.mxu0
        %s4263 = scalar_lea.vmem %s1, 32
        %v4264 = vld [vmem:[%s4263] sm:$0xf]
        %v4265 = vld [vmem:[%s4263 + $0x4] sm:$0xf]
        %v4266 = vld [vmem:[%s4263 + $0x8] sm:$0xf]
        %v4267 = vld [vmem:[%s4263 + $0xc] sm:$0xf]
        %s4268 = scalar_lea.vmem %s2, 2
        %v4269 = vld [vmem:[%s4268] sm:$0x1]
        %v4271 = vperm.slane %v4269, 0
        %v4277 = vunpack.c.l.b16 %v4264
        %v4278 = vunpack.c.l.b16 %v4265
        %v4279 = vunpack.c.l.b16 %v4266
        %v4280 = vunpack.c.l.b16 %v4267
        %v4281 = vpack.c.b16 %v4278, %v4277
        %v4282 = vpack.c.b16 %v4280, %v4279
        %4285 = vmatpush.bf16.msra.mxu0 0
        %4286 = vmatpush.bf16.msra.mxu0 0
        %4287 = vmatpush.bf16.msra.mxu0 0
        %4288 = vmatpush.bf16.msra.mxu0 0
        %4289 = vmatpush.bf16.msra.mxu0 0
        %4290 = vmatpush.bf16.msra.mxu0 0
        %4291 = vmatpush.bf16.msra.mxu0 %v4282
        %4292 = vmatpush.bf16.msra.mxu0 %v4281
        %4293 = vmatmul.bf16.gmra.mxu0 %v507
        %v4294 = vpop.f32.mrf.mxu0
        %v4295 = vadd.f32 %v4271, %v4294
        %v4296 = vpop.f32.mrf.mxu0
        %v4297 = vadd.f32 %v4271, %v4296
        %4298 = vmatmul.bf16.gmra.mxu0 %v510
        %v4299 = vpop.f32.mrf.mxu0
        %v4300 = vadd.f32 %v4271, %v4299
        %v4301 = vpop.f32.mrf.mxu0
        %v4302 = vadd.f32 %v4271, %v4301
        %4303 = vmatmul.bf16.gmra.mxu0 %v513
        %v4304 = vpop.f32.mrf.mxu0
        %v4305 = vadd.f32 %v4271, %v4304
        %v4306 = vpop.f32.mrf.mxu0
        %v4307 = vadd.f32 %v4271, %v4306
        %4308 = vmatmul.bf16.gmra.mxu0 %v516
        %v4309 = vpop.f32.mrf.mxu0
        %v4310 = vadd.f32 %v4271, %v4309
        %v4311 = vpop.f32.mrf.mxu0
        %v4312 = vadd.f32 %v4271, %v4311
        %4313 = vmatmul.bf16.gmra.mxu0 %v519
        %v4314 = vpop.f32.mrf.mxu0
        %v4315 = vadd.f32 %v4271, %v4314
        %v4316 = vpop.f32.mrf.mxu0
        %v4317 = vadd.f32 %v4271, %v4316
        %4318 = vmatmul.bf16.gmra.mxu0 %v522
        %v4319 = vpop.f32.mrf.mxu0
        %v4320 = vadd.f32 %v4271, %v4319
        %v4321 = vpop.f32.mrf.mxu0
        %v4322 = vadd.f32 %v4271, %v4321
        %4323 = vmatmul.bf16.gmra.mxu0 %v525
        %v4324 = vpop.f32.mrf.mxu0
        %v4325 = vadd.f32 %v4271, %v4324
        %v4326 = vpop.f32.mrf.mxu0
        %v4327 = vadd.f32 %v4271, %v4326
        %4328 = vmatmul.bf16.gmra.mxu0 %v528
        %v4329 = vpop.f32.mrf.mxu0
        %v4330 = vadd.f32 %v4271, %v4329
        %v4331 = vpop.f32.mrf.mxu0
        %v4332 = vadd.f32 %v4271, %v4331
        %4333 = vdwg.mxu0
        %s4334 = scalar_lea.vmem %s3, 32
        %v4335 = vld [vmem:[%s4334] sm:$0xf]
        %v4336 = vld [vmem:[%s4334 + $0x4] sm:$0xf]
        %v4337 = vld [vmem:[%s4334 + $0x8] sm:$0xf]
        %v4338 = vld [vmem:[%s4334 + $0xc] sm:$0xf]
        %s4339 = scalar_lea.vmem %s4, 2
        %v4340 = vld [vmem:[%s4339] sm:$0x1]
        %v4342 = vperm.slane %v4340, 0
        %v4348 = vunpack.c.l.b16 %v4335
        %v4349 = vunpack.c.l.b16 %v4336
        %v4350 = vunpack.c.l.b16 %v4337
        %v4351 = vunpack.c.l.b16 %v4338
        %v4352 = vpack.c.b16 %v4349, %v4348
        %v4353 = vpack.c.b16 %v4351, %v4350
        %4356 = vmatpush.bf16.msra.mxu0 0
        %4357 = vmatpush.bf16.msra.mxu0 0
        %4358 = vmatpush.bf16.msra.mxu0 0
        %4359 = vmatpush.bf16.msra.mxu0 0
        %4360 = vmatpush.bf16.msra.mxu0 0
        %4361 = vmatpush.bf16.msra.mxu0 0
        %4362 = vmatpush.bf16.msra.mxu0 %v4353
        %4363 = vmatpush.bf16.msra.mxu0 %v4352
        %4364 = vmatmul.bf16.gmra.mxu0 %v507
        %v4365 = vpop.f32.mrf.mxu0
        %v4366 = vadd.f32 %v4342, %v4365
        %v4367 = vpop.f32.mrf.mxu0
        %v4368 = vadd.f32 %v4342, %v4367
        %4369 = vmatmul.bf16.gmra.mxu0 %v510
        %v4370 = vpop.f32.mrf.mxu0
        %v4371 = vadd.f32 %v4342, %v4370
        %v4372 = vpop.f32.mrf.mxu0
        %v4373 = vadd.f32 %v4342, %v4372
        %4374 = vmatmul.bf16.gmra.mxu0 %v513
        %v4375 = vpop.f32.mrf.mxu0
        %v4376 = vadd.f32 %v4342, %v4375
        %v4377 = vpop.f32.mrf.mxu0
        %v4378 = vadd.f32 %v4342, %v4377
        %4379 = vmatmul.bf16.gmra.mxu0 %v516
        %v4380 = vpop.f32.mrf.mxu0
        %v4381 = vadd.f32 %v4342, %v4380
        %v4382 = vpop.f32.mrf.mxu0
        %v4383 = vadd.f32 %v4342, %v4382
        %4384 = vmatmul.bf16.gmra.mxu0 %v519
        %v4385 = vpop.f32.mrf.mxu0
        %v4386 = vadd.f32 %v4342, %v4385
        %v4387 = vpop.f32.mrf.mxu0
        %v4388 = vadd.f32 %v4342, %v4387
        %4389 = vmatmul.bf16.gmra.mxu0 %v522
        %v4390 = vpop.f32.mrf.mxu0
        %v4391 = vadd.f32 %v4342, %v4390
        %v4392 = vpop.f32.mrf.mxu0
        %v4393 = vadd.f32 %v4342, %v4392
        %4394 = vmatmul.bf16.gmra.mxu0 %v525
        %v4395 = vpop.f32.mrf.mxu0
        %v4396 = vadd.f32 %v4342, %v4395
        %v4397 = vpop.f32.mrf.mxu0
        %v4398 = vadd.f32 %v4342, %v4397
        %4399 = vmatmul.bf16.gmra.mxu0 %v528
        %v4400 = vpop.f32.mrf.mxu0
        %v4401 = vadd.f32 %v4342, %v4400
        %v4402 = vpop.f32.mrf.mxu0
        %v4403 = vadd.f32 %v4342, %v4402
        %4404 = vdwg.mxu0
        %s4405 = scalar_lea.vmem %s5, 32
        %v4406 = vld [vmem:[%s4405] sm:$0xf]
        %v4407 = vld [vmem:[%s4405 + $0x4] sm:$0xf]
        %v4408 = vld [vmem:[%s4405 + $0x8] sm:$0xf]
        %v4409 = vld [vmem:[%s4405 + $0xc] sm:$0xf]
        %s4410 = scalar_lea.vmem %s6, 2
        %v4411 = vld [vmem:[%s4410] sm:$0x1]
        %v4413 = vperm.slane %v4411, 0
        %v4419 = vunpack.c.l.b16 %v4406
        %v4420 = vunpack.c.l.b16 %v4407
        %v4421 = vunpack.c.l.b16 %v4408
        %v4422 = vunpack.c.l.b16 %v4409
        %v4423 = vpack.c.b16 %v4420, %v4419
        %v4424 = vpack.c.b16 %v4422, %v4421
        %4427 = vmatpush.bf16.msra.mxu0 0
        %4428 = vmatpush.bf16.msra.mxu0 0
        %4429 = vmatpush.bf16.msra.mxu0 0
        %4430 = vmatpush.bf16.msra.mxu0 0
        %4431 = vmatpush.bf16.msra.mxu0 0
        %4432 = vmatpush.bf16.msra.mxu0 0
        %4433 = vmatpush.bf16.msra.mxu0 %v4424
        %4434 = vmatpush.bf16.msra.mxu0 %v4423
        %4435 = vmatmul.bf16.gmra.mxu0 %v507
        %v4436 = vpop.f32.mrf.mxu0
        %v4437 = vadd.f32 %v4413, %v4436
        %v4438 = vpop.f32.mrf.mxu0
        %v4439 = vadd.f32 %v4413, %v4438
        %4440 = vmatmul.bf16.gmra.mxu0 %v510
        %v4441 = vpop.f32.mrf.mxu0
        %v4442 = vadd.f32 %v4413, %v4441
        %v4443 = vpop.f32.mrf.mxu0
        %v4444 = vadd.f32 %v4413, %v4443
        %4445 = vmatmul.bf16.gmra.mxu0 %v513
        %v4446 = vpop.f32.mrf.mxu0
        %v4447 = vadd.f32 %v4413, %v4446
        %v4448 = vpop.f32.mrf.mxu0
        %v4449 = vadd.f32 %v4413, %v4448
        %4450 = vmatmul.bf16.gmra.mxu0 %v516
        %v4451 = vpop.f32.mrf.mxu0
        %v4452 = vadd.f32 %v4413, %v4451
        %v4453 = vpop.f32.mrf.mxu0
        %v4454 = vadd.f32 %v4413, %v4453
        %4455 = vmatmul.bf16.gmra.mxu0 %v519
        %v4456 = vpop.f32.mrf.mxu0
        %v4457 = vadd.f32 %v4413, %v4456
        %v4458 = vpop.f32.mrf.mxu0
        %v4459 = vadd.f32 %v4413, %v4458
        %4460 = vmatmul.bf16.gmra.mxu0 %v522
        %v4461 = vpop.f32.mrf.mxu0
        %v4462 = vadd.f32 %v4413, %v4461
        %v4463 = vpop.f32.mrf.mxu0
        %v4464 = vadd.f32 %v4413, %v4463
        %4465 = vmatmul.bf16.gmra.mxu0 %v525
        %v4466 = vpop.f32.mrf.mxu0
        %v4467 = vadd.f32 %v4413, %v4466
        %v4468 = vpop.f32.mrf.mxu0
        %v4469 = vadd.f32 %v4413, %v4468
        %4470 = vmatmul.bf16.gmra.mxu0 %v528
        %v4471 = vpop.f32.mrf.mxu0
        %v4472 = vadd.f32 %v4413, %v4471
        %v4473 = vpop.f32.mrf.mxu0
        %v4474 = vadd.f32 %v4413, %v4473
        %4475 = vdwg.mxu0
        %v4476 = vpack.c.bf16 %v4297, %v4295
        %v4477 = vpack.c.bf16 %v4302, %v4300
        %v4478 = vpack.c.bf16 %v4307, %v4305
        %v4479 = vpack.c.bf16 %v4312, %v4310
        %v4480 = vpack.c.bf16 %v4317, %v4315
        %v4481 = vpack.c.bf16 %v4322, %v4320
        %v4482 = vpack.c.bf16 %v4327, %v4325
        %v4483 = vpack.c.bf16 %v4332, %v4330
        %v4484 = vpack.c.bf16 %v4368, %v4366
        %v4485 = vpack.c.bf16 %v4373, %v4371
        %v4486 = vpack.c.bf16 %v4378, %v4376
        %v4487 = vpack.c.bf16 %v4383, %v4381
        %v4488 = vpack.c.bf16 %v4388, %v4386
        %v4489 = vpack.c.bf16 %v4393, %v4391
        %v4490 = vpack.c.bf16 %v4398, %v4396
        %v4491 = vpack.c.bf16 %v4403, %v4401
        %v4493 = vsel %vm733, %v4476, 0
        %v4496 = vsel %vm733, %v4477, 0
        %v4499 = vsel %vm733, %v4478, 0
        %v4502 = vsel %vm733, %v4479, 0
        %v4505 = vsel %vm733, %v4480, 0
        %v4508 = vsel %vm733, %v4481, 0
        %v4511 = vsel %vm733, %v4482, 0
        %v4514 = vsel %vm733, %v4483, 0
        %v4517 = vsel %vm733, %v4484, 0
        %v4520 = vsel %vm733, %v4485, 0
        %v4523 = vsel %vm733, %v4486, 0
        %v4526 = vsel %vm733, %v4487, 0
        %v4529 = vsel %vm733, %v4488, 0
        %v4532 = vsel %vm733, %v4489, 0
        %v4535 = vsel %vm733, %v4490, 0
        %v4538 = vsel %vm733, %v4491, 0
        %4540 = vmatpush.bf16.xpose.msra.mxu0 %v4538
        %4541 = vmatpush.bf16.xpose.msra.mxu0 %v4535
        %4542 = vmatpush.bf16.xpose.msra.mxu0 %v4532
        %4543 = vmatpush.bf16.xpose.msra.mxu0 %v4529
        %4544 = vmatpush.bf16.xpose.msra.mxu0 %v4526
        %4545 = vmatpush.bf16.xpose.msra.mxu0 %v4523
        %4546 = vmatpush.bf16.xpose.msra.mxu0 %v4520
        %4547 = vmatpush.bf16.xpose.msra.mxu0 %v4517
        %4548 = vmatmul.bf16.gmra.mxu0 %v4493
        %v4549 = vpop.f32.mrf.mxu0
        %v4550 = vadd.f32 0.0, %v4549
        %v4551 = vpop.f32.mrf.mxu0
        %v4552 = vadd.f32 0.0, %v4551
        %4553 = vmatmul.bf16.gmra.mxu0 %v4496
        %v4554 = vpop.f32.mrf.mxu0
        %v4555 = vadd.f32 0.0, %v4554
        %v4556 = vpop.f32.mrf.mxu0
        %v4557 = vadd.f32 0.0, %v4556
        %4558 = vmatmul.bf16.gmra.mxu0 %v4499
        %v4559 = vpop.f32.mrf.mxu0
        %v4560 = vadd.f32 0.0, %v4559
        %v4561 = vpop.f32.mrf.mxu0
        %v4562 = vadd.f32 0.0, %v4561
        %4563 = vmatmul.bf16.gmra.mxu0 %v4502
        %v4564 = vpop.f32.mrf.mxu0
        %v4565 = vadd.f32 0.0, %v4564
        %v4566 = vpop.f32.mrf.mxu0
        %v4567 = vadd.f32 0.0, %v4566
        %4568 = vmatmul.bf16.gmra.mxu0 %v4505
        %v4569 = vpop.f32.mrf.mxu0
        %v4570 = vadd.f32 0.0, %v4569
        %v4571 = vpop.f32.mrf.mxu0
        %v4572 = vadd.f32 0.0, %v4571
        %4573 = vmatmul.bf16.gmra.mxu0 %v4508
        %v4574 = vpop.f32.mrf.mxu0
        %v4575 = vadd.f32 0.0, %v4574
        %v4576 = vpop.f32.mrf.mxu0
        %v4577 = vadd.f32 0.0, %v4576
        %4578 = vmatmul.bf16.gmra.mxu0 %v4511
        %v4579 = vpop.f32.mrf.mxu0
        %v4580 = vadd.f32 0.0, %v4579
        %v4581 = vpop.f32.mrf.mxu0
        %v4582 = vadd.f32 0.0, %v4581
        %4583 = vmatmul.bf16.gmra.mxu0 %v4514
        %v4584 = vpop.f32.mrf.mxu0
        %v4585 = vadd.f32 0.0, %v4584
        %v4586 = vpop.f32.mrf.mxu0
        %v4587 = vadd.f32 0.0, %v4586
        %4588 = vdwg.mxu0
        %v4589 = vsel %vm469, %v4550, -inf
        %v4590 = vsel %vm470, %v4552, -inf
        %v4591 = vsel %vm471, %v4555, -inf
        %v4592 = vsel %vm472, %v4557, -inf
        %v4593 = vsel %vm473, %v4560, -inf
        %v4594 = vsel %vm474, %v4562, -inf
        %v4595 = vsel %vm475, %v4565, -inf
        %v4596 = vsel %vm476, %v4567, -inf
        %v4597 = vsel %vm477, %v4570, -inf
        %v4598 = vsel %vm478, %v4572, -inf
        %v4599 = vsel %vm479, %v4575, -inf
        %v4600 = vsel %vm480, %v4577, -inf
        %v4601 = vsel %vm481, %v4580, -inf
        %v4602 = vsel %vm482, %v4582, -inf
        %v4603 = vsel %vm483, %v4585, -inf
        %v4604 = vsel %vm484, %v4587, -inf
        %4605 = vmax.xlane.f32.xlu0 %v4589
        %v4606 = vpop.xlane.xlu0 %4605
        %4607 = vmax.xlane.f32.xlu0 %v4590
        %v4608 = vpop.xlane.xlu0 %4607
        %4609 = vmax.xlane.f32.xlu0 %v4591
        %v4610 = vpop.xlane.xlu0 %4609
        %4611 = vmax.xlane.f32.xlu0 %v4592
        %v4612 = vpop.xlane.xlu0 %4611
        %4613 = vmax.xlane.f32.xlu0 %v4593
        %v4614 = vpop.xlane.xlu0 %4613
        %4615 = vmax.xlane.f32.xlu0 %v4594
        %v4616 = vpop.xlane.xlu0 %4615
        %4617 = vmax.xlane.f32.xlu0 %v4595
        %v4618 = vpop.xlane.xlu0 %4617
        %4619 = vmax.xlane.f32.xlu0 %v4596
        %v4620 = vpop.xlane.xlu0 %4619
        %4621 = vmax.xlane.f32.xlu0 %v4597
        %v4622 = vpop.xlane.xlu0 %4621
        %4623 = vmax.xlane.f32.xlu0 %v4598
        %v4624 = vpop.xlane.xlu0 %4623
        %4625 = vmax.xlane.f32.xlu0 %v4599
        %v4626 = vpop.xlane.xlu0 %4625
        %4627 = vmax.xlane.f32.xlu0 %v4600
        %v4628 = vpop.xlane.xlu0 %4627
        %4629 = vmax.xlane.f32.xlu0 %v4601
        %v4630 = vpop.xlane.xlu0 %4629
        %4631 = vmax.xlane.f32.xlu0 %v4602
        %v4632 = vpop.xlane.xlu0 %4631
        %4633 = vmax.xlane.f32.xlu0 %v4603
        %v4634 = vpop.xlane.xlu0 %4633
        %4635 = vmax.xlane.f32.xlu0 %v4604
        %v4636 = vpop.xlane.xlu0 %4635
        %v4637 = vsub.f32 %v4589, %v4606
        %v4638 = vsub.f32 %v4590, %v4608
        %v4639 = vsub.f32 %v4591, %v4610
        %v4640 = vsub.f32 %v4592, %v4612
        %v4641 = vsub.f32 %v4593, %v4614
        %v4642 = vsub.f32 %v4594, %v4616
        %v4643 = vsub.f32 %v4595, %v4618
        %v4644 = vsub.f32 %v4596, %v4620
        %v4645 = vsub.f32 %v4597, %v4622
        %v4646 = vsub.f32 %v4598, %v4624
        %v4647 = vsub.f32 %v4599, %v4626
        %v4648 = vsub.f32 %v4600, %v4628
        %v4649 = vsub.f32 %v4601, %v4630
        %v4650 = vsub.f32 %v4602, %v4632
        %v4651 = vsub.f32 %v4603, %v4634
        %v4652 = vsub.f32 %v4604, %v4636
        %v4653 = vmul.f32 %v4637, 1.442695
        %v4654 = vpow.pop %v4653
        %v4655 = vmul.f32 %v4638, 1.442695
        %v4656 = vpow.pop %v4655
        %v4657 = vmul.f32 %v4639, 1.442695
        %v4658 = vpow.pop %v4657
        %v4659 = vmul.f32 %v4640, 1.442695
        %v4660 = vpow.pop %v4659
        %v4661 = vmul.f32 %v4641, 1.442695
        %v4662 = vpow.pop %v4661
        %v4663 = vmul.f32 %v4642, 1.442695
        %v4664 = vpow.pop %v4663
        %v4665 = vmul.f32 %v4643, 1.442695
        %v4666 = vpow.pop %v4665
        %v4667 = vmul.f32 %v4644, 1.442695
        %v4668 = vpow.pop %v4667
        %v4669 = vmul.f32 %v4645, 1.442695
        %v4670 = vpow.pop %v4669
        %v4671 = vmul.f32 %v4646, 1.442695
        %v4672 = vpow.pop %v4671
        %v4673 = vmul.f32 %v4647, 1.442695
        %v4674 = vpow.pop %v4673
        %v4675 = vmul.f32 %v4648, 1.442695
        %v4676 = vpow.pop %v4675
        %v4677 = vmul.f32 %v4649, 1.442695
        %v4678 = vpow.pop %v4677
        %v4679 = vmul.f32 %v4650, 1.442695
        %v4680 = vpow.pop %v4679
        %v4681 = vmul.f32 %v4651, 1.442695
        %v4682 = vpow.pop %v4681
        %v4683 = vmul.f32 %v4652, 1.442695
        %v4684 = vpow.pop %v4683
        %4685 = vadd.xlane.f32.xlu0 %v4654
        %v4686 = vpop.xlane.xlu0 %4685
        %4687 = vadd.xlane.f32.xlu0 %v4656
        %v4688 = vpop.xlane.xlu0 %4687
        %4689 = vadd.xlane.f32.xlu0 %v4658
        %v4690 = vpop.xlane.xlu0 %4689
        %4691 = vadd.xlane.f32.xlu0 %v4660
        %v4692 = vpop.xlane.xlu0 %4691
        %4693 = vadd.xlane.f32.xlu0 %v4662
        %v4694 = vpop.xlane.xlu0 %4693
        %4695 = vadd.xlane.f32.xlu0 %v4664
        %v4696 = vpop.xlane.xlu0 %4695
        %4697 = vadd.xlane.f32.xlu0 %v4666
        %v4698 = vpop.xlane.xlu0 %4697
        %4699 = vadd.xlane.f32.xlu0 %v4668
        %v4700 = vpop.xlane.xlu0 %4699
        %4701 = vadd.xlane.f32.xlu0 %v4670
        %v4702 = vpop.xlane.xlu0 %4701
        %4703 = vadd.xlane.f32.xlu0 %v4672
        %v4704 = vpop.xlane.xlu0 %4703
        %4705 = vadd.xlane.f32.xlu0 %v4674
        %v4706 = vpop.xlane.xlu0 %4705
        %4707 = vadd.xlane.f32.xlu0 %v4676
        %v4708 = vpop.xlane.xlu0 %4707
        %4709 = vadd.xlane.f32.xlu0 %v4678
        %v4710 = vpop.xlane.xlu0 %4709
        %4711 = vadd.xlane.f32.xlu0 %v4680
        %v4712 = vpop.xlane.xlu0 %4711
        %4713 = vadd.xlane.f32.xlu0 %v4682
        %v4714 = vpop.xlane.xlu0 %4713
        %4715 = vadd.xlane.f32.xlu0 %v4684
        %v4716 = vpop.xlane.xlu0 %4715
        %v4717 = vrcp.pop %v4686
        %v4718 = vrcp.pop %v4688
        %v4719 = vrcp.pop %v4690
        %v4720 = vrcp.pop %v4692
        %v4721 = vrcp.pop %v4694
        %v4722 = vrcp.pop %v4696
        %v4723 = vrcp.pop %v4698
        %v4724 = vrcp.pop %v4700
        %v4725 = vrcp.pop %v4702
        %v4726 = vrcp.pop %v4704
        %v4727 = vrcp.pop %v4706
        %v4728 = vrcp.pop %v4708
        %v4729 = vrcp.pop %v4710
        %v4730 = vrcp.pop %v4712
        %v4731 = vrcp.pop %v4714
        %v4732 = vrcp.pop %v4716
        %v4733 = vmul.f32 %v4654, %v4717
        %v4734 = vmul.f32 %v4656, %v4718
        %v4735 = vmul.f32 %v4658, %v4719
        %v4736 = vmul.f32 %v4660, %v4720
        %v4737 = vmul.f32 %v4662, %v4721
        %v4738 = vmul.f32 %v4664, %v4722
        %v4739 = vmul.f32 %v4666, %v4723
        %v4740 = vmul.f32 %v4668, %v4724
        %v4741 = vmul.f32 %v4670, %v4725
        %v4742 = vmul.f32 %v4672, %v4726
        %v4743 = vmul.f32 %v4674, %v4727
        %v4744 = vmul.f32 %v4676, %v4728
        %v4745 = vmul.f32 %v4678, %v4729
        %v4746 = vmul.f32 %v4680, %v4730
        %v4747 = vmul.f32 %v4682, %v4731
        %v4748 = vmul.f32 %v4684, %v4732
        %s4749 = scalar_lea.vmem %s7, 32
        %v4750 = vld [vmem:[%s4749] sm:$0xf]
        %v4751 = vld [vmem:[%s4749 + $0x4] sm:$0xf]
        %v4752 = vld [vmem:[%s4749 + $0x8] sm:$0xf]
        %v4753 = vld [vmem:[%s4749 + $0xc] sm:$0xf]
        %s4754 = scalar_lea.vmem %s8, 2
        %v4755 = vld [vmem:[%s4754] sm:$0x1]
        %v4757 = vperm.slane %v4755, 0
        %v4763 = vunpack.c.l.b16 %v4750
        %v4764 = vunpack.c.l.b16 %v4751
        %v4765 = vunpack.c.l.b16 %v4752
        %v4766 = vunpack.c.l.b16 %v4753
        %v4767 = vpack.c.b16 %v4764, %v4763
        %v4768 = vpack.c.b16 %v4766, %v4765
        %4771 = vmatpush.bf16.msra.mxu0 0
        %4772 = vmatpush.bf16.msra.mxu0 0
        %4773 = vmatpush.bf16.msra.mxu0 0
        %4774 = vmatpush.bf16.msra.mxu0 0
        %4775 = vmatpush.bf16.msra.mxu0 0
        %4776 = vmatpush.bf16.msra.mxu0 0
        %4777 = vmatpush.bf16.msra.mxu0 %v4768
        %4778 = vmatpush.bf16.msra.mxu0 %v4767
        %4779 = vmatmul.bf16.gmra.mxu0 %v507
        %v4780 = vpop.f32.mrf.mxu0
        %v4781 = vadd.f32 %v4757, %v4780
        %v4782 = vpop.f32.mrf.mxu0
        %v4783 = vadd.f32 %v4757, %v4782
        %4784 = vmatmul.bf16.gmra.mxu0 %v510
        %v4785 = vpop.f32.mrf.mxu0
        %v4786 = vadd.f32 %v4757, %v4785
        %v4787 = vpop.f32.mrf.mxu0
        %v4788 = vadd.f32 %v4757, %v4787
        %4789 = vmatmul.bf16.gmra.mxu0 %v513
        %v4790 = vpop.f32.mrf.mxu0
        %v4791 = vadd.f32 %v4757, %v4790
        %v4792 = vpop.f32.mrf.mxu0
        %v4793 = vadd.f32 %v4757, %v4792
        %4794 = vmatmul.bf16.gmra.mxu0 %v516
        %v4795 = vpop.f32.mrf.mxu0
        %v4796 = vadd.f32 %v4757, %v4795
        %v4797 = vpop.f32.mrf.mxu0
        %v4798 = vadd.f32 %v4757, %v4797
        %4799 = vmatmul.bf16.gmra.mxu0 %v519
        %v4800 = vpop.f32.mrf.mxu0
        %v4801 = vadd.f32 %v4757, %v4800
        %v4802 = vpop.f32.mrf.mxu0
        %v4803 = vadd.f32 %v4757, %v4802
        %4804 = vmatmul.bf16.gmra.mxu0 %v522
        %v4805 = vpop.f32.mrf.mxu0
        %v4806 = vadd.f32 %v4757, %v4805
        %v4807 = vpop.f32.mrf.mxu0
        %v4808 = vadd.f32 %v4757, %v4807
        %4809 = vmatmul.bf16.gmra.mxu0 %v525
        %v4810 = vpop.f32.mrf.mxu0
        %v4811 = vadd.f32 %v4757, %v4810
        %v4812 = vpop.f32.mrf.mxu0
        %v4813 = vadd.f32 %v4757, %v4812
        %4814 = vmatmul.bf16.gmra.mxu0 %v528
        %v4815 = vpop.f32.mrf.mxu0
        %v4816 = vadd.f32 %v4757, %v4815
        %v4817 = vpop.f32.mrf.mxu0
        %v4818 = vadd.f32 %v4757, %v4817
        %4819 = vdwg.mxu0
        %v4820 = vsel %vm1060, %v4781, -inf
        %4821 = vmax.xlane.f32.xlu0 %v4820
        %v4822 = vpop.xlane.xlu0 %4821
        %v4823 = vsel %vm1060, %v4783, -inf
        %4824 = vmax.xlane.f32.xlu0 %v4823
        %v4825 = vpop.xlane.xlu0 %4824
        %v4826 = vsel %vm1060, %v4786, -inf
        %4827 = vmax.xlane.f32.xlu0 %v4826
        %v4828 = vpop.xlane.xlu0 %4827
        %v4829 = vsel %vm1060, %v4788, -inf
        %4830 = vmax.xlane.f32.xlu0 %v4829
        %v4831 = vpop.xlane.xlu0 %4830
        %v4832 = vsel %vm1060, %v4791, -inf
        %4833 = vmax.xlane.f32.xlu0 %v4832
        %v4834 = vpop.xlane.xlu0 %4833
        %v4835 = vsel %vm1060, %v4793, -inf
        %4836 = vmax.xlane.f32.xlu0 %v4835
        %v4837 = vpop.xlane.xlu0 %4836
        %v4838 = vsel %vm1060, %v4796, -inf
        %4839 = vmax.xlane.f32.xlu0 %v4838
        %v4840 = vpop.xlane.xlu0 %4839
        %v4841 = vsel %vm1060, %v4798, -inf
        %4842 = vmax.xlane.f32.xlu0 %v4841
        %v4843 = vpop.xlane.xlu0 %4842
        %v4844 = vsel %vm1060, %v4801, -inf
        %4845 = vmax.xlane.f32.xlu0 %v4844
        %v4846 = vpop.xlane.xlu0 %4845
        %v4847 = vsel %vm1060, %v4803, -inf
        %4848 = vmax.xlane.f32.xlu0 %v4847
        %v4849 = vpop.xlane.xlu0 %4848
        %v4850 = vsel %vm1060, %v4806, -inf
        %4851 = vmax.xlane.f32.xlu0 %v4850
        %v4852 = vpop.xlane.xlu0 %4851
        %v4853 = vsel %vm1060, %v4808, -inf
        %4854 = vmax.xlane.f32.xlu0 %v4853
        %v4855 = vpop.xlane.xlu0 %4854
        %v4856 = vsel %vm1060, %v4811, -inf
        %4857 = vmax.xlane.f32.xlu0 %v4856
        %v4858 = vpop.xlane.xlu0 %4857
        %v4859 = vsel %vm1060, %v4813, -inf
        %4860 = vmax.xlane.f32.xlu0 %v4859
        %v4861 = vpop.xlane.xlu0 %4860
        %v4862 = vsel %vm1060, %v4816, -inf
        %4863 = vmax.xlane.f32.xlu0 %v4862
        %v4864 = vpop.xlane.xlu0 %4863
        %v4865 = vsel %vm1060, %v4818, -inf
        %4866 = vmax.xlane.f32.xlu0 %v4865
        %v4867 = vpop.xlane.xlu0 %4866
        %v4868 = vsub.f32 %v4781, %v4822
        %v4869 = vsub.f32 %v4783, %v4825
        %v4870 = vsub.f32 %v4786, %v4828
        %v4871 = vsub.f32 %v4788, %v4831
        %v4872 = vsub.f32 %v4791, %v4834
        %v4873 = vsub.f32 %v4793, %v4837
        %v4874 = vsub.f32 %v4796, %v4840
        %v4875 = vsub.f32 %v4798, %v4843
        %v4876 = vsub.f32 %v4801, %v4846
        %v4877 = vsub.f32 %v4803, %v4849
        %v4878 = vsub.f32 %v4806, %v4852
        %v4879 = vsub.f32 %v4808, %v4855
        %v4880 = vsub.f32 %v4811, %v4858
        %v4881 = vsub.f32 %v4813, %v4861
        %v4882 = vsub.f32 %v4816, %v4864
        %v4883 = vsub.f32 %v4818, %v4867
        %v4884 = vmul.f32 %v4868, 1.442695
        %v4885 = vpow.pop %v4884
        %v4886 = vmul.f32 %v4869, 1.442695
        %v4887 = vpow.pop %v4886
        %v4888 = vmul.f32 %v4870, 1.442695
        %v4889 = vpow.pop %v4888
        %v4890 = vmul.f32 %v4871, 1.442695
        %v4891 = vpow.pop %v4890
        %v4892 = vmul.f32 %v4872, 1.442695
        %v4893 = vpow.pop %v4892
        %v4894 = vmul.f32 %v4873, 1.442695
        %v4895 = vpow.pop %v4894
        %v4896 = vmul.f32 %v4874, 1.442695
        %v4897 = vpow.pop %v4896
        %v4898 = vmul.f32 %v4875, 1.442695
        %v4899 = vpow.pop %v4898
        %v4900 = vmul.f32 %v4876, 1.442695
        %v4901 = vpow.pop %v4900
        %v4902 = vmul.f32 %v4877, 1.442695
        %v4903 = vpow.pop %v4902
        %v4904 = vmul.f32 %v4878, 1.442695
        %v4905 = vpow.pop %v4904
        %v4906 = vmul.f32 %v4879, 1.442695
        %v4907 = vpow.pop %v4906
        %v4908 = vmul.f32 %v4880, 1.442695
        %v4909 = vpow.pop %v4908
        %v4910 = vmul.f32 %v4881, 1.442695
        %v4911 = vpow.pop %v4910
        %v4912 = vmul.f32 %v4882, 1.442695
        %v4913 = vpow.pop %v4912
        %v4914 = vmul.f32 %v4883, 1.442695
        %v4915 = vpow.pop %v4914
        %v4916 = vsel %vm1060, %v4885, 0.0
        %4917 = vadd.xlane.f32.xlu0 %v4916
        %v4918 = vpop.xlane.xlu0 %4917
        %v4919 = vsel %vm1060, %v4887, 0.0
        %4920 = vadd.xlane.f32.xlu0 %v4919
        %v4921 = vpop.xlane.xlu0 %4920
        %v4922 = vsel %vm1060, %v4889, 0.0
        %4923 = vadd.xlane.f32.xlu0 %v4922
        %v4924 = vpop.xlane.xlu0 %4923
        %v4925 = vsel %vm1060, %v4891, 0.0
        %4926 = vadd.xlane.f32.xlu0 %v4925
        %v4927 = vpop.xlane.xlu0 %4926
        %v4928 = vsel %vm1060, %v4893, 0.0
        %4929 = vadd.xlane.f32.xlu0 %v4928
        %v4930 = vpop.xlane.xlu0 %4929
        %v4931 = vsel %vm1060, %v4895, 0.0
        %4932 = vadd.xlane.f32.xlu0 %v4931
        %v4933 = vpop.xlane.xlu0 %4932
        %v4934 = vsel %vm1060, %v4897, 0.0
        %4935 = vadd.xlane.f32.xlu0 %v4934
        %v4936 = vpop.xlane.xlu0 %4935
        %v4937 = vsel %vm1060, %v4899, 0.0
        %4938 = vadd.xlane.f32.xlu0 %v4937
        %v4939 = vpop.xlane.xlu0 %4938
        %v4940 = vsel %vm1060, %v4901, 0.0
        %4941 = vadd.xlane.f32.xlu0 %v4940
        %v4942 = vpop.xlane.xlu0 %4941
        %v4943 = vsel %vm1060, %v4903, 0.0
        %4944 = vadd.xlane.f32.xlu0 %v4943
        %v4945 = vpop.xlane.xlu0 %4944
        %v4946 = vsel %vm1060, %v4905, 0.0
        %4947 = vadd.xlane.f32.xlu0 %v4946
        %v4948 = vpop.xlane.xlu0 %4947
        %v4949 = vsel %vm1060, %v4907, 0.0
        %4950 = vadd.xlane.f32.xlu0 %v4949
        %v4951 = vpop.xlane.xlu0 %4950
        %v4952 = vsel %vm1060, %v4909, 0.0
        %4953 = vadd.xlane.f32.xlu0 %v4952
        %v4954 = vpop.xlane.xlu0 %4953
        %v4955 = vsel %vm1060, %v4911, 0.0
        %4956 = vadd.xlane.f32.xlu0 %v4955
        %v4957 = vpop.xlane.xlu0 %4956
        %v4958 = vsel %vm1060, %v4913, 0.0
        %4959 = vadd.xlane.f32.xlu0 %v4958
        %v4960 = vpop.xlane.xlu0 %4959
        %v4961 = vsel %vm1060, %v4915, 0.0
        %4962 = vadd.xlane.f32.xlu0 %v4961
        %v4963 = vpop.xlane.xlu0 %4962
        %v4964 = vrcp.pop %v4918
        %v4965 = vrcp.pop %v4921
        %v4966 = vrcp.pop %v4924
        %v4967 = vrcp.pop %v4927
        %v4968 = vrcp.pop %v4930
        %v4969 = vrcp.pop %v4933
        %v4970 = vrcp.pop %v4936
        %v4971 = vrcp.pop %v4939
        %v4972 = vrcp.pop %v4942
        %v4973 = vrcp.pop %v4945
        %v4974 = vrcp.pop %v4948
        %v4975 = vrcp.pop %v4951
        %v4976 = vrcp.pop %v4954
        %v4977 = vrcp.pop %v4957
        %v4978 = vrcp.pop %v4960
        %v4979 = vrcp.pop %v4963
        %v4980 = vmul.f32 %v4885, %v4964
        %v4981 = vmul.f32 %v4887, %v4965
        %v4982 = vmul.f32 %v4889, %v4966
        %v4983 = vmul.f32 %v4891, %v4967
        %v4984 = vmul.f32 %v4893, %v4968
        %v4985 = vmul.f32 %v4895, %v4969
        %v4986 = vmul.f32 %v4897, %v4970
        %v4987 = vmul.f32 %v4899, %v4971
        %v4988 = vmul.f32 %v4901, %v4972
        %v4989 = vmul.f32 %v4903, %v4973
        %v4990 = vmul.f32 %v4905, %v4974
        %v4991 = vmul.f32 %v4907, %v4975
        %v4992 = vmul.f32 %v4909, %v4976
        %v4993 = vmul.f32 %v4911, %v4977
        %v4994 = vmul.f32 %v4913, %v4978
        %v4995 = vmul.f32 %v4915, %v4979
        %4997 = vset.pattern.permute.xlu0 0
        %4998 = vperm.xlu0 %4997, %v4980
        %v4999 = vpop.permute.xlu0 %4998
        %5002 = vset.pattern.permute.xlu0 0
        %5003 = vperm.xlu0 %5002, %v4981
        %v5004 = vpop.permute.xlu0 %5003
        %5007 = vset.pattern.permute.xlu0 0
        %5008 = vperm.xlu0 %5007, %v4982
        %v5009 = vpop.permute.xlu0 %5008
        %5012 = vset.pattern.permute.xlu0 0
        %5013 = vperm.xlu0 %5012, %v4983
        %v5014 = vpop.permute.xlu0 %5013
        %5017 = vset.pattern.permute.xlu0 0
        %5018 = vperm.xlu0 %5017, %v4984
        %v5019 = vpop.permute.xlu0 %5018
        %5022 = vset.pattern.permute.xlu0 0
        %5023 = vperm.xlu0 %5022, %v4985
        %v5024 = vpop.permute.xlu0 %5023
        %5027 = vset.pattern.permute.xlu0 0
        %5028 = vperm.xlu0 %5027, %v4986
        %v5029 = vpop.permute.xlu0 %5028
        %5032 = vset.pattern.permute.xlu0 0
        %5033 = vperm.xlu0 %5032, %v4987
        %v5034 = vpop.permute.xlu0 %5033
        %5037 = vset.pattern.permute.xlu0 0
        %5038 = vperm.xlu0 %5037, %v4988
        %v5039 = vpop.permute.xlu0 %5038
        %5042 = vset.pattern.permute.xlu0 0
        %5043 = vperm.xlu0 %5042, %v4989
        %v5044 = vpop.permute.xlu0 %5043
        %5047 = vset.pattern.permute.xlu0 0
        %5048 = vperm.xlu0 %5047, %v4990
        %v5049 = vpop.permute.xlu0 %5048
        %5052 = vset.pattern.permute.xlu0 0
        %5053 = vperm.xlu0 %5052, %v4991
        %v5054 = vpop.permute.xlu0 %5053
        %5057 = vset.pattern.permute.xlu0 0
        %5058 = vperm.xlu0 %5057, %v4992
        %v5059 = vpop.permute.xlu0 %5058
        %5062 = vset.pattern.permute.xlu0 0
        %5063 = vperm.xlu0 %5062, %v4993
        %v5064 = vpop.permute.xlu0 %5063
        %5067 = vset.pattern.permute.xlu0 0
        %5068 = vperm.xlu0 %5067, %v4994
        %v5069 = vpop.permute.xlu0 %5068
        %5072 = vset.pattern.permute.xlu0 0
        %5073 = vperm.xlu0 %5072, %v4995
        %v5074 = vpop.permute.xlu0 %5073
        %v5076 = vmul.f32 %v4999, %v4733
        %v5077 = vmul.f32 %v5004, %v4734
        %v5078 = vmul.f32 %v5009, %v4735
        %v5079 = vmul.f32 %v5014, %v4736
        %v5080 = vmul.f32 %v5019, %v4737
        %v5081 = vmul.f32 %v5024, %v4738
        %v5082 = vmul.f32 %v5029, %v4739
        %v5083 = vmul.f32 %v5034, %v4740
        %v5084 = vmul.f32 %v5039, %v4741
        %v5085 = vmul.f32 %v5044, %v4742
        %v5086 = vmul.f32 %v5049, %v4743
        %v5087 = vmul.f32 %v5054, %v4744
        %v5088 = vmul.f32 %v5059, %v4745
        %v5089 = vmul.f32 %v5064, %v4746
        %v5090 = vmul.f32 %v5069, %v4747
        %v5091 = vmul.f32 %v5074, %v4748
        %5092 = vrot.lane.b32.xlu0 %v4733, 127
        %v5093 = vpop.permute.xlu0 %5092
        %5094 = vrot.lane.b32.xlu0 %v4734, 127
        %v5095 = vpop.permute.xlu0 %5094
        %5096 = vrot.lane.b32.xlu0 %v4735, 127
        %v5097 = vpop.permute.xlu0 %5096
        %5098 = vrot.lane.b32.xlu0 %v4736, 127
        %v5099 = vpop.permute.xlu0 %5098
        %5100 = vrot.lane.b32.xlu0 %v4737, 127
        %v5101 = vpop.permute.xlu0 %5100
        %5102 = vrot.lane.b32.xlu0 %v4738, 127
        %v5103 = vpop.permute.xlu0 %5102
        %5104 = vrot.lane.b32.xlu0 %v4739, 127
        %v5105 = vpop.permute.xlu0 %5104
        %5106 = vrot.lane.b32.xlu0 %v4740, 127
        %v5107 = vpop.permute.xlu0 %5106
        %5108 = vrot.lane.b32.xlu0 %v4741, 127
        %v5109 = vpop.permute.xlu0 %5108
        %5110 = vrot.lane.b32.xlu0 %v4742, 127
        %v5111 = vpop.permute.xlu0 %5110
        %5112 = vrot.lane.b32.xlu0 %v4743, 127
        %v5113 = vpop.permute.xlu0 %5112
        %5114 = vrot.lane.b32.xlu0 %v4744, 127
        %v5115 = vpop.permute.xlu0 %5114
        %5116 = vrot.lane.b32.xlu0 %v4745, 127
        %v5117 = vpop.permute.xlu0 %5116
        %5118 = vrot.lane.b32.xlu0 %v4746, 127
        %v5119 = vpop.permute.xlu0 %5118
        %5120 = vrot.lane.b32.xlu0 %v4747, 127
        %v5121 = vpop.permute.xlu0 %5120
        %5122 = vrot.lane.b32.xlu0 %v4748, 127
        %v5123 = vpop.permute.xlu0 %5122
        %v5124 = vsel %vm1365, %v5093, 0.0
        %v5125 = vsel %vm1365, %v5095, 0.0
        %v5126 = vsel %vm1365, %v5097, 0.0
        %v5127 = vsel %vm1365, %v5099, 0.0
        %v5128 = vsel %vm1365, %v5101, 0.0
        %v5129 = vsel %vm1365, %v5103, 0.0
        %v5130 = vsel %vm1365, %v5105, 0.0
        %v5131 = vsel %vm1365, %v5107, 0.0
        %v5132 = vsel %vm1365, %v5109, 0.0
        %v5133 = vsel %vm1365, %v5111, 0.0
        %v5134 = vsel %vm1365, %v5113, 0.0
        %v5135 = vsel %vm1365, %v5115, 0.0
        %v5136 = vsel %vm1365, %v5117, 0.0
        %v5137 = vsel %vm1365, %v5119, 0.0
        %v5138 = vsel %vm1365, %v5121, 0.0
        %v5139 = vsel %vm1365, %v5123, 0.0
        %5140 = vrot.lane.b32.xlu0 %v4733, 1
        %v5141 = vpop.permute.xlu0 %5140
        %5142 = vrot.lane.b32.xlu0 %v4734, 1
        %v5143 = vpop.permute.xlu0 %5142
        %5144 = vrot.lane.b32.xlu0 %v4735, 1
        %v5145 = vpop.permute.xlu0 %5144
        %5146 = vrot.lane.b32.xlu0 %v4736, 1
        %v5147 = vpop.permute.xlu0 %5146
        %5148 = vrot.lane.b32.xlu0 %v4737, 1
        %v5149 = vpop.permute.xlu0 %5148
        %5150 = vrot.lane.b32.xlu0 %v4738, 1
        %v5151 = vpop.permute.xlu0 %5150
        %5152 = vrot.lane.b32.xlu0 %v4739, 1
        %v5153 = vpop.permute.xlu0 %5152
        %5154 = vrot.lane.b32.xlu0 %v4740, 1
        %v5155 = vpop.permute.xlu0 %5154
        %5156 = vrot.lane.b32.xlu0 %v4741, 1
        %v5157 = vpop.permute.xlu0 %5156
        %5158 = vrot.lane.b32.xlu0 %v4742, 1
        %v5159 = vpop.permute.xlu0 %5158
        %5160 = vrot.lane.b32.xlu0 %v4743, 1
        %v5161 = vpop.permute.xlu0 %5160
        %5162 = vrot.lane.b32.xlu0 %v4744, 1
        %v5163 = vpop.permute.xlu0 %5162
        %5164 = vrot.lane.b32.xlu0 %v4745, 1
        %v5165 = vpop.permute.xlu0 %5164
        %5166 = vrot.lane.b32.xlu0 %v4746, 1
        %v5167 = vpop.permute.xlu0 %5166
        %5168 = vrot.lane.b32.xlu0 %v4747, 1
        %v5169 = vpop.permute.xlu0 %5168
        %5170 = vrot.lane.b32.xlu0 %v4748, 1
        %v5171 = vpop.permute.xlu0 %5170
        %v5172 = vsel %vm1414, %v5141, 0.0
        %v5173 = vsel %vm1414, %v5143, 0.0
        %v5174 = vsel %vm1414, %v5145, 0.0
        %v5175 = vsel %vm1414, %v5147, 0.0
        %v5176 = vsel %vm1414, %v5149, 0.0
        %v5177 = vsel %vm1414, %v5151, 0.0
        %v5178 = vsel %vm1414, %v5153, 0.0
        %v5179 = vsel %vm1414, %v5155, 0.0
        %v5180 = vsel %vm1414, %v5157, 0.0
        %v5181 = vsel %vm1414, %v5159, 0.0
        %v5182 = vsel %vm1414, %v5161, 0.0
        %v5183 = vsel %vm1414, %v5163, 0.0
        %v5184 = vsel %vm1414, %v5165, 0.0
        %v5185 = vsel %vm1414, %v5167, 0.0
        %v5186 = vsel %vm1414, %v5169, 0.0
        %v5187 = vsel %vm1414, %v5171, 0.0
        %5188 = vset.pattern.permute.xlu0 1
        %5189 = vperm.xlu0 %5188, %v4980
        %v5190 = vpop.permute.xlu0 %5189
        %5192 = vset.pattern.permute.xlu0 1
        %5193 = vperm.xlu0 %5192, %v4981
        %v5194 = vpop.permute.xlu0 %5193
        %5196 = vset.pattern.permute.xlu0 1
        %5197 = vperm.xlu0 %5196, %v4982
        %v5198 = vpop.permute.xlu0 %5197
        %5200 = vset.pattern.permute.xlu0 1
        %5201 = vperm.xlu0 %5200, %v4983
        %v5202 = vpop.permute.xlu0 %5201
        %5204 = vset.pattern.permute.xlu0 1
        %5205 = vperm.xlu0 %5204, %v4984
        %v5206 = vpop.permute.xlu0 %5205
        %5208 = vset.pattern.permute.xlu0 1
        %5209 = vperm.xlu0 %5208, %v4985
        %v5210 = vpop.permute.xlu0 %5209
        %5212 = vset.pattern.permute.xlu0 1
        %5213 = vperm.xlu0 %5212, %v4986
        %v5214 = vpop.permute.xlu0 %5213
        %5216 = vset.pattern.permute.xlu0 1
        %5217 = vperm.xlu0 %5216, %v4987
        %v5218 = vpop.permute.xlu0 %5217
        %5220 = vset.pattern.permute.xlu0 1
        %5221 = vperm.xlu0 %5220, %v4988
        %v5222 = vpop.permute.xlu0 %5221
        %5224 = vset.pattern.permute.xlu0 1
        %5225 = vperm.xlu0 %5224, %v4989
        %v5226 = vpop.permute.xlu0 %5225
        %5228 = vset.pattern.permute.xlu0 1
        %5229 = vperm.xlu0 %5228, %v4990
        %v5230 = vpop.permute.xlu0 %5229
        %5232 = vset.pattern.permute.xlu0 1
        %5233 = vperm.xlu0 %5232, %v4991
        %v5234 = vpop.permute.xlu0 %5233
        %5236 = vset.pattern.permute.xlu0 1
        %5237 = vperm.xlu0 %5236, %v4992
        %v5238 = vpop.permute.xlu0 %5237
        %5240 = vset.pattern.permute.xlu0 1
        %5241 = vperm.xlu0 %5240, %v4993
        %v5242 = vpop.permute.xlu0 %5241
        %5244 = vset.pattern.permute.xlu0 1
        %5245 = vperm.xlu0 %5244, %v4994
        %v5246 = vpop.permute.xlu0 %5245
        %5248 = vset.pattern.permute.xlu0 1
        %5249 = vperm.xlu0 %5248, %v4995
        %v5250 = vpop.permute.xlu0 %5249
        %v5252 = vmul.f32 %v5190, %v5124
        %v5253 = vmul.f32 %v5194, %v5125
        %v5254 = vmul.f32 %v5198, %v5126
        %v5255 = vmul.f32 %v5202, %v5127
        %v5256 = vmul.f32 %v5206, %v5128
        %v5257 = vmul.f32 %v5210, %v5129
        %v5258 = vmul.f32 %v5214, %v5130
        %v5259 = vmul.f32 %v5218, %v5131
        %v5260 = vmul.f32 %v5222, %v5132
        %v5261 = vmul.f32 %v5226, %v5133
        %v5262 = vmul.f32 %v5230, %v5134
        %v5263 = vmul.f32 %v5234, %v5135
        %v5264 = vmul.f32 %v5238, %v5136
        %v5265 = vmul.f32 %v5242, %v5137
        %v5266 = vmul.f32 %v5246, %v5138
        %v5267 = vmul.f32 %v5250, %v5139
        %v5268 = vadd.f32 %v5076, %v5252
        %v5269 = vadd.f32 %v5077, %v5253
        %v5270 = vadd.f32 %v5078, %v5254
        %v5271 = vadd.f32 %v5079, %v5255
        %v5272 = vadd.f32 %v5080, %v5256
        %v5273 = vadd.f32 %v5081, %v5257
        %v5274 = vadd.f32 %v5082, %v5258
        %v5275 = vadd.f32 %v5083, %v5259
        %v5276 = vadd.f32 %v5084, %v5260
        %v5277 = vadd.f32 %v5085, %v5261
        %v5278 = vadd.f32 %v5086, %v5262
        %v5279 = vadd.f32 %v5087, %v5263
        %v5280 = vadd.f32 %v5088, %v5264
        %v5281 = vadd.f32 %v5089, %v5265
        %v5282 = vadd.f32 %v5090, %v5266
        %v5283 = vadd.f32 %v5091, %v5267
        %5284 = vset.pattern.permute.xlu0 2
        %5285 = vperm.xlu0 %5284, %v4980
        %v5286 = vpop.permute.xlu0 %5285
        %5288 = vset.pattern.permute.xlu0 2
        %5289 = vperm.xlu0 %5288, %v4981
        %v5290 = vpop.permute.xlu0 %5289
        %5292 = vset.pattern.permute.xlu0 2
        %5293 = vperm.xlu0 %5292, %v4982
        %v5294 = vpop.permute.xlu0 %5293
        %5296 = vset.pattern.permute.xlu0 2
        %5297 = vperm.xlu0 %5296, %v4983
        %v5298 = vpop.permute.xlu0 %5297
        %5300 = vset.pattern.permute.xlu0 2
        %5301 = vperm.xlu0 %5300, %v4984
        %v5302 = vpop.permute.xlu0 %5301
        %5304 = vset.pattern.permute.xlu0 2
        %5305 = vperm.xlu0 %5304, %v4985
        %v5306 = vpop.permute.xlu0 %5305
        %5308 = vset.pattern.permute.xlu0 2
        %5309 = vperm.xlu0 %5308, %v4986
        %v5310 = vpop.permute.xlu0 %5309
        %5312 = vset.pattern.permute.xlu0 2
        %5313 = vperm.xlu0 %5312, %v4987
        %v5314 = vpop.permute.xlu0 %5313
        %5316 = vset.pattern.permute.xlu0 2
        %5317 = vperm.xlu0 %5316, %v4988
        %v5318 = vpop.permute.xlu0 %5317
        %5320 = vset.pattern.permute.xlu0 2
        %5321 = vperm.xlu0 %5320, %v4989
        %v5322 = vpop.permute.xlu0 %5321
        %5324 = vset.pattern.permute.xlu0 2
        %5325 = vperm.xlu0 %5324, %v4990
        %v5326 = vpop.permute.xlu0 %5325
        %5328 = vset.pattern.permute.xlu0 2
        %5329 = vperm.xlu0 %5328, %v4991
        %v5330 = vpop.permute.xlu0 %5329
        %5332 = vset.pattern.permute.xlu0 2
        %5333 = vperm.xlu0 %5332, %v4992
        %v5334 = vpop.permute.xlu0 %5333
        %5336 = vset.pattern.permute.xlu0 2
        %5337 = vperm.xlu0 %5336, %v4993
        %v5338 = vpop.permute.xlu0 %5337
        %5340 = vset.pattern.permute.xlu0 2
        %5341 = vperm.xlu0 %5340, %v4994
        %v5342 = vpop.permute.xlu0 %5341
        %5344 = vset.pattern.permute.xlu0 2
        %5345 = vperm.xlu0 %5344, %v4995
        %v5346 = vpop.permute.xlu0 %5345
        %v5348 = vmul.f32 %v5286, %v5172
        %v5349 = vmul.f32 %v5290, %v5173
        %v5350 = vmul.f32 %v5294, %v5174
        %v5351 = vmul.f32 %v5298, %v5175
        %v5352 = vmul.f32 %v5302, %v5176
        %v5353 = vmul.f32 %v5306, %v5177
        %v5354 = vmul.f32 %v5310, %v5178
        %v5355 = vmul.f32 %v5314, %v5179
        %v5356 = vmul.f32 %v5318, %v5180
        %v5357 = vmul.f32 %v5322, %v5181
        %v5358 = vmul.f32 %v5326, %v5182
        %v5359 = vmul.f32 %v5330, %v5183
        %v5360 = vmul.f32 %v5334, %v5184
        %v5361 = vmul.f32 %v5338, %v5185
        %v5362 = vmul.f32 %v5342, %v5186
        %v5363 = vmul.f32 %v5346, %v5187
        %v5364 = vadd.f32 %v5268, %v5348
        %v5365 = vadd.f32 %v5269, %v5349
        %v5366 = vadd.f32 %v5270, %v5350
        %v5367 = vadd.f32 %v5271, %v5351
        %v5368 = vadd.f32 %v5272, %v5352
        %v5369 = vadd.f32 %v5273, %v5353
        %v5370 = vadd.f32 %v5274, %v5354
        %v5371 = vadd.f32 %v5275, %v5355
        %v5372 = vadd.f32 %v5276, %v5356
        %v5373 = vadd.f32 %v5277, %v5357
        %v5374 = vadd.f32 %v5278, %v5358
        %v5375 = vadd.f32 %v5279, %v5359
        %v5376 = vadd.f32 %v5280, %v5360
        %v5377 = vadd.f32 %v5281, %v5361
        %v5378 = vadd.f32 %v5282, %v5362
        %v5379 = vadd.f32 %v5283, %v5363
        %5380 = vrot.lane.b32.xlu0 %v4733, 126
        %v5381 = vpop.permute.xlu0 %5380
        %5382 = vrot.lane.b32.xlu0 %v4734, 126
        %v5383 = vpop.permute.xlu0 %5382
        %5384 = vrot.lane.b32.xlu0 %v4735, 126
        %v5385 = vpop.permute.xlu0 %5384
        %5386 = vrot.lane.b32.xlu0 %v4736, 126
        %v5387 = vpop.permute.xlu0 %5386
        %5388 = vrot.lane.b32.xlu0 %v4737, 126
        %v5389 = vpop.permute.xlu0 %5388
        %5390 = vrot.lane.b32.xlu0 %v4738, 126
        %v5391 = vpop.permute.xlu0 %5390
        %5392 = vrot.lane.b32.xlu0 %v4739, 126
        %v5393 = vpop.permute.xlu0 %5392
        %5394 = vrot.lane.b32.xlu0 %v4740, 126
        %v5395 = vpop.permute.xlu0 %5394
        %5396 = vrot.lane.b32.xlu0 %v4741, 126
        %v5397 = vpop.permute.xlu0 %5396
        %5398 = vrot.lane.b32.xlu0 %v4742, 126
        %v5399 = vpop.permute.xlu0 %5398
        %5400 = vrot.lane.b32.xlu0 %v4743, 126
        %v5401 = vpop.permute.xlu0 %5400
        %5402 = vrot.lane.b32.xlu0 %v4744, 126
        %v5403 = vpop.permute.xlu0 %5402
        %5404 = vrot.lane.b32.xlu0 %v4745, 126
        %v5405 = vpop.permute.xlu0 %5404
        %5406 = vrot.lane.b32.xlu0 %v4746, 126
        %v5407 = vpop.permute.xlu0 %5406
        %5408 = vrot.lane.b32.xlu0 %v4747, 126
        %v5409 = vpop.permute.xlu0 %5408
        %5410 = vrot.lane.b32.xlu0 %v4748, 126
        %v5411 = vpop.permute.xlu0 %5410
        %v5412 = vsel %vm1655, %v5381, 0.0
        %v5413 = vsel %vm1655, %v5383, 0.0
        %v5414 = vsel %vm1655, %v5385, 0.0
        %v5415 = vsel %vm1655, %v5387, 0.0
        %v5416 = vsel %vm1655, %v5389, 0.0
        %v5417 = vsel %vm1655, %v5391, 0.0
        %v5418 = vsel %vm1655, %v5393, 0.0
        %v5419 = vsel %vm1655, %v5395, 0.0
        %v5420 = vsel %vm1655, %v5397, 0.0
        %v5421 = vsel %vm1655, %v5399, 0.0
        %v5422 = vsel %vm1655, %v5401, 0.0
        %v5423 = vsel %vm1655, %v5403, 0.0
        %v5424 = vsel %vm1655, %v5405, 0.0
        %v5425 = vsel %vm1655, %v5407, 0.0
        %v5426 = vsel %vm1655, %v5409, 0.0
        %v5427 = vsel %vm1655, %v5411, 0.0
        %5428 = vrot.lane.b32.xlu0 %v4733, 2
        %v5429 = vpop.permute.xlu0 %5428
        %5430 = vrot.lane.b32.xlu0 %v4734, 2
        %v5431 = vpop.permute.xlu0 %5430
        %5432 = vrot.lane.b32.xlu0 %v4735, 2
        %v5433 = vpop.permute.xlu0 %5432
        %5434 = vrot.lane.b32.xlu0 %v4736, 2
        %v5435 = vpop.permute.xlu0 %5434
        %5436 = vrot.lane.b32.xlu0 %v4737, 2
        %v5437 = vpop.permute.xlu0 %5436
        %5438 = vrot.lane.b32.xlu0 %v4738, 2
        %v5439 = vpop.permute.xlu0 %5438
        %5440 = vrot.lane.b32.xlu0 %v4739, 2
        %v5441 = vpop.permute.xlu0 %5440
        %5442 = vrot.lane.b32.xlu0 %v4740, 2
        %v5443 = vpop.permute.xlu0 %5442
        %5444 = vrot.lane.b32.xlu0 %v4741, 2
        %v5445 = vpop.permute.xlu0 %5444
        %5446 = vrot.lane.b32.xlu0 %v4742, 2
        %v5447 = vpop.permute.xlu0 %5446
        %5448 = vrot.lane.b32.xlu0 %v4743, 2
        %v5449 = vpop.permute.xlu0 %5448
        %5450 = vrot.lane.b32.xlu0 %v4744, 2
        %v5451 = vpop.permute.xlu0 %5450
        %5452 = vrot.lane.b32.xlu0 %v4745, 2
        %v5453 = vpop.permute.xlu0 %5452
        %5454 = vrot.lane.b32.xlu0 %v4746, 2
        %v5455 = vpop.permute.xlu0 %5454
        %5456 = vrot.lane.b32.xlu0 %v4747, 2
        %v5457 = vpop.permute.xlu0 %5456
        %5458 = vrot.lane.b32.xlu0 %v4748, 2
        %v5459 = vpop.permute.xlu0 %5458
        %v5460 = vsel %vm1704, %v5429, 0.0
        %v5461 = vsel %vm1704, %v5431, 0.0
        %v5462 = vsel %vm1704, %v5433, 0.0
        %v5463 = vsel %vm1704, %v5435, 0.0
        %v5464 = vsel %vm1704, %v5437, 0.0
        %v5465 = vsel %vm1704, %v5439, 0.0
        %v5466 = vsel %vm1704, %v5441, 0.0
        %v5467 = vsel %vm1704, %v5443, 0.0
        %v5468 = vsel %vm1704, %v5445, 0.0
        %v5469 = vsel %vm1704, %v5447, 0.0
        %v5470 = vsel %vm1704, %v5449, 0.0
        %v5471 = vsel %vm1704, %v5451, 0.0
        %v5472 = vsel %vm1704, %v5453, 0.0
        %v5473 = vsel %vm1704, %v5455, 0.0
        %v5474 = vsel %vm1704, %v5457, 0.0
        %v5475 = vsel %vm1704, %v5459, 0.0
        %5476 = vset.pattern.permute.xlu0 3
        %5477 = vperm.xlu0 %5476, %v4980
        %v5478 = vpop.permute.xlu0 %5477
        %5480 = vset.pattern.permute.xlu0 3
        %5481 = vperm.xlu0 %5480, %v4981
        %v5482 = vpop.permute.xlu0 %5481
        %5484 = vset.pattern.permute.xlu0 3
        %5485 = vperm.xlu0 %5484, %v4982
        %v5486 = vpop.permute.xlu0 %5485
        %5488 = vset.pattern.permute.xlu0 3
        %5489 = vperm.xlu0 %5488, %v4983
        %v5490 = vpop.permute.xlu0 %5489
        %5492 = vset.pattern.permute.xlu0 3
        %5493 = vperm.xlu0 %5492, %v4984
        %v5494 = vpop.permute.xlu0 %5493
        %5496 = vset.pattern.permute.xlu0 3
        %5497 = vperm.xlu0 %5496, %v4985
        %v5498 = vpop.permute.xlu0 %5497
        %5500 = vset.pattern.permute.xlu0 3
        %5501 = vperm.xlu0 %5500, %v4986
        %v5502 = vpop.permute.xlu0 %5501
        %5504 = vset.pattern.permute.xlu0 3
        %5505 = vperm.xlu0 %5504, %v4987
        %v5506 = vpop.permute.xlu0 %5505
        %5508 = vset.pattern.permute.xlu0 3
        %5509 = vperm.xlu0 %5508, %v4988
        %v5510 = vpop.permute.xlu0 %5509
        %5512 = vset.pattern.permute.xlu0 3
        %5513 = vperm.xlu0 %5512, %v4989
        %v5514 = vpop.permute.xlu0 %5513
        %5516 = vset.pattern.permute.xlu0 3
        %5517 = vperm.xlu0 %5516, %v4990
        %v5518 = vpop.permute.xlu0 %5517
        %5520 = vset.pattern.permute.xlu0 3
        %5521 = vperm.xlu0 %5520, %v4991
        %v5522 = vpop.permute.xlu0 %5521
        %5524 = vset.pattern.permute.xlu0 3
        %5525 = vperm.xlu0 %5524, %v4992
        %v5526 = vpop.permute.xlu0 %5525
        %5528 = vset.pattern.permute.xlu0 3
        %5529 = vperm.xlu0 %5528, %v4993
        %v5530 = vpop.permute.xlu0 %5529
        %5532 = vset.pattern.permute.xlu0 3
        %5533 = vperm.xlu0 %5532, %v4994
        %v5534 = vpop.permute.xlu0 %5533
        %5536 = vset.pattern.permute.xlu0 3
        %5537 = vperm.xlu0 %5536, %v4995
        %v5538 = vpop.permute.xlu0 %5537
        %v5540 = vmul.f32 %v5478, %v5412
        %v5541 = vmul.f32 %v5482, %v5413
        %v5542 = vmul.f32 %v5486, %v5414
        %v5543 = vmul.f32 %v5490, %v5415
        %v5544 = vmul.f32 %v5494, %v5416
        %v5545 = vmul.f32 %v5498, %v5417
        %v5546 = vmul.f32 %v5502, %v5418
        %v5547 = vmul.f32 %v5506, %v5419
        %v5548 = vmul.f32 %v5510, %v5420
        %v5549 = vmul.f32 %v5514, %v5421
        %v5550 = vmul.f32 %v5518, %v5422
        %v5551 = vmul.f32 %v5522, %v5423
        %v5552 = vmul.f32 %v5526, %v5424
        %v5553 = vmul.f32 %v5530, %v5425
        %v5554 = vmul.f32 %v5534, %v5426
        %v5555 = vmul.f32 %v5538, %v5427
        %v5556 = vadd.f32 %v5364, %v5540
        %v5557 = vadd.f32 %v5365, %v5541
        %v5558 = vadd.f32 %v5366, %v5542
        %v5559 = vadd.f32 %v5367, %v5543
        %v5560 = vadd.f32 %v5368, %v5544
        %v5561 = vadd.f32 %v5369, %v5545
        %v5562 = vadd.f32 %v5370, %v5546
        %v5563 = vadd.f32 %v5371, %v5547
        %v5564 = vadd.f32 %v5372, %v5548
        %v5565 = vadd.f32 %v5373, %v5549
        %v5566 = vadd.f32 %v5374, %v5550
        %v5567 = vadd.f32 %v5375, %v5551
        %v5568 = vadd.f32 %v5376, %v5552
        %v5569 = vadd.f32 %v5377, %v5553
        %v5570 = vadd.f32 %v5378, %v5554
        %v5571 = vadd.f32 %v5379, %v5555
        %5572 = vset.pattern.permute.xlu0 4
        %5573 = vperm.xlu0 %5572, %v4980
        %v5574 = vpop.permute.xlu0 %5573
        %5576 = vset.pattern.permute.xlu0 4
        %5577 = vperm.xlu0 %5576, %v4981
        %v5578 = vpop.permute.xlu0 %5577
        %5580 = vset.pattern.permute.xlu0 4
        %5581 = vperm.xlu0 %5580, %v4982
        %v5582 = vpop.permute.xlu0 %5581
        %5584 = vset.pattern.permute.xlu0 4
        %5585 = vperm.xlu0 %5584, %v4983
        %v5586 = vpop.permute.xlu0 %5585
        %5588 = vset.pattern.permute.xlu0 4
        %5589 = vperm.xlu0 %5588, %v4984
        %v5590 = vpop.permute.xlu0 %5589
        %5592 = vset.pattern.permute.xlu0 4
        %5593 = vperm.xlu0 %5592, %v4985
        %v5594 = vpop.permute.xlu0 %5593
        %5596 = vset.pattern.permute.xlu0 4
        %5597 = vperm.xlu0 %5596, %v4986
        %v5598 = vpop.permute.xlu0 %5597
        %5600 = vset.pattern.permute.xlu0 4
        %5601 = vperm.xlu0 %5600, %v4987
        %v5602 = vpop.permute.xlu0 %5601
        %5604 = vset.pattern.permute.xlu0 4
        %5605 = vperm.xlu0 %5604, %v4988
        %v5606 = vpop.permute.xlu0 %5605
        %5608 = vset.pattern.permute.xlu0 4
        %5609 = vperm.xlu0 %5608, %v4989
        %v5610 = vpop.permute.xlu0 %5609
        %5612 = vset.pattern.permute.xlu0 4
        %5613 = vperm.xlu0 %5612, %v4990
        %v5614 = vpop.permute.xlu0 %5613
        %5616 = vset.pattern.permute.xlu0 4
        %5617 = vperm.xlu0 %5616, %v4991
        %v5618 = vpop.permute.xlu0 %5617
        %5620 = vset.pattern.permute.xlu0 4
        %5621 = vperm.xlu0 %5620, %v4992
        %v5622 = vpop.permute.xlu0 %5621
        %5624 = vset.pattern.permute.xlu0 4
        %5625 = vperm.xlu0 %5624, %v4993
        %v5626 = vpop.permute.xlu0 %5625
        %5628 = vset.pattern.permute.xlu0 4
        %5629 = vperm.xlu0 %5628, %v4994
        %v5630 = vpop.permute.xlu0 %5629
        %5632 = vset.pattern.permute.xlu0 4
        %5633 = vperm.xlu0 %5632, %v4995
        %v5634 = vpop.permute.xlu0 %5633
        %v5636 = vmul.f32 %v5574, %v5460
        %v5637 = vmul.f32 %v5578, %v5461
        %v5638 = vmul.f32 %v5582, %v5462
        %v5639 = vmul.f32 %v5586, %v5463
        %v5640 = vmul.f32 %v5590, %v5464
        %v5641 = vmul.f32 %v5594, %v5465
        %v5642 = vmul.f32 %v5598, %v5466
        %v5643 = vmul.f32 %v5602, %v5467
        %v5644 = vmul.f32 %v5606, %v5468
        %v5645 = vmul.f32 %v5610, %v5469
        %v5646 = vmul.f32 %v5614, %v5470
        %v5647 = vmul.f32 %v5618, %v5471
        %v5648 = vmul.f32 %v5622, %v5472
        %v5649 = vmul.f32 %v5626, %v5473
        %v5650 = vmul.f32 %v5630, %v5474
        %v5651 = vmul.f32 %v5634, %v5475
        %v5652 = vadd.f32 %v5556, %v5636
        %v5653 = vadd.f32 %v5557, %v5637
        %v5654 = vadd.f32 %v5558, %v5638
        %v5655 = vadd.f32 %v5559, %v5639
        %v5656 = vadd.f32 %v5560, %v5640
        %v5657 = vadd.f32 %v5561, %v5641
        %v5658 = vadd.f32 %v5562, %v5642
        %v5659 = vadd.f32 %v5563, %v5643
        %v5660 = vadd.f32 %v5564, %v5644
        %v5661 = vadd.f32 %v5565, %v5645
        %v5662 = vadd.f32 %v5566, %v5646
        %v5663 = vadd.f32 %v5567, %v5647
        %v5664 = vadd.f32 %v5568, %v5648
        %v5665 = vadd.f32 %v5569, %v5649
        %v5666 = vadd.f32 %v5570, %v5650
        %v5667 = vadd.f32 %v5571, %v5651
        %5668 = vrot.lane.b32.xlu0 %v4733, 125
        %v5669 = vpop.permute.xlu0 %5668
        %5670 = vrot.lane.b32.xlu0 %v4734, 125
        %v5671 = vpop.permute.xlu0 %5670
        %5672 = vrot.lane.b32.xlu0 %v4735, 125
        %v5673 = vpop.permute.xlu0 %5672
        %5674 = vrot.lane.b32.xlu0 %v4736, 125
        %v5675 = vpop.permute.xlu0 %5674
        %5676 = vrot.lane.b32.xlu0 %v4737, 125
        %v5677 = vpop.permute.xlu0 %5676
        %5678 = vrot.lane.b32.xlu0 %v4738, 125
        %v5679 = vpop.permute.xlu0 %5678
        %5680 = vrot.lane.b32.xlu0 %v4739, 125
        %v5681 = vpop.permute.xlu0 %5680
        %5682 = vrot.lane.b32.xlu0 %v4740, 125
        %v5683 = vpop.permute.xlu0 %5682
        %5684 = vrot.lane.b32.xlu0 %v4741, 125
        %v5685 = vpop.permute.xlu0 %5684
        %5686 = vrot.lane.b32.xlu0 %v4742, 125
        %v5687 = vpop.permute.xlu0 %5686
        %5688 = vrot.lane.b32.xlu0 %v4743, 125
        %v5689 = vpop.permute.xlu0 %5688
        %5690 = vrot.lane.b32.xlu0 %v4744, 125
        %v5691 = vpop.permute.xlu0 %5690
        %5692 = vrot.lane.b32.xlu0 %v4745, 125
        %v5693 = vpop.permute.xlu0 %5692
        %5694 = vrot.lane.b32.xlu0 %v4746, 125
        %v5695 = vpop.permute.xlu0 %5694
        %5696 = vrot.lane.b32.xlu0 %v4747, 125
        %v5697 = vpop.permute.xlu0 %5696
        %5698 = vrot.lane.b32.xlu0 %v4748, 125
        %v5699 = vpop.permute.xlu0 %5698
        %v5700 = vsel %vm1945, %v5669, 0.0
        %v5701 = vsel %vm1945, %v5671, 0.0
        %v5702 = vsel %vm1945, %v5673, 0.0
        %v5703 = vsel %vm1945, %v5675, 0.0
        %v5704 = vsel %vm1945, %v5677, 0.0
        %v5705 = vsel %vm1945, %v5679, 0.0
        %v5706 = vsel %vm1945, %v5681, 0.0
        %v5707 = vsel %vm1945, %v5683, 0.0
        %v5708 = vsel %vm1945, %v5685, 0.0
        %v5709 = vsel %vm1945, %v5687, 0.0
        %v5710 = vsel %vm1945, %v5689, 0.0
        %v5711 = vsel %vm1945, %v5691, 0.0
        %v5712 = vsel %vm1945, %v5693, 0.0
        %v5713 = vsel %vm1945, %v5695, 0.0
        %v5714 = vsel %vm1945, %v5697, 0.0
        %v5715 = vsel %vm1945, %v5699, 0.0
        %5716 = vrot.lane.b32.xlu0 %v4733, 3
        %v5717 = vpop.permute.xlu0 %5716
        %5718 = vrot.lane.b32.xlu0 %v4734, 3
        %v5719 = vpop.permute.xlu0 %5718
        %5720 = vrot.lane.b32.xlu0 %v4735, 3
        %v5721 = vpop.permute.xlu0 %5720
        %5722 = vrot.lane.b32.xlu0 %v4736, 3
        %v5723 = vpop.permute.xlu0 %5722
        %5724 = vrot.lane.b32.xlu0 %v4737, 3
        %v5725 = vpop.permute.xlu0 %5724
        %5726 = vrot.lane.b32.xlu0 %v4738, 3
        %v5727 = vpop.permute.xlu0 %5726
        %5728 = vrot.lane.b32.xlu0 %v4739, 3
        %v5729 = vpop.permute.xlu0 %5728
        %5730 = vrot.lane.b32.xlu0 %v4740, 3
        %v5731 = vpop.permute.xlu0 %5730
        %5732 = vrot.lane.b32.xlu0 %v4741, 3
        %v5733 = vpop.permute.xlu0 %5732
        %5734 = vrot.lane.b32.xlu0 %v4742, 3
        %v5735 = vpop.permute.xlu0 %5734
        %5736 = vrot.lane.b32.xlu0 %v4743, 3
        %v5737 = vpop.permute.xlu0 %5736
        %5738 = vrot.lane.b32.xlu0 %v4744, 3
        %v5739 = vpop.permute.xlu0 %5738
        %5740 = vrot.lane.b32.xlu0 %v4745, 3
        %v5741 = vpop.permute.xlu0 %5740
        %5742 = vrot.lane.b32.xlu0 %v4746, 3
        %v5743 = vpop.permute.xlu0 %5742
        %5744 = vrot.lane.b32.xlu0 %v4747, 3
        %v5745 = vpop.permute.xlu0 %5744
        %5746 = vrot.lane.b32.xlu0 %v4748, 3
        %v5747 = vpop.permute.xlu0 %5746
        %v5748 = vsel %vm1994, %v5717, 0.0
        %v5749 = vsel %vm1994, %v5719, 0.0
        %v5750 = vsel %vm1994, %v5721, 0.0
        %v5751 = vsel %vm1994, %v5723, 0.0
        %v5752 = vsel %vm1994, %v5725, 0.0
        %v5753 = vsel %vm1994, %v5727, 0.0
        %v5754 = vsel %vm1994, %v5729, 0.0
        %v5755 = vsel %vm1994, %v5731, 0.0
        %v5756 = vsel %vm1994, %v5733, 0.0
        %v5757 = vsel %vm1994, %v5735, 0.0
        %v5758 = vsel %vm1994, %v5737, 0.0
        %v5759 = vsel %vm1994, %v5739, 0.0
        %v5760 = vsel %vm1994, %v5741, 0.0
        %v5761 = vsel %vm1994, %v5743, 0.0
        %v5762 = vsel %vm1994, %v5745, 0.0
        %v5763 = vsel %vm1994, %v5747, 0.0
        %5764 = vset.pattern.permute.xlu0 5
        %5765 = vperm.xlu0 %5764, %v4980
        %v5766 = vpop.permute.xlu0 %5765
        %5768 = vset.pattern.permute.xlu0 5
        %5769 = vperm.xlu0 %5768, %v4981
        %v5770 = vpop.permute.xlu0 %5769
        %5772 = vset.pattern.permute.xlu0 5
        %5773 = vperm.xlu0 %5772, %v4982
        %v5774 = vpop.permute.xlu0 %5773
        %5776 = vset.pattern.permute.xlu0 5
        %5777 = vperm.xlu0 %5776, %v4983
        %v5778 = vpop.permute.xlu0 %5777
        %5780 = vset.pattern.permute.xlu0 5
        %5781 = vperm.xlu0 %5780, %v4984
        %v5782 = vpop.permute.xlu0 %5781
        %5784 = vset.pattern.permute.xlu0 5
        %5785 = vperm.xlu0 %5784, %v4985
        %v5786 = vpop.permute.xlu0 %5785
        %5788 = vset.pattern.permute.xlu0 5
        %5789 = vperm.xlu0 %5788, %v4986
        %v5790 = vpop.permute.xlu0 %5789
        %5792 = vset.pattern.permute.xlu0 5
        %5793 = vperm.xlu0 %5792, %v4987
        %v5794 = vpop.permute.xlu0 %5793
        %5796 = vset.pattern.permute.xlu0 5
        %5797 = vperm.xlu0 %5796, %v4988
        %v5798 = vpop.permute.xlu0 %5797
        %5800 = vset.pattern.permute.xlu0 5
        %5801 = vperm.xlu0 %5800, %v4989
        %v5802 = vpop.permute.xlu0 %5801
        %5804 = vset.pattern.permute.xlu0 5
        %5805 = vperm.xlu0 %5804, %v4990
        %v5806 = vpop.permute.xlu0 %5805
        %5808 = vset.pattern.permute.xlu0 5
        %5809 = vperm.xlu0 %5808, %v4991
        %v5810 = vpop.permute.xlu0 %5809
        %5812 = vset.pattern.permute.xlu0 5
        %5813 = vperm.xlu0 %5812, %v4992
        %v5814 = vpop.permute.xlu0 %5813
        %5816 = vset.pattern.permute.xlu0 5
        %5817 = vperm.xlu0 %5816, %v4993
        %v5818 = vpop.permute.xlu0 %5817
        %5820 = vset.pattern.permute.xlu0 5
        %5821 = vperm.xlu0 %5820, %v4994
        %v5822 = vpop.permute.xlu0 %5821
        %5824 = vset.pattern.permute.xlu0 5
        %5825 = vperm.xlu0 %5824, %v4995
        %v5826 = vpop.permute.xlu0 %5825
        %v5828 = vmul.f32 %v5766, %v5700
        %v5829 = vmul.f32 %v5770, %v5701
        %v5830 = vmul.f32 %v5774, %v5702
        %v5831 = vmul.f32 %v5778, %v5703
        %v5832 = vmul.f32 %v5782, %v5704
        %v5833 = vmul.f32 %v5786, %v5705
        %v5834 = vmul.f32 %v5790, %v5706
        %v5835 = vmul.f32 %v5794, %v5707
        %v5836 = vmul.f32 %v5798, %v5708
        %v5837 = vmul.f32 %v5802, %v5709
        %v5838 = vmul.f32 %v5806, %v5710
        %v5839 = vmul.f32 %v5810, %v5711
        %v5840 = vmul.f32 %v5814, %v5712
        %v5841 = vmul.f32 %v5818, %v5713
        %v5842 = vmul.f32 %v5822, %v5714
        %v5843 = vmul.f32 %v5826, %v5715
        %v5844 = vadd.f32 %v5652, %v5828
        %v5845 = vadd.f32 %v5653, %v5829
        %v5846 = vadd.f32 %v5654, %v5830
        %v5847 = vadd.f32 %v5655, %v5831
        %v5848 = vadd.f32 %v5656, %v5832
        %v5849 = vadd.f32 %v5657, %v5833
        %v5850 = vadd.f32 %v5658, %v5834
        %v5851 = vadd.f32 %v5659, %v5835
        %v5852 = vadd.f32 %v5660, %v5836
        %v5853 = vadd.f32 %v5661, %v5837
        %v5854 = vadd.f32 %v5662, %v5838
        %v5855 = vadd.f32 %v5663, %v5839
        %v5856 = vadd.f32 %v5664, %v5840
        %v5857 = vadd.f32 %v5665, %v5841
        %v5858 = vadd.f32 %v5666, %v5842
        %v5859 = vadd.f32 %v5667, %v5843
        %5860 = vset.pattern.permute.xlu0 6
        %5861 = vperm.xlu0 %5860, %v4980
        %v5862 = vpop.permute.xlu0 %5861
        %5864 = vset.pattern.permute.xlu0 6
        %5865 = vperm.xlu0 %5864, %v4981
        %v5866 = vpop.permute.xlu0 %5865
        %5868 = vset.pattern.permute.xlu0 6
        %5869 = vperm.xlu0 %5868, %v4982
        %v5870 = vpop.permute.xlu0 %5869
        %5872 = vset.pattern.permute.xlu0 6
        %5873 = vperm.xlu0 %5872, %v4983
        %v5874 = vpop.permute.xlu0 %5873
        %5876 = vset.pattern.permute.xlu0 6
        %5877 = vperm.xlu0 %5876, %v4984
        %v5878 = vpop.permute.xlu0 %5877
        %5880 = vset.pattern.permute.xlu0 6
        %5881 = vperm.xlu0 %5880, %v4985
        %v5882 = vpop.permute.xlu0 %5881
        %5884 = vset.pattern.permute.xlu0 6
        %5885 = vperm.xlu0 %5884, %v4986
        %v5886 = vpop.permute.xlu0 %5885
        %5888 = vset.pattern.permute.xlu0 6
        %5889 = vperm.xlu0 %5888, %v4987
        %v5890 = vpop.permute.xlu0 %5889
        %5892 = vset.pattern.permute.xlu0 6
        %5893 = vperm.xlu0 %5892, %v4988
        %v5894 = vpop.permute.xlu0 %5893
        %5896 = vset.pattern.permute.xlu0 6
        %5897 = vperm.xlu0 %5896, %v4989
        %v5898 = vpop.permute.xlu0 %5897
        %5900 = vset.pattern.permute.xlu0 6
        %5901 = vperm.xlu0 %5900, %v4990
        %v5902 = vpop.permute.xlu0 %5901
        %5904 = vset.pattern.permute.xlu0 6
        %5905 = vperm.xlu0 %5904, %v4991
        %v5906 = vpop.permute.xlu0 %5905
        %5908 = vset.pattern.permute.xlu0 6
        %5909 = vperm.xlu0 %5908, %v4992
        %v5910 = vpop.permute.xlu0 %5909
        %5912 = vset.pattern.permute.xlu0 6
        %5913 = vperm.xlu0 %5912, %v4993
        %v5914 = vpop.permute.xlu0 %5913
        %5916 = vset.pattern.permute.xlu0 6
        %5917 = vperm.xlu0 %5916, %v4994
        %v5918 = vpop.permute.xlu0 %5917
        %5920 = vset.pattern.permute.xlu0 6
        %5921 = vperm.xlu0 %5920, %v4995
        %v5922 = vpop.permute.xlu0 %5921
        %v5924 = vmul.f32 %v5862, %v5748
        %v5925 = vmul.f32 %v5866, %v5749
        %v5926 = vmul.f32 %v5870, %v5750
        %v5927 = vmul.f32 %v5874, %v5751
        %v5928 = vmul.f32 %v5878, %v5752
        %v5929 = vmul.f32 %v5882, %v5753
        %v5930 = vmul.f32 %v5886, %v5754
        %v5931 = vmul.f32 %v5890, %v5755
        %v5932 = vmul.f32 %v5894, %v5756
        %v5933 = vmul.f32 %v5898, %v5757
        %v5934 = vmul.f32 %v5902, %v5758
        %v5935 = vmul.f32 %v5906, %v5759
        %v5936 = vmul.f32 %v5910, %v5760
        %v5937 = vmul.f32 %v5914, %v5761
        %v5938 = vmul.f32 %v5918, %v5762
        %v5939 = vmul.f32 %v5922, %v5763
        %v5940 = vadd.f32 %v5844, %v5924
        %v5941 = vadd.f32 %v5845, %v5925
        %v5942 = vadd.f32 %v5846, %v5926
        %v5943 = vadd.f32 %v5847, %v5927
        %v5944 = vadd.f32 %v5848, %v5928
        %v5945 = vadd.f32 %v5849, %v5929
        %v5946 = vadd.f32 %v5850, %v5930
        %v5947 = vadd.f32 %v5851, %v5931
        %v5948 = vadd.f32 %v5852, %v5932
        %v5949 = vadd.f32 %v5853, %v5933
        %v5950 = vadd.f32 %v5854, %v5934
        %v5951 = vadd.f32 %v5855, %v5935
        %v5952 = vadd.f32 %v5856, %v5936
        %v5953 = vadd.f32 %v5857, %v5937
        %v5954 = vadd.f32 %v5858, %v5938
        %v5955 = vadd.f32 %v5859, %v5939
        %v5956 = vsel %vm469, %v5940, 0.0
        %v5957 = vsel %vm470, %v5941, 0.0
        %v5958 = vsel %vm471, %v5942, 0.0
        %v5959 = vsel %vm472, %v5943, 0.0
        %v5960 = vsel %vm473, %v5944, 0.0
        %v5961 = vsel %vm474, %v5945, 0.0
        %v5962 = vsel %vm475, %v5946, 0.0
        %v5963 = vsel %vm476, %v5947, 0.0
        %v5964 = vsel %vm477, %v5948, 0.0
        %v5965 = vsel %vm478, %v5949, 0.0
        %v5966 = vsel %vm479, %v5950, 0.0
        %v5967 = vsel %vm480, %v5951, 0.0
        %v5968 = vsel %vm481, %v5952, 0.0
        %v5969 = vsel %vm482, %v5953, 0.0
        %v5970 = vsel %vm483, %v5954, 0.0
        %v5971 = vsel %vm484, %v5955, 0.0
        %s5972 = scalar_lea.vmem %s414, 256 [#allocation2]
        %5973 = vst [vmem:[%s5972] sm:$0xff] %v5956
        %5974 = vst [vmem:[%s5972 + $0x8] sm:$0xff] %v5957
        %5975 = vst [vmem:[%s5972 + $0x10] sm:$0xff] %v5958
        %5976 = vst [vmem:[%s5972 + $0x18] sm:$0xff] %v5959
        %5977 = vst [vmem:[%s5972 + $0x20] sm:$0xff] %v5960
        %5978 = vst [vmem:[%s5972 + $0x28] sm:$0xff] %v5961
        %5979 = vst [vmem:[%s5972 + $0x30] sm:$0xff] %v5962
        %5980 = vst [vmem:[%s5972 + $0x38] sm:$0xff] %v5963
        %5981 = vst [vmem:[%s5972 + $0x40] sm:$0xff] %v5964
        %5982 = vst [vmem:[%s5972 + $0x48] sm:$0xff] %v5965
        %5983 = vst [vmem:[%s5972 + $0x50] sm:$0xff] %v5966
        %5984 = vst [vmem:[%s5972 + $0x58] sm:$0xff] %v5967
        %5985 = vst [vmem:[%s5972 + $0x60] sm:$0xff] %v5968
        %5986 = vst [vmem:[%s5972 + $0x68] sm:$0xff] %v5969
        %5987 = vst [vmem:[%s5972 + $0x70] sm:$0xff] %v5970
        %5988 = vst [vmem:[%s5972 + $0x78] sm:$0xff] %v5971
        %v5989 = vpack.c.bf16 %v5957, %v5956
        %v5990 = vpack.c.bf16 %v5959, %v5958
        %v5991 = vpack.c.bf16 %v5961, %v5960
        %v5992 = vpack.c.bf16 %v5963, %v5962
        %v5993 = vpack.c.bf16 %v5965, %v5964
        %v5994 = vpack.c.bf16 %v5967, %v5966
        %v5995 = vpack.c.bf16 %v5969, %v5968
        %v5996 = vpack.c.bf16 %v5971, %v5970
        %v5997 = vpack.c.bf16 %v4439, %v4437
        %v5998 = vpack.c.bf16 %v4444, %v4442
        %v5999 = vpack.c.bf16 %v4449, %v4447
        %v6000 = vpack.c.bf16 %v4454, %v4452
        %v6001 = vpack.c.bf16 %v4459, %v4457
        %v6002 = vpack.c.bf16 %v4464, %v4462
        %v6003 = vpack.c.bf16 %v4469, %v4467
        %v6004 = vpack.c.bf16 %v4474, %v4472
        %6005 = vmatpush.bf16.msra.mxu0 %v6004
        %6006 = vmatpush.bf16.msra.mxu0 %v6003
        %6007 = vmatpush.bf16.msra.mxu0 %v6002
        %6008 = vmatpush.bf16.msra.mxu0 %v6001
        %6009 = vmatpush.bf16.msra.mxu0 %v6000
        %6010 = vmatpush.bf16.msra.mxu0 %v5999
        %6011 = vmatpush.bf16.msra.mxu0 %v5998
        %6012 = vmatpush.bf16.msra.mxu0 %v5997
        %6013 = vmatmul.bf16.gmra.mxu0 %v5989
        %v6014 = vpop.f32.mrf.mxu0
        %v6015 = vadd.f32 0.0, %v6014
        %v6016 = vpop.f32.mrf.mxu0
        %v6017 = vadd.f32 0.0, %v6016
        %6018 = vmatmul.bf16.gmra.mxu0 %v5990
        %v6019 = vpop.f32.mrf.mxu0
        %v6020 = vadd.f32 0.0, %v6019
        %v6021 = vpop.f32.mrf.mxu0
        %v6022 = vadd.f32 0.0, %v6021
        %6023 = vmatmul.bf16.gmra.mxu0 %v5991
        %v6024 = vpop.f32.mrf.mxu0
        %v6025 = vadd.f32 0.0, %v6024
        %v6026 = vpop.f32.mrf.mxu0
        %v6027 = vadd.f32 0.0, %v6026
        %6028 = vmatmul.bf16.gmra.mxu0 %v5992
        %v6029 = vpop.f32.mrf.mxu0
        %v6030 = vadd.f32 0.0, %v6029
        %v6031 = vpop.f32.mrf.mxu0
        %v6032 = vadd.f32 0.0, %v6031
        %6033 = vmatmul.bf16.gmra.mxu0 %v5993
        %v6034 = vpop.f32.mrf.mxu0
        %v6035 = vadd.f32 0.0, %v6034
        %v6036 = vpop.f32.mrf.mxu0
        %v6037 = vadd.f32 0.0, %v6036
        %6038 = vmatmul.bf16.gmra.mxu0 %v5994
        %v6039 = vpop.f32.mrf.mxu0
        %v6040 = vadd.f32 0.0, %v6039
        %v6041 = vpop.f32.mrf.mxu0
        %v6042 = vadd.f32 0.0, %v6041
        %6043 = vmatmul.bf16.gmra.mxu0 %v5995
        %v6044 = vpop.f32.mrf.mxu0
        %v6045 = vadd.f32 0.0, %v6044
        %v6046 = vpop.f32.mrf.mxu0
        %v6047 = vadd.f32 0.0, %v6046
        %6048 = vmatmul.bf16.gmra.mxu0 %v5996
        %v6049 = vpop.f32.mrf.mxu0
        %v6050 = vadd.f32 0.0, %v6049
        %v6051 = vpop.f32.mrf.mxu0
        %v6052 = vadd.f32 0.0, %v6051
        %6053 = vdwg.mxu0
        %v6054 = vpack.c.bf16 %v6017, %v6015
        %v6055 = vpack.c.bf16 %v6022, %v6020
        %v6056 = vpack.c.bf16 %v6027, %v6025
        %v6057 = vpack.c.bf16 %v6032, %v6030
        %v6058 = vpack.c.bf16 %v6037, %v6035
        %v6059 = vpack.c.bf16 %v6042, %v6040
        %v6060 = vpack.c.bf16 %v6047, %v6045
        %v6061 = vpack.c.bf16 %v6052, %v6050
        %s6062 = scalar_lea.vmem %s9, 8
        %v6063 = vld [vmem:[%s6062] sm:$0xf]
        %v6065 = vsel %vm733, %v6054, 0
        %v6068 = vsel %vm733, %v6055, 0
        %v6071 = vsel %vm733, %v6056, 0
        %v6074 = vsel %vm733, %v6057, 0
        %v6077 = vsel %vm733, %v6058, 0
        %v6080 = vsel %vm733, %v6059, 0
        %v6083 = vsel %vm733, %v6060, 0
        %v6086 = vsel %vm733, %v6061, 0
        %v6089 = vsel %vm4134, %v6063, 0
        %6091 = vmatpush.bf16.msra.mxu0 0
        %6092 = vmatpush.bf16.msra.mxu0 0
        %6093 = vmatpush.bf16.msra.mxu0 0
        %6094 = vmatpush.bf16.msra.mxu0 0
        %6095 = vmatpush.bf16.msra.mxu0 0
        %6096 = vmatpush.bf16.msra.mxu0 0
        %6097 = vmatpush.bf16.msra.mxu0 0
        %6098 = vmatpush.bf16.msra.mxu0 %v6089
        %6099 = vmatmul.bf16.gmra.mxu0 %v6065
        %v6100 = vpop.f32.mrf.mxu0
        %v6101 = vadd.f32 0.0, %v6100
        %v6102 = vpop.f32.mrf.mxu0
        %v6103 = vadd.f32 0.0, %v6102
        %6104 = vmatmul.bf16.gmra.mxu0 %v6068
        %v6105 = vpop.f32.mrf.mxu0
        %v6106 = vadd.f32 0.0, %v6105
        %v6107 = vpop.f32.mrf.mxu0
        %v6108 = vadd.f32 0.0, %v6107
        %6109 = vmatmul.bf16.gmra.mxu0 %v6071
        %v6110 = vpop.f32.mrf.mxu0
        %v6111 = vadd.f32 0.0, %v6110
        %v6112 = vpop.f32.mrf.mxu0
        %v6113 = vadd.f32 0.0, %v6112
        %6114 = vmatmul.bf16.gmra.mxu0 %v6074
        %v6115 = vpop.f32.mrf.mxu0
        %v6116 = vadd.f32 0.0, %v6115
        %v6117 = vpop.f32.mrf.mxu0
        %v6118 = vadd.f32 0.0, %v6117
        %6119 = vmatmul.bf16.gmra.mxu0 %v6077
        %v6120 = vpop.f32.mrf.mxu0
        %v6121 = vadd.f32 0.0, %v6120
        %v6122 = vpop.f32.mrf.mxu0
        %v6123 = vadd.f32 0.0, %v6122
        %6124 = vmatmul.bf16.gmra.mxu0 %v6080
        %v6125 = vpop.f32.mrf.mxu0
        %v6126 = vadd.f32 0.0, %v6125
        %v6127 = vpop.f32.mrf.mxu0
        %v6128 = vadd.f32 0.0, %v6127
        %6129 = vmatmul.bf16.gmra.mxu0 %v6083
        %v6130 = vpop.f32.mrf.mxu0
        %v6131 = vadd.f32 0.0, %v6130
        %v6132 = vpop.f32.mrf.mxu0
        %v6133 = vadd.f32 0.0, %v6132
        %6134 = vmatmul.bf16.gmra.mxu0 %v6086
        %v6135 = vpop.f32.mrf.mxu0
        %v6136 = vadd.f32 0.0, %v6135
        %v6137 = vpop.f32.mrf.mxu0
        %v6138 = vadd.f32 0.0, %v6137
        %6139 = vdwg.mxu0
        %v6140 = vadd.f32 %v4224, %v6101
        %v6141 = vadd.f32 %v4226, %v6103
        %v6142 = vadd.f32 %v4229, %v6106
        %v6143 = vadd.f32 %v4231, %v6108
        %v6144 = vadd.f32 %v4234, %v6111
        %v6145 = vadd.f32 %v4236, %v6113
        %v6146 = vadd.f32 %v4239, %v6116
        %v6147 = vadd.f32 %v4241, %v6118
        %v6148 = vadd.f32 %v4244, %v6121
        %v6149 = vadd.f32 %v4246, %v6123
        %v6150 = vadd.f32 %v4249, %v6126
        %v6151 = vadd.f32 %v4251, %v6128
        %v6152 = vadd.f32 %v4254, %v6131
        %v6153 = vadd.f32 %v4256, %v6133
        %v6154 = vadd.f32 %v4259, %v6136
        %v6155 = vadd.f32 %v4261, %v6138
        %s6156 = scalar_lea.vmem %s1, 48
        %v6157 = vld [vmem:[%s6156] sm:$0xf]
        %v6158 = vld [vmem:[%s6156 + $0x4] sm:$0xf]
        %v6159 = vld [vmem:[%s6156 + $0x8] sm:$0xf]
        %v6160 = vld [vmem:[%s6156 + $0xc] sm:$0xf]
        %s6161 = scalar_lea.vmem %s2, 3
        %v6162 = vld [vmem:[%s6161] sm:$0x1]
        %v6164 = vperm.slane %v6162, 0
        %v6170 = vunpack.c.l.b16 %v6157
        %v6171 = vunpack.c.l.b16 %v6158
        %v6172 = vunpack.c.l.b16 %v6159
        %v6173 = vunpack.c.l.b16 %v6160
        %v6174 = vpack.c.b16 %v6171, %v6170
        %v6175 = vpack.c.b16 %v6173, %v6172
        %6178 = vmatpush.bf16.msra.mxu0 0
        %6179 = vmatpush.bf16.msra.mxu0 0
        %6180 = vmatpush.bf16.msra.mxu0 0
        %6181 = vmatpush.bf16.msra.mxu0 0
        %6182 = vmatpush.bf16.msra.mxu0 0
        %6183 = vmatpush.bf16.msra.mxu0 0
        %6184 = vmatpush.bf16.msra.mxu0 %v6175
        %6185 = vmatpush.bf16.msra.mxu0 %v6174
        %6186 = vmatmul.bf16.gmra.mxu0 %v507
        %v6187 = vpop.f32.mrf.mxu0
        %v6188 = vadd.f32 %v6164, %v6187
        %v6189 = vpop.f32.mrf.mxu0
        %v6190 = vadd.f32 %v6164, %v6189
        %6191 = vmatmul.bf16.gmra.mxu0 %v510
        %v6192 = vpop.f32.mrf.mxu0
        %v6193 = vadd.f32 %v6164, %v6192
        %v6194 = vpop.f32.mrf.mxu0
        %v6195 = vadd.f32 %v6164, %v6194
        %6196 = vmatmul.bf16.gmra.mxu0 %v513
        %v6197 = vpop.f32.mrf.mxu0
        %v6198 = vadd.f32 %v6164, %v6197
        %v6199 = vpop.f32.mrf.mxu0
        %v6200 = vadd.f32 %v6164, %v6199
        %6201 = vmatmul.bf16.gmra.mxu0 %v516
        %v6202 = vpop.f32.mrf.mxu0
        %v6203 = vadd.f32 %v6164, %v6202
        %v6204 = vpop.f32.mrf.mxu0
        %v6205 = vadd.f32 %v6164, %v6204
        %6206 = vmatmul.bf16.gmra.mxu0 %v519
        %v6207 = vpop.f32.mrf.mxu0
        %v6208 = vadd.f32 %v6164, %v6207
        %v6209 = vpop.f32.mrf.mxu0
        %v6210 = vadd.f32 %v6164, %v6209
        %6211 = vmatmul.bf16.gmra.mxu0 %v522
        %v6212 = vpop.f32.mrf.mxu0
        %v6213 = vadd.f32 %v6164, %v6212
        %v6214 = vpop.f32.mrf.mxu0
        %v6215 = vadd.f32 %v6164, %v6214
        %6216 = vmatmul.bf16.gmra.mxu0 %v525
        %v6217 = vpop.f32.mrf.mxu0
        %v6218 = vadd.f32 %v6164, %v6217
        %v6219 = vpop.f32.mrf.mxu0
        %v6220 = vadd.f32 %v6164, %v6219
        %6221 = vmatmul.bf16.gmra.mxu0 %v528
        %v6222 = vpop.f32.mrf.mxu0
        %v6223 = vadd.f32 %v6164, %v6222
        %v6224 = vpop.f32.mrf.mxu0
        %v6225 = vadd.f32 %v6164, %v6224
        %6226 = vdwg.mxu0
        %s6227 = scalar_lea.vmem %s3, 48
        %v6228 = vld [vmem:[%s6227] sm:$0xf]
        %v6229 = vld [vmem:[%s6227 + $0x4] sm:$0xf]
        %v6230 = vld [vmem:[%s6227 + $0x8] sm:$0xf]
        %v6231 = vld [vmem:[%s6227 + $0xc] sm:$0xf]
        %s6232 = scalar_lea.vmem %s4, 3
        %v6233 = vld [vmem:[%s6232] sm:$0x1]
        %v6235 = vperm.slane %v6233, 0
        %v6241 = vunpack.c.l.b16 %v6228
        %v6242 = vunpack.c.l.b16 %v6229
        %v6243 = vunpack.c.l.b16 %v6230
        %v6244 = vunpack.c.l.b16 %v6231
        %v6245 = vpack.c.b16 %v6242, %v6241
        %v6246 = vpack.c.b16 %v6244, %v6243
        %6249 = vmatpush.bf16.msra.mxu0 0
        %6250 = vmatpush.bf16.msra.mxu0 0
        %6251 = vmatpush.bf16.msra.mxu0 0
        %6252 = vmatpush.bf16.msra.mxu0 0
        %6253 = vmatpush.bf16.msra.mxu0 0
        %6254 = vmatpush.bf16.msra.mxu0 0
        %6255 = vmatpush.bf16.msra.mxu0 %v6246
        %6256 = vmatpush.bf16.msra.mxu0 %v6245
        %6257 = vmatmul.bf16.gmra.mxu0 %v507
        %v6258 = vpop.f32.mrf.mxu0
        %v6259 = vadd.f32 %v6235, %v6258
        %v6260 = vpop.f32.mrf.mxu0
        %v6261 = vadd.f32 %v6235, %v6260
        %6262 = vmatmul.bf16.gmra.mxu0 %v510
        %v6263 = vpop.f32.mrf.mxu0
        %v6264 = vadd.f32 %v6235, %v6263
        %v6265 = vpop.f32.mrf.mxu0
        %v6266 = vadd.f32 %v6235, %v6265
        %6267 = vmatmul.bf16.gmra.mxu0 %v513
        %v6268 = vpop.f32.mrf.mxu0
        %v6269 = vadd.f32 %v6235, %v6268
        %v6270 = vpop.f32.mrf.mxu0
        %v6271 = vadd.f32 %v6235, %v6270
        %6272 = vmatmul.bf16.gmra.mxu0 %v516
        %v6273 = vpop.f32.mrf.mxu0
        %v6274 = vadd.f32 %v6235, %v6273
        %v6275 = vpop.f32.mrf.mxu0
        %v6276 = vadd.f32 %v6235, %v6275
        %6277 = vmatmul.bf16.gmra.mxu0 %v519
        %v6278 = vpop.f32.mrf.mxu0
        %v6279 = vadd.f32 %v6235, %v6278
        %v6280 = vpop.f32.mrf.mxu0
        %v6281 = vadd.f32 %v6235, %v6280
        %6282 = vmatmul.bf16.gmra.mxu0 %v522
        %v6283 = vpop.f32.mrf.mxu0
        %v6284 = vadd.f32 %v6235, %v6283
        %v6285 = vpop.f32.mrf.mxu0
        %v6286 = vadd.f32 %v6235, %v6285
        %6287 = vmatmul.bf16.gmra.mxu0 %v525
        %v6288 = vpop.f32.mrf.mxu0
        %v6289 = vadd.f32 %v6235, %v6288
        %v6290 = vpop.f32.mrf.mxu0
        %v6291 = vadd.f32 %v6235, %v6290
        %6292 = vmatmul.bf16.gmra.mxu0 %v528
        %v6293 = vpop.f32.mrf.mxu0
        %v6294 = vadd.f32 %v6235, %v6293
        %v6295 = vpop.f32.mrf.mxu0
        %v6296 = vadd.f32 %v6235, %v6295
        %6297 = vdwg.mxu0
        %s6298 = scalar_lea.vmem %s5, 48
        %v6299 = vld [vmem:[%s6298] sm:$0xf]
        %v6300 = vld [vmem:[%s6298 + $0x4] sm:$0xf]
        %v6301 = vld [vmem:[%s6298 + $0x8] sm:$0xf]
        %v6302 = vld [vmem:[%s6298 + $0xc] sm:$0xf]
        %s6303 = scalar_lea.vmem %s6, 3
        %v6304 = vld [vmem:[%s6303] sm:$0x1]
        %v6306 = vperm.slane %v6304, 0
        %v6312 = vunpack.c.l.b16 %v6299
        %v6313 = vunpack.c.l.b16 %v6300
        %v6314 = vunpack.c.l.b16 %v6301
        %v6315 = vunpack.c.l.b16 %v6302
        %v6316 = vpack.c.b16 %v6313, %v6312
        %v6317 = vpack.c.b16 %v6315, %v6314
        %6320 = vmatpush.bf16.msra.mxu0 0
        %6321 = vmatpush.bf16.msra.mxu0 0
        %6322 = vmatpush.bf16.msra.mxu0 0
        %6323 = vmatpush.bf16.msra.mxu0 0
        %6324 = vmatpush.bf16.msra.mxu0 0
        %6325 = vmatpush.bf16.msra.mxu0 0
        %6326 = vmatpush.bf16.msra.mxu0 %v6317
        %6327 = vmatpush.bf16.msra.mxu0 %v6316
        %6328 = vmatmul.bf16.gmra.mxu0 %v507
        %v6329 = vpop.f32.mrf.mxu0
        %v6330 = vadd.f32 %v6306, %v6329
        %v6331 = vpop.f32.mrf.mxu0
        %v6332 = vadd.f32 %v6306, %v6331
        %6333 = vmatmul.bf16.gmra.mxu0 %v510
        %v6334 = vpop.f32.mrf.mxu0
        %v6335 = vadd.f32 %v6306, %v6334
        %v6336 = vpop.f32.mrf.mxu0
        %v6337 = vadd.f32 %v6306, %v6336
        %6338 = vmatmul.bf16.gmra.mxu0 %v513
        %v6339 = vpop.f32.mrf.mxu0
        %v6340 = vadd.f32 %v6306, %v6339
        %v6341 = vpop.f32.mrf.mxu0
        %v6342 = vadd.f32 %v6306, %v6341
        %6343 = vmatmul.bf16.gmra.mxu0 %v516
        %v6344 = vpop.f32.mrf.mxu0
        %v6345 = vadd.f32 %v6306, %v6344
        %v6346 = vpop.f32.mrf.mxu0
        %v6347 = vadd.f32 %v6306, %v6346
        %6348 = vmatmul.bf16.gmra.mxu0 %v519
        %v6349 = vpop.f32.mrf.mxu0
        %v6350 = vadd.f32 %v6306, %v6349
        %v6351 = vpop.f32.mrf.mxu0
        %v6352 = vadd.f32 %v6306, %v6351
        %6353 = vmatmul.bf16.gmra.mxu0 %v522
        %v6354 = vpop.f32.mrf.mxu0
        %v6355 = vadd.f32 %v6306, %v6354
        %v6356 = vpop.f32.mrf.mxu0
        %v6357 = vadd.f32 %v6306, %v6356
        %6358 = vmatmul.bf16.gmra.mxu0 %v525
        %v6359 = vpop.f32.mrf.mxu0
        %v6360 = vadd.f32 %v6306, %v6359
        %v6361 = vpop.f32.mrf.mxu0
        %v6362 = vadd.f32 %v6306, %v6361
        %6363 = vmatmul.bf16.gmra.mxu0 %v528
        %v6364 = vpop.f32.mrf.mxu0
        %v6365 = vadd.f32 %v6306, %v6364
        %v6366 = vpop.f32.mrf.mxu0
        %v6367 = vadd.f32 %v6306, %v6366
        %6368 = vdwg.mxu0
        %v6369 = vpack.c.bf16 %v6190, %v6188
        %v6370 = vpack.c.bf16 %v6195, %v6193
        %v6371 = vpack.c.bf16 %v6200, %v6198
        %v6372 = vpack.c.bf16 %v6205, %v6203
        %v6373 = vpack.c.bf16 %v6210, %v6208
        %v6374 = vpack.c.bf16 %v6215, %v6213
        %v6375 = vpack.c.bf16 %v6220, %v6218
        %v6376 = vpack.c.bf16 %v6225, %v6223
        %v6377 = vpack.c.bf16 %v6261, %v6259
        %v6378 = vpack.c.bf16 %v6266, %v6264
        %v6379 = vpack.c.bf16 %v6271, %v6269
        %v6380 = vpack.c.bf16 %v6276, %v6274
        %v6381 = vpack.c.bf16 %v6281, %v6279
        %v6382 = vpack.c.bf16 %v6286, %v6284
        %v6383 = vpack.c.bf16 %v6291, %v6289
        %v6384 = vpack.c.bf16 %v6296, %v6294
        %v6386 = vsel %vm733, %v6369, 0
        %v6389 = vsel %vm733, %v6370, 0
        %v6392 = vsel %vm733, %v6371, 0
        %v6395 = vsel %vm733, %v6372, 0
        %v6398 = vsel %vm733, %v6373, 0
        %v6401 = vsel %vm733, %v6374, 0
        %v6404 = vsel %vm733, %v6375, 0
        %v6407 = vsel %vm733, %v6376, 0
        %v6410 = vsel %vm733, %v6377, 0
        %v6413 = vsel %vm733, %v6378, 0
        %v6416 = vsel %vm733, %v6379, 0
        %v6419 = vsel %vm733, %v6380, 0
        %v6422 = vsel %vm733, %v6381, 0
        %v6425 = vsel %vm733, %v6382, 0
        %v6428 = vsel %vm733, %v6383, 0
        %v6431 = vsel %vm733, %v6384, 0
        %6433 = vmatpush.bf16.xpose.msra.mxu0 %v6431
        %6434 = vmatpush.bf16.xpose.msra.mxu0 %v6428
        %6435 = vmatpush.bf16.xpose.msra.mxu0 %v6425
        %6436 = vmatpush.bf16.xpose.msra.mxu0 %v6422
        %6437 = vmatpush.bf16.xpose.msra.mxu0 %v6419
        %6438 = vmatpush.bf16.xpose.msra.mxu0 %v6416
        %6439 = vmatpush.bf16.xpose.msra.mxu0 %v6413
        %6440 = vmatpush.bf16.xpose.msra.mxu0 %v6410
        %6441 = vmatmul.bf16.gmra.mxu0 %v6386
        %v6442 = vpop.f32.mrf.mxu0
        %v6443 = vadd.f32 0.0, %v6442
        %v6444 = vpop.f32.mrf.mxu0
        %v6445 = vadd.f32 0.0, %v6444
        %6446 = vmatmul.bf16.gmra.mxu0 %v6389
        %v6447 = vpop.f32.mrf.mxu0
        %v6448 = vadd.f32 0.0, %v6447
        %v6449 = vpop.f32.mrf.mxu0
        %v6450 = vadd.f32 0.0, %v6449
        %6451 = vmatmul.bf16.gmra.mxu0 %v6392
        %v6452 = vpop.f32.mrf.mxu0
        %v6453 = vadd.f32 0.0, %v6452
        %v6454 = vpop.f32.mrf.mxu0
        %v6455 = vadd.f32 0.0, %v6454
        %6456 = vmatmul.bf16.gmra.mxu0 %v6395
        %v6457 = vpop.f32.mrf.mxu0
        %v6458 = vadd.f32 0.0, %v6457
        %v6459 = vpop.f32.mrf.mxu0
        %v6460 = vadd.f32 0.0, %v6459
        %6461 = vmatmul.bf16.gmra.mxu0 %v6398
        %v6462 = vpop.f32.mrf.mxu0
        %v6463 = vadd.f32 0.0, %v6462
        %v6464 = vpop.f32.mrf.mxu0
        %v6465 = vadd.f32 0.0, %v6464
        %6466 = vmatmul.bf16.gmra.mxu0 %v6401
        %v6467 = vpop.f32.mrf.mxu0
        %v6468 = vadd.f32 0.0, %v6467
        %v6469 = vpop.f32.mrf.mxu0
        %v6470 = vadd.f32 0.0, %v6469
        %6471 = vmatmul.bf16.gmra.mxu0 %v6404
        %v6472 = vpop.f32.mrf.mxu0
        %v6473 = vadd.f32 0.0, %v6472
        %v6474 = vpop.f32.mrf.mxu0
        %v6475 = vadd.f32 0.0, %v6474
        %6476 = vmatmul.bf16.gmra.mxu0 %v6407
        %v6477 = vpop.f32.mrf.mxu0
        %v6478 = vadd.f32 0.0, %v6477
        %v6479 = vpop.f32.mrf.mxu0
        %v6480 = vadd.f32 0.0, %v6479
        %6481 = vdwg.mxu0
        %v6482 = vsel %vm469, %v6443, -inf
        %v6483 = vsel %vm470, %v6445, -inf
        %v6484 = vsel %vm471, %v6448, -inf
        %v6485 = vsel %vm472, %v6450, -inf
        %v6486 = vsel %vm473, %v6453, -inf
        %v6487 = vsel %vm474, %v6455, -inf
        %v6488 = vsel %vm475, %v6458, -inf
        %v6489 = vsel %vm476, %v6460, -inf
        %v6490 = vsel %vm477, %v6463, -inf
        %v6491 = vsel %vm478, %v6465, -inf
        %v6492 = vsel %vm479, %v6468, -inf
        %v6493 = vsel %vm480, %v6470, -inf
        %v6494 = vsel %vm481, %v6473, -inf
        %v6495 = vsel %vm482, %v6475, -inf
        %v6496 = vsel %vm483, %v6478, -inf
        %v6497 = vsel %vm484, %v6480, -inf
        %6498 = vmax.xlane.f32.xlu0 %v6482
        %v6499 = vpop.xlane.xlu0 %6498
        %6500 = vmax.xlane.f32.xlu0 %v6483
        %v6501 = vpop.xlane.xlu0 %6500
        %6502 = vmax.xlane.f32.xlu0 %v6484
        %v6503 = vpop.xlane.xlu0 %6502
        %6504 = vmax.xlane.f32.xlu0 %v6485
        %v6505 = vpop.xlane.xlu0 %6504
        %6506 = vmax.xlane.f32.xlu0 %v6486
        %v6507 = vpop.xlane.xlu0 %6506
        %6508 = vmax.xlane.f32.xlu0 %v6487
        %v6509 = vpop.xlane.xlu0 %6508
        %6510 = vmax.xlane.f32.xlu0 %v6488
        %v6511 = vpop.xlane.xlu0 %6510
        %6512 = vmax.xlane.f32.xlu0 %v6489
        %v6513 = vpop.xlane.xlu0 %6512
        %6514 = vmax.xlane.f32.xlu0 %v6490
        %v6515 = vpop.xlane.xlu0 %6514
        %6516 = vmax.xlane.f32.xlu0 %v6491
        %v6517 = vpop.xlane.xlu0 %6516
        %6518 = vmax.xlane.f32.xlu0 %v6492
        %v6519 = vpop.xlane.xlu0 %6518
        %6520 = vmax.xlane.f32.xlu0 %v6493
        %v6521 = vpop.xlane.xlu0 %6520
        %6522 = vmax.xlane.f32.xlu0 %v6494
        %v6523 = vpop.xlane.xlu0 %6522
        %6524 = vmax.xlane.f32.xlu0 %v6495
        %v6525 = vpop.xlane.xlu0 %6524
        %6526 = vmax.xlane.f32.xlu0 %v6496
        %v6527 = vpop.xlane.xlu0 %6526
        %6528 = vmax.xlane.f32.xlu0 %v6497
        %v6529 = vpop.xlane.xlu0 %6528
        %v6530 = vsub.f32 %v6482, %v6499
        %v6531 = vsub.f32 %v6483, %v6501
        %v6532 = vsub.f32 %v6484, %v6503
        %v6533 = vsub.f32 %v6485, %v6505
        %v6534 = vsub.f32 %v6486, %v6507
        %v6535 = vsub.f32 %v6487, %v6509
        %v6536 = vsub.f32 %v6488, %v6511
        %v6537 = vsub.f32 %v6489, %v6513
        %v6538 = vsub.f32 %v6490, %v6515
        %v6539 = vsub.f32 %v6491, %v6517
        %v6540 = vsub.f32 %v6492, %v6519
        %v6541 = vsub.f32 %v6493, %v6521
        %v6542 = vsub.f32 %v6494, %v6523
        %v6543 = vsub.f32 %v6495, %v6525
        %v6544 = vsub.f32 %v6496, %v6527
        %v6545 = vsub.f32 %v6497, %v6529
        %v6546 = vmul.f32 %v6530, 1.442695
        %v6547 = vpow.pop %v6546
        %v6548 = vmul.f32 %v6531, 1.442695
        %v6549 = vpow.pop %v6548
        %v6550 = vmul.f32 %v6532, 1.442695
        %v6551 = vpow.pop %v6550
        %v6552 = vmul.f32 %v6533, 1.442695
        %v6553 = vpow.pop %v6552
        %v6554 = vmul.f32 %v6534, 1.442695
        %v6555 = vpow.pop %v6554
        %v6556 = vmul.f32 %v6535, 1.442695
        %v6557 = vpow.pop %v6556
        %v6558 = vmul.f32 %v6536, 1.442695
        %v6559 = vpow.pop %v6558
        %v6560 = vmul.f32 %v6537, 1.442695
        %v6561 = vpow.pop %v6560
        %v6562 = vmul.f32 %v6538, 1.442695
        %v6563 = vpow.pop %v6562
        %v6564 = vmul.f32 %v6539, 1.442695
        %v6565 = vpow.pop %v6564
        %v6566 = vmul.f32 %v6540, 1.442695
        %v6567 = vpow.pop %v6566
        %v6568 = vmul.f32 %v6541, 1.442695
        %v6569 = vpow.pop %v6568
        %v6570 = vmul.f32 %v6542, 1.442695
        %v6571 = vpow.pop %v6570
        %v6572 = vmul.f32 %v6543, 1.442695
        %v6573 = vpow.pop %v6572
        %v6574 = vmul.f32 %v6544, 1.442695
        %v6575 = vpow.pop %v6574
        %v6576 = vmul.f32 %v6545, 1.442695
        %v6577 = vpow.pop %v6576
        %6578 = vadd.xlane.f32.xlu0 %v6547
        %v6579 = vpop.xlane.xlu0 %6578
        %6580 = vadd.xlane.f32.xlu0 %v6549
        %v6581 = vpop.xlane.xlu0 %6580
        %6582 = vadd.xlane.f32.xlu0 %v6551
        %v6583 = vpop.xlane.xlu0 %6582
        %6584 = vadd.xlane.f32.xlu0 %v6553
        %v6585 = vpop.xlane.xlu0 %6584
        %6586 = vadd.xlane.f32.xlu0 %v6555
        %v6587 = vpop.xlane.xlu0 %6586
        %6588 = vadd.xlane.f32.xlu0 %v6557
        %v6589 = vpop.xlane.xlu0 %6588
        %6590 = vadd.xlane.f32.xlu0 %v6559
        %v6591 = vpop.xlane.xlu0 %6590
        %6592 = vadd.xlane.f32.xlu0 %v6561
        %v6593 = vpop.xlane.xlu0 %6592
        %6594 = vadd.xlane.f32.xlu0 %v6563
        %v6595 = vpop.xlane.xlu0 %6594
        %6596 = vadd.xlane.f32.xlu0 %v6565
        %v6597 = vpop.xlane.xlu0 %6596
        %6598 = vadd.xlane.f32.xlu0 %v6567
        %v6599 = vpop.xlane.xlu0 %6598
        %6600 = vadd.xlane.f32.xlu0 %v6569
        %v6601 = vpop.xlane.xlu0 %6600
        %6602 = vadd.xlane.f32.xlu0 %v6571
        %v6603 = vpop.xlane.xlu0 %6602
        %6604 = vadd.xlane.f32.xlu0 %v6573
        %v6605 = vpop.xlane.xlu0 %6604
        %6606 = vadd.xlane.f32.xlu0 %v6575
        %v6607 = vpop.xlane.xlu0 %6606
        %6608 = vadd.xlane.f32.xlu0 %v6577
        %v6609 = vpop.xlane.xlu0 %6608
        %v6610 = vrcp.pop %v6579
        %v6611 = vrcp.pop %v6581
        %v6612 = vrcp.pop %v6583
        %v6613 = vrcp.pop %v6585
        %v6614 = vrcp.pop %v6587
        %v6615 = vrcp.pop %v6589
        %v6616 = vrcp.pop %v6591
        %v6617 = vrcp.pop %v6593
        %v6618 = vrcp.pop %v6595
        %v6619 = vrcp.pop %v6597
        %v6620 = vrcp.pop %v6599
        %v6621 = vrcp.pop %v6601
        %v6622 = vrcp.pop %v6603
        %v6623 = vrcp.pop %v6605
        %v6624 = vrcp.pop %v6607
        %v6625 = vrcp.pop %v6609
        %v6626 = vmul.f32 %v6547, %v6610
        %v6627 = vmul.f32 %v6549, %v6611
        %v6628 = vmul.f32 %v6551, %v6612
        %v6629 = vmul.f32 %v6553, %v6613
        %v6630 = vmul.f32 %v6555, %v6614
        %v6631 = vmul.f32 %v6557, %v6615
        %v6632 = vmul.f32 %v6559, %v6616
        %v6633 = vmul.f32 %v6561, %v6617
        %v6634 = vmul.f32 %v6563, %v6618
        %v6635 = vmul.f32 %v6565, %v6619
        %v6636 = vmul.f32 %v6567, %v6620
        %v6637 = vmul.f32 %v6569, %v6621
        %v6638 = vmul.f32 %v6571, %v6622
        %v6639 = vmul.f32 %v6573, %v6623
        %v6640 = vmul.f32 %v6575, %v6624
        %v6641 = vmul.f32 %v6577, %v6625
        %s6642 = scalar_lea.vmem %s7, 48
        %v6643 = vld [vmem:[%s6642] sm:$0xf]
        %v6644 = vld [vmem:[%s6642 + $0x4] sm:$0xf]
        %v6645 = vld [vmem:[%s6642 + $0x8] sm:$0xf]
        %v6646 = vld [vmem:[%s6642 + $0xc] sm:$0xf]
        %s6647 = scalar_lea.vmem %s8, 3
        %v6648 = vld [vmem:[%s6647] sm:$0x1]
        %v6650 = vperm.slane %v6648, 0
        %v6656 = vunpack.c.l.b16 %v6643
        %v6657 = vunpack.c.l.b16 %v6644
        %v6658 = vunpack.c.l.b16 %v6645
        %v6659 = vunpack.c.l.b16 %v6646
        %v6660 = vpack.c.b16 %v6657, %v6656
        %v6661 = vpack.c.b16 %v6659, %v6658
        %6664 = vmatpush.bf16.msra.mxu0 0
        %6665 = vmatpush.bf16.msra.mxu0 0
        %6666 = vmatpush.bf16.msra.mxu0 0
        %6667 = vmatpush.bf16.msra.mxu0 0
        %6668 = vmatpush.bf16.msra.mxu0 0
        %6669 = vmatpush.bf16.msra.mxu0 0
        %6670 = vmatpush.bf16.msra.mxu0 %v6661
        %6671 = vmatpush.bf16.msra.mxu0 %v6660
        %6672 = vmatmul.bf16.gmra.mxu0 %v507
        %v6673 = vpop.f32.mrf.mxu0
        %v6674 = vadd.f32 %v6650, %v6673
        %v6675 = vpop.f32.mrf.mxu0
        %v6676 = vadd.f32 %v6650, %v6675
        %6677 = vmatmul.bf16.gmra.mxu0 %v510
        %v6678 = vpop.f32.mrf.mxu0
        %v6679 = vadd.f32 %v6650, %v6678
        %v6680 = vpop.f32.mrf.mxu0
        %v6681 = vadd.f32 %v6650, %v6680
        %6682 = vmatmul.bf16.gmra.mxu0 %v513
        %v6683 = vpop.f32.mrf.mxu0
        %v6684 = vadd.f32 %v6650, %v6683
        %v6685 = vpop.f32.mrf.mxu0
        %v6686 = vadd.f32 %v6650, %v6685
        %6687 = vmatmul.bf16.gmra.mxu0 %v516
        %v6688 = vpop.f32.mrf.mxu0
        %v6689 = vadd.f32 %v6650, %v6688
        %v6690 = vpop.f32.mrf.mxu0
        %v6691 = vadd.f32 %v6650, %v6690
        %6692 = vmatmul.bf16.gmra.mxu0 %v519
        %v6693 = vpop.f32.mrf.mxu0
        %v6694 = vadd.f32 %v6650, %v6693
        %v6695 = vpop.f32.mrf.mxu0
        %v6696 = vadd.f32 %v6650, %v6695
        %6697 = vmatmul.bf16.gmra.mxu0 %v522
        %v6698 = vpop.f32.mrf.mxu0
        %v6699 = vadd.f32 %v6650, %v6698
        %v6700 = vpop.f32.mrf.mxu0
        %v6701 = vadd.f32 %v6650, %v6700
        %6702 = vmatmul.bf16.gmra.mxu0 %v525
        %v6703 = vpop.f32.mrf.mxu0
        %v6704 = vadd.f32 %v6650, %v6703
        %v6705 = vpop.f32.mrf.mxu0
        %v6706 = vadd.f32 %v6650, %v6705
        %6707 = vmatmul.bf16.gmra.mxu0 %v528
        %v6708 = vpop.f32.mrf.mxu0
        %v6709 = vadd.f32 %v6650, %v6708
        %v6710 = vpop.f32.mrf.mxu0
        %v6711 = vadd.f32 %v6650, %v6710
        %6712 = vdwg.mxu0
        %v6713 = vsel %vm1060, %v6674, -inf
        %6714 = vmax.xlane.f32.xlu0 %v6713
        %v6715 = vpop.xlane.xlu0 %6714
        %v6716 = vsel %vm1060, %v6676, -inf
        %6717 = vmax.xlane.f32.xlu0 %v6716
        %v6718 = vpop.xlane.xlu0 %6717
        %v6719 = vsel %vm1060, %v6679, -inf
        %6720 = vmax.xlane.f32.xlu0 %v6719
        %v6721 = vpop.xlane.xlu0 %6720
        %v6722 = vsel %vm1060, %v6681, -inf
        %6723 = vmax.xlane.f32.xlu0 %v6722
        %v6724 = vpop.xlane.xlu0 %6723
        %v6725 = vsel %vm1060, %v6684, -inf
        %6726 = vmax.xlane.f32.xlu0 %v6725
        %v6727 = vpop.xlane.xlu0 %6726
        %v6728 = vsel %vm1060, %v6686, -inf
        %6729 = vmax.xlane.f32.xlu0 %v6728
        %v6730 = vpop.xlane.xlu0 %6729
        %v6731 = vsel %vm1060, %v6689, -inf
        %6732 = vmax.xlane.f32.xlu0 %v6731
        %v6733 = vpop.xlane.xlu0 %6732
        %v6734 = vsel %vm1060, %v6691, -inf
        %6735 = vmax.xlane.f32.xlu0 %v6734
        %v6736 = vpop.xlane.xlu0 %6735
        %v6737 = vsel %vm1060, %v6694, -inf
        %6738 = vmax.xlane.f32.xlu0 %v6737
        %v6739 = vpop.xlane.xlu0 %6738
        %v6740 = vsel %vm1060, %v6696, -inf
        %6741 = vmax.xlane.f32.xlu0 %v6740
        %v6742 = vpop.xlane.xlu0 %6741
        %v6743 = vsel %vm1060, %v6699, -inf
        %6744 = vmax.xlane.f32.xlu0 %v6743
        %v6745 = vpop.xlane.xlu0 %6744
        %v6746 = vsel %vm1060, %v6701, -inf
        %6747 = vmax.xlane.f32.xlu0 %v6746
        %v6748 = vpop.xlane.xlu0 %6747
        %v6749 = vsel %vm1060, %v6704, -inf
        %6750 = vmax.xlane.f32.xlu0 %v6749
        %v6751 = vpop.xlane.xlu0 %6750
        %v6752 = vsel %vm1060, %v6706, -inf
        %6753 = vmax.xlane.f32.xlu0 %v6752
        %v6754 = vpop.xlane.xlu0 %6753
        %v6755 = vsel %vm1060, %v6709, -inf
        %6756 = vmax.xlane.f32.xlu0 %v6755
        %v6757 = vpop.xlane.xlu0 %6756
        %v6758 = vsel %vm1060, %v6711, -inf
        %6759 = vmax.xlane.f32.xlu0 %v6758
        %v6760 = vpop.xlane.xlu0 %6759
        %v6761 = vsub.f32 %v6674, %v6715
        %v6762 = vsub.f32 %v6676, %v6718
        %v6763 = vsub.f32 %v6679, %v6721
        %v6764 = vsub.f32 %v6681, %v6724
        %v6765 = vsub.f32 %v6684, %v6727
        %v6766 = vsub.f32 %v6686, %v6730
        %v6767 = vsub.f32 %v6689, %v6733
        %v6768 = vsub.f32 %v6691, %v6736
        %v6769 = vsub.f32 %v6694, %v6739
        %v6770 = vsub.f32 %v6696, %v6742
        %v6771 = vsub.f32 %v6699, %v6745
        %v6772 = vsub.f32 %v6701, %v6748
        %v6773 = vsub.f32 %v6704, %v6751
        %v6774 = vsub.f32 %v6706, %v6754
        %v6775 = vsub.f32 %v6709, %v6757
        %v6776 = vsub.f32 %v6711, %v6760
        %v6777 = vmul.f32 %v6761, 1.442695
        %v6778 = vpow.pop %v6777
        %v6779 = vmul.f32 %v6762, 1.442695
        %v6780 = vpow.pop %v6779
        %v6781 = vmul.f32 %v6763, 1.442695
        %v6782 = vpow.pop %v6781
        %v6783 = vmul.f32 %v6764, 1.442695
        %v6784 = vpow.pop %v6783
        %v6785 = vmul.f32 %v6765, 1.442695
        %v6786 = vpow.pop %v6785
        %v6787 = vmul.f32 %v6766, 1.442695
        %v6788 = vpow.pop %v6787
        %v6789 = vmul.f32 %v6767, 1.442695
        %v6790 = vpow.pop %v6789
        %v6791 = vmul.f32 %v6768, 1.442695
        %v6792 = vpow.pop %v6791
        %v6793 = vmul.f32 %v6769, 1.442695
        %v6794 = vpow.pop %v6793
        %v6795 = vmul.f32 %v6770, 1.442695
        %v6796 = vpow.pop %v6795
        %v6797 = vmul.f32 %v6771, 1.442695
        %v6798 = vpow.pop %v6797
        %v6799 = vmul.f32 %v6772, 1.442695
        %v6800 = vpow.pop %v6799
        %v6801 = vmul.f32 %v6773, 1.442695
        %v6802 = vpow.pop %v6801
        %v6803 = vmul.f32 %v6774, 1.442695
        %v6804 = vpow.pop %v6803
        %v6805 = vmul.f32 %v6775, 1.442695
        %v6806 = vpow.pop %v6805
        %v6807 = vmul.f32 %v6776, 1.442695
        %v6808 = vpow.pop %v6807
        %v6809 = vsel %vm1060, %v6778, 0.0
        %6810 = vadd.xlane.f32.xlu0 %v6809
        %v6811 = vpop.xlane.xlu0 %6810
        %v6812 = vsel %vm1060, %v6780, 0.0
        %6813 = vadd.xlane.f32.xlu0 %v6812
        %v6814 = vpop.xlane.xlu0 %6813
        %v6815 = vsel %vm1060, %v6782, 0.0
        %6816 = vadd.xlane.f32.xlu0 %v6815
        %v6817 = vpop.xlane.xlu0 %6816
        %v6818 = vsel %vm1060, %v6784, 0.0
        %6819 = vadd.xlane.f32.xlu0 %v6818
        %v6820 = vpop.xlane.xlu0 %6819
        %v6821 = vsel %vm1060, %v6786, 0.0
        %6822 = vadd.xlane.f32.xlu0 %v6821
        %v6823 = vpop.xlane.xlu0 %6822
        %v6824 = vsel %vm1060, %v6788, 0.0
        %6825 = vadd.xlane.f32.xlu0 %v6824
        %v6826 = vpop.xlane.xlu0 %6825
        %v6827 = vsel %vm1060, %v6790, 0.0
        %6828 = vadd.xlane.f32.xlu0 %v6827
        %v6829 = vpop.xlane.xlu0 %6828
        %v6830 = vsel %vm1060, %v6792, 0.0
        %6831 = vadd.xlane.f32.xlu0 %v6830
        %v6832 = vpop.xlane.xlu0 %6831
        %v6833 = vsel %vm1060, %v6794, 0.0
        %6834 = vadd.xlane.f32.xlu0 %v6833
        %v6835 = vpop.xlane.xlu0 %6834
        %v6836 = vsel %vm1060, %v6796, 0.0
        %6837 = vadd.xlane.f32.xlu0 %v6836
        %v6838 = vpop.xlane.xlu0 %6837
        %v6839 = vsel %vm1060, %v6798, 0.0
        %6840 = vadd.xlane.f32.xlu0 %v6839
        %v6841 = vpop.xlane.xlu0 %6840
        %v6842 = vsel %vm1060, %v6800, 0.0
        %6843 = vadd.xlane.f32.xlu0 %v6842
        %v6844 = vpop.xlane.xlu0 %6843
        %v6845 = vsel %vm1060, %v6802, 0.0
        %6846 = vadd.xlane.f32.xlu0 %v6845
        %v6847 = vpop.xlane.xlu0 %6846
        %v6848 = vsel %vm1060, %v6804, 0.0
        %6849 = vadd.xlane.f32.xlu0 %v6848
        %v6850 = vpop.xlane.xlu0 %6849
        %v6851 = vsel %vm1060, %v6806, 0.0
        %6852 = vadd.xlane.f32.xlu0 %v6851
        %v6853 = vpop.xlane.xlu0 %6852
        %v6854 = vsel %vm1060, %v6808, 0.0
        %6855 = vadd.xlane.f32.xlu0 %v6854
        %v6856 = vpop.xlane.xlu0 %6855
        %v6857 = vrcp.pop %v6811
        %v6858 = vrcp.pop %v6814
        %v6859 = vrcp.pop %v6817
        %v6860 = vrcp.pop %v6820
        %v6861 = vrcp.pop %v6823
        %v6862 = vrcp.pop %v6826
        %v6863 = vrcp.pop %v6829
        %v6864 = vrcp.pop %v6832
        %v6865 = vrcp.pop %v6835
        %v6866 = vrcp.pop %v6838
        %v6867 = vrcp.pop %v6841
        %v6868 = vrcp.pop %v6844
        %v6869 = vrcp.pop %v6847
        %v6870 = vrcp.pop %v6850
        %v6871 = vrcp.pop %v6853
        %v6872 = vrcp.pop %v6856
        %v6873 = vmul.f32 %v6778, %v6857
        %v6874 = vmul.f32 %v6780, %v6858
        %v6875 = vmul.f32 %v6782, %v6859
        %v6876 = vmul.f32 %v6784, %v6860
        %v6877 = vmul.f32 %v6786, %v6861
        %v6878 = vmul.f32 %v6788, %v6862
        %v6879 = vmul.f32 %v6790, %v6863
        %v6880 = vmul.f32 %v6792, %v6864
        %v6881 = vmul.f32 %v6794, %v6865
        %v6882 = vmul.f32 %v6796, %v6866
        %v6883 = vmul.f32 %v6798, %v6867
        %v6884 = vmul.f32 %v6800, %v6868
        %v6885 = vmul.f32 %v6802, %v6869
        %v6886 = vmul.f32 %v6804, %v6870
        %v6887 = vmul.f32 %v6806, %v6871
        %v6888 = vmul.f32 %v6808, %v6872
        %6890 = vset.pattern.permute.xlu0 0
        %6891 = vperm.xlu0 %6890, %v6873
        %v6892 = vpop.permute.xlu0 %6891
        %6895 = vset.pattern.permute.xlu0 0
        %6896 = vperm.xlu0 %6895, %v6874
        %v6897 = vpop.permute.xlu0 %6896
        %6900 = vset.pattern.permute.xlu0 0
        %6901 = vperm.xlu0 %6900, %v6875
        %v6902 = vpop.permute.xlu0 %6901
        %6905 = vset.pattern.permute.xlu0 0
        %6906 = vperm.xlu0 %6905, %v6876
        %v6907 = vpop.permute.xlu0 %6906
        %6910 = vset.pattern.permute.xlu0 0
        %6911 = vperm.xlu0 %6910, %v6877
        %v6912 = vpop.permute.xlu0 %6911
        %6915 = vset.pattern.permute.xlu0 0
        %6916 = vperm.xlu0 %6915, %v6878
        %v6917 = vpop.permute.xlu0 %6916
        %6920 = vset.pattern.permute.xlu0 0
        %6921 = vperm.xlu0 %6920, %v6879
        %v6922 = vpop.permute.xlu0 %6921
        %6925 = vset.pattern.permute.xlu0 0
        %6926 = vperm.xlu0 %6925, %v6880
        %v6927 = vpop.permute.xlu0 %6926
        %6930 = vset.pattern.permute.xlu0 0
        %6931 = vperm.xlu0 %6930, %v6881
        %v6932 = vpop.permute.xlu0 %6931
        %6935 = vset.pattern.permute.xlu0 0
        %6936 = vperm.xlu0 %6935, %v6882
        %v6937 = vpop.permute.xlu0 %6936
        %6940 = vset.pattern.permute.xlu0 0
        %6941 = vperm.xlu0 %6940, %v6883
        %v6942 = vpop.permute.xlu0 %6941
        %6945 = vset.pattern.permute.xlu0 0
        %6946 = vperm.xlu0 %6945, %v6884
        %v6947 = vpop.permute.xlu0 %6946
        %6950 = vset.pattern.permute.xlu0 0
        %6951 = vperm.xlu0 %6950, %v6885
        %v6952 = vpop.permute.xlu0 %6951
        %6955 = vset.pattern.permute.xlu0 0
        %6956 = vperm.xlu0 %6955, %v6886
        %v6957 = vpop.permute.xlu0 %6956
        %6960 = vset.pattern.permute.xlu0 0
        %6961 = vperm.xlu0 %6960, %v6887
        %v6962 = vpop.permute.xlu0 %6961
        %6965 = vset.pattern.permute.xlu0 0
        %6966 = vperm.xlu0 %6965, %v6888
        %v6967 = vpop.permute.xlu0 %6966
        %v6969 = vmul.f32 %v6892, %v6626
        %v6970 = vmul.f32 %v6897, %v6627
        %v6971 = vmul.f32 %v6902, %v6628
        %v6972 = vmul.f32 %v6907, %v6629
        %v6973 = vmul.f32 %v6912, %v6630
        %v6974 = vmul.f32 %v6917, %v6631
        %v6975 = vmul.f32 %v6922, %v6632
        %v6976 = vmul.f32 %v6927, %v6633
        %v6977 = vmul.f32 %v6932, %v6634
        %v6978 = vmul.f32 %v6937, %v6635
        %v6979 = vmul.f32 %v6942, %v6636
        %v6980 = vmul.f32 %v6947, %v6637
        %v6981 = vmul.f32 %v6952, %v6638
        %v6982 = vmul.f32 %v6957, %v6639
        %v6983 = vmul.f32 %v6962, %v6640
        %v6984 = vmul.f32 %v6967, %v6641
        %6985 = vrot.lane.b32.xlu0 %v6626, 127
        %v6986 = vpop.permute.xlu0 %6985
        %6987 = vrot.lane.b32.xlu0 %v6627, 127
        %v6988 = vpop.permute.xlu0 %6987
        %6989 = vrot.lane.b32.xlu0 %v6628, 127
        %v6990 = vpop.permute.xlu0 %6989
        %6991 = vrot.lane.b32.xlu0 %v6629, 127
        %v6992 = vpop.permute.xlu0 %6991
        %6993 = vrot.lane.b32.xlu0 %v6630, 127
        %v6994 = vpop.permute.xlu0 %6993
        %6995 = vrot.lane.b32.xlu0 %v6631, 127
        %v6996 = vpop.permute.xlu0 %6995
        %6997 = vrot.lane.b32.xlu0 %v6632, 127
        %v6998 = vpop.permute.xlu0 %6997
        %6999 = vrot.lane.b32.xlu0 %v6633, 127
        %v7000 = vpop.permute.xlu0 %6999
        %7001 = vrot.lane.b32.xlu0 %v6634, 127
        %v7002 = vpop.permute.xlu0 %7001
        %7003 = vrot.lane.b32.xlu0 %v6635, 127
        %v7004 = vpop.permute.xlu0 %7003
        %7005 = vrot.lane.b32.xlu0 %v6636, 127
        %v7006 = vpop.permute.xlu0 %7005
        %7007 = vrot.lane.b32.xlu0 %v6637, 127
        %v7008 = vpop.permute.xlu0 %7007
        %7009 = vrot.lane.b32.xlu0 %v6638, 127
        %v7010 = vpop.permute.xlu0 %7009
        %7011 = vrot.lane.b32.xlu0 %v6639, 127
        %v7012 = vpop.permute.xlu0 %7011
        %7013 = vrot.lane.b32.xlu0 %v6640, 127
        %v7014 = vpop.permute.xlu0 %7013
        %7015 = vrot.lane.b32.xlu0 %v6641, 127
        %v7016 = vpop.permute.xlu0 %7015
        %v7017 = vsel %vm1365, %v6986, 0.0
        %v7018 = vsel %vm1365, %v6988, 0.0
        %v7019 = vsel %vm1365, %v6990, 0.0
        %v7020 = vsel %vm1365, %v6992, 0.0
        %v7021 = vsel %vm1365, %v6994, 0.0
        %v7022 = vsel %vm1365, %v6996, 0.0
        %v7023 = vsel %vm1365, %v6998, 0.0
        %v7024 = vsel %vm1365, %v7000, 0.0
        %v7025 = vsel %vm1365, %v7002, 0.0
        %v7026 = vsel %vm1365, %v7004, 0.0
        %v7027 = vsel %vm1365, %v7006, 0.0
        %v7028 = vsel %vm1365, %v7008, 0.0
        %v7029 = vsel %vm1365, %v7010, 0.0
        %v7030 = vsel %vm1365, %v7012, 0.0
        %v7031 = vsel %vm1365, %v7014, 0.0
        %v7032 = vsel %vm1365, %v7016, 0.0
        %7033 = vrot.lane.b32.xlu0 %v6626, 1
        %v7034 = vpop.permute.xlu0 %7033
        %7035 = vrot.lane.b32.xlu0 %v6627, 1
        %v7036 = vpop.permute.xlu0 %7035
        %7037 = vrot.lane.b32.xlu0 %v6628, 1
        %v7038 = vpop.permute.xlu0 %7037
        %7039 = vrot.lane.b32.xlu0 %v6629, 1
        %v7040 = vpop.permute.xlu0 %7039
        %7041 = vrot.lane.b32.xlu0 %v6630, 1
        %v7042 = vpop.permute.xlu0 %7041
        %7043 = vrot.lane.b32.xlu0 %v6631, 1
        %v7044 = vpop.permute.xlu0 %7043
        %7045 = vrot.lane.b32.xlu0 %v6632, 1
        %v7046 = vpop.permute.xlu0 %7045
        %7047 = vrot.lane.b32.xlu0 %v6633, 1
        %v7048 = vpop.permute.xlu0 %7047
        %7049 = vrot.lane.b32.xlu0 %v6634, 1
        %v7050 = vpop.permute.xlu0 %7049
        %7051 = vrot.lane.b32.xlu0 %v6635, 1
        %v7052 = vpop.permute.xlu0 %7051
        %7053 = vrot.lane.b32.xlu0 %v6636, 1
        %v7054 = vpop.permute.xlu0 %7053
        %7055 = vrot.lane.b32.xlu0 %v6637, 1
        %v7056 = vpop.permute.xlu0 %7055
        %7057 = vrot.lane.b32.xlu0 %v6638, 1
        %v7058 = vpop.permute.xlu0 %7057
        %7059 = vrot.lane.b32.xlu0 %v6639, 1
        %v7060 = vpop.permute.xlu0 %7059
        %7061 = vrot.lane.b32.xlu0 %v6640, 1
        %v7062 = vpop.permute.xlu0 %7061
        %7063 = vrot.lane.b32.xlu0 %v6641, 1
        %v7064 = vpop.permute.xlu0 %7063
        %v7065 = vsel %vm1414, %v7034, 0.0
        %v7066 = vsel %vm1414, %v7036, 0.0
        %v7067 = vsel %vm1414, %v7038, 0.0
        %v7068 = vsel %vm1414, %v7040, 0.0
        %v7069 = vsel %vm1414, %v7042, 0.0
        %v7070 = vsel %vm1414, %v7044, 0.0
        %v7071 = vsel %vm1414, %v7046, 0.0
        %v7072 = vsel %vm1414, %v7048, 0.0
        %v7073 = vsel %vm1414, %v7050, 0.0
        %v7074 = vsel %vm1414, %v7052, 0.0
        %v7075 = vsel %vm1414, %v7054, 0.0
        %v7076 = vsel %vm1414, %v7056, 0.0
        %v7077 = vsel %vm1414, %v7058, 0.0
        %v7078 = vsel %vm1414, %v7060, 0.0
        %v7079 = vsel %vm1414, %v7062, 0.0
        %v7080 = vsel %vm1414, %v7064, 0.0
        %7081 = vset.pattern.permute.xlu0 1
        %7082 = vperm.xlu0 %7081, %v6873
        %v7083 = vpop.permute.xlu0 %7082
        %7085 = vset.pattern.permute.xlu0 1
        %7086 = vperm.xlu0 %7085, %v6874
        %v7087 = vpop.permute.xlu0 %7086
        %7089 = vset.pattern.permute.xlu0 1
        %7090 = vperm.xlu0 %7089, %v6875
        %v7091 = vpop.permute.xlu0 %7090
        %7093 = vset.pattern.permute.xlu0 1
        %7094 = vperm.xlu0 %7093, %v6876
        %v7095 = vpop.permute.xlu0 %7094
        %7097 = vset.pattern.permute.xlu0 1
        %7098 = vperm.xlu0 %7097, %v6877
        %v7099 = vpop.permute.xlu0 %7098
        %7101 = vset.pattern.permute.xlu0 1
        %7102 = vperm.xlu0 %7101, %v6878
        %v7103 = vpop.permute.xlu0 %7102
        %7105 = vset.pattern.permute.xlu0 1
        %7106 = vperm.xlu0 %7105, %v6879
        %v7107 = vpop.permute.xlu0 %7106
        %7109 = vset.pattern.permute.xlu0 1
        %7110 = vperm.xlu0 %7109, %v6880
        %v7111 = vpop.permute.xlu0 %7110
        %7113 = vset.pattern.permute.xlu0 1
        %7114 = vperm.xlu0 %7113, %v6881
        %v7115 = vpop.permute.xlu0 %7114
        %7117 = vset.pattern.permute.xlu0 1
        %7118 = vperm.xlu0 %7117, %v6882
        %v7119 = vpop.permute.xlu0 %7118
        %7121 = vset.pattern.permute.xlu0 1
        %7122 = vperm.xlu0 %7121, %v6883
        %v7123 = vpop.permute.xlu0 %7122
        %7125 = vset.pattern.permute.xlu0 1
        %7126 = vperm.xlu0 %7125, %v6884
        %v7127 = vpop.permute.xlu0 %7126
        %7129 = vset.pattern.permute.xlu0 1
        %7130 = vperm.xlu0 %7129, %v6885
        %v7131 = vpop.permute.xlu0 %7130
        %7133 = vset.pattern.permute.xlu0 1
        %7134 = vperm.xlu0 %7133, %v6886
        %v7135 = vpop.permute.xlu0 %7134
        %7137 = vset.pattern.permute.xlu0 1
        %7138 = vperm.xlu0 %7137, %v6887
        %v7139 = vpop.permute.xlu0 %7138
        %7141 = vset.pattern.permute.xlu0 1
        %7142 = vperm.xlu0 %7141, %v6888
        %v7143 = vpop.permute.xlu0 %7142
        %v7145 = vmul.f32 %v7083, %v7017
        %v7146 = vmul.f32 %v7087, %v7018
        %v7147 = vmul.f32 %v7091, %v7019
        %v7148 = vmul.f32 %v7095, %v7020
        %v7149 = vmul.f32 %v7099, %v7021
        %v7150 = vmul.f32 %v7103, %v7022
        %v7151 = vmul.f32 %v7107, %v7023
        %v7152 = vmul.f32 %v7111, %v7024
        %v7153 = vmul.f32 %v7115, %v7025
        %v7154 = vmul.f32 %v7119, %v7026
        %v7155 = vmul.f32 %v7123, %v7027
        %v7156 = vmul.f32 %v7127, %v7028
        %v7157 = vmul.f32 %v7131, %v7029
        %v7158 = vmul.f32 %v7135, %v7030
        %v7159 = vmul.f32 %v7139, %v7031
        %v7160 = vmul.f32 %v7143, %v7032
        %v7161 = vadd.f32 %v6969, %v7145
        %v7162 = vadd.f32 %v6970, %v7146
        %v7163 = vadd.f32 %v6971, %v7147
        %v7164 = vadd.f32 %v6972, %v7148
        %v7165 = vadd.f32 %v6973, %v7149
        %v7166 = vadd.f32 %v6974, %v7150
        %v7167 = vadd.f32 %v6975, %v7151
        %v7168 = vadd.f32 %v6976, %v7152
        %v7169 = vadd.f32 %v6977, %v7153
        %v7170 = vadd.f32 %v6978, %v7154
        %v7171 = vadd.f32 %v6979, %v7155
        %v7172 = vadd.f32 %v6980, %v7156
        %v7173 = vadd.f32 %v6981, %v7157
        %v7174 = vadd.f32 %v6982, %v7158
        %v7175 = vadd.f32 %v6983, %v7159
        %v7176 = vadd.f32 %v6984, %v7160
        %7177 = vset.pattern.permute.xlu0 2
        %7178 = vperm.xlu0 %7177, %v6873
        %v7179 = vpop.permute.xlu0 %7178
        %7181 = vset.pattern.permute.xlu0 2
        %7182 = vperm.xlu0 %7181, %v6874
        %v7183 = vpop.permute.xlu0 %7182
        %7185 = vset.pattern.permute.xlu0 2
        %7186 = vperm.xlu0 %7185, %v6875
        %v7187 = vpop.permute.xlu0 %7186
        %7189 = vset.pattern.permute.xlu0 2
        %7190 = vperm.xlu0 %7189, %v6876
        %v7191 = vpop.permute.xlu0 %7190
        %7193 = vset.pattern.permute.xlu0 2
        %7194 = vperm.xlu0 %7193, %v6877
        %v7195 = vpop.permute.xlu0 %7194
        %7197 = vset.pattern.permute.xlu0 2
        %7198 = vperm.xlu0 %7197, %v6878
        %v7199 = vpop.permute.xlu0 %7198
        %7201 = vset.pattern.permute.xlu0 2
        %7202 = vperm.xlu0 %7201, %v6879
        %v7203 = vpop.permute.xlu0 %7202
        %7205 = vset.pattern.permute.xlu0 2
        %7206 = vperm.xlu0 %7205, %v6880
        %v7207 = vpop.permute.xlu0 %7206
        %7209 = vset.pattern.permute.xlu0 2
        %7210 = vperm.xlu0 %7209, %v6881
        %v7211 = vpop.permute.xlu0 %7210
        %7213 = vset.pattern.permute.xlu0 2
        %7214 = vperm.xlu0 %7213, %v6882
        %v7215 = vpop.permute.xlu0 %7214
        %7217 = vset.pattern.permute.xlu0 2
        %7218 = vperm.xlu0 %7217, %v6883
        %v7219 = vpop.permute.xlu0 %7218
        %7221 = vset.pattern.permute.xlu0 2
        %7222 = vperm.xlu0 %7221, %v6884
        %v7223 = vpop.permute.xlu0 %7222
        %7225 = vset.pattern.permute.xlu0 2
        %7226 = vperm.xlu0 %7225, %v6885
        %v7227 = vpop.permute.xlu0 %7226
        %7229 = vset.pattern.permute.xlu0 2
        %7230 = vperm.xlu0 %7229, %v6886
        %v7231 = vpop.permute.xlu0 %7230
        %7233 = vset.pattern.permute.xlu0 2
        %7234 = vperm.xlu0 %7233, %v6887
        %v7235 = vpop.permute.xlu0 %7234
        %7237 = vset.pattern.permute.xlu0 2
        %7238 = vperm.xlu0 %7237, %v6888
        %v7239 = vpop.permute.xlu0 %7238
        %v7241 = vmul.f32 %v7179, %v7065
        %v7242 = vmul.f32 %v7183, %v7066
        %v7243 = vmul.f32 %v7187, %v7067
        %v7244 = vmul.f32 %v7191, %v7068
        %v7245 = vmul.f32 %v7195, %v7069
        %v7246 = vmul.f32 %v7199, %v7070
        %v7247 = vmul.f32 %v7203, %v7071
        %v7248 = vmul.f32 %v7207, %v7072
        %v7249 = vmul.f32 %v7211, %v7073
        %v7250 = vmul.f32 %v7215, %v7074
        %v7251 = vmul.f32 %v7219, %v7075
        %v7252 = vmul.f32 %v7223, %v7076
        %v7253 = vmul.f32 %v7227, %v7077
        %v7254 = vmul.f32 %v7231, %v7078
        %v7255 = vmul.f32 %v7235, %v7079
        %v7256 = vmul.f32 %v7239, %v7080
        %v7257 = vadd.f32 %v7161, %v7241
        %v7258 = vadd.f32 %v7162, %v7242
        %v7259 = vadd.f32 %v7163, %v7243
        %v7260 = vadd.f32 %v7164, %v7244
        %v7261 = vadd.f32 %v7165, %v7245
        %v7262 = vadd.f32 %v7166, %v7246
        %v7263 = vadd.f32 %v7167, %v7247
        %v7264 = vadd.f32 %v7168, %v7248
        %v7265 = vadd.f32 %v7169, %v7249
        %v7266 = vadd.f32 %v7170, %v7250
        %v7267 = vadd.f32 %v7171, %v7251
        %v7268 = vadd.f32 %v7172, %v7252
        %v7269 = vadd.f32 %v7173, %v7253
        %v7270 = vadd.f32 %v7174, %v7254
        %v7271 = vadd.f32 %v7175, %v7255
        %v7272 = vadd.f32 %v7176, %v7256
        %7273 = vrot.lane.b32.xlu0 %v6626, 126
        %v7274 = vpop.permute.xlu0 %7273
        %7275 = vrot.lane.b32.xlu0 %v6627, 126
        %v7276 = vpop.permute.xlu0 %7275
        %7277 = vrot.lane.b32.xlu0 %v6628, 126
        %v7278 = vpop.permute.xlu0 %7277
        %7279 = vrot.lane.b32.xlu0 %v6629, 126
        %v7280 = vpop.permute.xlu0 %7279
        %7281 = vrot.lane.b32.xlu0 %v6630, 126
        %v7282 = vpop.permute.xlu0 %7281
        %7283 = vrot.lane.b32.xlu0 %v6631, 126
        %v7284 = vpop.permute.xlu0 %7283
        %7285 = vrot.lane.b32.xlu0 %v6632, 126
        %v7286 = vpop.permute.xlu0 %7285
        %7287 = vrot.lane.b32.xlu0 %v6633, 126
        %v7288 = vpop.permute.xlu0 %7287
        %7289 = vrot.lane.b32.xlu0 %v6634, 126
        %v7290 = vpop.permute.xlu0 %7289
        %7291 = vrot.lane.b32.xlu0 %v6635, 126
        %v7292 = vpop.permute.xlu0 %7291
        %7293 = vrot.lane.b32.xlu0 %v6636, 126
        %v7294 = vpop.permute.xlu0 %7293
        %7295 = vrot.lane.b32.xlu0 %v6637, 126
        %v7296 = vpop.permute.xlu0 %7295
        %7297 = vrot.lane.b32.xlu0 %v6638, 126
        %v7298 = vpop.permute.xlu0 %7297
        %7299 = vrot.lane.b32.xlu0 %v6639, 126
        %v7300 = vpop.permute.xlu0 %7299
        %7301 = vrot.lane.b32.xlu0 %v6640, 126
        %v7302 = vpop.permute.xlu0 %7301
        %7303 = vrot.lane.b32.xlu0 %v6641, 126
        %v7304 = vpop.permute.xlu0 %7303
        %v7305 = vsel %vm1655, %v7274, 0.0
        %v7306 = vsel %vm1655, %v7276, 0.0
        %v7307 = vsel %vm1655, %v7278, 0.0
        %v7308 = vsel %vm1655, %v7280, 0.0
        %v7309 = vsel %vm1655, %v7282, 0.0
        %v7310 = vsel %vm1655, %v7284, 0.0
        %v7311 = vsel %vm1655, %v7286, 0.0
        %v7312 = vsel %vm1655, %v7288, 0.0
        %v7313 = vsel %vm1655, %v7290, 0.0
        %v7314 = vsel %vm1655, %v7292, 0.0
        %v7315 = vsel %vm1655, %v7294, 0.0
        %v7316 = vsel %vm1655, %v7296, 0.0
        %v7317 = vsel %vm1655, %v7298, 0.0
        %v7318 = vsel %vm1655, %v7300, 0.0
        %v7319 = vsel %vm1655, %v7302, 0.0
        %v7320 = vsel %vm1655, %v7304, 0.0
        %7321 = vrot.lane.b32.xlu0 %v6626, 2
        %v7322 = vpop.permute.xlu0 %7321
        %7323 = vrot.lane.b32.xlu0 %v6627, 2
        %v7324 = vpop.permute.xlu0 %7323
        %7325 = vrot.lane.b32.xlu0 %v6628, 2
        %v7326 = vpop.permute.xlu0 %7325
        %7327 = vrot.lane.b32.xlu0 %v6629, 2
        %v7328 = vpop.permute.xlu0 %7327
        %7329 = vrot.lane.b32.xlu0 %v6630, 2
        %v7330 = vpop.permute.xlu0 %7329
        %7331 = vrot.lane.b32.xlu0 %v6631, 2
        %v7332 = vpop.permute.xlu0 %7331
        %7333 = vrot.lane.b32.xlu0 %v6632, 2
        %v7334 = vpop.permute.xlu0 %7333
        %7335 = vrot.lane.b32.xlu0 %v6633, 2
        %v7336 = vpop.permute.xlu0 %7335
        %7337 = vrot.lane.b32.xlu0 %v6634, 2
        %v7338 = vpop.permute.xlu0 %7337
        %7339 = vrot.lane.b32.xlu0 %v6635, 2
        %v7340 = vpop.permute.xlu0 %7339
        %7341 = vrot.lane.b32.xlu0 %v6636, 2
        %v7342 = vpop.permute.xlu0 %7341
        %7343 = vrot.lane.b32.xlu0 %v6637, 2
        %v7344 = vpop.permute.xlu0 %7343
        %7345 = vrot.lane.b32.xlu0 %v6638, 2
        %v7346 = vpop.permute.xlu0 %7345
        %7347 = vrot.lane.b32.xlu0 %v6639, 2
        %v7348 = vpop.permute.xlu0 %7347
        %7349 = vrot.lane.b32.xlu0 %v6640, 2
        %v7350 = vpop.permute.xlu0 %7349
        %7351 = vrot.lane.b32.xlu0 %v6641, 2
        %v7352 = vpop.permute.xlu0 %7351
        %v7353 = vsel %vm1704, %v7322, 0.0
        %v7354 = vsel %vm1704, %v7324, 0.0
        %v7355 = vsel %vm1704, %v7326, 0.0
        %v7356 = vsel %vm1704, %v7328, 0.0
        %v7357 = vsel %vm1704, %v7330, 0.0
        %v7358 = vsel %vm1704, %v7332, 0.0
        %v7359 = vsel %vm1704, %v7334, 0.0
        %v7360 = vsel %vm1704, %v7336, 0.0
        %v7361 = vsel %vm1704, %v7338, 0.0
        %v7362 = vsel %vm1704, %v7340, 0.0
        %v7363 = vsel %vm1704, %v7342, 0.0
        %v7364 = vsel %vm1704, %v7344, 0.0
        %v7365 = vsel %vm1704, %v7346, 0.0
        %v7366 = vsel %vm1704, %v7348, 0.0
        %v7367 = vsel %vm1704, %v7350, 0.0
        %v7368 = vsel %vm1704, %v7352, 0.0
        %7369 = vset.pattern.permute.xlu0 3
        %7370 = vperm.xlu0 %7369, %v6873
        %v7371 = vpop.permute.xlu0 %7370
        %7373 = vset.pattern.permute.xlu0 3
        %7374 = vperm.xlu0 %7373, %v6874
        %v7375 = vpop.permute.xlu0 %7374
        %7377 = vset.pattern.permute.xlu0 3
        %7378 = vperm.xlu0 %7377, %v6875
        %v7379 = vpop.permute.xlu0 %7378
        %7381 = vset.pattern.permute.xlu0 3
        %7382 = vperm.xlu0 %7381, %v6876
        %v7383 = vpop.permute.xlu0 %7382
        %7385 = vset.pattern.permute.xlu0 3
        %7386 = vperm.xlu0 %7385, %v6877
        %v7387 = vpop.permute.xlu0 %7386
        %7389 = vset.pattern.permute.xlu0 3
        %7390 = vperm.xlu0 %7389, %v6878
        %v7391 = vpop.permute.xlu0 %7390
        %7393 = vset.pattern.permute.xlu0 3
        %7394 = vperm.xlu0 %7393, %v6879
        %v7395 = vpop.permute.xlu0 %7394
        %7397 = vset.pattern.permute.xlu0 3
        %7398 = vperm.xlu0 %7397, %v6880
        %v7399 = vpop.permute.xlu0 %7398
        %7401 = vset.pattern.permute.xlu0 3
        %7402 = vperm.xlu0 %7401, %v6881
        %v7403 = vpop.permute.xlu0 %7402
        %7405 = vset.pattern.permute.xlu0 3
        %7406 = vperm.xlu0 %7405, %v6882
        %v7407 = vpop.permute.xlu0 %7406
        %7409 = vset.pattern.permute.xlu0 3
        %7410 = vperm.xlu0 %7409, %v6883
        %v7411 = vpop.permute.xlu0 %7410
        %7413 = vset.pattern.permute.xlu0 3
        %7414 = vperm.xlu0 %7413, %v6884
        %v7415 = vpop.permute.xlu0 %7414
        %7417 = vset.pattern.permute.xlu0 3
        %7418 = vperm.xlu0 %7417, %v6885
        %v7419 = vpop.permute.xlu0 %7418
        %7421 = vset.pattern.permute.xlu0 3
        %7422 = vperm.xlu0 %7421, %v6886
        %v7423 = vpop.permute.xlu0 %7422
        %7425 = vset.pattern.permute.xlu0 3
        %7426 = vperm.xlu0 %7425, %v6887
        %v7427 = vpop.permute.xlu0 %7426
        %7429 = vset.pattern.permute.xlu0 3
        %7430 = vperm.xlu0 %7429, %v6888
        %v7431 = vpop.permute.xlu0 %7430
        %v7433 = vmul.f32 %v7371, %v7305
        %v7434 = vmul.f32 %v7375, %v7306
        %v7435 = vmul.f32 %v7379, %v7307
        %v7436 = vmul.f32 %v7383, %v7308
        %v7437 = vmul.f32 %v7387, %v7309
        %v7438 = vmul.f32 %v7391, %v7310
        %v7439 = vmul.f32 %v7395, %v7311
        %v7440 = vmul.f32 %v7399, %v7312
        %v7441 = vmul.f32 %v7403, %v7313
        %v7442 = vmul.f32 %v7407, %v7314
        %v7443 = vmul.f32 %v7411, %v7315
        %v7444 = vmul.f32 %v7415, %v7316
        %v7445 = vmul.f32 %v7419, %v7317
        %v7446 = vmul.f32 %v7423, %v7318
        %v7447 = vmul.f32 %v7427, %v7319
        %v7448 = vmul.f32 %v7431, %v7320
        %v7449 = vadd.f32 %v7257, %v7433
        %v7450 = vadd.f32 %v7258, %v7434
        %v7451 = vadd.f32 %v7259, %v7435
        %v7452 = vadd.f32 %v7260, %v7436
        %v7453 = vadd.f32 %v7261, %v7437
        %v7454 = vadd.f32 %v7262, %v7438
        %v7455 = vadd.f32 %v7263, %v7439
        %v7456 = vadd.f32 %v7264, %v7440
        %v7457 = vadd.f32 %v7265, %v7441
        %v7458 = vadd.f32 %v7266, %v7442
        %v7459 = vadd.f32 %v7267, %v7443
        %v7460 = vadd.f32 %v7268, %v7444
        %v7461 = vadd.f32 %v7269, %v7445
        %v7462 = vadd.f32 %v7270, %v7446
        %v7463 = vadd.f32 %v7271, %v7447
        %v7464 = vadd.f32 %v7272, %v7448
        %7465 = vset.pattern.permute.xlu0 4
        %7466 = vperm.xlu0 %7465, %v6873
        %v7467 = vpop.permute.xlu0 %7466
        %7469 = vset.pattern.permute.xlu0 4
        %7470 = vperm.xlu0 %7469, %v6874
        %v7471 = vpop.permute.xlu0 %7470
        %7473 = vset.pattern.permute.xlu0 4
        %7474 = vperm.xlu0 %7473, %v6875
        %v7475 = vpop.permute.xlu0 %7474
        %7477 = vset.pattern.permute.xlu0 4
        %7478 = vperm.xlu0 %7477, %v6876
        %v7479 = vpop.permute.xlu0 %7478
        %7481 = vset.pattern.permute.xlu0 4
        %7482 = vperm.xlu0 %7481, %v6877
        %v7483 = vpop.permute.xlu0 %7482
        %7485 = vset.pattern.permute.xlu0 4
        %7486 = vperm.xlu0 %7485, %v6878
        %v7487 = vpop.permute.xlu0 %7486
        %7489 = vset.pattern.permute.xlu0 4
        %7490 = vperm.xlu0 %7489, %v6879
        %v7491 = vpop.permute.xlu0 %7490
        %7493 = vset.pattern.permute.xlu0 4
        %7494 = vperm.xlu0 %7493, %v6880
        %v7495 = vpop.permute.xlu0 %7494
        %7497 = vset.pattern.permute.xlu0 4
        %7498 = vperm.xlu0 %7497, %v6881
        %v7499 = vpop.permute.xlu0 %7498
        %7501 = vset.pattern.permute.xlu0 4
        %7502 = vperm.xlu0 %7501, %v6882
        %v7503 = vpop.permute.xlu0 %7502
        %7505 = vset.pattern.permute.xlu0 4
        %7506 = vperm.xlu0 %7505, %v6883
        %v7507 = vpop.permute.xlu0 %7506
        %7509 = vset.pattern.permute.xlu0 4
        %7510 = vperm.xlu0 %7509, %v6884
        %v7511 = vpop.permute.xlu0 %7510
        %7513 = vset.pattern.permute.xlu0 4
        %7514 = vperm.xlu0 %7513, %v6885
        %v7515 = vpop.permute.xlu0 %7514
        %7517 = vset.pattern.permute.xlu0 4
        %7518 = vperm.xlu0 %7517, %v6886
        %v7519 = vpop.permute.xlu0 %7518
        %7521 = vset.pattern.permute.xlu0 4
        %7522 = vperm.xlu0 %7521, %v6887
        %v7523 = vpop.permute.xlu0 %7522
        %7525 = vset.pattern.permute.xlu0 4
        %7526 = vperm.xlu0 %7525, %v6888
        %v7527 = vpop.permute.xlu0 %7526
        %v7529 = vmul.f32 %v7467, %v7353
        %v7530 = vmul.f32 %v7471, %v7354
        %v7531 = vmul.f32 %v7475, %v7355
        %v7532 = vmul.f32 %v7479, %v7356
        %v7533 = vmul.f32 %v7483, %v7357
        %v7534 = vmul.f32 %v7487, %v7358
        %v7535 = vmul.f32 %v7491, %v7359
        %v7536 = vmul.f32 %v7495, %v7360
        %v7537 = vmul.f32 %v7499, %v7361
        %v7538 = vmul.f32 %v7503, %v7362
        %v7539 = vmul.f32 %v7507, %v7363
        %v7540 = vmul.f32 %v7511, %v7364
        %v7541 = vmul.f32 %v7515, %v7365
        %v7542 = vmul.f32 %v7519, %v7366
        %v7543 = vmul.f32 %v7523, %v7367
        %v7544 = vmul.f32 %v7527, %v7368
        %v7545 = vadd.f32 %v7449, %v7529
        %v7546 = vadd.f32 %v7450, %v7530
        %v7547 = vadd.f32 %v7451, %v7531
        %v7548 = vadd.f32 %v7452, %v7532
        %v7549 = vadd.f32 %v7453, %v7533
        %v7550 = vadd.f32 %v7454, %v7534
        %v7551 = vadd.f32 %v7455, %v7535
        %v7552 = vadd.f32 %v7456, %v7536
        %v7553 = vadd.f32 %v7457, %v7537
        %v7554 = vadd.f32 %v7458, %v7538
        %v7555 = vadd.f32 %v7459, %v7539
        %v7556 = vadd.f32 %v7460, %v7540
        %v7557 = vadd.f32 %v7461, %v7541
        %v7558 = vadd.f32 %v7462, %v7542
        %v7559 = vadd.f32 %v7463, %v7543
        %v7560 = vadd.f32 %v7464, %v7544
        %7561 = vrot.lane.b32.xlu0 %v6626, 125
        %v7562 = vpop.permute.xlu0 %7561
        %7563 = vrot.lane.b32.xlu0 %v6627, 125
        %v7564 = vpop.permute.xlu0 %7563
        %7565 = vrot.lane.b32.xlu0 %v6628, 125
        %v7566 = vpop.permute.xlu0 %7565
        %7567 = vrot.lane.b32.xlu0 %v6629, 125
        %v7568 = vpop.permute.xlu0 %7567
        %7569 = vrot.lane.b32.xlu0 %v6630, 125
        %v7570 = vpop.permute.xlu0 %7569
        %7571 = vrot.lane.b32.xlu0 %v6631, 125
        %v7572 = vpop.permute.xlu0 %7571
        %7573 = vrot.lane.b32.xlu0 %v6632, 125
        %v7574 = vpop.permute.xlu0 %7573
        %7575 = vrot.lane.b32.xlu0 %v6633, 125
        %v7576 = vpop.permute.xlu0 %7575
        %7577 = vrot.lane.b32.xlu0 %v6634, 125
        %v7578 = vpop.permute.xlu0 %7577
        %7579 = vrot.lane.b32.xlu0 %v6635, 125
        %v7580 = vpop.permute.xlu0 %7579
        %7581 = vrot.lane.b32.xlu0 %v6636, 125
        %v7582 = vpop.permute.xlu0 %7581
        %7583 = vrot.lane.b32.xlu0 %v6637, 125
        %v7584 = vpop.permute.xlu0 %7583
        %7585 = vrot.lane.b32.xlu0 %v6638, 125
        %v7586 = vpop.permute.xlu0 %7585
        %7587 = vrot.lane.b32.xlu0 %v6639, 125
        %v7588 = vpop.permute.xlu0 %7587
        %7589 = vrot.lane.b32.xlu0 %v6640, 125
        %v7590 = vpop.permute.xlu0 %7589
        %7591 = vrot.lane.b32.xlu0 %v6641, 125
        %v7592 = vpop.permute.xlu0 %7591
        %v7593 = vsel %vm1945, %v7562, 0.0
        %v7594 = vsel %vm1945, %v7564, 0.0
        %v7595 = vsel %vm1945, %v7566, 0.0
        %v7596 = vsel %vm1945, %v7568, 0.0
        %v7597 = vsel %vm1945, %v7570, 0.0
        %v7598 = vsel %vm1945, %v7572, 0.0
        %v7599 = vsel %vm1945, %v7574, 0.0
        %v7600 = vsel %vm1945, %v7576, 0.0
        %v7601 = vsel %vm1945, %v7578, 0.0
        %v7602 = vsel %vm1945, %v7580, 0.0
        %v7603 = vsel %vm1945, %v7582, 0.0
        %v7604 = vsel %vm1945, %v7584, 0.0
        %v7605 = vsel %vm1945, %v7586, 0.0
        %v7606 = vsel %vm1945, %v7588, 0.0
        %v7607 = vsel %vm1945, %v7590, 0.0
        %v7608 = vsel %vm1945, %v7592, 0.0
        %7609 = vrot.lane.b32.xlu0 %v6626, 3
        %v7610 = vpop.permute.xlu0 %7609
        %7611 = vrot.lane.b32.xlu0 %v6627, 3
        %v7612 = vpop.permute.xlu0 %7611
        %7613 = vrot.lane.b32.xlu0 %v6628, 3
        %v7614 = vpop.permute.xlu0 %7613
        %7615 = vrot.lane.b32.xlu0 %v6629, 3
        %v7616 = vpop.permute.xlu0 %7615
        %7617 = vrot.lane.b32.xlu0 %v6630, 3
        %v7618 = vpop.permute.xlu0 %7617
        %7619 = vrot.lane.b32.xlu0 %v6631, 3
        %v7620 = vpop.permute.xlu0 %7619
        %7621 = vrot.lane.b32.xlu0 %v6632, 3
        %v7622 = vpop.permute.xlu0 %7621
        %7623 = vrot.lane.b32.xlu0 %v6633, 3
        %v7624 = vpop.permute.xlu0 %7623
        %7625 = vrot.lane.b32.xlu0 %v6634, 3
        %v7626 = vpop.permute.xlu0 %7625
        %7627 = vrot.lane.b32.xlu0 %v6635, 3
        %v7628 = vpop.permute.xlu0 %7627
        %7629 = vrot.lane.b32.xlu0 %v6636, 3
        %v7630 = vpop.permute.xlu0 %7629
        %7631 = vrot.lane.b32.xlu0 %v6637, 3
        %v7632 = vpop.permute.xlu0 %7631
        %7633 = vrot.lane.b32.xlu0 %v6638, 3
        %v7634 = vpop.permute.xlu0 %7633
        %7635 = vrot.lane.b32.xlu0 %v6639, 3
        %v7636 = vpop.permute.xlu0 %7635
        %7637 = vrot.lane.b32.xlu0 %v6640, 3
        %v7638 = vpop.permute.xlu0 %7637
        %7639 = vrot.lane.b32.xlu0 %v6641, 3
        %v7640 = vpop.permute.xlu0 %7639
        %v7641 = vsel %vm1994, %v7610, 0.0
        %v7642 = vsel %vm1994, %v7612, 0.0
        %v7643 = vsel %vm1994, %v7614, 0.0
        %v7644 = vsel %vm1994, %v7616, 0.0
        %v7645 = vsel %vm1994, %v7618, 0.0
        %v7646 = vsel %vm1994, %v7620, 0.0
        %v7647 = vsel %vm1994, %v7622, 0.0
        %v7648 = vsel %vm1994, %v7624, 0.0
        %v7649 = vsel %vm1994, %v7626, 0.0
        %v7650 = vsel %vm1994, %v7628, 0.0
        %v7651 = vsel %vm1994, %v7630, 0.0
        %v7652 = vsel %vm1994, %v7632, 0.0
        %v7653 = vsel %vm1994, %v7634, 0.0
        %v7654 = vsel %vm1994, %v7636, 0.0
        %v7655 = vsel %vm1994, %v7638, 0.0
        %v7656 = vsel %vm1994, %v7640, 0.0
        %7657 = vset.pattern.permute.xlu0 5
        %7658 = vperm.xlu0 %7657, %v6873
        %v7659 = vpop.permute.xlu0 %7658
        %7661 = vset.pattern.permute.xlu0 5
        %7662 = vperm.xlu0 %7661, %v6874
        %v7663 = vpop.permute.xlu0 %7662
        %7665 = vset.pattern.permute.xlu0 5
        %7666 = vperm.xlu0 %7665, %v6875
        %v7667 = vpop.permute.xlu0 %7666
        %7669 = vset.pattern.permute.xlu0 5
        %7670 = vperm.xlu0 %7669, %v6876
        %v7671 = vpop.permute.xlu0 %7670
        %7673 = vset.pattern.permute.xlu0 5
        %7674 = vperm.xlu0 %7673, %v6877
        %v7675 = vpop.permute.xlu0 %7674
        %7677 = vset.pattern.permute.xlu0 5
        %7678 = vperm.xlu0 %7677, %v6878
        %v7679 = vpop.permute.xlu0 %7678
        %7681 = vset.pattern.permute.xlu0 5
        %7682 = vperm.xlu0 %7681, %v6879
        %v7683 = vpop.permute.xlu0 %7682
        %7685 = vset.pattern.permute.xlu0 5
        %7686 = vperm.xlu0 %7685, %v6880
        %v7687 = vpop.permute.xlu0 %7686
        %7689 = vset.pattern.permute.xlu0 5
        %7690 = vperm.xlu0 %7689, %v6881
        %v7691 = vpop.permute.xlu0 %7690
        %7693 = vset.pattern.permute.xlu0 5
        %7694 = vperm.xlu0 %7693, %v6882
        %v7695 = vpop.permute.xlu0 %7694
        %7697 = vset.pattern.permute.xlu0 5
        %7698 = vperm.xlu0 %7697, %v6883
        %v7699 = vpop.permute.xlu0 %7698
        %7701 = vset.pattern.permute.xlu0 5
        %7702 = vperm.xlu0 %7701, %v6884
        %v7703 = vpop.permute.xlu0 %7702
        %7705 = vset.pattern.permute.xlu0 5
        %7706 = vperm.xlu0 %7705, %v6885
        %v7707 = vpop.permute.xlu0 %7706
        %7709 = vset.pattern.permute.xlu0 5
        %7710 = vperm.xlu0 %7709, %v6886
        %v7711 = vpop.permute.xlu0 %7710
        %7713 = vset.pattern.permute.xlu0 5
        %7714 = vperm.xlu0 %7713, %v6887
        %v7715 = vpop.permute.xlu0 %7714
        %7717 = vset.pattern.permute.xlu0 5
        %7718 = vperm.xlu0 %7717, %v6888
        %v7719 = vpop.permute.xlu0 %7718
        %v7721 = vmul.f32 %v7659, %v7593
        %v7722 = vmul.f32 %v7663, %v7594
        %v7723 = vmul.f32 %v7667, %v7595
        %v7724 = vmul.f32 %v7671, %v7596
        %v7725 = vmul.f32 %v7675, %v7597
        %v7726 = vmul.f32 %v7679, %v7598
        %v7727 = vmul.f32 %v7683, %v7599
        %v7728 = vmul.f32 %v7687, %v7600
        %v7729 = vmul.f32 %v7691, %v7601
        %v7730 = vmul.f32 %v7695, %v7602
        %v7731 = vmul.f32 %v7699, %v7603
        %v7732 = vmul.f32 %v7703, %v7604
        %v7733 = vmul.f32 %v7707, %v7605
        %v7734 = vmul.f32 %v7711, %v7606
        %v7735 = vmul.f32 %v7715, %v7607
        %v7736 = vmul.f32 %v7719, %v7608
        %v7737 = vadd.f32 %v7545, %v7721
        %v7738 = vadd.f32 %v7546, %v7722
        %v7739 = vadd.f32 %v7547, %v7723
        %v7740 = vadd.f32 %v7548, %v7724
        %v7741 = vadd.f32 %v7549, %v7725
        %v7742 = vadd.f32 %v7550, %v7726
        %v7743 = vadd.f32 %v7551, %v7727
        %v7744 = vadd.f32 %v7552, %v7728
        %v7745 = vadd.f32 %v7553, %v7729
        %v7746 = vadd.f32 %v7554, %v7730
        %v7747 = vadd.f32 %v7555, %v7731
        %v7748 = vadd.f32 %v7556, %v7732
        %v7749 = vadd.f32 %v7557, %v7733
        %v7750 = vadd.f32 %v7558, %v7734
        %v7751 = vadd.f32 %v7559, %v7735
        %v7752 = vadd.f32 %v7560, %v7736
        %7753 = vset.pattern.permute.xlu0 6
        %7754 = vperm.xlu0 %7753, %v6873
        %v7755 = vpop.permute.xlu0 %7754
        %7757 = vset.pattern.permute.xlu0 6
        %7758 = vperm.xlu0 %7757, %v6874
        %v7759 = vpop.permute.xlu0 %7758
        %7761 = vset.pattern.permute.xlu0 6
        %7762 = vperm.xlu0 %7761, %v6875
        %v7763 = vpop.permute.xlu0 %7762
        %7765 = vset.pattern.permute.xlu0 6
        %7766 = vperm.xlu0 %7765, %v6876
        %v7767 = vpop.permute.xlu0 %7766
        %7769 = vset.pattern.permute.xlu0 6
        %7770 = vperm.xlu0 %7769, %v6877
        %v7771 = vpop.permute.xlu0 %7770
        %7773 = vset.pattern.permute.xlu0 6
        %7774 = vperm.xlu0 %7773, %v6878
        %v7775 = vpop.permute.xlu0 %7774
        %7777 = vset.pattern.permute.xlu0 6
        %7778 = vperm.xlu0 %7777, %v6879
        %v7779 = vpop.permute.xlu0 %7778
        %7781 = vset.pattern.permute.xlu0 6
        %7782 = vperm.xlu0 %7781, %v6880
        %v7783 = vpop.permute.xlu0 %7782
        %7785 = vset.pattern.permute.xlu0 6
        %7786 = vperm.xlu0 %7785, %v6881
        %v7787 = vpop.permute.xlu0 %7786
        %7789 = vset.pattern.permute.xlu0 6
        %7790 = vperm.xlu0 %7789, %v6882
        %v7791 = vpop.permute.xlu0 %7790
        %7793 = vset.pattern.permute.xlu0 6
        %7794 = vperm.xlu0 %7793, %v6883
        %v7795 = vpop.permute.xlu0 %7794
        %7797 = vset.pattern.permute.xlu0 6
        %7798 = vperm.xlu0 %7797, %v6884
        %v7799 = vpop.permute.xlu0 %7798
        %7801 = vset.pattern.permute.xlu0 6
        %7802 = vperm.xlu0 %7801, %v6885
        %v7803 = vpop.permute.xlu0 %7802
        %7805 = vset.pattern.permute.xlu0 6
        %7806 = vperm.xlu0 %7805, %v6886
        %v7807 = vpop.permute.xlu0 %7806
        %7809 = vset.pattern.permute.xlu0 6
        %7810 = vperm.xlu0 %7809, %v6887
        %v7811 = vpop.permute.xlu0 %7810
        %7813 = vset.pattern.permute.xlu0 6
        %7814 = vperm.xlu0 %7813, %v6888
        %v7815 = vpop.permute.xlu0 %7814
        %v7817 = vmul.f32 %v7755, %v7641
        %v7818 = vmul.f32 %v7759, %v7642
        %v7819 = vmul.f32 %v7763, %v7643
        %v7820 = vmul.f32 %v7767, %v7644
        %v7821 = vmul.f32 %v7771, %v7645
        %v7822 = vmul.f32 %v7775, %v7646
        %v7823 = vmul.f32 %v7779, %v7647
        %v7824 = vmul.f32 %v7783, %v7648
        %v7825 = vmul.f32 %v7787, %v7649
        %v7826 = vmul.f32 %v7791, %v7650
        %v7827 = vmul.f32 %v7795, %v7651
        %v7828 = vmul.f32 %v7799, %v7652
        %v7829 = vmul.f32 %v7803, %v7653
        %v7830 = vmul.f32 %v7807, %v7654
        %v7831 = vmul.f32 %v7811, %v7655
        %v7832 = vmul.f32 %v7815, %v7656
        %v7833 = vadd.f32 %v7737, %v7817
        %v7834 = vadd.f32 %v7738, %v7818
        %v7835 = vadd.f32 %v7739, %v7819
        %v7836 = vadd.f32 %v7740, %v7820
        %v7837 = vadd.f32 %v7741, %v7821
        %v7838 = vadd.f32 %v7742, %v7822
        %v7839 = vadd.f32 %v7743, %v7823
        %v7840 = vadd.f32 %v7744, %v7824
        %v7841 = vadd.f32 %v7745, %v7825
        %v7842 = vadd.f32 %v7746, %v7826
        %v7843 = vadd.f32 %v7747, %v7827
        %v7844 = vadd.f32 %v7748, %v7828
        %v7845 = vadd.f32 %v7749, %v7829
        %v7846 = vadd.f32 %v7750, %v7830
        %v7847 = vadd.f32 %v7751, %v7831
        %v7848 = vadd.f32 %v7752, %v7832
        %v7849 = vsel %vm469, %v7833, 0.0
        %v7850 = vsel %vm470, %v7834, 0.0
        %v7851 = vsel %vm471, %v7835, 0.0
        %v7852 = vsel %vm472, %v7836, 0.0
        %v7853 = vsel %vm473, %v7837, 0.0
        %v7854 = vsel %vm474, %v7838, 0.0
        %v7855 = vsel %vm475, %v7839, 0.0
        %v7856 = vsel %vm476, %v7840, 0.0
        %v7857 = vsel %vm477, %v7841, 0.0
        %v7858 = vsel %vm478, %v7842, 0.0
        %v7859 = vsel %vm479, %v7843, 0.0
        %v7860 = vsel %vm480, %v7844, 0.0
        %v7861 = vsel %vm481, %v7845, 0.0
        %v7862 = vsel %vm482, %v7846, 0.0
        %v7863 = vsel %vm483, %v7847, 0.0
        %v7864 = vsel %vm484, %v7848, 0.0
        %s7865 = scalar_lea.vmem %s414, 384 [#allocation2]
        %7866 = vst [vmem:[%s7865] sm:$0xff] %v7849
        %7867 = vst [vmem:[%s7865 + $0x8] sm:$0xff] %v7850
        %7868 = vst [vmem:[%s7865 + $0x10] sm:$0xff] %v7851
        %7869 = vst [vmem:[%s7865 + $0x18] sm:$0xff] %v7852
        %7870 = vst [vmem:[%s7865 + $0x20] sm:$0xff] %v7853
        %7871 = vst [vmem:[%s7865 + $0x28] sm:$0xff] %v7854
        %7872 = vst [vmem:[%s7865 + $0x30] sm:$0xff] %v7855
        %7873 = vst [vmem:[%s7865 + $0x38] sm:$0xff] %v7856
        %7874 = vst [vmem:[%s7865 + $0x40] sm:$0xff] %v7857
        %7875 = vst [vmem:[%s7865 + $0x48] sm:$0xff] %v7858
        %7876 = vst [vmem:[%s7865 + $0x50] sm:$0xff] %v7859
        %7877 = vst [vmem:[%s7865 + $0x58] sm:$0xff] %v7860
        %7878 = vst [vmem:[%s7865 + $0x60] sm:$0xff] %v7861
        %7879 = vst [vmem:[%s7865 + $0x68] sm:$0xff] %v7862
        %7880 = vst [vmem:[%s7865 + $0x70] sm:$0xff] %v7863
        %7881 = vst [vmem:[%s7865 + $0x78] sm:$0xff] %v7864
        %v7882 = vpack.c.bf16 %v7850, %v7849
        %v7883 = vpack.c.bf16 %v7852, %v7851
        %v7884 = vpack.c.bf16 %v7854, %v7853
        %v7885 = vpack.c.bf16 %v7856, %v7855
        %v7886 = vpack.c.bf16 %v7858, %v7857
        %v7887 = vpack.c.bf16 %v7860, %v7859
        %v7888 = vpack.c.bf16 %v7862, %v7861
        %v7889 = vpack.c.bf16 %v7864, %v7863
        %v7890 = vpack.c.bf16 %v6332, %v6330
        %v7891 = vpack.c.bf16 %v6337, %v6335
        %v7892 = vpack.c.bf16 %v6342, %v6340
        %v7893 = vpack.c.bf16 %v6347, %v6345
        %v7894 = vpack.c.bf16 %v6352, %v6350
        %v7895 = vpack.c.bf16 %v6357, %v6355
        %v7896 = vpack.c.bf16 %v6362, %v6360
        %v7897 = vpack.c.bf16 %v6367, %v6365
        %7898 = vmatpush.bf16.msra.mxu0 %v7897
        %7899 = vmatpush.bf16.msra.mxu0 %v7896
        %7900 = vmatpush.bf16.msra.mxu0 %v7895
        %7901 = vmatpush.bf16.msra.mxu0 %v7894
        %7902 = vmatpush.bf16.msra.mxu0 %v7893
        %7903 = vmatpush.bf16.msra.mxu0 %v7892
        %7904 = vmatpush.bf16.msra.mxu0 %v7891
        %7905 = vmatpush.bf16.msra.mxu0 %v7890
        %7906 = vmatmul.bf16.gmra.mxu0 %v7882
        %v7907 = vpop.f32.mrf.mxu0
        %v7908 = vadd.f32 0.0, %v7907
        %v7909 = vpop.f32.mrf.mxu0
        %v7910 = vadd.f32 0.0, %v7909
        %7911 = vmatmul.bf16.gmra.mxu0 %v7883
        %v7912 = vpop.f32.mrf.mxu0
        %v7913 = vadd.f32 0.0, %v7912
        %v7914 = vpop.f32.mrf.mxu0
        %v7915 = vadd.f32 0.0, %v7914
        %7916 = vmatmul.bf16.gmra.mxu0 %v7884
        %v7917 = vpop.f32.mrf.mxu0
        %v7918 = vadd.f32 0.0, %v7917
        %v7919 = vpop.f32.mrf.mxu0
        %v7920 = vadd.f32 0.0, %v7919
        %7921 = vmatmul.bf16.gmra.mxu0 %v7885
        %v7922 = vpop.f32.mrf.mxu0
        %v7923 = vadd.f32 0.0, %v7922
        %v7924 = vpop.f32.mrf.mxu0
        %v7925 = vadd.f32 0.0, %v7924
        %7926 = vmatmul.bf16.gmra.mxu0 %v7886
        %v7927 = vpop.f32.mrf.mxu0
        %v7928 = vadd.f32 0.0, %v7927
        %v7929 = vpop.f32.mrf.mxu0
        %v7930 = vadd.f32 0.0, %v7929
        %7931 = vmatmul.bf16.gmra.mxu0 %v7887
        %v7932 = vpop.f32.mrf.mxu0
        %v7933 = vadd.f32 0.0, %v7932
        %v7934 = vpop.f32.mrf.mxu0
        %v7935 = vadd.f32 0.0, %v7934
        %7936 = vmatmul.bf16.gmra.mxu0 %v7888
        %v7937 = vpop.f32.mrf.mxu0
        %v7938 = vadd.f32 0.0, %v7937
        %v7939 = vpop.f32.mrf.mxu0
        %v7940 = vadd.f32 0.0, %v7939
        %7941 = vmatmul.bf16.gmra.mxu0 %v7889
        %v7942 = vpop.f32.mrf.mxu0
        %v7943 = vadd.f32 0.0, %v7942
        %v7944 = vpop.f32.mrf.mxu0
        %v7945 = vadd.f32 0.0, %v7944
        %7946 = vdwg.mxu0
        %v7947 = vpack.c.bf16 %v7910, %v7908
        %v7948 = vpack.c.bf16 %v7915, %v7913
        %v7949 = vpack.c.bf16 %v7920, %v7918
        %v7950 = vpack.c.bf16 %v7925, %v7923
        %v7951 = vpack.c.bf16 %v7930, %v7928
        %v7952 = vpack.c.bf16 %v7935, %v7933
        %v7953 = vpack.c.bf16 %v7940, %v7938
        %v7954 = vpack.c.bf16 %v7945, %v7943
        %s7955 = scalar_lea.vmem %s9, 12
        %v7956 = vld [vmem:[%s7955] sm:$0xf]
        %v7958 = vsel %vm733, %v7947, 0
        %v7961 = vsel %vm733, %v7948, 0
        %v7964 = vsel %vm733, %v7949, 0
        %v7967 = vsel %vm733, %v7950, 0
        %v7970 = vsel %vm733, %v7951, 0
        %v7973 = vsel %vm733, %v7952, 0
        %v7976 = vsel %vm733, %v7953, 0
        %v7979 = vsel %vm733, %v7954, 0
        %v7982 = vsel %vm4134, %v7956, 0
        %7984 = vmatpush.bf16.msra.mxu0 0
        %7985 = vmatpush.bf16.msra.mxu0 0
        %7986 = vmatpush.bf16.msra.mxu0 0
        %7987 = vmatpush.bf16.msra.mxu0 0
        %7988 = vmatpush.bf16.msra.mxu0 0
        %7989 = vmatpush.bf16.msra.mxu0 0
        %7990 = vmatpush.bf16.msra.mxu0 0
        %7991 = vmatpush.bf16.msra.mxu0 %v7982
        %7992 = vmatmul.bf16.gmra.mxu0 %v7958
        %v7993 = vpop.f32.mrf.mxu0
        %v7994 = vadd.f32 0.0, %v7993
        %v7995 = vpop.f32.mrf.mxu0
        %v7996 = vadd.f32 0.0, %v7995
        %7997 = vmatmul.bf16.gmra.mxu0 %v7961
        %v7998 = vpop.f32.mrf.mxu0
        %v7999 = vadd.f32 0.0, %v7998
        %v8000 = vpop.f32.mrf.mxu0
        %v8001 = vadd.f32 0.0, %v8000
        %8002 = vmatmul.bf16.gmra.mxu0 %v7964
        %v8003 = vpop.f32.mrf.mxu0
        %v8004 = vadd.f32 0.0, %v8003
        %v8005 = vpop.f32.mrf.mxu0
        %v8006 = vadd.f32 0.0, %v8005
        %8007 = vmatmul.bf16.gmra.mxu0 %v7967
        %v8008 = vpop.f32.mrf.mxu0
        %v8009 = vadd.f32 0.0, %v8008
        %v8010 = vpop.f32.mrf.mxu0
        %v8011 = vadd.f32 0.0, %v8010
        %8012 = vmatmul.bf16.gmra.mxu0 %v7970
        %v8013 = vpop.f32.mrf.mxu0
        %v8014 = vadd.f32 0.0, %v8013
        %v8015 = vpop.f32.mrf.mxu0
        %v8016 = vadd.f32 0.0, %v8015
        %8017 = vmatmul.bf16.gmra.mxu0 %v7973
        %v8018 = vpop.f32.mrf.mxu0
        %v8019 = vadd.f32 0.0, %v8018
        %v8020 = vpop.f32.mrf.mxu0
        %v8021 = vadd.f32 0.0, %v8020
        %8022 = vmatmul.bf16.gmra.mxu0 %v7976
        %v8023 = vpop.f32.mrf.mxu0
        %v8024 = vadd.f32 0.0, %v8023
        %v8025 = vpop.f32.mrf.mxu0
        %v8026 = vadd.f32 0.0, %v8025
        %8027 = vmatmul.bf16.gmra.mxu0 %v7979
        %v8028 = vpop.f32.mrf.mxu0
        %v8029 = vadd.f32 0.0, %v8028
        %v8030 = vpop.f32.mrf.mxu0
        %v8031 = vadd.f32 0.0, %v8030
        %8032 = vdwg.mxu0
        %v8033 = vadd.f32 %v6140, %v7994
        %v8034 = vadd.f32 %v6141, %v7996
        %v8035 = vadd.f32 %v6142, %v7999
        %v8036 = vadd.f32 %v6143, %v8001
        %v8037 = vadd.f32 %v6144, %v8004
        %v8038 = vadd.f32 %v6145, %v8006
        %v8039 = vadd.f32 %v6146, %v8009
        %v8040 = vadd.f32 %v6147, %v8011
        %v8041 = vadd.f32 %v6148, %v8014
        %v8042 = vadd.f32 %v6149, %v8016
        %v8043 = vadd.f32 %v6150, %v8019
        %v8044 = vadd.f32 %v6151, %v8021
        %v8045 = vadd.f32 %v6152, %v8024
        %v8046 = vadd.f32 %v6153, %v8026
        %v8047 = vadd.f32 %v6154, %v8029
        %v8048 = vadd.f32 %v6155, %v8031
        %v8049 = vld [vmem:[%s10] sm:$0x1]
        %v8051 = vperm.slane %v8049, 0
        %v8053 = vadd.f32 %v8033, %v8051
        %v8054 = vadd.f32 %v8034, %v8051
        %v8055 = vadd.f32 %v8035, %v8051
        %v8056 = vadd.f32 %v8036, %v8051
        %v8057 = vadd.f32 %v8037, %v8051
        %v8058 = vadd.f32 %v8038, %v8051
        %v8059 = vadd.f32 %v8039, %v8051
        %v8060 = vadd.f32 %v8040, %v8051
        %v8061 = vadd.f32 %v8041, %v8051
        %v8062 = vadd.f32 %v8042, %v8051
        %v8063 = vadd.f32 %v8043, %v8051
        %v8064 = vadd.f32 %v8044, %v8051
        %v8065 = vadd.f32 %v8045, %v8051
        %v8066 = vadd.f32 %v8046, %v8051
        %v8067 = vadd.f32 %v8047, %v8051
        %v8068 = vadd.f32 %v8048, %v8051
        %8069 = vst.msk [vmem:[%s424] sm:$0xff] %vm505, %v8053
        %8070 = vst.msk [vmem:[%s424 + $0x8] sm:$0xff] %vm505, %v8054
        %8071 = vst.msk [vmem:[%s424 + $0x10] sm:$0xff] %vm505, %v8055
        %8072 = vst.msk [vmem:[%s424 + $0x18] sm:$0xff] %vm505, %v8056
        %8073 = vst.msk [vmem:[%s424 + $0x20] sm:$0xff] %vm505, %v8057
        %8074 = vst.msk [vmem:[%s424 + $0x28] sm:$0xff] %vm505, %v8058
        %8075 = vst.msk [vmem:[%s424 + $0x30] sm:$0xff] %vm505, %v8059
        %8076 = vst.msk [vmem:[%s424 + $0x38] sm:$0xff] %vm505, %v8060
        %8077 = vst.msk [vmem:[%s424 + $0x40] sm:$0xff] %vm505, %v8061
        %8078 = vst.msk [vmem:[%s424 + $0x48] sm:$0xff] %vm505, %v8062
        %8079 = vst.msk [vmem:[%s424 + $0x50] sm:$0xff] %vm505, %v8063
        %8080 = vst.msk [vmem:[%s424 + $0x58] sm:$0xff] %vm505, %v8064
        %8081 = vst.msk [vmem:[%s424 + $0x60] sm:$0xff] %vm505, %v8065
        %8082 = vst.msk [vmem:[%s424 + $0x68] sm:$0xff] %vm505, %v8066
        %8083 = vst.msk [vmem:[%s424 + $0x70] sm:$0xff] %vm505, %v8067
        %8084 = vst.msk [vmem:[%s424 + $0x78] sm:$0xff] %vm505, %v8068
        %p8085 = scmp.lt.s32.totalorder %s27, 1
        %s8086 = scalar_select %p8085, %s27, 1
        %s8087 = smul.addr %s8086, 16
        %s8088 = smul.addr %s8087, 8
        %s8089 = scalar_lea.vmem %s11, %s8088
        %s8090 = sand.u32 %s297, 1
        %s8091 = scalar_lea.sflag [#allocation3], %s8090
        %s8092 = sand.u32 %s297, 1
        %s8093 = smul.addr %s8092, 512
        %s8094 = scalar_lea.vmem [#allocation2], %s8093
        // Predicated region
        $region65: #{tpu_custom_call.1} parent=63 // pred_check
          %p8095 = pneg %p281
        $region66: #{tpu_custom_call.1} parent=63 // pred_check_branch
          %8097 = sbr.rel (%p8095) target = $region68
        $region67: #{tpu_custom_call.1} parent=63 // pred_region
          _
        $region68: #{tpu_custom_call.1} parent=63 // pred_fallthru
          _
        // Predicated region
        $region69: #{tpu_custom_call.1} parent=63 // pred_check
          %p8098 = pneg %p307
        $region70: #{tpu_custom_call.1} parent=63 // pred_check_branch
          %8100 = sbr.rel (%p8098) target = $region72
        $region71: #{tpu_custom_call.1} parent=63 // pred_region
          %8102 = vsyncadd %s8091, 0
          %s8103 = smul.addr %s27, 64
          %s8104 = smul.addr %s8103, 8
          %s8105 = scalar_lea.hbm %s12, %s8104
          %s8106 = sshll.u32 %s8094, 4
          %s8107 = int_to_ptr.vmem [resolvable:$true] %s8106
          %s8108 = sshll.u32 %s8105, 4
          %s8109 = int_to_ptr.hbm [resolvable:$true] %s8108
          %8114 = dma.vmem_to_hbm [thread:$0]  %s8107, 8192, %s8109, %s8091, 128, 128, 8
        $region72: #{tpu_custom_call.1} parent=63 // pred_fallthru
          _
      $region64: #{tpu_custom_call.1} parent=5 // pred_fallthru
        _
      %p8115 = scmp.le.s32.totalorder 2, %s22
      // Predicated region
      $region73: #{tpu_custom_call.1} parent=5 // pred_check
        %p8116 = pneg %p8115
      $region74: #{tpu_custom_call.1} parent=5 // pred_check_branch
        %8118 = sbr.rel (%p8116) target = $region76
      $region75: #{tpu_custom_call.1} parent=5 // pred_region
        %s8119 = ssub.s32 %s22, 2
        // Predicated region
        $region77: #{tpu_custom_call.1} parent=75 // pred_check
          %p8120 = pneg %p287
        $region78: #{tpu_custom_call.1} parent=75 // pred_check_branch
          %8122 = sbr.rel (%p8120) target = $region80
        $region79: #{tpu_custom_call.1} parent=75 // pred_region
          %p8123 = scmp.lt.s32.totalorder %s28, 1
          %s8124 = scalar_select %p8123, %s28, 1
          %s8125 = smul.addr %s8124, 16
          %s8126 = smul.addr %s8125, 8
          %s8127 = scalar_lea.vmem %s11, %s8126
        $region80: #{tpu_custom_call.1} parent=75 // pred_fallthru
          _
        // Predicated region
        $region81: #{tpu_custom_call.1} parent=75 // pred_check
          %p8128 = pneg %p313
        $region82: #{tpu_custom_call.1} parent=75 // pred_check_branch
          %8130 = sbr.rel (%p8128) target = $region84
        $region83: #{tpu_custom_call.1} parent=75 // pred_region
          %s8131 = sand.u32 %s298, 1
          %s8132 = scalar_lea.sflag [#allocation3], %s8131
          %s8133 = sand.u32 %s298, 1
          %s8134 = smul.addr %s8133, 512
          %s8135 = scalar_lea.vmem [#allocation2], %s8134
          %8137 = dma.done %s8132, 8192
        $region84: #{tpu_custom_call.1} parent=75 // pred_fallthru
          _
      $region76: #{tpu_custom_call.1} parent=5 // pred_fallthru
        _
    $region6: #{tpu_custom_call.1} parent=1 // loop_footer
      %s26 = sadd.s32 1, %s22
    $region7: #{tpu_custom_call.1} parent=1 // loop_footer_branch
      %21 = sbr.rel target = $region3
    $region8: #{tpu_custom_call.1} parent=1 // loop_exit
      _
    %8138 = vsyncpa [#allocation3], 1
    %s8139 = scalar_lea.sflag [#allocation3], 1
    %8140 = vsyncpa %s8139, 1

</llo_original>
